<compile_context>
chip_gen: v7x
topology: tpu7x:2x2x1
jax: 0.10.0
libtpu: 0.0.40
codegen_flags: <defaults>
</compile_context>

<pallas_src>
import functools

import jax
import jax.numpy as jnp
from jax import lax
from jax.experimental import pallas as pl
from jax.experimental.pallas import tpu as pltpu

EPS = 1e-5


def _choose_th(h):
    # Row-tile height: prefer 8 (th*W ~ 128 matmul rows at W=16) and >= 2 tiles
    # so the batch/row grid offers parallel work.
    for t in (8, 16, 4, 2, 1):
        if h % t == 0 and (h // t) >= 2:
            return t
    return h


def _round_up(v, m):
    return ((v + m - 1) // m) * m


# ----------------------------------------------------------------------------
# Generic grouped / dilated 3x3 conv kernel.
#   x        : (N, H, W, Cin)          bf16 NHWC
#   w        : (G, 9, Cin, Cout_g)     bf16, tap-major (k = ky*3 + kx)
#   s1,b1    : (1, G*Cout_g) f32       affine stage 1 (BN / conv-bias folded)
#   s2,b2    : (1, G*Cout_g) f32       affine stage 2
#   out      : (N, H, W, G*Cout_g)
#   sums     : (N, R, 1, G*Cout_g) f32 per-row-tile channel sums (optional)
# The zero-padded image lives in a VMEM scratch filled once per batch element
# (r == 0) and reused by all row tiles; patches are 9*G shifted VMEM windows.
# ----------------------------------------------------------------------------
def _conv3x3_kernel(x_ref, w_ref, s1_ref, b1_ref, s2_ref, b2_ref, *rest,
                    dils, rpad, cpad, hw, th, acts, with_sums):
    if with_sums:
        o_ref, sums_ref, xpad_ref = rest
    else:
        o_ref, xpad_ref = rest
        sums_ref = None
    H, W = hw
    r = pl.program_id(1)

    @pl.when(r == 0)
    def _():
        xpad_ref[...] = jnp.zeros(xpad_ref.shape, xpad_ref.dtype)
        xpad_ref[rpad:rpad + H, cpad:cpad + W, :] = x_ref[0]

    G = len(dils)
    cout_g = w_ref.shape[-1]
    row0 = r * th

    parts = []
    for g in range(G):
        d = dils[g]
        acc = jnp.zeros((th * W, cout_g), jnp.float32)
        for ky in range(3):
            ro = rpad - d + ky * d
            for kx in range(3):
                co = cpad - d + kx * d
                a = xpad_ref[pl.ds(row0 + ro, th), co:co + W, :]
                a = a.reshape(th * W, a.shape[-1])
                acc += jnp.dot(a, w_ref[g, ky * 3 + kx],
                               preferred_element_type=jnp.float32)
        parts.append(acc)
    y = parts[0] if G == 1 else jnp.concatenate(parts, axis=-1)

    y = y * s1_ref[...] + b1_ref[...]
    if acts[0] == "relu":
        y = jnp.maximum(y, 0.0)
    y = y * s2_ref[...] + b2_ref[...]
    if acts[1] == "relu":
        y = jnp.maximum(y, 0.0)

    if sums_ref is not None:
        sums_ref[...] = jnp.sum(y, axis=0, keepdims=True).reshape(1, 1, 1, -1)
    o_ref[0] = y.reshape(th, W, -1).astype(o_ref.dtype)


def conv3x3(x, w, s1, b1, s2, b2, *, dils, acts, out_dtype, with_sums=False):
    n, h, wdt, cin = x.shape
    g, _, cin_w, cout_g = w.shape
    assert cin_w == cin and g == len(dils)
    cout = g * cout_g
    rpad = max(dils)
    cpad = _round_up(rpad, 16)          # sublane-aligned interior column start
    th = _choose_th(h)
    rtiles = h // th

    kern = functools.partial(
        _conv3x3_kernel, dils=tuple(dils), rpad=rpad, cpad=cpad,
        hw=(h, wdt), th=th, acts=tuple(acts), with_sums=with_sums)

    in_specs = [
        pl.BlockSpec((1, h, wdt, cin), lambda ni, ri: (ni, 0, 0, 0)),
        pl.BlockSpec((g, 9, cin, cout_g), lambda ni, ri: (0, 0, 0, 0)),
        pl.BlockSpec((1, cout), lambda ni, ri: (0, 0)),
        pl.BlockSpec((1, cout), lambda ni, ri: (0, 0)),
        pl.BlockSpec((1, cout), lambda ni, ri: (0, 0)),
        pl.BlockSpec((1, cout), lambda ni, ri: (0, 0)),
    ]
    out_spec = pl.BlockSpec((1, th, wdt, cout), lambda ni, ri: (ni, ri, 0, 0))
    out_shape = jax.ShapeDtypeStruct((n, h, wdt, cout), out_dtype)
    if with_sums:
        out_specs = (out_spec,
                     pl.BlockSpec((1, 1, 1, cout), lambda ni, ri: (ni, ri, 0, 0)))
        out_shapes = (out_shape,
                      jax.ShapeDtypeStruct((n, rtiles, 1, cout), jnp.float32))
    else:
        out_specs = out_spec
        out_shapes = out_shape

    return pl.pallas_call(
        kern,
        grid=(n, rtiles),
        in_specs=in_specs,
        out_specs=out_specs,
        out_shape=out_shapes,
        scratch_shapes=[pltpu.VMEM((h + 2 * rpad, cpad + wdt + rpad, cin),
                                   x.dtype)],
        compiler_params=pltpu.CompilerParams(
            dimension_semantics=("parallel", "arbitrary"),
            vmem_limit_bytes=32 * 1024 * 1024),
    )(x, w, s1, b1, s2, b6 if False else b2)


# ----------------------------------------------------------------------------
# SE gates for all branches / all batch elements in one small kernel.
#   pooled : (N, 3C) f32, w1 : (3C, 3*C//16) block-diag, w2 : (3*C//16, 3C)
# ----------------------------------------------------------------------------
def _se_fc_kernel(p_ref, w1_ref, b1_ref, w2_ref, b2_ref, o_ref):
    h = jnp.dot(p_ref[...], w1_ref[...], preferred_element_type=jnp.float32)
    h = jnp.maximum(h + b1_ref[...], 0.0)
    g = jnp.dot(h, w2_ref[...], preferred_element_type=jnp.float32) + b2_ref[...]
    o_ref[...] = jax.nn.sigmoid(g)


def se_gates(pooled, w1, b1, w2, b2):
    n, c3 = pooled.shape
    h3 = w1.shape[1]
    return pl.pallas_call(
        _se_fc_kernel,
        out_shape=jax.ShapeDtypeStruct((n, c3), jnp.float32),
        grid=(1,),
        in_specs=[
            pl.BlockSpec((n, c3), lambda i: (0, 0)),
            pl.BlockSpec((c3, h3), lambda i: (0, 0)),
            pl.BlockSpec((1, h3), lambda i: (0, 0)),
            pl.BlockSpec((h3, c3), lambda i: (0, 0)),
            pl.BlockSpec((1, c3), lambda i: (0, 0)),
        ],
        out_specs=pl.BlockSpec((n, c3), lambda i: (0, 0)),
    )(pooled, w1, b1, w2, b2)


# ----------------------------------------------------------------------------
# Fused: y = relu( sum_b gate_b * o2_b + x )
# ----------------------------------------------------------------------------
def _combine_kernel(o2_ref, g_ref, x_ref, o_ref, *, nb, c):
    gated = o2_ref[0].astype(jnp.float32) * g_ref[0]        # (th, W, nb*c)
    acc = x_ref[0].astype(jnp.float32)
    for b in range(nb):
        acc = acc + gated[..., b * c:(b + 1) * c]
    o_ref[0] = jnp.maximum(acc, 0.0).astype(o_ref.dtype)


def combine(o2, gates, x, *, nb, c):
    n, h, w, _ = x.shape
    th = _choose_th(h)
    kern = functools.partial(_combine_kernel, nb=nb, c=c)
    return pl.pallas_call(
        kern,
        out_shape=jax.ShapeDtypeStruct((n, h, w, c), jnp.bfloat16),
        grid=(n, h // th),
        in_specs=[
            pl.BlockSpec((1, th, w, nb * c), lambda ni, ri: (ni, ri, 0, 0)),
            pl.BlockSpec((1, 1, nb * c), lambda ni, ri: (ni, 0, 0)),
            pl.BlockSpec((1, th, w, c), lambda ni, ri: (ni, ri, 0, 0)),
        ],
        out_specs=pl.BlockSpec((1, th, w, c), lambda ni, ri: (ni, ri, 0, 0)),
        compiler_params=pltpu.CompilerParams(
            dimension_semantics=("parallel", "arbitrary")),
    )(o2, gates, x)


# ----------------------------------------------------------------------------
# Glue: BN folding, weight packing, module composition
# ----------------------------------------------------------------------------
def bn_affine(bn, c):
    inv = bn["gamma"] / jnp.sqrt(bn["var"] + EPS)
    return inv.reshape(1, c), (bn["beta"] - bn["mean"] * inv).reshape(1, c)


def _w_taps(w_oihw):
    o, i, kh, kw = w_oihw.shape
    return jnp.transpose(w_oihw, (2, 3, 1, 0)).reshape(kh * kw, i, o)


def _block_diag(mats):
    rows = sum(m.shape[0] for m in mats)
    cols = sum(m.shape[1] for m in mats)
    out = jnp.zeros((rows, cols), mats[0].dtype)
    r = c = 0
    for m in mats:
        out = out.at[r:r + m.shape[0], c:c + m.shape[1]].set(m)
        r += m.shape[0]
        c += m.shape[1]
    return out


def _block_diag_taps(tap_list):
    return jnp.stack([_block_diag([t[k] for t in tap_list]) for k in range(9)], 0)


def atten_aspp_forward(x_nchw, params):
    x = jnp.transpose(x_nchw, (0, 2, 3, 1)).astype(jnp.float32)   # NHWC
    n, h, w, c = x.shape
    x_bf = x.astype(jnp.bfloat16)
    branches = params["branches"]
    nb = len(branches)
    rates = tuple(int(br["rate"]) for br in branches)
    ones = jnp.ones((1, nb * c), jnp.float32)
    zeros = jnp.zeros((1, nb * c), jnp.float32)

    # Fused dilated branch convs:
    #   t_b = relu(preact_bn1_b(relu(bn_b(conv_{rate_b}(x) + bias_b))))
    w_br = jnp.stack([_w_taps(br["conv_w"]) for br in branches], 0).astype(jnp.bfloat16)
    s1, b1, s2, b2 = [], [], [], []
    for br in branches:
        sc, sh = bn_affine(br["bn"], c)
        s1.append(sc)
        b1.append(br["conv_b"].reshape(1, c) * sc + sh)
        sc2, sh2 = bn_affine(br["block"]["bn1"], c)
        s2.append(sc2)
        b2.append(sh2)
    t = conv3x3(x_bf, w_br,
                jnp.concatenate(s1, 1), jnp.concatenate(b1, 1),
                jnp.concatenate(s2, 1), jnp.concatenate(b2, 1),
                dils=rates, acts=("relu", "relu"), out_dtype=jnp.bfloat16)

    # conv1 of all PreActBlocks (block-diagonal 3C -> 3C) with bn2 + relu fused.
    w1_bd = _block_diag_taps([_w_taps(br["block"]["conv1_w"]) for br in branches])
    sb, bb = [], []
    for br in branches:
        sc, sh = bn_affine(br["block"]["bn2"], c)
        sb.append(sc)
        bb.append(sh)
    o1 = conv3x3(t, w1_bd[None].astype(jnp.bfloat16),
                 jnp.concatenate(sb, 1), jnp.concatenate(bb, 1), ones, zeros,
                 dils=(1,), acts=("relu", "none"), out_dtype=jnp.bfloat16)

    # conv2 of all PreActBlocks; also emit channel sums for the SE avg-pool.
    w2_bd = _block_diag_taps([_w_taps(br["block"]["conv2_w"]) for br in branches])
    o2, sums = conv3x3(o1, w2_bd[None].astype(jnp.bfloat16),
                       ones, zeros, ones, zeros,
                       dils=(1,), acts=("none", "none"), out_dtype=jnp.bfloat16,
                       with_sums=True)
    # Like the original avg_pool2d(out, H) this is the global mean (H == W).
    pooled = jnp.sum(sums, axis=(1, 2)) * (1.0 / (h * w))          # (N, 3C)

    # SE gates for all branches in one tiny kernel (block-diagonal FCs).
    c16 = c // 16
    w1s, b1s, w2s, b2s = [], [], [], []
    for br in branches:
        blk = br["block"]
        w1s.append(blk["fc1_w"].reshape(c16, c).T)
        b1s.append(blk["fc1_b"].reshape(1, c16))
        w2s.append(blk["fc2_w"].reshape(c, c16).T)
        b2s.append(blk["fc2_b"].reshape(1, c))
    gates = se_gates(pooled, _block_diag(w1s), jnp.concatenate(b1s, 1),
                     _block_diag(w2s), jnp.concatenate(b2s, 1))    # (N, 3C)
    # NOTE: PreActBlock's shortcut branch is computed but never used by the
    # original module (it returns out * w only), so it is omitted here too.

    # y = relu( sum_b gate_b * o2_b + x ), fused in one elementwise kernel.
    y = combine(o2, gates.reshape(n, 1, nb * c), x_bf, nb=nb, c=c)

    # out_conv + BN + relu.
    cout = params["out_conv_w"].shape[0]
    sc, sh = bn_affine(params["out_bn"], cout)
    out = conv3x3(y, _w_taps(params["out_conv_w"])[None].astype(jnp.bfloat16),
                  sc, params["out_conv_b"].reshape(1, cout) * sc + sh,
                  jnp.ones((1, cout), jnp.float32),
                  jnp.zeros((1, cout), jnp.float32),
                  dils=(1,), acts=("relu", "none"), out_dtype=jnp.float32)
    return jnp.transpose(out, (0, 3, 1, 2))                        # NCHW


# ----------------------------------------------------------------------------
# Deterministic parameter initialization (BatchNorm in inference mode)
# ----------------------------------------------------------------------------
def init_params(key, c, cout, rates=(6, 12, 18)):
    keys = iter(jax.random.split(key, 128))

    def nk():
        return next(keys)

    def conv_w(o, i, k):
        return 0.1 * jax.random.normal(nk(), (o, i, k, k), jnp.float32)

    def bn_p(ch):
        return dict(
            gamma=1.0 + 0.1 * jax.random.normal(nk(), (ch,), jnp.float32),
            beta=0.1 * jax.random.normal(nk(), (ch,), jnp.float32),
            mean=0.1 * jax.random.normal(nk(), (ch,), jnp.float32),
            var=0.5 + jax.random.uniform(nk(), (ch,), jnp.float32),
        )

    c16 = c // 16
    params = {"branches": []}
    for r in rates:
        params["branches"].append(dict(
            rate=r,
            conv_w=conv_w(c, c, 3),
            conv_b=0.1 * jax.random.normal(nk(), (c,), jnp.float32),
            bn=bn_p(c),
            block=dict(
                bn1=bn_p(c),
                conv1_w=conv_w(c, c, 3),
                bn2=bn_p(c),
                conv2_w=conv_w(c, c, 3),
                fc1_w=conv_w(c16, c, 1),
                fc1_b=0.1 * jax.random.normal(nk(), (c16,), jnp.float32),
                fc2_w=conv_w(c, c16, 1),
                fc2_b=0.1 * jax.random.normal(nk(), (c,), jnp.float32),
            ),
        ))
    params["out_conv_w"] = conv_w(cout, c, 3)
    params["out_conv_b"] = 0.1 * jax.random.normal(nk(), (cout,), jnp.float32)
    params["out_bn"] = bn_p(cout)
    return params


# ----------------------------------------------------------------------------
# Pure-JAX float32 reference (for correctness check)
# ----------------------------------------------------------------------------
def ref_conv2d(x, w, b=None, padding=0, dilation=1):
    out = lax.conv_general_dilated(
        x, w, window_strides=(1, 1),
        padding=((padding, padding), (padding, padding)),
        rhs_dilation=(dilation, dilation),
        dimension_numbers=("NCHW", "OIHW", "NCHW"))
    if b is not None:
        out = out + b.reshape(1, -1, 1, 1)
    return out


def ref_bn(x, bn):
    g = bn["gamma"].reshape(1, -1, 1, 1)
    b = bn["beta"].reshape(1, -1, 1, 1)
    m = bn["mean"].reshape(1, -1, 1, 1)
    v = bn["var"].reshape(1, -1, 1, 1)
    return (x - m) / jnp.sqrt(v + EPS) * g + b


def ref_preact(x, p):
    out = jax.nn.relu(ref_bn(x, p["bn1"]))
    out = ref_conv2d(out, p["conv1_w"], padding=1)
    out = ref_conv2d(jax.nn.relu(ref_bn(out, p["bn2"])), p["conv2_w"], padding=1)
    w = jnp.mean(out, axis=(2, 3), keepdims=True)
    w = jax.nn.relu(ref_conv2d(w, p["fc1_w"], p["fc1_b"]))
    w = jax.nn.sigmoid(ref_conv2d(w, p["fc2_w"], p["fc2_b"]))
    return out * w


def ref_forward(x, params):
    res = []
    for br in params["branches"]:
        y = ref_conv2d(x, br["conv_w"], br["conv_b"],
                       padding=br["rate"], dilation=br["rate"])
        y = jax.nn.relu(ref_bn(y, br["bn"]))
        res.append(ref_preact(y, br["block"]))
    y = jax.nn.relu(res[0] + res[1] + res[2] + x)
    out = ref_conv2d(y, params["out_conv_w"], params["out_conv_b"], padding=1)
    return jax.nn.relu(ref_bn(out, params["out_bn"]))


# ----------------------------------------------------------------------------
if __name__ == "__main__":
    key = jax.random.PRNGKey(0)
    kx, kp = jax.random.split(key)

    # in_channels must be >= 16 (PreActBlock uses planes // 16 for its SE fc1)
    N, C, H, W = 2, 32, 16, 16
    COUT = 32

    x = jax.random.normal(kx, (N, C, H, W), jnp.float32)
    params = init_params(kp, C, COUT, rates=(6, 12, 18))

    out = jax.block_until_ready(atten_aspp_forward(x, params))
    ref = jax.block_until_ready(ref_forward(x, params))

    assert out.shape == (N, COUT, H, W), out.shape
    assert bool(jnp.all(jnp.isfinite(out)))
    # bf16 matmul inputs with f32 accumulation: check normalized max error.
    err = float(jnp.max(jnp.abs(out - ref)) / (jnp.max(jnp.abs(ref)) + 1e-6))
    assert err < 5e-2, err

    print("KERNEL_OK")
</pallas_src>

<mosaic_0001>
module attributes {stable_mosaic.version = 11 : i64} {
  func.func @_conv3x3_kernel(%arg0: i32, %arg1: i32, %arg2: memref<1x16x16x32xbf16, #tpu.memory_space<vmem>>, %arg3: memref<3x9x32x32xbf16, #tpu.memory_space<vmem>>, %arg4: memref<1x96xf32, #tpu.memory_space<vmem>>, %arg5: memref<1x96xf32, #tpu.memory_space<vmem>>, %arg6: memref<1x96xf32, #tpu.memory_space<vmem>>, %arg7: memref<1x96xf32, #tpu.memory_space<vmem>>, %arg8: memref<1x8x16x96xbf16, #tpu.memory_space<vmem>>, %arg9: memref<52x66x32xbf16, #tpu.memory_space<vmem>>) attributes {dimension_semantics = [#tpu.dimension_semantics<parallel>, #tpu.dimension_semantics<arbitrary>], iteration_bounds = array<i64: 2, 2>, scalar_prefetch = 0 : i64, scratch_operands = 1 : i64, tpu.core_type = #tpu.core_type<tc>, window_params = [{transform_indices = @transform_0, window_bounds = array<i64: 1, 16, 16, 32>}, {pipeline_mode = #tpu.pipeline_mode<synchronous>, transform_indices = @transform_1, window_bounds = array<i64: 3, 9, 32, 32>}, {pipeline_mode = #tpu.pipeline_mode<synchronous>, transform_indices = @transform_2, window_bounds = array<i64: 1, 96>}, {pipeline_mode = #tpu.pipeline_mode<synchronous>, transform_indices = @transform_3, window_bounds = array<i64: 1, 96>}, {pipeline_mode = #tpu.pipeline_mode<synchronous>, transform_indices = @transform_4, window_bounds = array<i64: 1, 96>}, {pipeline_mode = #tpu.pipeline_mode<synchronous>, transform_indices = @transform_5, window_bounds = array<i64: 1, 96>}, {transform_indices = @transform_6, window_bounds = array<i64: 1, 8, 16, 96>}]} {
    %c0_i32 = arith.constant 0 : i32
    %0 = arith.cmpi eq, %arg1, %c0_i32 : i32
    %1 = arith.extui %0 : i1 to i32
    %c0_i32_0 = arith.constant 0 : i32
    %2 = arith.cmpi ne, %1, %c0_i32_0 : i32
    scf.if %2 {
      %cst_211 = arith.constant 0.000000e+00 : bf16
      %245 = vector.broadcast %cst_211 : bf16 to vector<52x66x32xbf16>
      %c0_212 = arith.constant 0 : index
      %c0_213 = arith.constant 0 : index
      %c0_214 = arith.constant 0 : index
      %246 = vector.load %arg9[%c0_212, %c0_213, %c0_214] : memref<52x66x32xbf16, #tpu.memory_space<vmem>>, vector<52x66x32xbf16>
      tpu.vector_store %arg9[%c0_212, %c0_213, %c0_214], %245 {strides = array<i32>} : memref<52x66x32xbf16, #tpu.memory_space<vmem>>, vector<52x66x32xbf16>,
      %c0_215 = arith.constant 0 : index
      %c0_216 = arith.constant 0 : index
      %c0_217 = arith.constant 0 : index
      %c0_218 = arith.constant 0 : index
      %247 = vector.load %arg2[%c0_215, %c0_216, %c0_217, %c0_218] : memref<1x16x16x32xbf16, #tpu.memory_space<vmem>>, vector<1x16x16x32xbf16>
      %248 = vector.shape_cast %247 : vector<1x16x16x32xbf16> to vector<16x16x32xbf16>
      %c18 = arith.constant 18 : index
      %c32_219 = arith.constant 32 : index
      %c0_220 = arith.constant 0 : index
      %249 = vector.load %arg9[%c18, %c32_219, %c0_220] : memref<52x66x32xbf16, #tpu.memory_space<vmem>>, vector<16x16x32xbf16>
      tpu.vector_store %arg9[%c18, %c32_219, %c0_220], %248 {strides = array<i32>} : memref<52x66x32xbf16, #tpu.memory_space<vmem>>, vector<16x16x32xbf16>,
    } else {
    }
    %c8_i32 = arith.constant 8 : i32
    %3 = arith.muli %arg1, %c8_i32 : i32
    %cst = arith.constant 0.000000e+00 : f32
    %4 = vector.broadcast %cst : f32 to vector<128x32xf32>
    %c12_i32 = arith.constant 12 : i32
    %5 = arith.addi %3, %c12_i32 : i32
    %6 = arith.index_cast %5 : i32 to index
    %c26 = arith.constant 26 : index
    %c0 = arith.constant 0 : index
    %7 = vector.load %arg9[%6, %c26, %c0] : memref<52x66x32xbf16, #tpu.memory_space<vmem>>, vector<8x16x32xbf16>
    %8 = vector.shape_cast %7 : vector<8x16x32xbf16> to vector<128x32xbf16>
    %c0_1 = arith.constant 0 : index
    %c0_2 = arith.constant 0 : index
    %c0_3 = arith.constant 0 : index
    %c0_4 = arith.constant 0 : index
    %9 = vector.load %arg3[%c0_1, %c0_2, %c0_3, %c0_4] : memref<3x9x32x32xbf16, #tpu.memory_space<vmem>>, vector<1x1x32x32xbf16>
    %10 = vector.shape_cast %9 : vector<1x1x32x32xbf16> to vector<32x32xbf16>
    %cst_5 = arith.constant dense<0.000000e+00> : vector<128x32xf32>
    %11 = tpu.matmul %8, %10, %cst_5 {dimension_numbers = #tpu.dot_dimension_numbers<[1], [0], [0], [1], [0, 0, 1, 1], [], []>} : vector<128x32xbf16>, vector<32x32xbf16>, vector<128x32xf32> -> vector<128x32xf32>
    %12 = arith.addf %4, %11 : vector<128x32xf32>
    %c12_i32_6 = arith.constant 12 : i32
    %13 = arith.addi %3, %c12_i32_6 : i32
    %14 = arith.index_cast %13 : i32 to index
    %c32 = arith.constant 32 : index
    %c0_7 = arith.constant 0 : index
    %15 = vector.load %arg9[%14, %c32, %c0_7] : memref<52x66x32xbf16, #tpu.memory_space<vmem>>, vector<8x16x32xbf16>
    %16 = vector.shape_cast %15 : vector<8x16x32xbf16> to vector<128x32xbf16>
    %c0_8 = arith.constant 0 : index
    %c1 = arith.constant 1 : index
    %c0_9 = arith.constant 0 : index
    %c0_10 = arith.constant 0 : index
    %17 = vector.load %arg3[%c0_8, %c1, %c0_9, %c0_10] : memref<3x9x32x32xbf16, #tpu.memory_space<vmem>>, vector<1x1x32x32xbf16>
    %18 = vector.shape_cast %17 : vector<1x1x32x32xbf16> to vector<32x32xbf16>
    %cst_11 = arith.constant dense<0.000000e+00> : vector<128x32xf32>
    %19 = tpu.matmul %16, %18, %cst_11 {dimension_numbers = #tpu.dot_dimension_numbers<[1], [0], [0], [1], [0, 0, 1, 1], [], []>} : vector<128x32xbf16>, vector<32x32xbf16>, vector<128x32xf32> -> vector<128x32xf32>
    %20 = arith.addf %12, %19 : vector<128x32xf32>
    %c12_i32_12 = arith.constant 12 : i32
    %21 = arith.addi %3, %c12_i32_12 : i32
    %22 = arith.index_cast %21 : i32 to index
    %c38 = arith.constant 38 : index
    %c0_13 = arith.constant 0 : index
    %23 = vector.load %arg9[%22, %c38, %c0_13] : memref<52x66x32xbf16, #tpu.memory_space<vmem>>, vector<8x16x32xbf16>
    %24 = vector.shape_cast %23 : vector<8x16x32xbf16> to vector<128x32xbf16>
    %c0_14 = arith.constant 0 : index
    %c2 = arith.constant 2 : index
    %c0_15 = arith.constant 0 : index
    %c0_16 = arith.constant 0 : index
    %25 = vector.load %arg3[%c0_14, %c2, %c0_15, %c0_16] : memref<3x9x32x32xbf16, #tpu.memory_space<vmem>>, vector<1x1x32x32xbf16>
    %26 = vector.shape_cast %25 : vector<1x1x32x32xbf16> to vector<32x32xbf16>
    %cst_17 = arith.constant dense<0.000000e+00> : vector<128x32xf32>
    %27 = tpu.matmul %24, %26, %cst_17 {dimension_numbers = #tpu.dot_dimension_numbers<[1], [0], [0], [1], [0, 0, 1, 1], [], []>} : vector<128x32xbf16>, vector<32x32xbf16>, vector<128x32xf32> -> vector<128x32xf32>
    %28 = arith.addf %20, %27 : vector<128x32xf32>
    %c18_i32 = arith.constant 18 : i32
    %29 = arith.addi %3, %c18_i32 : i32
    %30 = arith.index_cast %29 : i32 to index
    %c26_18 = arith.constant 26 : index
    %c0_19 = arith.constant 0 : index
    %31 = vector.load %arg9[%30, %c26_18, %c0_19] : memref<52x66x32xbf16, #tpu.memory_space<vmem>>, vector<8x16x32xbf16>
    %32 = vector.shape_cast %31 : vector<8x16x32xbf16> to vector<128x32xbf16>
    %c0_20 = arith.constant 0 : index
    %c3 = arith.constant 3 : index
    %c0_21 = arith.constant 0 : index
    %c0_22 = arith.constant 0 : index
    %33 = vector.load %arg3[%c0_20, %c3, %c0_21, %c0_22] : memref<3x9x32x32xbf16, #tpu.memory_space<vmem>>, vector<1x1x32x32xbf16>
    %34 = vector.shape_cast %33 : vector<1x1x32x32xbf16> to vector<32x32xbf16>
    %cst_23 = arith.constant dense<0.000000e+00> : vector<128x32xf32>
    %35 = tpu.matmul %32, %34, %cst_23 {dimension_numbers = #tpu.dot_dimension_numbers<[1], [0], [0], [1], [0, 0, 1, 1], [], []>} : vector<128x32xbf16>, vector<32x32xbf16>, vector<128x32xf32> -> vector<128x32xf32>
    %36 = arith.addf %28, %35 : vector<128x32xf32>
    %c18_i32_24 = arith.constant 18 : i32
    %37 = arith.addi %3, %c18_i32_24 : i32
    %38 = arith.index_cast %37 : i32 to index
    %c32_25 = arith.constant 32 : index
    %c0_26 = arith.constant 0 : index
    %39 = vector.load %arg9[%38, %c32_25, %c0_26] : memref<52x66x32xbf16, #tpu.memory_space<vmem>>, vector<8x16x32xbf16>
    %40 = vector.shape_cast %39 : vector<8x16x32xbf16> to vector<128x32xbf16>
    %c0_27 = arith.constant 0 : index
    %c4 = arith.constant 4 : index
    %c0_28 = arith.constant 0 : index
    %c0_29 = arith.constant 0 : index
    %41 = vector.load %arg3[%c0_27, %c4, %c0_28, %c0_29] : memref<3x9x32x32xbf16, #tpu.memory_space<vmem>>, vector<1x1x32x32xbf16>
    %42 = vector.shape_cast %41 : vector<1x1x32x32xbf16> to vector<32x32xbf16>
    %cst_30 = arith.constant dense<0.000000e+00> : vector<128x32xf32>
    %43 = tpu.matmul %40, %42, %cst_30 {dimension_numbers = #tpu.dot_dimension_numbers<[1], [0], [0], [1], [0, 0, 1, 1], [], []>} : vector<128x32xbf16>, vector<32x32xbf16>, vector<128x32xf32> -> vector<128x32xf32>
    %44 = arith.addf %36, %43 : vector<128x32xf32>
    %c18_i32_31 = arith.constant 18 : i32
    %45 = arith.addi %3, %c18_i32_31 : i32
    %46 = arith.index_cast %45 : i32 to index
    %c38_32 = arith.constant 38 : index
    %c0_33 = arith.constant 0 : index
    %47 = vector.load %arg9[%46, %c38_32, %c0_33] : memref<52x66x32xbf16, #tpu.memory_space<vmem>>, vector<8x16x32xbf16>
    %48 = vector.shape_cast %47 : vector<8x16x32xbf16> to vector<128x32xbf16>
    %c0_34 = arith.constant 0 : index
    %c5 = arith.constant 5 : index
    %c0_35 = arith.constant 0 : index
    %c0_36 = arith.constant 0 : index
    %49 = vector.load %arg3[%c0_34, %c5, %c0_35, %c0_36] : memref<3x9x32x32xbf16, #tpu.memory_space<vmem>>, vector<1x1x32x32xbf16>
    %50 = vector.shape_cast %49 : vector<1x1x32x32xbf16> to vector<32x32xbf16>
    %cst_37 = arith.constant dense<0.000000e+00> : vector<128x32xf32>
    %51 = tpu.matmul %48, %50, %cst_37 {dimension_numbers = #tpu.dot_dimension_numbers<[1], [0], [0], [1], [0, 0, 1, 1], [], []>} : vector<128x32xbf16>, vector<32x32xbf16>, vector<128x32xf32> -> vector<128x32xf32>
    %52 = arith.addf %44, %51 : vector<128x32xf32>
    %c24_i32 = arith.constant 24 : i32
    %53 = arith.addi %3, %c24_i32 : i32
    %54 = arith.index_cast %53 : i32 to index
    %c26_38 = arith.constant 26 : index
    %c0_39 = arith.constant 0 : index
    %55 = vector.load %arg9[%54, %c26_38, %c0_39] : memref<52x66x32xbf16, #tpu.memory_space<vmem>>, vector<8x16x32xbf16>
    %56 = vector.shape_cast %55 : vector<8x16x32xbf16> to vector<128x32xbf16>
    %c0_40 = arith.constant 0 : index
    %c6 = arith.constant 6 : index
    %c0_41 = arith.constant 0 : index
    %c0_42 = arith.constant 0 : index
    %57 = vector.load %arg3[%c0_40, %c6, %c0_41, %c0_42] : memref<3x9x32x32xbf16, #tpu.memory_space<vmem>>, vector<1x1x32x32xbf16>
    %58 = vector.shape_cast %57 : vector<1x1x32x32xbf16> to vector<32x32xbf16>
    %cst_43 = arith.constant dense<0.000000e+00> : vector<128x32xf32>
    %59 = tpu.matmul %56, %58, %cst_43 {dimension_numbers = #tpu.dot_dimension_numbers<[1], [0], [0], [1], [0, 0, 1, 1], [], []>} : vector<128x32xbf16>, vector<32x32xbf16>, vector<128x32xf32> -> vector<128x32xf32>
    %60 = arith.addf %52, %59 : vector<128x32xf32>
    %c24_i32_44 = arith.constant 24 : i32
    %61 = arith.addi %3, %c24_i32_44 : i32
    %62 = arith.index_cast %61 : i32 to index
    %c32_45 = arith.constant 32 : index
    %c0_46 = arith.constant 0 : index
    %63 = vector.load %arg9[%62, %c32_45, %c0_46] : memref<52x66x32xbf16, #tpu.memory_space<vmem>>, vector<8x16x32xbf16>
    %64 = vector.shape_cast %63 : vector<8x16x32xbf16> to vector<128x32xbf16>
    %c0_47 = arith.constant 0 : index
    %c7 = arith.constant 7 : index
    %c0_48 = arith.constant 0 : index
    %c0_49 = arith.constant 0 : index
    %65 = vector.load %arg3[%c0_47, %c7, %c0_48, %c0_49] : memref<3x9x32x32xbf16, #tpu.memory_space<vmem>>, vector<1x1x32x32xbf16>
    %66 = vector.shape_cast %65 : vector<1x1x32x32xbf16> to vector<32x32xbf16>
    %cst_50 = arith.constant dense<0.000000e+00> : vector<128x32xf32>
    %67 = tpu.matmul %64, %66, %cst_50 {dimension_numbers = #tpu.dot_dimension_numbers<[1], [0], [0], [1], [0, 0, 1, 1], [], []>} : vector<128x32xbf16>, vector<32x32xbf16>, vector<128x32xf32> -> vector<128x32xf32>
    %68 = arith.addf %60, %67 : vector<128x32xf32>
    %c24_i32_51 = arith.constant 24 : i32
    %69 = arith.addi %3, %c24_i32_51 : i32
    %70 = arith.index_cast %69 : i32 to index
    %c38_52 = arith.constant 38 : index
    %c0_53 = arith.constant 0 : index
    %71 = vector.load %arg9[%70, %c38_52, %c0_53] : memref<52x66x32xbf16, #tpu.memory_space<vmem>>, vector<8x16x32xbf16>
    %72 = vector.shape_cast %71 : vector<8x16x32xbf16> to vector<128x32xbf16>
    %c0_54 = arith.constant 0 : index
    %c8 = arith.constant 8 : index
    %c0_55 = arith.constant 0 : index
    %c0_56 = arith.constant 0 : index
    %73 = vector.load %arg3[%c0_54, %c8, %c0_55, %c0_56] : memref<3x9x32x32xbf16, #tpu.memory_space<vmem>>, vector<1x1x32x32xbf16>
    %74 = vector.shape_cast %73 : vector<1x1x32x32xbf16> to vector<32x32xbf16>
    %cst_57 = arith.constant dense<0.000000e+00> : vector<128x32xf32>
    %75 = tpu.matmul %72, %74, %cst_57 {dimension_numbers = #tpu.dot_dimension_numbers<[1], [0], [0], [1], [0, 0, 1, 1], [], []>} : vector<128x32xbf16>, vector<32x32xbf16>, vector<128x32xf32> -> vector<128x32xf32>
    %76 = arith.addf %68, %75 : vector<128x32xf32>
    %cst_58 = arith.constant 0.000000e+00 : f32
    %77 = vector.broadcast %cst_58 : f32 to vector<128x32xf32>
    %c6_i32 = arith.constant 6 : i32
    %78 = arith.addi %3, %c6_i32 : i32
    %79 = arith.index_cast %78 : i32 to index
    %c20 = arith.constant 20 : index
    %c0_59 = arith.constant 0 : index
    %80 = vector.load %arg9[%79, %c20, %c0_59] : memref<52x66x32xbf16, #tpu.memory_space<vmem>>, vector<8x16x32xbf16>
    %81 = vector.shape_cast %80 : vector<8x16x32xbf16> to vector<128x32xbf16>
    %c1_60 = arith.constant 1 : index
    %c0_61 = arith.constant 0 : index
    %c0_62 = arith.constant 0 : index
    %c0_63 = arith.constant 0 : index
    %82 = vector.load %arg3[%c1_60, %c0_61, %c0_62, %c0_63] : memref<3x9x32x32xbf16, #tpu.memory_space<vmem>>, vector<1x1x32x32xbf16>
    %83 = vector.shape_cast %82 : vector<1x1x32x32xbf16> to vector<32x32xbf16>
    %cst_64 = arith.constant dense<0.000000e+00> : vector<128x32xf32>
    %84 = tpu.matmul %81, %83, %cst_64 {dimension_numbers = #tpu.dot_dimension_numbers<[1], [0], [0], [1], [0, 0, 1, 1], [], []>} : vector<128x32xbf16>, vector<32x32xbf16>, vector<128x32xf32> -> vector<128x32xf32>
    %85 = arith.addf %77, %84 : vector<128x32xf32>
    %c6_i32_65 = arith.constant 6 : i32
    %86 = arith.addi %3, %c6_i32_65 : i32
    %87 = arith.index_cast %86 : i32 to index
    %c32_66 = arith.constant 32 : index
    %c0_67 = arith.constant 0 : index
    %88 = vector.load %arg9[%87, %c32_66, %c0_67] : memref<52x66x32xbf16, #tpu.memory_space<vmem>>, vector<8x16x32xbf16>
    %89 = vector.shape_cast %88 : vector<8x16x32xbf16> to vector<128x32xbf16>
    %c1_68 = arith.constant 1 : index
    %c1_69 = arith.constant 1 : index
    %c0_70 = arith.constant 0 : index
    %c0_71 = arith.constant 0 : index
    %90 = vector.load %arg3[%c1_68, %c1_69, %c0_70, %c0_71] : memref<3x9x32x32xbf16, #tpu.memory_space<vmem>>, vector<1x1x32x32xbf16>
    %91 = vector.shape_cast %90 : vector<1x1x32x32xbf16> to vector<32x32xbf16>
    %cst_72 = arith.constant dense<0.000000e+00> : vector<128x32xf32>
    %92 = tpu.matmul %89, %91, %cst_72 {dimension_numbers = #tpu.dot_dimension_numbers<[1], [0], [0], [1], [0, 0, 1, 1], [], []>} : vector<128x32xbf16>, vector<32x32xbf16>, vector<128x32xf32> -> vector<128x32xf32>
    %93 = arith.addf %85, %92 : vector<128x32xf32>
    %c6_i32_73 = arith.constant 6 : i32
    %94 = arith.addi %3, %c6_i32_73 : i32
    %95 = arith.index_cast %94 : i32 to index
    %c44 = arith.constant 44 : index
    %c0_74 = arith.constant 0 : index
    %96 = vector.load %arg9[%95, %c44, %c0_74] : memref<52x66x32xbf16, #tpu.memory_space<vmem>>, vector<8x16x32xbf16>
    %97 = vector.shape_cast %96 : vector<8x16x32xbf16> to vector<128x32xbf16>
    %c1_75 = arith.constant 1 : index
    %c2_76 = arith.constant 2 : index
    %c0_77 = arith.constant 0 : index
    %c0_78 = arith.constant 0 : index
    %98 = vector.load %arg3[%c1_75, %c2_76, %c0_77, %c0_78] : memref<3x9x32x32xbf16, #tpu.memory_space<vmem>>, vector<1x1x32x32xbf16>
    %99 = vector.shape_cast %98 : vector<1x1x32x32xbf16> to vector<32x32xbf16>
    %cst_79 = arith.constant dense<0.000000e+00> : vector<128x32xf32>
    %100 = tpu.matmul %97, %99, %cst_79 {dimension_numbers = #tpu.dot_dimension_numbers<[1], [0], [0], [1], [0, 0, 1, 1], [], []>} : vector<128x32xbf16>, vector<32x32xbf16>, vector<128x32xf32> -> vector<128x32xf32>
    %101 = arith.addf %93, %100 : vector<128x32xf32>
    %c18_i32_80 = arith.constant 18 : i32
    %102 = arith.addi %3, %c18_i32_80 : i32
    %103 = arith.index_cast %102 : i32 to index
    %c20_81 = arith.constant 20 : index
    %c0_82 = arith.constant 0 : index
    %104 = vector.load %arg9[%103, %c20_81, %c0_82] : memref<52x66x32xbf16, #tpu.memory_space<vmem>>, vector<8x16x32xbf16>
    %105 = vector.shape_cast %104 : vector<8x16x32xbf16> to vector<128x32xbf16>
    %c1_83 = arith.constant 1 : index
    %c3_84 = arith.constant 3 : index
    %c0_85 = arith.constant 0 : index
    %c0_86 = arith.constant 0 : index
    %106 = vector.load %arg3[%c1_83, %c3_84, %c0_85, %c0_86] : memref<3x9x32x32xbf16, #tpu.memory_space<vmem>>, vector<1x1x32x32xbf16>
    %107 = vector.shape_cast %106 : vector<1x1x32x32xbf16> to vector<32x32xbf16>
    %cst_87 = arith.constant dense<0.000000e+00> : vector<128x32xf32>
    %108 = tpu.matmul %105, %107, %cst_87 {dimension_numbers = #tpu.dot_dimension_numbers<[1], [0], [0], [1], [0, 0, 1, 1], [], []>} : vector<128x32xbf16>, vector<32x32xbf16>, vector<128x32xf32> -> vector<128x32xf32>
    %109 = arith.addf %101, %108 : vector<128x32xf32>
    %c18_i32_88 = arith.constant 18 : i32
    %110 = arith.addi %3, %c18_i32_88 : i32
    %111 = arith.index_cast %110 : i32 to index
    %c32_89 = arith.constant 32 : index
    %c0_90 = arith.constant 0 : index
    %112 = vector.load %arg9[%111, %c32_89, %c0_90] : memref<52x66x32xbf16, #tpu.memory_space<vmem>>, vector<8x16x32xbf16>
    %113 = vector.shape_cast %112 : vector<8x16x32xbf16> to vector<128x32xbf16>
    %c1_91 = arith.constant 1 : index
    %c4_92 = arith.constant 4 : index
    %c0_93 = arith.constant 0 : index
    %c0_94 = arith.constant 0 : index
    %114 = vector.load %arg3[%c1_91, %c4_92, %c0_93, %c0_94] : memref<3x9x32x32xbf16, #tpu.memory_space<vmem>>, vector<1x1x32x32xbf16>
    %115 = vector.shape_cast %114 : vector<1x1x32x32xbf16> to vector<32x32xbf16>
    %cst_95 = arith.constant dense<0.000000e+00> : vector<128x32xf32>
    %116 = tpu.matmul %113, %115, %cst_95 {dimension_numbers = #tpu.dot_dimension_numbers<[1], [0], [0], [1], [0, 0, 1, 1], [], []>} : vector<128x32xbf16>, vector<32x32xbf16>, vector<128x32xf32> -> vector<128x32xf32>
    %117 = arith.addf %109, %116 : vector<128x32xf32>
    %c18_i32_96 = arith.constant 18 : i32
    %118 = arith.addi %3, %c18_i32_96 : i32
    %119 = arith.index_cast %118 : i32 to index
    %c44_97 = arith.constant 44 : index
    %c0_98 = arith.constant 0 : index
    %120 = vector.load %arg9[%119, %c44_97, %c0_98] : memref<52x66x32xbf16, #tpu.memory_space<vmem>>, vector<8x16x32xbf16>
    %121 = vector.shape_cast %120 : vector<8x16x32xbf16> to vector<128x32xbf16>
    %c1_99 = arith.constant 1 : index
    %c5_100 = arith.constant 5 : index
    %c0_101 = arith.constant 0 : index
    %c0_102 = arith.constant 0 : index
    %122 = vector.load %arg3[%c1_99, %c5_100, %c0_101, %c0_102] : memref<3x9x32x32xbf16, #tpu.memory_space<vmem>>, vector<1x1x32x32xbf16>
    %123 = vector.shape_cast %122 : vector<1x1x32x32xbf16> to vector<32x32xbf16>
    %cst_103 = arith.constant dense<0.000000e+00> : vector<128x32xf32>
    %124 = tpu.matmul %121, %123, %cst_103 {dimension_numbers = #tpu.dot_dimension_numbers<[1], [0], [0], [1], [0, 0, 1, 1], [], []>} : vector<128x32xbf16>, vector<32x32xbf16>, vector<128x32xf32> -> vector<128x32xf32>
    %125 = arith.addf %117, %124 : vector<128x32xf32>
    %c30_i32 = arith.constant 30 : i32
    %126 = arith.addi %3, %c30_i32 : i32
    %127 = arith.index_cast %126 : i32 to index
    %c20_104 = arith.constant 20 : index
    %c0_105 = arith.constant 0 : index
    %128 = vector.load %arg9[%127, %c20_104, %c0_105] : memref<52x66x32xbf16, #tpu.memory_space<vmem>>, vector<8x16x32xbf16>
    %129 = vector.shape_cast %128 : vector<8x16x32xbf16> to vector<128x32xbf16>
    %c1_106 = arith.constant 1 : index
    %c6_107 = arith.constant 6 : index
    %c0_108 = arith.constant 0 : index
    %c0_109 = arith.constant 0 : index
    %130 = vector.load %arg3[%c1_106, %c6_107, %c0_108, %c0_109] : memref<3x9x32x32xbf16, #tpu.memory_space<vmem>>, vector<1x1x32x32xbf16>
    %131 = vector.shape_cast %130 : vector<1x1x32x32xbf16> to vector<32x32xbf16>
    %cst_110 = arith.constant dense<0.000000e+00> : vector<128x32xf32>
    %132 = tpu.matmul %129, %131, %cst_110 {dimension_numbers = #tpu.dot_dimension_numbers<[1], [0], [0], [1], [0, 0, 1, 1], [], []>} : vector<128x32xbf16>, vector<32x32xbf16>, vector<128x32xf32> -> vector<128x32xf32>
    %133 = arith.addf %125, %132 : vector<128x32xf32>
    %c30_i32_111 = arith.constant 30 : i32
    %134 = arith.addi %3, %c30_i32_111 : i32
    %135 = arith.index_cast %134 : i32 to index
    %c32_112 = arith.constant 32 : index
    %c0_113 = arith.constant 0 : index
    %136 = vector.load %arg9[%135, %c32_112, %c0_113] : memref<52x66x32xbf16, #tpu.memory_space<vmem>>, vector<8x16x32xbf16>
    %137 = vector.shape_cast %136 : vector<8x16x32xbf16> to vector<128x32xbf16>
    %c1_114 = arith.constant 1 : index
    %c7_115 = arith.constant 7 : index
    %c0_116 = arith.constant 0 : index
    %c0_117 = arith.constant 0 : index
    %138 = vector.load %arg3[%c1_114, %c7_115, %c0_116, %c0_117] : memref<3x9x32x32xbf16, #tpu.memory_space<vmem>>, vector<1x1x32x32xbf16>
    %139 = vector.shape_cast %138 : vector<1x1x32x32xbf16> to vector<32x32xbf16>
    %cst_118 = arith.constant dense<0.000000e+00> : vector<128x32xf32>
    %140 = tpu.matmul %137, %139, %cst_118 {dimension_numbers = #tpu.dot_dimension_numbers<[1], [0], [0], [1], [0, 0, 1, 1], [], []>} : vector<128x32xbf16>, vector<32x32xbf16>, vector<128x32xf32> -> vector<128x32xf32>
    %141 = arith.addf %133, %140 : vector<128x32xf32>
    %c30_i32_119 = arith.constant 30 : i32
    %142 = arith.addi %3, %c30_i32_119 : i32
    %143 = arith.index_cast %142 : i32 to index
    %c44_120 = arith.constant 44 : index
    %c0_121 = arith.constant 0 : index
    %144 = vector.load %arg9[%143, %c44_120, %c0_121] : memref<52x66x32xbf16, #tpu.memory_space<vmem>>, vector<8x16x32xbf16>
    %145 = vector.shape_cast %144 : vector<8x16x32xbf16> to vector<128x32xbf16>
    %c1_122 = arith.constant 1 : index
    %c8_123 = arith.constant 8 : index
    %c0_124 = arith.constant 0 : index
    %c0_125 = arith.constant 0 : index
    %146 = vector.load %arg3[%c1_122, %c8_123, %c0_124, %c0_125] : memref<3x9x32x32xbf16, #tpu.memory_space<vmem>>, vector<1x1x32x32xbf16>
    %147 = vector.shape_cast %146 : vector<1x1x32x32xbf16> to vector<32x32xbf16>
    %cst_126 = arith.constant dense<0.000000e+00> : vector<128x32xf32>
    %148 = tpu.matmul %145, %147, %cst_126 {dimension_numbers = #tpu.dot_dimension_numbers<[1], [0], [0], [1], [0, 0, 1, 1], [], []>} : vector<128x32xbf16>, vector<32x32xbf16>, vector<128x32xf32> -> vector<128x32xf32>
    %149 = arith.addf %141, %148 : vector<128x32xf32>
    %cst_127 = arith.constant 0.000000e+00 : f32
    %150 = vector.broadcast %cst_127 : f32 to vector<128x32xf32>
    %c0_i32_128 = arith.constant 0 : i32
    %151 = arith.addi %3, %c0_i32_128 : i32
    %152 = arith.index_cast %151 : i32 to index
    %c14 = arith.constant 14 : index
    %c0_129 = arith.constant 0 : index
    %153 = vector.load %arg9[%152, %c14, %c0_129] : memref<52x66x32xbf16, #tpu.memory_space<vmem>>, vector<8x16x32xbf16>
    %154 = vector.shape_cast %153 : vector<8x16x32xbf16> to vector<128x32xbf16>
    %c2_130 = arith.constant 2 : index
    %c0_131 = arith.constant 0 : index
    %c0_132 = arith.constant 0 : index
    %c0_133 = arith.constant 0 : index
    %155 = vector.load %arg3[%c2_130, %c0_131, %c0_132, %c0_133] : memref<3x9x32x32xbf16, #tpu.memory_space<vmem>>, vector<1x1x32x32xbf16>
    %156 = vector.shape_cast %155 : vector<1x1x32x32xbf16> to vector<32x32xbf16>
    %cst_134 = arith.constant dense<0.000000e+00> : vector<128x32xf32>
    %157 = tpu.matmul %154, %156, %cst_134 {dimension_numbers = #tpu.dot_dimension_numbers<[1], [0], [0], [1], [0, 0, 1, 1], [], []>} : vector<128x32xbf16>, vector<32x32xbf16>, vector<128x32xf32> -> vector<128x32xf32>
    %158 = arith.addf %150, %157 : vector<128x32xf32>
    %c0_i32_135 = arith.constant 0 : i32
    %159 = arith.addi %3, %c0_i32_135 : i32
    %160 = arith.index_cast %159 : i32 to index
    %c32_136 = arith.constant 32 : index
    %c0_137 = arith.constant 0 : index
    %161 = vector.load %arg9[%160, %c32_136, %c0_137] : memref<52x66x32xbf16, #tpu.memory_space<vmem>>, vector<8x16x32xbf16>
    %162 = vector.shape_cast %161 : vector<8x16x32xbf16> to vector<128x32xbf16>
    %c2_138 = arith.constant 2 : index
    %c1_139 = arith.constant 1 : index
    %c0_140 = arith.constant 0 : index
    %c0_141 = arith.constant 0 : index
    %163 = vector.load %arg3[%c2_138, %c1_139, %c0_140, %c0_141] : memref<3x9x32x32xbf16, #tpu.memory_space<vmem>>, vector<1x1x32x32xbf16>
    %164 = vector.shape_cast %163 : vector<1x1x32x32xbf16> to vector<32x32xbf16>
    %cst_142 = arith.constant dense<0.000000e+00> : vector<128x32xf32>
    %165 = tpu.matmul %162, %164, %cst_142 {dimension_numbers = #tpu.dot_dimension_numbers<[1], [0], [0], [1], [0, 0, 1, 1], [], []>} : vector<128x32xbf16>, vector<32x32xbf16>, vector<128x32xf32> -> vector<128x32xf32>
    %166 = arith.addf %158, %165 : vector<128x32xf32>
    %c0_i32_143 = arith.constant 0 : i32
    %167 = arith.addi %3, %c0_i32_143 : i32
    %168 = arith.index_cast %167 : i32 to index
    %c50 = arith.constant 50 : index
    %c0_144 = arith.constant 0 : index
    %169 = vector.load %arg9[%168, %c50, %c0_144] : memref<52x66x32xbf16, #tpu.memory_space<vmem>>, vector<8x16x32xbf16>
    %170 = vector.shape_cast %169 : vector<8x16x32xbf16> to vector<128x32xbf16>
    %c2_145 = arith.constant 2 : index
    %c2_146 = arith.constant 2 : index
    %c0_147 = arith.constant 0 : index
    %c0_148 = arith.constant 0 : index
    %171 = vector.load %arg3[%c2_145, %c2_146, %c0_147, %c0_148] : memref<3x9x32x32xbf16, #tpu.memory_space<vmem>>, vector<1x1x32x32xbf16>
    %172 = vector.shape_cast %171 : vector<1x1x32x32xbf16> to vector<32x32xbf16>
    %cst_149 = arith.constant dense<0.000000e+00> : vector<128x32xf32>
    %173 = tpu.matmul %170, %172, %cst_149 {dimension_numbers = #tpu.dot_dimension_numbers<[1], [0], [0], [1], [0, 0, 1, 1], [], []>} : vector<128x32xbf16>, vector<32x32xbf16>, vector<128x32xf32> -> vector<128x32xf32>
    %174 = arith.addf %166, %173 : vector<128x32xf32>
    %c18_i32_150 = arith.constant 18 : i32
    %175 = arith.addi %3, %c18_i32_150 : i32
    %176 = arith.index_cast %175 : i32 to index
    %c14_151 = arith.constant 14 : index
    %c0_152 = arith.constant 0 : index
    %177 = vector.load %arg9[%176, %c14_151, %c0_152] : memref<52x66x32xbf16, #tpu.memory_space<vmem>>, vector<8x16x32xbf16>
    %178 = vector.shape_cast %177 : vector<8x16x32xbf16> to vector<128x32xbf16>
    %c2_153 = arith.constant 2 : index
    %c3_154 = arith.constant 3 : index
    %c0_155 = arith.constant 0 : index
    %c0_156 = arith.constant 0 : index
    %179 = vector.load %arg3[%c2_153, %c3_154, %c0_155, %c0_156] : memref<3x9x32x32xbf16, #tpu.memory_space<vmem>>, vector<1x1x32x32xbf16>
    %180 = vector.shape_cast %179 : vector<1x1x32x32xbf16> to vector<32x32xbf16>
    %cst_157 = arith.constant dense<0.000000e+00> : vector<128x32xf32>
    %181 = tpu.matmul %178, %180, %cst_157 {dimension_numbers = #tpu.dot_dimension_numbers<[1], [0], [0], [1], [0, 0, 1, 1], [], []>} : vector<128x32xbf16>, vector<32x32xbf16>, vector<128x32xf32> -> vector<128x32xf32>
    %182 = arith.addf %174, %181 : vector<128x32xf32>
    %c18_i32_158 = arith.constant 18 : i32
    %183 = arith.addi %3, %c18_i32_158 : i32
    %184 = arith.index_cast %183 : i32 to index
    %c32_159 = arith.constant 32 : index
    %c0_160 = arith.constant 0 : index
    %185 = vector.load %arg9[%184, %c32_159, %c0_160] : memref<52x66x32xbf16, #tpu.memory_space<vmem>>, vector<8x16x32xbf16>
    %186 = vector.shape_cast %185 : vector<8x16x32xbf16> to vector<128x32xbf16>
    %c2_161 = arith.constant 2 : index
    %c4_162 = arith.constant 4 : index
    %c0_163 = arith.constant 0 : index
    %c0_164 = arith.constant 0 : index
    %187 = vector.load %arg3[%c2_161, %c4_162, %c0_163, %c0_164] : memref<3x9x32x32xbf16, #tpu.memory_space<vmem>>, vector<1x1x32x32xbf16>
    %188 = vector.shape_cast %187 : vector<1x1x32x32xbf16> to vector<32x32xbf16>
    %cst_165 = arith.constant dense<0.000000e+00> : vector<128x32xf32>
    %189 = tpu.matmul %186, %188, %cst_165 {dimension_numbers = #tpu.dot_dimension_numbers<[1], [0], [0], [1], [0, 0, 1, 1], [], []>} : vector<128x32xbf16>, vector<32x32xbf16>, vector<128x32xf32> -> vector<128x32xf32>
    %190 = arith.addf %182, %189 : vector<128x32xf32>
    %c18_i32_166 = arith.constant 18 : i32
    %191 = arith.addi %3, %c18_i32_166 : i32
    %192 = arith.index_cast %191 : i32 to index
    %c50_167 = arith.constant 50 : index
    %c0_168 = arith.constant 0 : index
    %193 = vector.load %arg9[%192, %c50_167, %c0_168] : memref<52x66x32xbf16, #tpu.memory_space<vmem>>, vector<8x16x32xbf16>
    %194 = vector.shape_cast %193 : vector<8x16x32xbf16> to vector<128x32xbf16>
    %c2_169 = arith.constant 2 : index
    %c5_170 = arith.constant 5 : index
    %c0_171 = arith.constant 0 : index
    %c0_172 = arith.constant 0 : index
    %195 = vector.load %arg3[%c2_169, %c5_170, %c0_171, %c0_172] : memref<3x9x32x32xbf16, #tpu.memory_space<vmem>>, vector<1x1x32x32xbf16>
    %196 = vector.shape_cast %195 : vector<1x1x32x32xbf16> to vector<32x32xbf16>
    %cst_173 = arith.constant dense<0.000000e+00> : vector<128x32xf32>
    %197 = tpu.matmul %194, %196, %cst_173 {dimension_numbers = #tpu.dot_dimension_numbers<[1], [0], [0], [1], [0, 0, 1, 1], [], []>} : vector<128x32xbf16>, vector<32x32xbf16>, vector<128x32xf32> -> vector<128x32xf32>
    %198 = arith.addf %190, %197 : vector<128x32xf32>
    %c36_i32 = arith.constant 36 : i32
    %199 = arith.addi %3, %c36_i32 : i32
    %200 = arith.index_cast %199 : i32 to index
    %c14_174 = arith.constant 14 : index
    %c0_175 = arith.constant 0 : index
    %201 = vector.load %arg9[%200, %c14_174, %c0_175] : memref<52x66x32xbf16, #tpu.memory_space<vmem>>, vector<8x16x32xbf16>
    %202 = vector.shape_cast %201 : vector<8x16x32xbf16> to vector<128x32xbf16>
    %c2_176 = arith.constant 2 : index
    %c6_177 = arith.constant 6 : index
    %c0_178 = arith.constant 0 : index
    %c0_179 = arith.constant 0 : index
    %203 = vector.load %arg3[%c2_176, %c6_177, %c0_178, %c0_179] : memref<3x9x32x32xbf16, #tpu.memory_space<vmem>>, vector<1x1x32x32xbf16>
    %204 = vector.shape_cast %203 : vector<1x1x32x32xbf16> to vector<32x32xbf16>
    %cst_180 = arith.constant dense<0.000000e+00> : vector<128x32xf32>
    %205 = tpu.matmul %202, %204, %cst_180 {dimension_numbers = #tpu.dot_dimension_numbers<[1], [0], [0], [1], [0, 0, 1, 1], [], []>} : vector<128x32xbf16>, vector<32x32xbf16>, vector<128x32xf32> -> vector<128x32xf32>
    %206 = arith.addf %198, %205 : vector<128x32xf32>
    %c36_i32_181 = arith.constant 36 : i32
    %207 = arith.addi %3, %c36_i32_181 : i32
    %208 = arith.index_cast %207 : i32 to index
    %c32_182 = arith.constant 32 : index
    %c0_183 = arith.constant 0 : index
    %209 = vector.load %arg9[%208, %c32_182, %c0_183] : memref<52x66x32xbf16, #tpu.memory_space<vmem>>, vector<8x16x32xbf16>
    %210 = vector.shape_cast %209 : vector<8x16x32xbf16> to vector<128x32xbf16>
    %c2_184 = arith.constant 2 : index
    %c7_185 = arith.constant 7 : index
    %c0_186 = arith.constant 0 : index
    %c0_187 = arith.constant 0 : index
    %211 = vector.load %arg3[%c2_184, %c7_185, %c0_186, %c0_187] : memref<3x9x32x32xbf16, #tpu.memory_space<vmem>>, vector<1x1x32x32xbf16>
    %212 = vector.shape_cast %211 : vector<1x1x32x32xbf16> to vector<32x32xbf16>
    %cst_188 = arith.constant dense<0.000000e+00> : vector<128x32xf32>
    %213 = tpu.matmul %210, %212, %cst_188 {dimension_numbers = #tpu.dot_dimension_numbers<[1], [0], [0], [1], [0, 0, 1, 1], [], []>} : vector<128x32xbf16>, vector<32x32xbf16>, vector<128x32xf32> -> vector<128x32xf32>
    %214 = arith.addf %206, %213 : vector<128x32xf32>
    %c36_i32_189 = arith.constant 36 : i32
    %215 = arith.addi %3, %c36_i32_189 : i32
    %216 = arith.index_cast %215 : i32 to index
    %c50_190 = arith.constant 50 : index
    %c0_191 = arith.constant 0 : index
    %217 = vector.load %arg9[%216, %c50_190, %c0_191] : memref<52x66x32xbf16, #tpu.memory_space<vmem>>, vector<8x16x32xbf16>
    %218 = vector.shape_cast %217 : vector<8x16x32xbf16> to vector<128x32xbf16>
    %c2_192 = arith.constant 2 : index
    %c8_193 = arith.constant 8 : index
    %c0_194 = arith.constant 0 : index
    %c0_195 = arith.constant 0 : index
    %219 = vector.load %arg3[%c2_192, %c8_193, %c0_194, %c0_195] : memref<3x9x32x32xbf16, #tpu.memory_space<vmem>>, vector<1x1x32x32xbf16>
    %220 = vector.shape_cast %219 : vector<1x1x32x32xbf16> to vector<32x32xbf16>
    %cst_196 = arith.constant dense<0.000000e+00> : vector<128x32xf32>
    %221 = tpu.matmul %218, %220, %cst_196 {dimension_numbers = #tpu.dot_dimension_numbers<[1], [0], [0], [1], [0, 0, 1, 1], [], []>} : vector<128x32xbf16>, vector<32x32xbf16>, vector<128x32xf32> -> vector<128x32xf32>
    %222 = arith.addf %214, %221 : vector<128x32xf32>
    %223 = tpu.concatenate %76, %149, %222 in 1 : vector<128x32xf32>, vector<128x32xf32>, vector<128x32xf32> -> vector<128x96xf32>
    %c0_197 = arith.constant 0 : index
    %c0_198 = arith.constant 0 : index
    %224 = vector.load %arg4[%c0_197, %c0_198] : memref<1x96xf32, #tpu.memory_space<vmem>>, vector<1x96xf32>
    %225 = vector.broadcast %224 : vector<1x96xf32> to vector<128x96xf32>
    %226 = arith.mulf %223, %225 : vector<128x96xf32>
    %c0_199 = arith.constant 0 : index
    %c0_200 = arith.constant 0 : index
    %227 = vector.load %arg5[%c0_199, %c0_200] : memref<1x96xf32, #tpu.memory_space<vmem>>, vector<1x96xf32>
    %228 = vector.broadcast %227 : vector<1x96xf32> to vector<128x96xf32>
    %229 = arith.addf %226, %228 : vector<128x96xf32>
    %cst_201 = arith.constant 0.000000e+00 : f32
    %230 = vector.broadcast %cst_201 : f32 to vector<128x96xf32>
    %231 = arith.maximumf %229, %230 : vector<128x96xf32>
    %c0_202 = arith.constant 0 : index
    %c0_203 = arith.constant 0 : index
    %232 = vector.load %arg6[%c0_202, %c0_203] : memref<1x96xf32, #tpu.memory_space<vmem>>, vector<1x96xf32>
    %233 = vector.broadcast %232 : vector<1x96xf32> to vector<128x96xf32>
    %234 = arith.mulf %231, %233 : vector<128x96xf32>
    %c0_204 = arith.constant 0 : index
    %c0_205 = arith.constant 0 : index
    %235 = vector.load %arg7[%c0_204, %c0_205] : memref<1x96xf32, #tpu.memory_space<vmem>>, vector<1x96xf32>
    %236 = vector.broadcast %235 : vector<1x96xf32> to vector<128x96xf32>
    %237 = arith.addf %234, %236 : vector<128x96xf32>
    %cst_206 = arith.constant 0.000000e+00 : f32
    %238 = vector.broadcast %cst_206 : f32 to vector<128x96xf32>
    %239 = arith.maximumf %237, %238 : vector<128x96xf32>
    %240 = vector.shape_cast %239 : vector<128x96xf32> to vector<8x16x96xf32>
    %241 = arith.truncf %240 : vector<8x16x96xf32> to vector<8x16x96xbf16>
    %c0_207 = arith.constant 0 : index
    %c0_208 = arith.constant 0 : index
    %c0_209 = arith.constant 0 : index
    %c0_210 = arith.constant 0 : index
    %242 = vector.load %arg8[%c0_207, %c0_208, %c0_209, %c0_210] : memref<1x8x16x96xbf16, #tpu.memory_space<vmem>>, vector<1x8x16x96xbf16>
    %243 = vector.shape_cast %242 : vector<1x8x16x96xbf16> to vector<8x16x96xbf16>
    %244 = vector.shape_cast %241 : vector<8x16x96xbf16> to vector<1x8x16x96xbf16>
    tpu.vector_store %arg8[%c0_207, %c0_208, %c0_209, %c0_210], %244 {strides = array<i32>} : memref<1x8x16x96xbf16, #tpu.memory_space<vmem>>, vector<1x8x16x96xbf16>,
    return
  }
  func.func @transform_0(%arg0: i32, %arg1: i32) -> (i32, i32, i32, i32) {
    %c0_i32 = arith.constant 0 : i32
    %c0_i32_0 = arith.constant 0 : i32
    %c0_i32_1 = arith.constant 0 : i32
    %c0_i32_2 = arith.constant 0 : i32
    return %arg0, %c0_i32, %c0_i32_0, %c0_i32_1 : i32, i32, i32, i32
  }
  func.func @transform_1(%arg0: i32, %arg1: i32) -> (i32, i32, i32, i32) {
    %c0_i32 = arith.constant 0 : i32
    %c0_i32_0 = arith.constant 0 : i32
    %c0_i32_1 = arith.constant 0 : i32
    %c0_i32_2 = arith.constant 0 : i32
    %c0_i32_3 = arith.constant 0 : i32
    return %c0_i32, %c0_i32_0, %c0_i32_1, %c0_i32_2 : i32, i32, i32, i32
  }
  func.func @transform_2(%arg0: i32, %arg1: i32) -> (i32, i32) {
    %c0_i32 = arith.constant 0 : i32
    %c0_i32_0 = arith.constant 0 : i32
    %c0_i32_1 = arith.constant 0 : i32
    return %c0_i32, %c0_i32_0 : i32, i32
  }
  func.func @transform_3(%arg0: i32, %arg1: i32) -> (i32, i32) {
    %c0_i32 = arith.constant 0 : i32
    %c0_i32_0 = arith.constant 0 : i32
    %c0_i32_1 = arith.constant 0 : i32
    return %c0_i32, %c0_i32_0 : i32, i32
  }
  func.func @transform_4(%arg0: i32, %arg1: i32) -> (i32, i32) {
    %c0_i32 = arith.constant 0 : i32
    %c0_i32_0 = arith.constant 0 : i32
    %c0_i32_1 = arith.constant 0 : i32
    return %c0_i32, %c0_i32_0 : i32, i32
  }
  func.func @transform_5(%arg0: i32, %arg1: i32) -> (i32, i32) {
    %c0_i32 = arith.constant 0 : i32
    %c0_i32_0 = arith.constant 0 : i32
    %c0_i32_1 = arith.constant 0 : i32
    return %c0_i32, %c0_i32_0 : i32, i32
  }
  func.func @transform_6(%arg0: i32, %arg1: i32) -> (i32, i32, i32, i32) {
    %c0_i32 = arith.constant 0 : i32
    %c0_i32_0 = arith.constant 0 : i32
    %c0_i32_1 = arith.constant 0 : i32
    return %arg0, %arg1, %c0_i32, %c0_i32_0 : i32, i32, i32, i32
  }
}

</mosaic_0001>

<llo_original>
// kernel: tpu_custom_call.1
$region0: #{tpu_custom_call.1}
  #allocation0 [shape = 'u32[]', space=smem, size = 0x4, offset = 0x4, fixed_abs, tag = 'smem constant byte address 0x4 - core index']
  #allocation1 [shape = 'u32[144,128]{1,0:T(1,128)}', space=vmem, size = 0x12000, scoped, tag = 'internal scratch']
  #allocation2 [shape = 'bf16[52,66,32]{2,1,0:T(8,128)(2,1)}', space=vmem, size = 0xea000, scoped, tag = 'scratch operand']
  %s0 = inlined_call_operand.hbm [shape: bf16[2,16,16,32], index: 0, kind: input, shape index: {}]
  %s1 = inlined_call_operand.hbm [shape: bf16[3,9,32,32], index: 1, kind: input, shape index: {}]
  %s2 = inlined_call_operand.vmem [shape: f32[1,96], index: 2, kind: input, shape index: {}]
  %s3 = inlined_call_operand.vmem [shape: f32[1,96], index: 3, kind: input, shape index: {}]
  %s4 = inlined_call_operand.vmem [shape: f32[1,96], index: 4, kind: input, shape index: {}]
  %s5 = inlined_call_operand.vmem [shape: f32[1,96], index: 5, kind: input, shape index: {}]
  %s6 = inlined_call_operand.hbm [shape: bf16[2,16,16,96], index: 6, kind: output, shape index: {}]
  %s7 = sld [smem:[#allocation0]]
  $region69: #{tpu_custom_call.1} parent=0
    _
  %s9 = ssub.s32 1, %s7
  %s10 = scalar_select 0, %s9, %s7
  $region1: #{tpu_custom_call.1} parent=0
    #allocation3 [shape = 'u8[131072]{0}', space=vmem, size = 0x20000, scoped, tag = 'input window, operand 0']
    #allocation4 [shape = 's32[2]{0}', space=sflag, size = 0x8, scoped, tag = 'scoped memory for tpu_custom_call.1']
    #allocation5 [shape = 's32[2]{0}', space=sflag, size = 0x8, scoped, tag = 'scoped memory for tpu_custom_call.1']
    #allocation6 [shape = 'u8[221184]{0}', space=vmem, size = 0x36000, scoped, tag = 'input window, operand 1, single buffered']
    #allocation7 [shape = 's32[1]{0}', space=sflag, size = 0x4, scoped, tag = 'scoped memory for tpu_custom_call.1']
    #allocation8 [shape = 'u8[65536]{0}', space=vmem, size = 0x10000, scoped, tag = 'output window, operand 0']
    %11 = vsyncpa [#allocation4], 0
    %s12 = scalar_lea.sflag [#allocation4], 1
    %13 = vsyncpa %s12, 0
    %14 = vsyncpa [#allocation7], 0
    %15 = vsyncpa [#allocation5], 0
    %s16 = scalar_lea.sflag [#allocation5], 1
    %17 = vsyncpa %s16, 0
    loop: start=0, step=1, limit=6
    $region2: #{tpu_custom_call.1} parent=1 // loop_pre_header
      _
    $region3: #{tpu_custom_call.1} parent=1 // loop_header
      %s19 = sphi 0, %s23
      %p20 = scmp.ge.s32.totalorder %s19, 6
      %s26 = sphi 0, %s38
      %s27 = sphi 0, %s34
      %s28 = sphi 0, %s26
      %s29 = sphi 0, %s27
      %s30 = sphi 0, %s28
      %s31 = sphi 0, %s29
      %s41 = sphi 0, %s43
      %s44 = sphi 0, %s41
      %s45 = sphi 0, %s44
      %s61 = sphi 0, %s45
      %s65 = sphi 0, %s65
      %s67 = sphi 0, %s65
      %s68 = sphi 0, %s67
      %s82 = sphi 0, %s68
      %s86 = sphi 0, %s86
      %s88 = sphi 0, %s86
      %s89 = sphi 0, %s88
      %s103 = sphi 0, %s89
      %s107 = sphi 0, %s107
      %s109 = sphi 0, %s107
      %s110 = sphi 0, %s109
      %s124 = sphi 0, %s110
      %s128 = sphi 0, %s128
      %s130 = sphi 0, %s128
      %s131 = sphi 0, %s130
      %s145 = sphi 0, %s131
      %s149 = sphi 0, %s149
      %s151 = sphi 0, %s149
      %s152 = sphi 0, %s151
      %s166 = sphi 0, %s152
      %s174 = sphi 0, %s176
      %s177 = sphi 0, %s174
      %s178 = sphi 0, %s177
      %s194 = sphi 0, %s178
    $region4: #{tpu_custom_call.1} parent=1 // loop_header_branch
      %22 = sbr.rel (%p20) target = $region8
    $region5: #{tpu_custom_call.1} parent=1 // loop_body
      %s24 = ssub.s32 %s19, 1
      %s25 = ssub.s32 %s19, 2
      %s32 = sadd.s32 1, %s27
      %p33 = scmp.ge.s32.totalorder %s32, 2
      %s34 = scalar_select %p33, 0, %s32
      %s35 = sadd.s32 1, %s26
      %s36 = scalar_select %p33, %s35, %s26
      %p37 = scmp.ge.s32.totalorder %s36, 2
      %s38 = scalar_select %p37, 0, %s36
      %s39 = ssub.s32 %s26, %s38
      %p40 = scmp.eq.s32.totalorder %s39, 0
      %s42 = sadd.s32 %s41, 1
      %s43 = scalar_select %p40, %s41, %s42
      %p46 = pneg %p40
      %p47 = scmp.eq.s32.totalorder %s19, 3
      %p48 = por %p46, %p47
      %p49 = scmp.ne.s32.totalorder %s41, %s44
      %p50 = scmp.eq.s32.totalorder %s19, 0
      %p51 = por %p49, %p50
      %p52 = scmp.ne.s32.totalorder %s41, %s44
      %p53 = scmp.eq.s32.totalorder %s24, 3
      %p54 = por %p52, %p53
      %p55 = scmp.ne.s32.totalorder %s44, %s45
      %p56 = scmp.eq.s32.totalorder %s24, 0
      %p57 = por %p55, %p56
      %p58 = scmp.ne.s32.totalorder %s44, %s45
      %p59 = scmp.eq.s32.totalorder %s25, 3
      %p60 = por %p58, %p59
      %p62 = scmp.ne.s32.totalorder %s45, %s61
      %p63 = scmp.eq.s32.totalorder %s25, 0
      %p64 = por %p62, %p63
      %s66 = sadd.s32 %s65, 1
      %p69 = scmp.eq.s32.totalorder %s19, 3
      %p70 = scmp.ne.s32.totalorder %s65, %s67
      %p71 = scmp.eq.s32.totalorder %s19, 0
      %p72 = por %p70, %p71
      %p73 = scmp.ne.s32.totalorder %s65, %s67
      %p74 = scmp.eq.s32.totalorder %s24, 3
      %p75 = por %p73, %p74
      %p76 = scmp.ne.s32.totalorder %s67, %s68
      %p77 = scmp.eq.s32.totalorder %s24, 0
      %p78 = por %p76, %p77
      %p79 = scmp.ne.s32.totalorder %s67, %s68
      %p80 = scmp.eq.s32.totalorder %s25, 3
      %p81 = por %p79, %p80
      %p83 = scmp.ne.s32.totalorder %s68, %s82
      %p84 = scmp.eq.s32.totalorder %s25, 0
      %p85 = por %p83, %p84
      %s87 = sadd.s32 %s86, 1
      %p90 = scmp.eq.s32.totalorder %s19, 3
      %p91 = scmp.ne.s32.totalorder %s86, %s88
      %p92 = scmp.eq.s32.totalorder %s19, 0
      %p93 = por %p91, %p92
      %p94 = scmp.ne.s32.totalorder %s86, %s88
      %p95 = scmp.eq.s32.totalorder %s24, 3
      %p96 = por %p94, %p95
      %p97 = scmp.ne.s32.totalorder %s88, %s89
      %p98 = scmp.eq.s32.totalorder %s24, 0
      %p99 = por %p97, %p98
      %p100 = scmp.ne.s32.totalorder %s88, %s89
      %p101 = scmp.eq.s32.totalorder %s25, 3
      %p102 = por %p100, %p101
      %p104 = scmp.ne.s32.totalorder %s89, %s103
      %p105 = scmp.eq.s32.totalorder %s25, 0
      %p106 = por %p104, %p105
      %s108 = sadd.s32 %s107, 1
      %p111 = scmp.eq.s32.totalorder %s19, 3
      %p112 = scmp.ne.s32.totalorder %s107, %s109
      %p113 = scmp.eq.s32.totalorder %s19, 0
      %p114 = por %p112, %p113
      %p115 = scmp.ne.s32.totalorder %s107, %s109
      %p116 = scmp.eq.s32.totalorder %s24, 3
      %p117 = por %p115, %p116
      %p118 = scmp.ne.s32.totalorder %s109, %s110
      %p119 = scmp.eq.s32.totalorder %s24, 0
      %p120 = por %p118, %p119
      %p121 = scmp.ne.s32.totalorder %s109, %s110
      %p122 = scmp.eq.s32.totalorder %s25, 3
      %p123 = por %p121, %p122
      %p125 = scmp.ne.s32.totalorder %s110, %s124
      %p126 = scmp.eq.s32.totalorder %s25, 0
      %p127 = por %p125, %p126
      %s129 = sadd.s32 %s128, 1
      %p132 = scmp.eq.s32.totalorder %s19, 3
      %p133 = scmp.ne.s32.totalorder %s128, %s130
      %p134 = scmp.eq.s32.totalorder %s19, 0
      %p135 = por %p133, %p134
      %p136 = scmp.ne.s32.totalorder %s128, %s130
      %p137 = scmp.eq.s32.totalorder %s24, 3
      %p138 = por %p136, %p137
      %p139 = scmp.ne.s32.totalorder %s130, %s131
      %p140 = scmp.eq.s32.totalorder %s24, 0
      %p141 = por %p139, %p140
      %p142 = scmp.ne.s32.totalorder %s130, %s131
      %p143 = scmp.eq.s32.totalorder %s25, 3
      %p144 = por %p142, %p143
      %p146 = scmp.ne.s32.totalorder %s131, %s145
      %p147 = scmp.eq.s32.totalorder %s25, 0
      %p148 = por %p146, %p147
      %s150 = sadd.s32 %s149, 1
      %p153 = scmp.eq.s32.totalorder %s19, 3
      %p154 = scmp.ne.s32.totalorder %s149, %s151
      %p155 = scmp.eq.s32.totalorder %s19, 0
      %p156 = por %p154, %p155
      %p157 = scmp.ne.s32.totalorder %s149, %s151
      %p158 = scmp.eq.s32.totalorder %s24, 3
      %p159 = por %p157, %p158
      %p160 = scmp.ne.s32.totalorder %s151, %s152
      %p161 = scmp.eq.s32.totalorder %s24, 0
      %p162 = por %p160, %p161
      %p163 = scmp.ne.s32.totalorder %s151, %s152
      %p164 = scmp.eq.s32.totalorder %s25, 3
      %p165 = por %p163, %p164
      %p167 = scmp.ne.s32.totalorder %s152, %s166
      %p168 = scmp.eq.s32.totalorder %s25, 0
      %p169 = por %p167, %p168
      %s170 = ssub.s32 %s26, %s38
      %s171 = ssub.s32 %s27, %s34
      %s172 = sor.u32 %s170, %s171
      %p173 = scmp.eq.s32.totalorder %s172, 0
      %s175 = sadd.s32 %s174, 1
      %s176 = scalar_select %p173, %s174, %s175
      %p179 = pneg %p173
      %p180 = scmp.eq.s32.totalorder %s19, 3
      %p181 = por %p179, %p180
      %p182 = scmp.ne.s32.totalorder %s174, %s177
      %p183 = scmp.eq.s32.totalorder %s19, 0
      %p184 = por %p182, %p183
      %p185 = scmp.ne.s32.totalorder %s174, %s177
      %p186 = scmp.eq.s32.totalorder %s24, 3
      %p187 = por %p185, %p186
      %p188 = scmp.ne.s32.totalorder %s177, %s178
      %p189 = scmp.eq.s32.totalorder %s24, 0
      %p190 = por %p188, %p189
      %p191 = scmp.ne.s32.totalorder %s177, %s178
      %p192 = scmp.eq.s32.totalorder %s25, 3
      %p193 = por %p191, %p192
      %p195 = scmp.ne.s32.totalorder %s178, %s194
      %p196 = scmp.eq.s32.totalorder %s25, 0
      %p197 = por %p195, %p196
      %p198 = scmp.le.s32.totalorder 1, %s19
      %p199 = scmp.lt.s32.totalorder %s19, 5
      %p200 = pnand %p198, %p199
      %p201 = pneg %p200
      // Predicated region
      $region9: #{tpu_custom_call.1} parent=5 // pred_check
        _
      $region10: #{tpu_custom_call.1} parent=5 // pred_check_branch
        %203 = sbr.rel (%p200) target = $region12
      $region11: #{tpu_custom_call.1} parent=5 // pred_region
        %s204 = ssub.s32 %s19, 1
        // Predicated region
        $region13: #{tpu_custom_call.1} parent=11 // pred_check
          %p205 = pneg %p78
        $region14: #{tpu_custom_call.1} parent=11 // pred_check_branch
          %207 = sbr.rel (%p205) target = $region16
        $region15: #{tpu_custom_call.1} parent=11 // pred_region
          %s209 = ssub.s32 6912, 6912
          %210 = vsyncadd [#allocation7], %s209
          %s211 = sshll.u32 [#allocation6], 4
          %s212 = int_to_ptr.vmem [resolvable:$true] %s211
          %217 = dma.hbm_to_vmem [thread:$0]  %s1, 6912, %s212, [#allocation7], 64, 64, 4
        $region16: #{tpu_custom_call.1} parent=11 // pred_fallthru
          _
        // Predicated region
        $region17: #{tpu_custom_call.1} parent=11 // pred_check
          %p218 = pneg %p99
        $region18: #{tpu_custom_call.1} parent=11 // pred_check_branch
          %220 = sbr.rel (%p218) target = $region20
        $region19: #{tpu_custom_call.1} parent=11 // pred_region
          _
        $region20: #{tpu_custom_call.1} parent=11 // pred_fallthru
          _
        // Predicated region
        $region21: #{tpu_custom_call.1} parent=11 // pred_check
          %p221 = pneg %p120
        $region22: #{tpu_custom_call.1} parent=11 // pred_check_branch
          %223 = sbr.rel (%p221) target = $region24
        $region23: #{tpu_custom_call.1} parent=11 // pred_region
          _
        $region24: #{tpu_custom_call.1} parent=11 // pred_fallthru
          _
        // Predicated region
        $region25: #{tpu_custom_call.1} parent=11 // pred_check
          %p224 = pneg %p141
        $region26: #{tpu_custom_call.1} parent=11 // pred_check_branch
          %226 = sbr.rel (%p224) target = $region28
        $region27: #{tpu_custom_call.1} parent=11 // pred_region
          _
        $region28: #{tpu_custom_call.1} parent=11 // pred_fallthru
          _
        // Predicated region
        $region29: #{tpu_custom_call.1} parent=11 // pred_check
          %p227 = pneg %p162
        $region30: #{tpu_custom_call.1} parent=11 // pred_check_branch
          %229 = sbr.rel (%p227) target = $region32
        $region31: #{tpu_custom_call.1} parent=11 // pred_region
          _
        $region32: #{tpu_custom_call.1} parent=11 // pred_fallthru
          _
      $region12: #{tpu_custom_call.1} parent=5 // pred_fallthru
        _
      %p230 = scmp.lt.s32.totalorder %s19, 4
      // Predicated region
      $region33: #{tpu_custom_call.1} parent=5 // pred_check
        %p231 = pneg %p230
      $region34: #{tpu_custom_call.1} parent=5 // pred_check_branch
        %233 = sbr.rel (%p231) target = $region36
      $region35: #{tpu_custom_call.1} parent=5 // pred_region
        // Predicated region
        $region37: #{tpu_custom_call.1} parent=35 // pred_check
          %p234 = pneg %p51
        $region38: #{tpu_custom_call.1} parent=35 // pred_check_branch
          %236 = sbr.rel (%p234) target = $region40
        $region39: #{tpu_custom_call.1} parent=35 // pred_region
          %s237 = sand.u32 %s41, 1
          %s238 = scalar_lea.sflag [#allocation4], %s237
          %s239 = sand.u32 %s41, 1
          %s240 = smul.addr %s239, 128
          %s241 = scalar_lea.vmem [#allocation3], %s240
          %s243 = ssub.s32 2048, 2048
          %244 = vsyncadd %s238, %s243
          %s245 = smul.addr %s26, 32
          %s246 = smul.addr %s245, 64
          %s247 = scalar_lea.hbm %s0, %s246
          %s248 = sshll.u32 %s241, 4
          %s249 = int_to_ptr.vmem [resolvable:$true] %s248
          %254 = dma.hbm_to_vmem [thread:$0]  %s247, 2048, %s249, %s238, 64, 64, 4
        $region40: #{tpu_custom_call.1} parent=35 // pred_fallthru
          _
      $region36: #{tpu_custom_call.1} parent=5 // pred_fallthru
        _
      %p255 = scmp.le.s32.totalorder 1, %s19
      %p256 = scmp.lt.s32.totalorder %s19, 5
      %p257 = pnand %p255, %p256
      %p258 = pneg %p257
      // Predicated region
      $region41: #{tpu_custom_call.1} parent=5 // pred_check
        _
      $region42: #{tpu_custom_call.1} parent=5 // pred_check_branch
        %260 = sbr.rel (%p257) target = $region44
      $region43: #{tpu_custom_call.1} parent=5 // pred_region
        %s261 = ssub.s32 %s19, 1
        %s262 = sand.u32 %s44, 1
        %s263 = scalar_lea.sflag [#allocation4], %s262
        %s264 = sand.u32 %s44, 1
        %s265 = smul.addr %s264, 128
        %s266 = scalar_lea.vmem [#allocation3], %s265
        // Predicated region
        $region45: #{tpu_custom_call.1} parent=43 // pred_check
          %p267 = pneg %p57
        $region46: #{tpu_custom_call.1} parent=43 // pred_check_branch
          %269 = sbr.rel (%p267) target = $region48
        $region47: #{tpu_custom_call.1} parent=43 // pred_region
          %270 = dma.done %s263, 2048
        $region48: #{tpu_custom_call.1} parent=43 // pred_fallthru
          _
        // Predicated region
        $region49: #{tpu_custom_call.1} parent=43 // pred_check
          %p271 = pneg %p78
        $region50: #{tpu_custom_call.1} parent=43 // pred_check_branch
          %273 = sbr.rel (%p271) target = $region52
        $region51: #{tpu_custom_call.1} parent=43 // pred_region
          %274 = dma.done [#allocation7], 6912
        $region52: #{tpu_custom_call.1} parent=43 // pred_fallthru
          _
        %s275 = sand.u32 %s44, 1
        %s276 = scalar_lea.sflag [#allocation4], %s275
        %s277 = sand.u32 %s44, 1
        %s278 = smul.addr %s277, 128
        %s279 = scalar_lea.vmem [#allocation3], %s278
        %p280 = pneg %p57
        %p281 = pneg %p54
        %p282 = pneg %p78
        %p283 = pneg %p75
        %p284 = pneg %p99
        %p285 = pneg %p96
        %p286 = pneg %p120
        %p287 = pneg %p117
        %p288 = pneg %p141
        %p289 = pneg %p138
        %p290 = pneg %p162
        %p291 = pneg %p159
        %p292 = pneg %p190
        %p293 = pneg %p187
        %s294 = sand.u32 %s177, 1
        %s295 = scalar_lea.sflag [#allocation5], %s294
        %s296 = sand.u32 %s177, 1
        %s297 = smul.addr %s296, 64
        %s298 = scalar_lea.vmem [#allocation8], %s297
        %s299 = smul.u32 8, %s29
        %p301 = scmp.eq.s32.totalorder %s29, 0
        // Predicated region
        $region53: #{tpu_custom_call.1} parent=43 // pred_check
          %p302 = pneg %p301
        $region54: #{tpu_custom_call.1} parent=43 // pred_check_branch
          %304 = sbr.rel (%p302) target = $region56
        $region55: #{tpu_custom_call.1} parent=43 // pred_region
          %vm305 = vcmask 257024
          %306 = vst.msk [vmem:[#allocation2] sm:$0xf] %vm305, 0
          %307 = vst.msk [vmem:[#allocation2 + $0x4] sm:$0xf] %vm305, 0
          %308 = vst.msk [vmem:[#allocation2 + $0x8] sm:$0xf] %vm305, 0
          %309 = vst.msk [vmem:[#allocation2 + $0xc] sm:$0xf] %vm305, 0
          %310 = vst.msk [vmem:[#allocation2 + $0x10] sm:$0xf] %vm305, 0
          %311 = vst.msk [vmem:[#allocation2 + $0x14] sm:$0xf] %vm305, 0
          %312 = vst.msk [vmem:[#allocation2 + $0x18] sm:$0xf] %vm305, 0
          %313 = vst.msk [vmem:[#allocation2 + $0x1c] sm:$0xf] %vm305, 0
          %vm314 = vcmask 253952
          %315 = vst.msk [vmem:[#allocation2 + $0x20] sm:$0x1] %vm314, 0
          %316 = vst.msk [vmem:[#allocation2 + $0x24] sm:$0xf] %vm305, 0
          %317 = vst.msk [vmem:[#allocation2 + $0x28] sm:$0xf] %vm305, 0
          %318 = vst.msk [vmem:[#allocation2 + $0x2c] sm:$0xf] %vm305, 0
          %319 = vst.msk [vmem:[#allocation2 + $0x30] sm:$0xf] %vm305, 0
          %320 = vst.msk [vmem:[#allocation2 + $0x34] sm:$0xf] %vm305, 0
          %321 = vst.msk [vmem:[#allocation2 + $0x38] sm:$0xf] %vm305, 0
          %322 = vst.msk [vmem:[#allocation2 + $0x3c] sm:$0xf] %vm305, 0
          %323 = vst.msk [vmem:[#allocation2 + $0x40] sm:$0xf] %vm305, 0
          %324 = vst.msk [vmem:[#allocation2 + $0x44] sm:$0x1] %vm314, 0
          %325 = vst.msk [vmem:[#allocation2 + $0x48] sm:$0xf] %vm305, 0
          %326 = vst.msk [vmem:[#allocation2 + $0x4c] sm:$0xf] %vm305, 0
          %327 = vst.msk [vmem:[#allocation2 + $0x50] sm:$0xf] %vm305, 0
          %328 = vst.msk [vmem:[#allocation2 + $0x54] sm:$0xf] %vm305, 0
          %329 = vst.msk [vmem:[#allocation2 + $0x58] sm:$0xf] %vm305, 0
          %330 = vst.msk [vmem:[#allocation2 + $0x5c] sm:$0xf] %vm305, 0
          %331 = vst.msk [vmem:[#allocation2 + $0x60] sm:$0xf] %vm305, 0
          %332 = vst.msk [vmem:[#allocation2 + $0x64] sm:$0xf] %vm305, 0
          %333 = vst.msk [vmem:[#allocation2 + $0x68] sm:$0x1] %vm314, 0
          %334 = vst.msk [vmem:[#allocation2 + $0x6c] sm:$0xf] %vm305, 0
          %335 = vst.msk [vmem:[#allocation2 + $0x70] sm:$0xf] %vm305, 0
          %336 = vst.msk [vmem:[#allocation2 + $0x74] sm:$0xf] %vm305, 0
          %337 = vst.msk [vmem:[#allocation2 + $0x78] sm:$0xf] %vm305, 0
          %338 = vst.msk [vmem:[#allocation2 + $0x7c] sm:$0xf] %vm305, 0
          %339 = vst.msk [vmem:[#allocation2 + $0x80] sm:$0xf] %vm305, 0
          %340 = vst.msk [vmem:[#allocation2 + $0x84] sm:$0xf] %vm305, 0
          %341 = vst.msk [vmem:[#allocation2 + $0x88] sm:$0xf] %vm305, 0
          %342 = vst.msk [vmem:[#allocation2 + $0x8c] sm:$0x1] %vm314, 0
          %343 = vst.msk [vmem:[#allocation2 + $0x90] sm:$0xf] %vm305, 0
          %344 = vst.msk [vmem:[#allocation2 + $0x94] sm:$0xf] %vm305, 0
          %345 = vst.msk [vmem:[#allocation2 + $0x98] sm:$0xf] %vm305, 0
          %346 = vst.msk [vmem:[#allocation2 + $0x9c] sm:$0xf] %vm305, 0
          %347 = vst.msk [vmem:[#allocation2 + $0xa0] sm:$0xf] %vm305, 0
          %348 = vst.msk [vmem:[#allocation2 + $0xa4] sm:$0xf] %vm305, 0
          %349 = vst.msk [vmem:[#allocation2 + $0xa8] sm:$0xf] %vm305, 0
          %350 = vst.msk [vmem:[#allocation2 + $0xac] sm:$0xf] %vm305, 0
          %351 = vst.msk [vmem:[#allocation2 + $0xb0] sm:$0x1] %vm314, 0
          %352 = vst.msk [vmem:[#allocation2 + $0xb4] sm:$0xf] %vm305, 0
          %353 = vst.msk [vmem:[#allocation2 + $0xb8] sm:$0xf] %vm305, 0
          %354 = vst.msk [vmem:[#allocation2 + $0xbc] sm:$0xf] %vm305, 0
          %355 = vst.msk [vmem:[#allocation2 + $0xc0] sm:$0xf] %vm305, 0
          %356 = vst.msk [vmem:[#allocation2 + $0xc4] sm:$0xf] %vm305, 0
          %357 = vst.msk [vmem:[#allocation2 + $0xc8] sm:$0xf] %vm305, 0
          %358 = vst.msk [vmem:[#allocation2 + $0xcc] sm:$0xf] %vm305, 0
          %359 = vst.msk [vmem:[#allocation2 + $0xd0] sm:$0xf] %vm305, 0
          %360 = vst.msk [vmem:[#allocation2 + $0xd4] sm:$0x1] %vm314, 0
          %361 = vst.msk [vmem:[#allocation2 + $0xd8] sm:$0xf] %vm305, 0
          %362 = vst.msk [vmem:[#allocation2 + $0xdc] sm:$0xf] %vm305, 0
          %363 = vst.msk [vmem:[#allocation2 + $0xe0] sm:$0xf] %vm305, 0
          %364 = vst.msk [vmem:[#allocation2 + $0xe4] sm:$0xf] %vm305, 0
          %365 = vst.msk [vmem:[#allocation2 + $0xe8] sm:$0xf] %vm305, 0
          %366 = vst.msk [vmem:[#allocation2 + $0xec] sm:$0xf] %vm305, 0
          %367 = vst.msk [vmem:[#allocation2 + $0xf0] sm:$0xf] %vm305, 0
          %368 = vst.msk [vmem:[#allocation2 + $0xf4] sm:$0xf] %vm305, 0
          %369 = vst.msk [vmem:[#allocation2 + $0xf8] sm:$0x1] %vm314, 0
          %370 = vst.msk [vmem:[#allocation2 + $0xfc] sm:$0xf] %vm305, 0
          %371 = vst.msk [vmem:[#allocation2 + $0x100] sm:$0xf] %vm305, 0
          %372 = vst.msk [vmem:[#allocation2 + $0x104] sm:$0xf] %vm305, 0
          %373 = vst.msk [vmem:[#allocation2 + $0x108] sm:$0xf] %vm305, 0
          %374 = vst.msk [vmem:[#allocation2 + $0x10c] sm:$0xf] %vm305, 0
          %375 = vst.msk [vmem:[#allocation2 + $0x110] sm:$0xf] %vm305, 0
          %376 = vst.msk [vmem:[#allocation2 + $0x114] sm:$0xf] %vm305, 0
          %377 = vst.msk [vmem:[#allocation2 + $0x118] sm:$0xf] %vm305, 0
          %378 = vst.msk [vmem:[#allocation2 + $0x11c] sm:$0x1] %vm314, 0
          %379 = vst.msk [vmem:[#allocation2 + $0x120] sm:$0xf] %vm305, 0
          %380 = vst.msk [vmem:[#allocation2 + $0x124] sm:$0xf] %vm305, 0
          %381 = vst.msk [vmem:[#allocation2 + $0x128] sm:$0xf] %vm305, 0
          %382 = vst.msk [vmem:[#allocation2 + $0x12c] sm:$0xf] %vm305, 0
          %383 = vst.msk [vmem:[#allocation2 + $0x130] sm:$0xf] %vm305, 0
          %384 = vst.msk [vmem:[#allocation2 + $0x134] sm:$0xf] %vm305, 0
          %385 = vst.msk [vmem:[#allocation2 + $0x138] sm:$0xf] %vm305, 0
          %386 = vst.msk [vmem:[#allocation2 + $0x13c] sm:$0xf] %vm305, 0
          %387 = vst.msk [vmem:[#allocation2 + $0x140] sm:$0x1] %vm314, 0
          %388 = vst.msk [vmem:[#allocation2 + $0x144] sm:$0xf] %vm305, 0
          %389 = vst.msk [vmem:[#allocation2 + $0x148] sm:$0xf] %vm305, 0
          %390 = vst.msk [vmem:[#allocation2 + $0x14c] sm:$0xf] %vm305, 0
          %391 = vst.msk [vmem:[#allocation2 + $0x150] sm:$0xf] %vm305, 0
          %392 = vst.msk [vmem:[#allocation2 + $0x154] sm:$0xf] %vm305, 0
          %393 = vst.msk [vmem:[#allocation2 + $0x158] sm:$0xf] %vm305, 0
          %394 = vst.msk [vmem:[#allocation2 + $0x15c] sm:$0xf] %vm305, 0
          %395 = vst.msk [vmem:[#allocation2 + $0x160] sm:$0xf] %vm305, 0
          %396 = vst.msk [vmem:[#allocation2 + $0x164] sm:$0x1] %vm314, 0
          %397 = vst.msk [vmem:[#allocation2 + $0x168] sm:$0xf] %vm305, 0
          %398 = vst.msk [vmem:[#allocation2 + $0x16c] sm:$0xf] %vm305, 0
          %399 = vst.msk [vmem:[#allocation2 + $0x170] sm:$0xf] %vm305, 0
          %400 = vst.msk [vmem:[#allocation2 + $0x174] sm:$0xf] %vm305, 0
          %401 = vst.msk [vmem:[#allocation2 + $0x178] sm:$0xf] %vm305, 0
          %402 = vst.msk [vmem:[#allocation2 + $0x17c] sm:$0xf] %vm305, 0
          %403 = vst.msk [vmem:[#allocation2 + $0x180] sm:$0xf] %vm305, 0
          %404 = vst.msk [vmem:[#allocation2 + $0x184] sm:$0xf] %vm305, 0
          %405 = vst.msk [vmem:[#allocation2 + $0x188] sm:$0x1] %vm314, 0
          %406 = vst.msk [vmem:[#allocation2 + $0x18c] sm:$0xf] %vm305, 0
          %407 = vst.msk [vmem:[#allocation2 + $0x190] sm:$0xf] %vm305, 0
          %408 = vst.msk [vmem:[#allocation2 + $0x194] sm:$0xf] %vm305, 0
          %409 = vst.msk [vmem:[#allocation2 + $0x198] sm:$0xf] %vm305, 0
          %410 = vst.msk [vmem:[#allocation2 + $0x19c] sm:$0xf] %vm305, 0
          %411 = vst.msk [vmem:[#allocation2 + $0x1a0] sm:$0xf] %vm305, 0
          %412 = vst.msk [vmem:[#allocation2 + $0x1a4] sm:$0xf] %vm305, 0
          %413 = vst.msk [vmem:[#allocation2 + $0x1a8] sm:$0xf] %vm305, 0
          %414 = vst.msk [vmem:[#allocation2 + $0x1ac] sm:$0x1] %vm314, 0
          %415 = vst.msk [vmem:[#allocation2 + $0x1b0] sm:$0xf] %vm305, 0
          %416 = vst.msk [vmem:[#allocation2 + $0x1b4] sm:$0xf] %vm305, 0
          %417 = vst.msk [vmem:[#allocation2 + $0x1b8] sm:$0xf] %vm305, 0
          %418 = vst.msk [vmem:[#allocation2 + $0x1bc] sm:$0xf] %vm305, 0
          %419 = vst.msk [vmem:[#allocation2 + $0x1c0] sm:$0xf] %vm305, 0
          %420 = vst.msk [vmem:[#allocation2 + $0x1c4] sm:$0xf] %vm305, 0
          %421 = vst.msk [vmem:[#allocation2 + $0x1c8] sm:$0xf] %vm305, 0
          %422 = vst.msk [vmem:[#allocation2 + $0x1cc] sm:$0xf] %vm305, 0
          %423 = vst.msk [vmem:[#allocation2 + $0x1d0] sm:$0x1] %vm314, 0
          %424 = vst.msk [vmem:[#allocation2 + $0x1d4] sm:$0xf] %vm305, 0
          %425 = vst.msk [vmem:[#allocation2 + $0x1d8] sm:$0xf] %vm305, 0
          %426 = vst.msk [vmem:[#allocation2 + $0x1dc] sm:$0xf] %vm305, 0
          %427 = vst.msk [vmem:[#allocation2 + $0x1e0] sm:$0xf] %vm305, 0
          %428 = vst.msk [vmem:[#allocation2 + $0x1e4] sm:$0xf] %vm305, 0
          %429 = vst.msk [vmem:[#allocation2 + $0x1e8] sm:$0xf] %vm305, 0
          %430 = vst.msk [vmem:[#allocation2 + $0x1ec] sm:$0xf] %vm305, 0
          %431 = vst.msk [vmem:[#allocation2 + $0x1f0] sm:$0xf] %vm305, 0
          %432 = vst.msk [vmem:[#allocation2 + $0x1f4] sm:$0x1] %vm314, 0
          %433 = vst.msk [vmem:[#allocation2 + $0x1f8] sm:$0xf] %vm305, 0
          %434 = vst.msk [vmem:[#allocation2 + $0x1fc] sm:$0xf] %vm305, 0
          %435 = vst.msk [vmem:[#allocation2 + $0x200] sm:$0xf] %vm305, 0
          %436 = vst.msk [vmem:[#allocation2 + $0x204] sm:$0xf] %vm305, 0
          %437 = vst.msk [vmem:[#allocation2 + $0x208] sm:$0xf] %vm305, 0
          %438 = vst.msk [vmem:[#allocation2 + $0x20c] sm:$0xf] %vm305, 0
          %439 = vst.msk [vmem:[#allocation2 + $0x210] sm:$0xf] %vm305, 0
          %440 = vst.msk [vmem:[#allocation2 + $0x214] sm:$0xf] %vm305, 0
          %441 = vst.msk [vmem:[#allocation2 + $0x218] sm:$0x1] %vm314, 0
          %442 = vst.msk [vmem:[#allocation2 + $0x21c] sm:$0xf] %vm305, 0
          %443 = vst.msk [vmem:[#allocation2 + $0x220] sm:$0xf] %vm305, 0
          %444 = vst.msk [vmem:[#allocation2 + $0x224] sm:$0xf] %vm305, 0
          %445 = vst.msk [vmem:[#allocation2 + $0x228] sm:$0xf] %vm305, 0
          %446 = vst.msk [vmem:[#allocation2 + $0x22c] sm:$0xf] %vm305, 0
          %447 = vst.msk [vmem:[#allocation2 + $0x230] sm:$0xf] %vm305, 0
          %448 = vst.msk [vmem:[#allocation2 + $0x234] sm:$0xf] %vm305, 0
          %449 = vst.msk [vmem:[#allocation2 + $0x238] sm:$0xf] %vm305, 0
          %450 = vst.msk [vmem:[#allocation2 + $0x23c] sm:$0x1] %vm314, 0
          %451 = vst.msk [vmem:[#allocation2 + $0x240] sm:$0xf] %vm305, 0
          %452 = vst.msk [vmem:[#allocation2 + $0x244] sm:$0xf] %vm305, 0
          %453 = vst.msk [vmem:[#allocation2 + $0x248] sm:$0xf] %vm305, 0
          %454 = vst.msk [vmem:[#allocation2 + $0x24c] sm:$0xf] %vm305, 0
          %455 = vst.msk [vmem:[#allocation2 + $0x250] sm:$0xf] %vm305, 0
          %456 = vst.msk [vmem:[#allocation2 + $0x254] sm:$0xf] %vm305, 0
          %457 = vst.msk [vmem:[#allocation2 + $0x258] sm:$0xf] %vm305, 0
          %458 = vst.msk [vmem:[#allocation2 + $0x25c] sm:$0xf] %vm305, 0
          %459 = vst.msk [vmem:[#allocation2 + $0x260] sm:$0x1] %vm314, 0
          %460 = vst.msk [vmem:[#allocation2 + $0x264] sm:$0xf] %vm305, 0
          %461 = vst.msk [vmem:[#allocation2 + $0x268] sm:$0xf] %vm305, 0
          %462 = vst.msk [vmem:[#allocation2 + $0x26c] sm:$0xf] %vm305, 0
          %463 = vst.msk [vmem:[#allocation2 + $0x270] sm:$0xf] %vm305, 0
          %464 = vst.msk [vmem:[#allocation2 + $0x274] sm:$0xf] %vm305, 0
          %465 = vst.msk [vmem:[#allocation2 + $0x278] sm:$0xf] %vm305, 0
          %466 = vst.msk [vmem:[#allocation2 + $0x27c] sm:$0xf] %vm305, 0
          %467 = vst.msk [vmem:[#allocation2 + $0x280] sm:$0xf] %vm305, 0
          %468 = vst.msk [vmem:[#allocation2 + $0x284] sm:$0x1] %vm314, 0
          %469 = vst.msk [vmem:[#allocation2 + $0x288] sm:$0xf] %vm305, 0
          %470 = vst.msk [vmem:[#allocation2 + $0x28c] sm:$0xf] %vm305, 0
          %471 = vst.msk [vmem:[#allocation2 + $0x290] sm:$0xf] %vm305, 0
          %472 = vst.msk [vmem:[#allocation2 + $0x294] sm:$0xf] %vm305, 0
          %473 = vst.msk [vmem:[#allocation2 + $0x298] sm:$0xf] %vm305, 0
          %474 = vst.msk [vmem:[#allocation2 + $0x29c] sm:$0xf] %vm305, 0
          %475 = vst.msk [vmem:[#allocation2 + $0x2a0] sm:$0xf] %vm305, 0
          %476 = vst.msk [vmem:[#allocation2 + $0x2a4] sm:$0xf] %vm305, 0
          %477 = vst.msk [vmem:[#allocation2 + $0x2a8] sm:$0x1] %vm314, 0
          %478 = vst.msk [vmem:[#allocation2 + $0x2ac] sm:$0xf] %vm305, 0
          %479 = vst.msk [vmem:[#allocation2 + $0x2b0] sm:$0xf] %vm305, 0
          %480 = vst.msk [vmem:[#allocation2 + $0x2b4] sm:$0xf] %vm305, 0
          %481 = vst.msk [vmem:[#allocation2 + $0x2b8] sm:$0xf] %vm305, 0
          %482 = vst.msk [vmem:[#allocation2 + $0x2bc] sm:$0xf] %vm305, 0
          %483 = vst.msk [vmem:[#allocation2 + $0x2c0] sm:$0xf] %vm305, 0
          %484 = vst.msk [vmem:[#allocation2 + $0x2c4] sm:$0xf] %vm305, 0
          %485 = vst.msk [vmem:[#allocation2 + $0x2c8] sm:$0xf] %vm305, 0
          %486 = vst.msk [vmem:[#allocation2 + $0x2cc] sm:$0x1] %vm314, 0
          %487 = vst.msk [vmem:[#allocation2 + $0x2d0] sm:$0xf] %vm305, 0
          %488 = vst.msk [vmem:[#allocation2 + $0x2d4] sm:$0xf] %vm305, 0
          %489 = vst.msk [vmem:[#allocation2 + $0x2d8] sm:$0xf] %vm305, 0
          %490 = vst.msk [vmem:[#allocation2 + $0x2dc] sm:$0xf] %vm305, 0
          %491 = vst.msk [vmem:[#allocation2 + $0x2e0] sm:$0xf] %vm305, 0
          %492 = vst.msk [vmem:[#allocation2 + $0x2e4] sm:$0xf] %vm305, 0
          %493 = vst.msk [vmem:[#allocation2 + $0x2e8] sm:$0xf] %vm305, 0
          %494 = vst.msk [vmem:[#allocation2 + $0x2ec] sm:$0xf] %vm305, 0
          %495 = vst.msk [vmem:[#allocation2 + $0x2f0] sm:$0x1] %vm314, 0
          %496 = vst.msk [vmem:[#allocation2 + $0x2f4] sm:$0xf] %vm305, 0
          %497 = vst.msk [vmem:[#allocation2 + $0x2f8] sm:$0xf] %vm305, 0
          %498 = vst.msk [vmem:[#allocation2 + $0x2fc] sm:$0xf] %vm305, 0
          %499 = vst.msk [vmem:[#allocation2 + $0x300] sm:$0xf] %vm305, 0
          %500 = vst.msk [vmem:[#allocation2 + $0x304] sm:$0xf] %vm305, 0
          %501 = vst.msk [vmem:[#allocation2 + $0x308] sm:$0xf] %vm305, 0
          %502 = vst.msk [vmem:[#allocation2 + $0x30c] sm:$0xf] %vm305, 0
          %503 = vst.msk [vmem:[#allocation2 + $0x310] sm:$0xf] %vm305, 0
          %504 = vst.msk [vmem:[#allocation2 + $0x314] sm:$0x1] %vm314, 0
          %505 = vst.msk [vmem:[#allocation2 + $0x318] sm:$0xf] %vm305, 0
          %506 = vst.msk [vmem:[#allocation2 + $0x31c] sm:$0xf] %vm305, 0
          %507 = vst.msk [vmem:[#allocation2 + $0x320] sm:$0xf] %vm305, 0
          %508 = vst.msk [vmem:[#allocation2 + $0x324] sm:$0xf] %vm305, 0
          %509 = vst.msk [vmem:[#allocation2 + $0x328] sm:$0xf] %vm305, 0
          %510 = vst.msk [vmem:[#allocation2 + $0x32c] sm:$0xf] %vm305, 0
          %511 = vst.msk [vmem:[#allocation2 + $0x330] sm:$0xf] %vm305, 0
          %512 = vst.msk [vmem:[#allocation2 + $0x334] sm:$0xf] %vm305, 0
          %513 = vst.msk [vmem:[#allocation2 + $0x338] sm:$0x1] %vm314, 0
          %514 = vst.msk [vmem:[#allocation2 + $0x33c] sm:$0xf] %vm305, 0
          %515 = vst.msk [vmem:[#allocation2 + $0x340] sm:$0xf] %vm305, 0
          %516 = vst.msk [vmem:[#allocation2 + $0x344] sm:$0xf] %vm305, 0
          %517 = vst.msk [vmem:[#allocation2 + $0x348] sm:$0xf] %vm305, 0
          %518 = vst.msk [vmem:[#allocation2 + $0x34c] sm:$0xf] %vm305, 0
          %519 = vst.msk [vmem:[#allocation2 + $0x350] sm:$0xf] %vm305, 0
          %520 = vst.msk [vmem:[#allocation2 + $0x354] sm:$0xf] %vm305, 0
          %521 = vst.msk [vmem:[#allocation2 + $0x358] sm:$0xf] %vm305, 0
          %522 = vst.msk [vmem:[#allocation2 + $0x35c] sm:$0x1] %vm314, 0
          %523 = vst.msk [vmem:[#allocation2 + $0x360] sm:$0xf] %vm305, 0
          %524 = vst.msk [vmem:[#allocation2 + $0x364] sm:$0xf] %vm305, 0
          %525 = vst.msk [vmem:[#allocation2 + $0x368] sm:$0xf] %vm305, 0
          %526 = vst.msk [vmem:[#allocation2 + $0x36c] sm:$0xf] %vm305, 0
          %527 = vst.msk [vmem:[#allocation2 + $0x370] sm:$0xf] %vm305, 0
          %528 = vst.msk [vmem:[#allocation2 + $0x374] sm:$0xf] %vm305, 0
          %529 = vst.msk [vmem:[#allocation2 + $0x378] sm:$0xf] %vm305, 0
          %530 = vst.msk [vmem:[#allocation2 + $0x37c] sm:$0xf] %vm305, 0
          %531 = vst.msk [vmem:[#allocation2 + $0x380] sm:$0x1] %vm314, 0
          %532 = vst.msk [vmem:[#allocation2 + $0x384] sm:$0xf] %vm305, 0
          %533 = vst.msk [vmem:[#allocation2 + $0x388] sm:$0xf] %vm305, 0
          %534 = vst.msk [vmem:[#allocation2 + $0x38c] sm:$0xf] %vm305, 0
          %535 = vst.msk [vmem:[#allocation2 + $0x390] sm:$0xf] %vm305, 0
          %536 = vst.msk [vmem:[#allocation2 + $0x394] sm:$0xf] %vm305, 0
          %537 = vst.msk [vmem:[#allocation2 + $0x398] sm:$0xf] %vm305, 0
          %538 = vst.msk [vmem:[#allocation2 + $0x39c] sm:$0xf] %vm305, 0
          %539 = vst.msk [vmem:[#allocation2 + $0x3a0] sm:$0xf] %vm305, 0
          %540 = vst.msk [vmem:[#allocation2 + $0x3a4] sm:$0x1] %vm314, 0
          %541 = vst.msk [vmem:[#allocation2 + $0x3a8] sm:$0xf] %vm305, 0
          %542 = vst.msk [vmem:[#allocation2 + $0x3ac] sm:$0xf] %vm305, 0
          %543 = vst.msk [vmem:[#allocation2 + $0x3b0] sm:$0xf] %vm305, 0
          %544 = vst.msk [vmem:[#allocation2 + $0x3b4] sm:$0xf] %vm305, 0
          %545 = vst.msk [vmem:[#allocation2 + $0x3b8] sm:$0xf] %vm305, 0
          %546 = vst.msk [vmem:[#allocation2 + $0x3bc] sm:$0xf] %vm305, 0
          %547 = vst.msk [vmem:[#allocation2 + $0x3c0] sm:$0xf] %vm305, 0
          %548 = vst.msk [vmem:[#allocation2 + $0x3c4] sm:$0xf] %vm305, 0
          %549 = vst.msk [vmem:[#allocation2 + $0x3c8] sm:$0x1] %vm314, 0
          %550 = vst.msk [vmem:[#allocation2 + $0x3cc] sm:$0xf] %vm305, 0
          %551 = vst.msk [vmem:[#allocation2 + $0x3d0] sm:$0xf] %vm305, 0
          %552 = vst.msk [vmem:[#allocation2 + $0x3d4] sm:$0xf] %vm305, 0
          %553 = vst.msk [vmem:[#allocation2 + $0x3d8] sm:$0xf] %vm305, 0
          %554 = vst.msk [vmem:[#allocation2 + $0x3dc] sm:$0xf] %vm305, 0
          %555 = vst.msk [vmem:[#allocation2 + $0x3e0] sm:$0xf] %vm305, 0
          %556 = vst.msk [vmem:[#allocation2 + $0x3e4] sm:$0xf] %vm305, 0
          %557 = vst.msk [vmem:[#allocation2 + $0x3e8] sm:$0xf] %vm305, 0
          %558 = vst.msk [vmem:[#allocation2 + $0x3ec] sm:$0x1] %vm314, 0
          %559 = vst.msk [vmem:[#allocation2 + $0x3f0] sm:$0xf] %vm305, 0
          %560 = vst.msk [vmem:[#allocation2 + $0x3f4] sm:$0xf] %vm305, 0
          %561 = vst.msk [vmem:[#allocation2 + $0x3f8] sm:$0xf] %vm305, 0
          %562 = vst.msk [vmem:[#allocation2 + $0x3fc] sm:$0xf] %vm305, 0
          %563 = vst.msk [vmem:[#allocation2 + $0x400] sm:$0xf] %vm305, 0
          %564 = vst.msk [vmem:[#allocation2 + $0x404] sm:$0xf] %vm305, 0
          %565 = vst.msk [vmem:[#allocation2 + $0x408] sm:$0xf] %vm305, 0
          %566 = vst.msk [vmem:[#allocation2 + $0x40c] sm:$0xf] %vm305, 0
          %567 = vst.msk [vmem:[#allocation2 + $0x410] sm:$0x1] %vm314, 0
          %568 = vst.msk [vmem:[#allocation2 + $0x414] sm:$0xf] %vm305, 0
          %569 = vst.msk [vmem:[#allocation2 + $0x418] sm:$0xf] %vm305, 0
          %570 = vst.msk [vmem:[#allocation2 + $0x41c] sm:$0xf] %vm305, 0
          %571 = vst.msk [vmem:[#allocation2 + $0x420] sm:$0xf] %vm305, 0
          %572 = vst.msk [vmem:[#allocation2 + $0x424] sm:$0xf] %vm305, 0
          %573 = vst.msk [vmem:[#allocation2 + $0x428] sm:$0xf] %vm305, 0
          %574 = vst.msk [vmem:[#allocation2 + $0x42c] sm:$0xf] %vm305, 0
          %575 = vst.msk [vmem:[#allocation2 + $0x430] sm:$0xf] %vm305, 0
          %576 = vst.msk [vmem:[#allocation2 + $0x434] sm:$0x1] %vm314, 0
          %577 = vst.msk [vmem:[#allocation2 + $0x438] sm:$0xf] %vm305, 0
          %578 = vst.msk [vmem:[#allocation2 + $0x43c] sm:$0xf] %vm305, 0
          %579 = vst.msk [vmem:[#allocation2 + $0x440] sm:$0xf] %vm305, 0
          %580 = vst.msk [vmem:[#allocation2 + $0x444] sm:$0xf] %vm305, 0
          %581 = vst.msk [vmem:[#allocation2 + $0x448] sm:$0xf] %vm305, 0
          %582 = vst.msk [vmem:[#allocation2 + $0x44c] sm:$0xf] %vm305, 0
          %583 = vst.msk [vmem:[#allocation2 + $0x450] sm:$0xf] %vm305, 0
          %584 = vst.msk [vmem:[#allocation2 + $0x454] sm:$0xf] %vm305, 0
          %585 = vst.msk [vmem:[#allocation2 + $0x458] sm:$0x1] %vm314, 0
          %586 = vst.msk [vmem:[#allocation2 + $0x45c] sm:$0xf] %vm305, 0
          %587 = vst.msk [vmem:[#allocation2 + $0x460] sm:$0xf] %vm305, 0
          %588 = vst.msk [vmem:[#allocation2 + $0x464] sm:$0xf] %vm305, 0
          %589 = vst.msk [vmem:[#allocation2 + $0x468] sm:$0xf] %vm305, 0
          %590 = vst.msk [vmem:[#allocation2 + $0x46c] sm:$0xf] %vm305, 0
          %591 = vst.msk [vmem:[#allocation2 + $0x470] sm:$0xf] %vm305, 0
          %592 = vst.msk [vmem:[#allocation2 + $0x474] sm:$0xf] %vm305, 0
          %593 = vst.msk [vmem:[#allocation2 + $0x478] sm:$0xf] %vm305, 0
          %594 = vst.msk [vmem:[#allocation2 + $0x47c] sm:$0x1] %vm314, 0
          %595 = vst.msk [vmem:[#allocation2 + $0x480] sm:$0xf] %vm305, 0
          %596 = vst.msk [vmem:[#allocation2 + $0x484] sm:$0xf] %vm305, 0
          %597 = vst.msk [vmem:[#allocation2 + $0x488] sm:$0xf] %vm305, 0
          %598 = vst.msk [vmem:[#allocation2 + $0x48c] sm:$0xf] %vm305, 0
          %599 = vst.msk [vmem:[#allocation2 + $0x490] sm:$0xf] %vm305, 0
          %600 = vst.msk [vmem:[#allocation2 + $0x494] sm:$0xf] %vm305, 0
          %601 = vst.msk [vmem:[#allocation2 + $0x498] sm:$0xf] %vm305, 0
          %602 = vst.msk [vmem:[#allocation2 + $0x49c] sm:$0xf] %vm305, 0
          %603 = vst.msk [vmem:[#allocation2 + $0x4a0] sm:$0x1] %vm314, 0
          %604 = vst.msk [vmem:[#allocation2 + $0x4a4] sm:$0xf] %vm305, 0
          %605 = vst.msk [vmem:[#allocation2 + $0x4a8] sm:$0xf] %vm305, 0
          %606 = vst.msk [vmem:[#allocation2 + $0x4ac] sm:$0xf] %vm305, 0
          %607 = vst.msk [vmem:[#allocation2 + $0x4b0] sm:$0xf] %vm305, 0
          %608 = vst.msk [vmem:[#allocation2 + $0x4b4] sm:$0xf] %vm305, 0
          %609 = vst.msk [vmem:[#allocation2 + $0x4b8] sm:$0xf] %vm305, 0
          %610 = vst.msk [vmem:[#allocation2 + $0x4bc] sm:$0xf] %vm305, 0
          %611 = vst.msk [vmem:[#allocation2 + $0x4c0] sm:$0xf] %vm305, 0
          %612 = vst.msk [vmem:[#allocation2 + $0x4c4] sm:$0x1] %vm314, 0
          %613 = vst.msk [vmem:[#allocation2 + $0x4c8] sm:$0xf] %vm305, 0
          %614 = vst.msk [vmem:[#allocation2 + $0x4cc] sm:$0xf] %vm305, 0
          %615 = vst.msk [vmem:[#allocation2 + $0x4d0] sm:$0xf] %vm305, 0
          %616 = vst.msk [vmem:[#allocation2 + $0x4d4] sm:$0xf] %vm305, 0
          %617 = vst.msk [vmem:[#allocation2 + $0x4d8] sm:$0xf] %vm305, 0
          %618 = vst.msk [vmem:[#allocation2 + $0x4dc] sm:$0xf] %vm305, 0
          %619 = vst.msk [vmem:[#allocation2 + $0x4e0] sm:$0xf] %vm305, 0
          %620 = vst.msk [vmem:[#allocation2 + $0x4e4] sm:$0xf] %vm305, 0
          %621 = vst.msk [vmem:[#allocation2 + $0x4e8] sm:$0x1] %vm314, 0
          %622 = vst.msk [vmem:[#allocation2 + $0x4ec] sm:$0xf] %vm305, 0
          %623 = vst.msk [vmem:[#allocation2 + $0x4f0] sm:$0xf] %vm305, 0
          %624 = vst.msk [vmem:[#allocation2 + $0x4f4] sm:$0xf] %vm305, 0
          %625 = vst.msk [vmem:[#allocation2 + $0x4f8] sm:$0xf] %vm305, 0
          %626 = vst.msk [vmem:[#allocation2 + $0x4fc] sm:$0xf] %vm305, 0
          %627 = vst.msk [vmem:[#allocation2 + $0x500] sm:$0xf] %vm305, 0
          %628 = vst.msk [vmem:[#allocation2 + $0x504] sm:$0xf] %vm305, 0
          %629 = vst.msk [vmem:[#allocation2 + $0x508] sm:$0xf] %vm305, 0
          %630 = vst.msk [vmem:[#allocation2 + $0x50c] sm:$0x1] %vm314, 0
          %631 = vst.msk [vmem:[#allocation2 + $0x510] sm:$0xf] %vm305, 0
          %632 = vst.msk [vmem:[#allocation2 + $0x514] sm:$0xf] %vm305, 0
          %633 = vst.msk [vmem:[#allocation2 + $0x518] sm:$0xf] %vm305, 0
          %634 = vst.msk [vmem:[#allocation2 + $0x51c] sm:$0xf] %vm305, 0
          %635 = vst.msk [vmem:[#allocation2 + $0x520] sm:$0xf] %vm305, 0
          %636 = vst.msk [vmem:[#allocation2 + $0x524] sm:$0xf] %vm305, 0
          %637 = vst.msk [vmem:[#allocation2 + $0x528] sm:$0xf] %vm305, 0
          %638 = vst.msk [vmem:[#allocation2 + $0x52c] sm:$0xf] %vm305, 0
          %639 = vst.msk [vmem:[#allocation2 + $0x530] sm:$0x1] %vm314, 0
          %640 = vst.msk [vmem:[#allocation2 + $0x534] sm:$0xf] %vm305, 0
          %641 = vst.msk [vmem:[#allocation2 + $0x538] sm:$0xf] %vm305, 0
          %642 = vst.msk [vmem:[#allocation2 + $0x53c] sm:$0xf] %vm305, 0
          %643 = vst.msk [vmem:[#allocation2 + $0x540] sm:$0xf] %vm305, 0
          %644 = vst.msk [vmem:[#allocation2 + $0x544] sm:$0xf] %vm305, 0
          %645 = vst.msk [vmem:[#allocation2 + $0x548] sm:$0xf] %vm305, 0
          %646 = vst.msk [vmem:[#allocation2 + $0x54c] sm:$0xf] %vm305, 0
          %647 = vst.msk [vmem:[#allocation2 + $0x550] sm:$0xf] %vm305, 0
          %648 = vst.msk [vmem:[#allocation2 + $0x554] sm:$0x1] %vm314, 0
          %649 = vst.msk [vmem:[#allocation2 + $0x558] sm:$0xf] %vm305, 0
          %650 = vst.msk [vmem:[#allocation2 + $0x55c] sm:$0xf] %vm305, 0
          %651 = vst.msk [vmem:[#allocation2 + $0x560] sm:$0xf] %vm305, 0
          %652 = vst.msk [vmem:[#allocation2 + $0x564] sm:$0xf] %vm305, 0
          %653 = vst.msk [vmem:[#allocation2 + $0x568] sm:$0xf] %vm305, 0
          %654 = vst.msk [vmem:[#allocation2 + $0x56c] sm:$0xf] %vm305, 0
          %655 = vst.msk [vmem:[#allocation2 + $0x570] sm:$0xf] %vm305, 0
          %656 = vst.msk [vmem:[#allocation2 + $0x574] sm:$0xf] %vm305, 0
          %657 = vst.msk [vmem:[#allocation2 + $0x578] sm:$0x1] %vm314, 0
          %658 = vst.msk [vmem:[#allocation2 + $0x57c] sm:$0xf] %vm305, 0
          %659 = vst.msk [vmem:[#allocation2 + $0x580] sm:$0xf] %vm305, 0
          %660 = vst.msk [vmem:[#allocation2 + $0x584] sm:$0xf] %vm305, 0
          %661 = vst.msk [vmem:[#allocation2 + $0x588] sm:$0xf] %vm305, 0
          %662 = vst.msk [vmem:[#allocation2 + $0x58c] sm:$0xf] %vm305, 0
          %663 = vst.msk [vmem:[#allocation2 + $0x590] sm:$0xf] %vm305, 0
          %664 = vst.msk [vmem:[#allocation2 + $0x594] sm:$0xf] %vm305, 0
          %665 = vst.msk [vmem:[#allocation2 + $0x598] sm:$0xf] %vm305, 0
          %666 = vst.msk [vmem:[#allocation2 + $0x59c] sm:$0x1] %vm314, 0
          %667 = vst.msk [vmem:[#allocation2 + $0x5a0] sm:$0xf] %vm305, 0
          %668 = vst.msk [vmem:[#allocation2 + $0x5a4] sm:$0xf] %vm305, 0
          %669 = vst.msk [vmem:[#allocation2 + $0x5a8] sm:$0xf] %vm305, 0
          %670 = vst.msk [vmem:[#allocation2 + $0x5ac] sm:$0xf] %vm305, 0
          %671 = vst.msk [vmem:[#allocation2 + $0x5b0] sm:$0xf] %vm305, 0
          %672 = vst.msk [vmem:[#allocation2 + $0x5b4] sm:$0xf] %vm305, 0
          %673 = vst.msk [vmem:[#allocation2 + $0x5b8] sm:$0xf] %vm305, 0
          %674 = vst.msk [vmem:[#allocation2 + $0x5bc] sm:$0xf] %vm305, 0
          %675 = vst.msk [vmem:[#allocation2 + $0x5c0] sm:$0x1] %vm314, 0
          %676 = vst.msk [vmem:[#allocation2 + $0x5c4] sm:$0xf] %vm305, 0
          %677 = vst.msk [vmem:[#allocation2 + $0x5c8] sm:$0xf] %vm305, 0
          %678 = vst.msk [vmem:[#allocation2 + $0x5cc] sm:$0xf] %vm305, 0
          %679 = vst.msk [vmem:[#allocation2 + $0x5d0] sm:$0xf] %vm305, 0
          %680 = vst.msk [vmem:[#allocation2 + $0x5d4] sm:$0xf] %vm305, 0
          %681 = vst.msk [vmem:[#allocation2 + $0x5d8] sm:$0xf] %vm305, 0
          %682 = vst.msk [vmem:[#allocation2 + $0x5dc] sm:$0xf] %vm305, 0
          %683 = vst.msk [vmem:[#allocation2 + $0x5e0] sm:$0xf] %vm305, 0
          %684 = vst.msk [vmem:[#allocation2 + $0x5e4] sm:$0x1] %vm314, 0
          %685 = vst.msk [vmem:[#allocation2 + $0x5e8] sm:$0xf] %vm305, 0
          %686 = vst.msk [vmem:[#allocation2 + $0x5ec] sm:$0xf] %vm305, 0
          %687 = vst.msk [vmem:[#allocation2 + $0x5f0] sm:$0xf] %vm305, 0
          %688 = vst.msk [vmem:[#allocation2 + $0x5f4] sm:$0xf] %vm305, 0
          %689 = vst.msk [vmem:[#allocation2 + $0x5f8] sm:$0xf] %vm305, 0
          %690 = vst.msk [vmem:[#allocation2 + $0x5fc] sm:$0xf] %vm305, 0
          %691 = vst.msk [vmem:[#allocation2 + $0x600] sm:$0xf] %vm305, 0
          %692 = vst.msk [vmem:[#allocation2 + $0x604] sm:$0xf] %vm305, 0
          %693 = vst.msk [vmem:[#allocation2 + $0x608] sm:$0x1] %vm314, 0
          %694 = vst.msk [vmem:[#allocation2 + $0x60c] sm:$0xf] %vm305, 0
          %695 = vst.msk [vmem:[#allocation2 + $0x610] sm:$0xf] %vm305, 0
          %696 = vst.msk [vmem:[#allocation2 + $0x614] sm:$0xf] %vm305, 0
          %697 = vst.msk [vmem:[#allocation2 + $0x618] sm:$0xf] %vm305, 0
          %698 = vst.msk [vmem:[#allocation2 + $0x61c] sm:$0xf] %vm305, 0
          %699 = vst.msk [vmem:[#allocation2 + $0x620] sm:$0xf] %vm305, 0
          %700 = vst.msk [vmem:[#allocation2 + $0x624] sm:$0xf] %vm305, 0
          %701 = vst.msk [vmem:[#allocation2 + $0x628] sm:$0xf] %vm305, 0
          %702 = vst.msk [vmem:[#allocation2 + $0x62c] sm:$0x1] %vm314, 0
          %703 = vst.msk [vmem:[#allocation2 + $0x630] sm:$0xf] %vm305, 0
          %704 = vst.msk [vmem:[#allocation2 + $0x634] sm:$0xf] %vm305, 0
          %705 = vst.msk [vmem:[#allocation2 + $0x638] sm:$0xf] %vm305, 0
          %706 = vst.msk [vmem:[#allocation2 + $0x63c] sm:$0xf] %vm305, 0
          %707 = vst.msk [vmem:[#allocation2 + $0x640] sm:$0xf] %vm305, 0
          %708 = vst.msk [vmem:[#allocation2 + $0x644] sm:$0xf] %vm305, 0
          %709 = vst.msk [vmem:[#allocation2 + $0x648] sm:$0xf] %vm305, 0
          %710 = vst.msk [vmem:[#allocation2 + $0x64c] sm:$0xf] %vm305, 0
          %711 = vst.msk [vmem:[#allocation2 + $0x650] sm:$0x1] %vm314, 0
          %712 = vst.msk [vmem:[#allocation2 + $0x654] sm:$0xf] %vm305, 0
          %713 = vst.msk [vmem:[#allocation2 + $0x658] sm:$0xf] %vm305, 0
          %714 = vst.msk [vmem:[#allocation2 + $0x65c] sm:$0xf] %vm305, 0
          %715 = vst.msk [vmem:[#allocation2 + $0x660] sm:$0xf] %vm305, 0
          %716 = vst.msk [vmem:[#allocation2 + $0x664] sm:$0xf] %vm305, 0
          %717 = vst.msk [vmem:[#allocation2 + $0x668] sm:$0xf] %vm305, 0
          %718 = vst.msk [vmem:[#allocation2 + $0x66c] sm:$0xf] %vm305, 0
          %719 = vst.msk [vmem:[#allocation2 + $0x670] sm:$0xf] %vm305, 0
          %720 = vst.msk [vmem:[#allocation2 + $0x674] sm:$0x1] %vm314, 0
          %721 = vst.msk [vmem:[#allocation2 + $0x678] sm:$0xf] %vm305, 0
          %722 = vst.msk [vmem:[#allocation2 + $0x67c] sm:$0xf] %vm305, 0
          %723 = vst.msk [vmem:[#allocation2 + $0x680] sm:$0xf] %vm305, 0
          %724 = vst.msk [vmem:[#allocation2 + $0x684] sm:$0xf] %vm305, 0
          %725 = vst.msk [vmem:[#allocation2 + $0x688] sm:$0xf] %vm305, 0
          %726 = vst.msk [vmem:[#allocation2 + $0x68c] sm:$0xf] %vm305, 0
          %727 = vst.msk [vmem:[#allocation2 + $0x690] sm:$0xf] %vm305, 0
          %728 = vst.msk [vmem:[#allocation2 + $0x694] sm:$0xf] %vm305, 0
          %729 = vst.msk [vmem:[#allocation2 + $0x698] sm:$0x1] %vm314, 0
          %730 = vst.msk [vmem:[#allocation2 + $0x69c] sm:$0xf] %vm305, 0
          %731 = vst.msk [vmem:[#allocation2 + $0x6a0] sm:$0xf] %vm305, 0
          %732 = vst.msk [vmem:[#allocation2 + $0x6a4] sm:$0xf] %vm305, 0
          %733 = vst.msk [vmem:[#allocation2 + $0x6a8] sm:$0xf] %vm305, 0
          %734 = vst.msk [vmem:[#allocation2 + $0x6ac] sm:$0xf] %vm305, 0
          %735 = vst.msk [vmem:[#allocation2 + $0x6b0] sm:$0xf] %vm305, 0
          %736 = vst.msk [vmem:[#allocation2 + $0x6b4] sm:$0xf] %vm305, 0
          %737 = vst.msk [vmem:[#allocation2 + $0x6b8] sm:$0xf] %vm305, 0
          %738 = vst.msk [vmem:[#allocation2 + $0x6bc] sm:$0x1] %vm314, 0
          %739 = vst.msk [vmem:[#allocation2 + $0x6c0] sm:$0xf] %vm305, 0
          %740 = vst.msk [vmem:[#allocation2 + $0x6c4] sm:$0xf] %vm305, 0
          %741 = vst.msk [vmem:[#allocation2 + $0x6c8] sm:$0xf] %vm305, 0
          %742 = vst.msk [vmem:[#allocation2 + $0x6cc] sm:$0xf] %vm305, 0
          %743 = vst.msk [vmem:[#allocation2 + $0x6d0] sm:$0xf] %vm305, 0
          %744 = vst.msk [vmem:[#allocation2 + $0x6d4] sm:$0xf] %vm305, 0
          %745 = vst.msk [vmem:[#allocation2 + $0x6d8] sm:$0xf] %vm305, 0
          %746 = vst.msk [vmem:[#allocation2 + $0x6dc] sm:$0xf] %vm305, 0
          %747 = vst.msk [vmem:[#allocation2 + $0x6e0] sm:$0x1] %vm314, 0
          %748 = vst.msk [vmem:[#allocation2 + $0x6e4] sm:$0xf] %vm305, 0
          %749 = vst.msk [vmem:[#allocation2 + $0x6e8] sm:$0xf] %vm305, 0
          %750 = vst.msk [vmem:[#allocation2 + $0x6ec] sm:$0xf] %vm305, 0
          %751 = vst.msk [vmem:[#allocation2 + $0x6f0] sm:$0xf] %vm305, 0
          %752 = vst.msk [vmem:[#allocation2 + $0x6f4] sm:$0xf] %vm305, 0
          %753 = vst.msk [vmem:[#allocation2 + $0x6f8] sm:$0xf] %vm305, 0
          %754 = vst.msk [vmem:[#allocation2 + $0x6fc] sm:$0xf] %vm305, 0
          %755 = vst.msk [vmem:[#allocation2 + $0x700] sm:$0xf] %vm305, 0
          %756 = vst.msk [vmem:[#allocation2 + $0x704] sm:$0x1] %vm314, 0
          %757 = vst.msk [vmem:[#allocation2 + $0x708] sm:$0xf] %vm305, 0
          %758 = vst.msk [vmem:[#allocation2 + $0x70c] sm:$0xf] %vm305, 0
          %759 = vst.msk [vmem:[#allocation2 + $0x710] sm:$0xf] %vm305, 0
          %760 = vst.msk [vmem:[#allocation2 + $0x714] sm:$0xf] %vm305, 0
          %761 = vst.msk [vmem:[#allocation2 + $0x718] sm:$0xf] %vm305, 0
          %762 = vst.msk [vmem:[#allocation2 + $0x71c] sm:$0xf] %vm305, 0
          %763 = vst.msk [vmem:[#allocation2 + $0x720] sm:$0xf] %vm305, 0
          %764 = vst.msk [vmem:[#allocation2 + $0x724] sm:$0xf] %vm305, 0
          %765 = vst.msk [vmem:[#allocation2 + $0x728] sm:$0x1] %vm314, 0
          %766 = vst.msk [vmem:[#allocation2 + $0x72c] sm:$0xf] %vm305, 0
          %767 = vst.msk [vmem:[#allocation2 + $0x730] sm:$0xf] %vm305, 0
          %768 = vst.msk [vmem:[#allocation2 + $0x734] sm:$0xf] %vm305, 0
          %769 = vst.msk [vmem:[#allocation2 + $0x738] sm:$0xf] %vm305, 0
          %770 = vst.msk [vmem:[#allocation2 + $0x73c] sm:$0xf] %vm305, 0
          %771 = vst.msk [vmem:[#allocation2 + $0x740] sm:$0xf] %vm305, 0
          %772 = vst.msk [vmem:[#allocation2 + $0x744] sm:$0xf] %vm305, 0
          %773 = vst.msk [vmem:[#allocation2 + $0x748] sm:$0xf] %vm305, 0
          %774 = vst.msk [vmem:[#allocation2 + $0x74c] sm:$0x1] %vm314, 0
          %v775 = vld [vmem:[%s266] sm:$0xf]
          %v776 = vld [vmem:[%s266 + $0x4] sm:$0xf]
          %v777 = vld [vmem:[%s266 + $0x8] sm:$0xf]
          %v778 = vld [vmem:[%s266 + $0xc] sm:$0xf]
          %v779 = vld [vmem:[%s266 + $0x10] sm:$0xf]
          %v780 = vld [vmem:[%s266 + $0x14] sm:$0xf]
          %v781 = vld [vmem:[%s266 + $0x18] sm:$0xf]
          %v782 = vld [vmem:[%s266 + $0x1c] sm:$0xf]
          %v783 = vld [vmem:[%s266 + $0x20] sm:$0xf]
          %v784 = vld [vmem:[%s266 + $0x24] sm:$0xf]
          %v785 = vld [vmem:[%s266 + $0x28] sm:$0xf]
          %v786 = vld [vmem:[%s266 + $0x2c] sm:$0xf]
          %v787 = vld [vmem:[%s266 + $0x30] sm:$0xf]
          %v788 = vld [vmem:[%s266 + $0x34] sm:$0xf]
          %v789 = vld [vmem:[%s266 + $0x38] sm:$0xf]
          %v790 = vld [vmem:[%s266 + $0x3c] sm:$0xf]
          %v791 = vld [vmem:[%s266 + $0x40] sm:$0xf]
          %v792 = vld [vmem:[%s266 + $0x44] sm:$0xf]
          %v793 = vld [vmem:[%s266 + $0x48] sm:$0xf]
          %v794 = vld [vmem:[%s266 + $0x4c] sm:$0xf]
          %v795 = vld [vmem:[%s266 + $0x50] sm:$0xf]
          %v796 = vld [vmem:[%s266 + $0x54] sm:$0xf]
          %v797 = vld [vmem:[%s266 + $0x58] sm:$0xf]
          %v798 = vld [vmem:[%s266 + $0x5c] sm:$0xf]
          %v799 = vld [vmem:[%s266 + $0x60] sm:$0xf]
          %v800 = vld [vmem:[%s266 + $0x64] sm:$0xf]
          %v801 = vld [vmem:[%s266 + $0x68] sm:$0xf]
          %v802 = vld [vmem:[%s266 + $0x6c] sm:$0xf]
          %v803 = vld [vmem:[%s266 + $0x70] sm:$0xf]
          %v804 = vld [vmem:[%s266 + $0x74] sm:$0xf]
          %v805 = vld [vmem:[%s266 + $0x78] sm:$0xf]
          %v806 = vld [vmem:[%s266 + $0x7c] sm:$0xf]
          %s807 = scalar_lea.vmem [#allocation2], 648
          %808 = vst.msk [vmem:[%s807 + $0x10] sm:$0xf] %vm305, %v775
          %809 = vst.msk [vmem:[%s807 + $0x14] sm:$0xf] %vm305, %v776
          %810 = vst.msk [vmem:[%s807 + $0x34] sm:$0xf] %vm305, %v777
          %811 = vst.msk [vmem:[%s807 + $0x38] sm:$0xf] %vm305, %v778
          %812 = vst.msk [vmem:[%s807 + $0x58] sm:$0xf] %vm305, %v779
          %813 = vst.msk [vmem:[%s807 + $0x5c] sm:$0xf] %vm305, %v780
          %814 = vst.msk [vmem:[%s807 + $0x7c] sm:$0xf] %vm305, %v781
          %815 = vst.msk [vmem:[%s807 + $0x80] sm:$0xf] %vm305, %v782
          %816 = vst.msk [vmem:[%s807 + $0xa0] sm:$0xf] %vm305, %v783
          %817 = vst.msk [vmem:[%s807 + $0xa4] sm:$0xf] %vm305, %v784
          %818 = vst.msk [vmem:[%s807 + $0xc4] sm:$0xf] %vm305, %v785
          %819 = vst.msk [vmem:[%s807 + $0xc8] sm:$0xf] %vm305, %v786
          %820 = vst.msk [vmem:[%s807 + $0xe8] sm:$0xf] %vm305, %v787
          %821 = vst.msk [vmem:[%s807 + $0xec] sm:$0xf] %vm305, %v788
          %822 = vst.msk [vmem:[%s807 + $0x10c] sm:$0xf] %vm305, %v789
          %823 = vst.msk [vmem:[%s807 + $0x110] sm:$0xf] %vm305, %v790
          %824 = vst.msk [vmem:[%s807 + $0x130] sm:$0xf] %vm305, %v791
          %825 = vst.msk [vmem:[%s807 + $0x134] sm:$0xf] %vm305, %v792
          %826 = vst.msk [vmem:[%s807 + $0x154] sm:$0xf] %vm305, %v793
          %827 = vst.msk [vmem:[%s807 + $0x158] sm:$0xf] %vm305, %v794
          %828 = vst.msk [vmem:[%s807 + $0x178] sm:$0xf] %vm305, %v795
          %829 = vst.msk [vmem:[%s807 + $0x17c] sm:$0xf] %vm305, %v796
          %830 = vst.msk [vmem:[%s807 + $0x19c] sm:$0xf] %vm305, %v797
          %831 = vst.msk [vmem:[%s807 + $0x1a0] sm:$0xf] %vm305, %v798
          %832 = vst.msk [vmem:[%s807 + $0x1c0] sm:$0xf] %vm305, %v799
          %833 = vst.msk [vmem:[%s807 + $0x1c4] sm:$0xf] %vm305, %v800
          %834 = vst.msk [vmem:[%s807 + $0x1e4] sm:$0xf] %vm305, %v801
          %835 = vst.msk [vmem:[%s807 + $0x1e8] sm:$0xf] %vm305, %v802
          %836 = vst.msk [vmem:[%s807 + $0x208] sm:$0xf] %vm305, %v803
          %837 = vst.msk [vmem:[%s807 + $0x20c] sm:$0xf] %vm305, %v804
          %838 = vst.msk [vmem:[%s807 + $0x22c] sm:$0xf] %vm305, %v805
          %839 = vst.msk [vmem:[%s807 + $0x230] sm:$0xf] %vm305, %v806
        $region56: #{tpu_custom_call.1} parent=43 // pred_fallthru
          _
        %s840 = smul.u32 %s29, 8
        %s841 = sadd.s32 %s840, 12
        %s842 = smul.u32 %s841, 9
        %s843 = smul.addr %s842, 4
        %s844 = scalar_lea.vmem [#allocation2], %s843
        %v845 = vld [vmem:[%s844 + $0xc] sm:$0xe]
        %v846 = vld [vmem:[%s844 + $0x10] sm:$0xf]
        %v847 = vld [vmem:[%s844 + $0x14] sm:$0x1]
        %v848 = vld [vmem:[%s844 + $0x30] sm:$0xe]
        %v849 = vld [vmem:[%s844 + $0x34] sm:$0xf]
        %v850 = vld [vmem:[%s844 + $0x38] sm:$0x1]
        %v851 = vld [vmem:[%s844 + $0x54] sm:$0xe]
        %v852 = vld [vmem:[%s844 + $0x58] sm:$0xf]
        %v853 = vld [vmem:[%s844 + $0x5c] sm:$0x1]
        %v854 = vld [vmem:[%s844 + $0x78] sm:$0xe]
        %v855 = vld [vmem:[%s844 + $0x7c] sm:$0xf]
        %v856 = vld [vmem:[%s844 + $0x80] sm:$0x1]
        %v857 = vld [vmem:[%s844 + $0x9c] sm:$0xe]
        %v858 = vld [vmem:[%s844 + $0xa0] sm:$0xf]
        %v859 = vld [vmem:[%s844 + $0xa4] sm:$0x1]
        %v860 = vld [vmem:[%s844 + $0xc0] sm:$0xe]
        %v861 = vld [vmem:[%s844 + $0xc4] sm:$0xf]
        %v862 = vld [vmem:[%s844 + $0xc8] sm:$0x1]
        %v863 = vld [vmem:[%s844 + $0xe4] sm:$0xe]
        %v864 = vld [vmem:[%s844 + $0xe8] sm:$0xf]
        %v865 = vld [vmem:[%s844 + $0xec] sm:$0x1]
        %v866 = vld [vmem:[%s844 + $0x108] sm:$0xe]
        %v867 = vld [vmem:[%s844 + $0x10c] sm:$0xf]
        %v868 = vld [vmem:[%s844 + $0x110] sm:$0x1]
        %vm893 = vcmask 1042432
        %vm894 = vcmask 1046532
        %vm895 = vmor %vm893, %vm894
        %v896 = vrot.slane %v845, 5
        %v897 = vrot.slane %v896, 4
        %v898 = vrot.slane %v846, 5
        %v899 = vsel %vm895, %v897, %v898
        %v900 = vrot.slane %v898, 4
        %v901 = vrot.slane %v847, 5
        %v902 = vsel %vm895, %v900, %v901
        %v903 = vrot.slane %v848, 5
        %v904 = vrot.slane %v903, 4
        %v905 = vrot.slane %v849, 5
        %v906 = vsel %vm895, %v904, %v905
        %v907 = vrot.slane %v905, 4
        %v908 = vrot.slane %v850, 5
        %v909 = vsel %vm895, %v907, %v908
        %v910 = vrot.slane %v851, 5
        %v911 = vrot.slane %v910, 4
        %v912 = vrot.slane %v852, 5
        %v913 = vsel %vm895, %v911, %v912
        %v914 = vrot.slane %v912, 4
        %v915 = vrot.slane %v853, 5
        %v916 = vsel %vm895, %v914, %v915
        %v917 = vrot.slane %v854, 5
        %v918 = vrot.slane %v917, 4
        %v919 = vrot.slane %v855, 5
        %v920 = vsel %vm895, %v918, %v919
        %v921 = vrot.slane %v919, 4
        %v922 = vrot.slane %v856, 5
        %v923 = vsel %vm895, %v921, %v922
        %v924 = vrot.slane %v857, 5
        %v925 = vrot.slane %v924, 4
        %v926 = vrot.slane %v858, 5
        %v927 = vsel %vm895, %v925, %v926
        %v928 = vrot.slane %v926, 4
        %v929 = vrot.slane %v859, 5
        %v930 = vsel %vm895, %v928, %v929
        %v931 = vrot.slane %v860, 5
        %v932 = vrot.slane %v931, 4
        %v933 = vrot.slane %v861, 5
        %v934 = vsel %vm895, %v932, %v933
        %v935 = vrot.slane %v933, 4
        %v936 = vrot.slane %v862, 5
        %v937 = vsel %vm895, %v935, %v936
        %v938 = vrot.slane %v863, 5
        %v939 = vrot.slane %v938, 4
        %v940 = vrot.slane %v864, 5
        %v941 = vsel %vm895, %v939, %v940
        %v942 = vrot.slane %v940, 4
        %v943 = vrot.slane %v865, 5
        %v944 = vsel %vm895, %v942, %v943
        %v945 = vrot.slane %v866, 5
        %v946 = vrot.slane %v945, 4
        %v947 = vrot.slane %v867, 5
        %v948 = vsel %vm895, %v946, %v947
        %v949 = vrot.slane %v947, 4
        %v950 = vrot.slane %v868, 5
        %v951 = vsel %vm895, %v949, %v950
        %v952 = vld [vmem:[#allocation6] sm:$0xf]
        %v953 = vld [vmem:[#allocation6 + $0x4] sm:$0xf]
        %v954 = vld [vmem:[#allocation6 + $0x8] sm:$0xf]
        %v955 = vld [vmem:[#allocation6 + $0xc] sm:$0xf]
        %v956 = vld [vmem:[%s844 + $0x14] sm:$0xf]
        %v957 = vld [vmem:[%s844 + $0x38] sm:$0xf]
        %v958 = vld [vmem:[%s844 + $0x5c] sm:$0xf]
        %v959 = vld [vmem:[%s844 + $0x80] sm:$0xf]
        %v960 = vld [vmem:[%s844 + $0xa4] sm:$0xf]
        %v961 = vld [vmem:[%s844 + $0xc8] sm:$0xf]
        %v962 = vld [vmem:[%s844 + $0xec] sm:$0xf]
        %v963 = vld [vmem:[%s844 + $0x110] sm:$0xf]
        %s964 = scalar_lea.vmem [#allocation6], 16
        %v965 = vld [vmem:[%s964] sm:$0xf]
        %v966 = vld [vmem:[%s964 + $0x4] sm:$0xf]
        %v967 = vld [vmem:[%s964 + $0x8] sm:$0xf]
        %v968 = vld [vmem:[%s964 + $0xc] sm:$0xf]
        %v977 = vunpack.c.l.b16 %v846
        %v978 = vunpack.c.l.b16 %v956
        %v979 = vunpack.c.l.b16 %v849
        %v980 = vunpack.c.l.b16 %v957
        %v981 = vunpack.c.l.b16 %v852
        %v982 = vunpack.c.l.b16 %v958
        %v983 = vunpack.c.l.b16 %v855
        %v984 = vunpack.c.l.b16 %v959
        %v985 = vunpack.c.l.b16 %v858
        %v986 = vunpack.c.l.b16 %v960
        %v987 = vunpack.c.l.b16 %v861
        %v988 = vunpack.c.l.b16 %v961
        %v989 = vunpack.c.l.b16 %v864
        %v990 = vunpack.c.l.b16 %v962
        %v991 = vunpack.c.l.b16 %v867
        %v992 = vunpack.c.l.b16 %v963
        %v993 = vpack.c.b16 %v978, %v977
        %v994 = vpack.c.b16 %v980, %v979
        %v995 = vpack.c.b16 %v982, %v981
        %v996 = vpack.c.b16 %v984, %v983
        %v997 = vpack.c.b16 %v986, %v985
        %v998 = vpack.c.b16 %v988, %v987
        %v999 = vpack.c.b16 %v990, %v989
        %v1000 = vpack.c.b16 %v992, %v991
        %v1005 = vunpack.c.l.b16 %v965
        %v1006 = vunpack.c.l.b16 %v966
        %v1007 = vunpack.c.l.b16 %v967
        %v1008 = vunpack.c.l.b16 %v968
        %v1009 = vpack.c.b16 %v1006, %v1005
        %v1010 = vpack.c.b16 %v1008, %v1007
        %vm1013 = vcmask 261120
        %v1015 = vsel %vm1013, %v993, 0
        %v1018 = vsel %vm1013, %v994, 0
        %v1021 = vsel %vm1013, %v995, 0
        %v1024 = vsel %vm1013, %v996, 0
        %v1027 = vsel %vm1013, %v997, 0
        %v1030 = vsel %vm1013, %v998, 0
        %v1033 = vsel %vm1013, %v999, 0
        %v1036 = vsel %vm1013, %v1000, 0
        %1038 = vmatprep.subr.bf16.mxu0 0
        %1039 = vmatpush1.bf16.msra.mxu0 %v1009
        %1040 = vmatprep.subr.bf16.mxu0 0
        %1041 = vmatpush1.bf16.msra.mxu0 %v1010
        %1042 = vmatprep.subr.bf16.mxu0 0
        %1043 = vmatpush1.bf16.msra.mxu0 0
        %1044 = vmatprep.subr.bf16.mxu0 0
        %1045 = vmatpush1.bf16.msra.mxu0 0
        %1046 = vmatprep.subr.bf16.mxu0 0
        %1047 = vmatpush1.bf16.msra.mxu0 0
        %1048 = vmatprep.subr.bf16.mxu0 0
        %1049 = vmatpush1.bf16.msra.mxu0 0
        %1050 = vmatprep.subr.bf16.mxu0 0
        %1051 = vmatpush1.bf16.msra.mxu0 0
        %1052 = vmatprep.subr.bf16.mxu0 0
        %1053 = vmatpush1.bf16.msra.mxu0 0
        %1054 = vmatprep.subr.bf16.mxu0 0
        %1055 = vmatpush1.bf16.msra.mxu0 0
        %1056 = vmatprep.subr.bf16.mxu0 0
        %1057 = vmatpush1.bf16.msra.mxu0 0
        %1058 = vmatprep.subr.bf16.mxu0 0
        %1059 = vmatpush1.bf16.msra.mxu0 0
        %1060 = vmatprep.subr.bf16.mxu0 0
        %1061 = vmatpush1.bf16.msra.mxu0 0
        %1062 = vmatprep.subr.bf16.mxu0 0
        %1063 = vmatpush1.bf16.msra.mxu0 0
        %1064 = vmatprep.subr.bf16.mxu0 0
        %1065 = vmatpush1.bf16.msra.mxu0 0
        %1066 = vmatprep.subr.bf16.mxu0 0
        %1067 = vmatpush1.bf16.msra.mxu0 0
        %1068 = vmatprep.subr.bf16.mxu0 0
        %1069 = vmatpush1.bf16.msra.mxu0 0
        %1070 = vmatprep.mubr.bf16.mxu0 0
        %1071 = vmatmul.mubr.bf16.gmra.mrb[0].mxu0 %v1015
        %v1072 = vpop.f32.mrb[0].mxu0
        %v1073 = vadd.f32 0.0, %v1072
        %v1074 = vpop.f32.mrb[0].mxu0
        %v1075 = vpop.f32.mrb[0].mxu0
        %v1076 = vadd.f32 0.0, %v1075
        %v1077 = vpop.f32.mrb[0].mxu0
        %1078 = vmatprep.mubr.bf16.mxu0 0
        %1079 = vmatmul.mubr.bf16.gmra.mrb[0].mxu0 %v1018
        %v1080 = vpop.f32.mrb[0].mxu0
        %v1081 = vadd.f32 0.0, %v1080
        %v1082 = vpop.f32.mrb[0].mxu0
        %v1083 = vpop.f32.mrb[0].mxu0
        %v1084 = vadd.f32 0.0, %v1083
        %v1085 = vpop.f32.mrb[0].mxu0
        %1086 = vmatprep.mubr.bf16.mxu0 0
        %1087 = vmatmul.mubr.bf16.gmra.mrb[0].mxu0 %v1021
        %v1088 = vpop.f32.mrb[0].mxu0
        %v1089 = vadd.f32 0.0, %v1088
        %v1090 = vpop.f32.mrb[0].mxu0
        %v1091 = vpop.f32.mrb[0].mxu0
        %v1092 = vadd.f32 0.0, %v1091
        %v1093 = vpop.f32.mrb[0].mxu0
        %1094 = vmatprep.mubr.bf16.mxu0 0
        %1095 = vmatmul.mubr.bf16.gmra.mrb[0].mxu0 %v1024
        %v1096 = vpop.f32.mrb[0].mxu0
        %v1097 = vadd.f32 0.0, %v1096
        %v1098 = vpop.f32.mrb[0].mxu0
        %v1099 = vpop.f32.mrb[0].mxu0
        %v1100 = vadd.f32 0.0, %v1099
        %v1101 = vpop.f32.mrb[0].mxu0
        %1102 = vmatprep.mubr.bf16.mxu0 0
        %1103 = vmatmul.mubr.bf16.gmra.mrb[0].mxu0 %v1027
        %v1104 = vpop.f32.mrb[0].mxu0
        %v1105 = vadd.f32 0.0, %v1104
        %v1106 = vpop.f32.mrb[0].mxu0
        %v1107 = vpop.f32.mrb[0].mxu0
        %v1108 = vadd.f32 0.0, %v1107
        %v1109 = vpop.f32.mrb[0].mxu0
        %1110 = vmatprep.mubr.bf16.mxu0 0
        %1111 = vmatmul.mubr.bf16.gmra.mrb[0].mxu0 %v1030
        %v1112 = vpop.f32.mrb[0].mxu0
        %v1113 = vadd.f32 0.0, %v1112
        %v1114 = vpop.f32.mrb[0].mxu0
        %v1115 = vpop.f32.mrb[0].mxu0
        %v1116 = vadd.f32 0.0, %v1115
        %v1117 = vpop.f32.mrb[0].mxu0
        %1118 = vmatprep.mubr.bf16.mxu0 0
        %1119 = vmatmul.mubr.bf16.gmra.mrb[0].mxu0 %v1033
        %v1120 = vpop.f32.mrb[0].mxu0
        %v1121 = vadd.f32 0.0, %v1120
        %v1122 = vpop.f32.mrb[0].mxu0
        %v1123 = vpop.f32.mrb[0].mxu0
        %v1124 = vadd.f32 0.0, %v1123
        %v1125 = vpop.f32.mrb[0].mxu0
        %1126 = vmatprep.mubr.bf16.mxu0 0
        %1127 = vmatmul.mubr.bf16.gmra.mrb[0].mxu0 %v1036
        %v1128 = vpop.f32.mrb[0].mxu0
        %v1129 = vadd.f32 0.0, %v1128
        %v1130 = vpop.f32.mrb[0].mxu0
        %v1131 = vpop.f32.mrb[0].mxu0
        %v1132 = vadd.f32 0.0, %v1131
        %v1133 = vpop.f32.mrb[0].mxu0
        %1134 = vdwg.mxu0
        %v1135 = vunpack.c.l.b16 %v899
        %v1136 = vunpack.c.l.b16 %v902
        %v1137 = vunpack.c.l.b16 %v906
        %v1138 = vunpack.c.l.b16 %v909
        %v1139 = vunpack.c.l.b16 %v913
        %v1140 = vunpack.c.l.b16 %v916
        %v1141 = vunpack.c.l.b16 %v920
        %v1142 = vunpack.c.l.b16 %v923
        %v1143 = vunpack.c.l.b16 %v927
        %v1144 = vunpack.c.l.b16 %v930
        %v1145 = vunpack.c.l.b16 %v934
        %v1146 = vunpack.c.l.b16 %v937
        %v1147 = vunpack.c.l.b16 %v941
        %v1148 = vunpack.c.l.b16 %v944
        %v1149 = vunpack.c.l.b16 %v948
        %v1150 = vunpack.c.l.b16 %v951
        %v1151 = vpack.c.b16 %v1136, %v1135
        %v1152 = vpack.c.b16 %v1138, %v1137
        %v1153 = vpack.c.b16 %v1140, %v1139
        %v1154 = vpack.c.b16 %v1142, %v1141
        %v1155 = vpack.c.b16 %v1144, %v1143
        %v1156 = vpack.c.b16 %v1146, %v1145
        %v1157 = vpack.c.b16 %v1148, %v1147
        %v1158 = vpack.c.b16 %v1150, %v1149
        %v1163 = vunpack.c.l.b16 %v952
        %v1164 = vunpack.c.l.b16 %v953
        %v1165 = vunpack.c.l.b16 %v954
        %v1166 = vunpack.c.l.b16 %v955
        %v1167 = vpack.c.b16 %v1164, %v1163
        %v1168 = vpack.c.b16 %v1166, %v1165
        %v1172 = vsel %vm1013, %v1151, 0
        %v1175 = vsel %vm1013, %v1152, 0
        %v1178 = vsel %vm1013, %v1153, 0
        %v1181 = vsel %vm1013, %v1154, 0
        %v1184 = vsel %vm1013, %v1155, 0
        %v1187 = vsel %vm1013, %v1156, 0
        %v1190 = vsel %vm1013, %v1157, 0
        %v1193 = vsel %vm1013, %v1158, 0
        %1195 = vmatprep.subr.bf16.mxu0 0
        %1196 = vmatpush1.bf16.msra.mxu0 %v1167
        %1197 = vmatprep.subr.bf16.mxu0 0
        %1198 = vmatpush1.bf16.msra.mxu0 %v1168
        %1199 = vmatprep.subr.bf16.mxu0 0
        %1200 = vmatpush1.bf16.msra.mxu0 0
        %1201 = vmatprep.subr.bf16.mxu0 0
        %1202 = vmatpush1.bf16.msra.mxu0 0
        %1203 = vmatprep.subr.bf16.mxu0 0
        %1204 = vmatpush1.bf16.msra.mxu0 0
        %1205 = vmatprep.subr.bf16.mxu0 0
        %1206 = vmatpush1.bf16.msra.mxu0 0
        %1207 = vmatprep.subr.bf16.mxu0 0
        %1208 = vmatpush1.bf16.msra.mxu0 0
        %1209 = vmatprep.subr.bf16.mxu0 0
        %1210 = vmatpush1.bf16.msra.mxu0 0
        %1211 = vmatprep.subr.bf16.mxu0 0
        %1212 = vmatpush1.bf16.msra.mxu0 0
        %1213 = vmatprep.subr.bf16.mxu0 0
        %1214 = vmatpush1.bf16.msra.mxu0 0
        %1215 = vmatprep.subr.bf16.mxu0 0
        %1216 = vmatpush1.bf16.msra.mxu0 0
        %1217 = vmatprep.subr.bf16.mxu0 0
        %1218 = vmatpush1.bf16.msra.mxu0 0
        %1219 = vmatprep.subr.bf16.mxu0 0
        %1220 = vmatpush1.bf16.msra.mxu0 0
        %1221 = vmatprep.subr.bf16.mxu0 0
        %1222 = vmatpush1.bf16.msra.mxu0 0
        %1223 = vmatprep.subr.bf16.mxu0 0
        %1224 = vmatpush1.bf16.msra.mxu0 0
        %1225 = vmatprep.subr.bf16.mxu0 0
        %1226 = vmatpush1.bf16.msra.mxu0 0
        %1227 = vmatprep.mubr.bf16.mxu0 0
        %1228 = vmatmul.mubr.bf16.gmra.mrb[0].mxu0 %v1172
        %v1229 = vpop.f32.mrb[0].mxu0
        %v1230 = vadd.f32 %v1073, %v1229
        %v1231 = vpop.f32.mrb[0].mxu0
        %v1232 = vpop.f32.mrb[0].mxu0
        %v1233 = vadd.f32 %v1076, %v1232
        %v1234 = vpop.f32.mrb[0].mxu0
        %1235 = vmatprep.mubr.bf16.mxu0 0
        %1236 = vmatmul.mubr.bf16.gmra.mrb[0].mxu0 %v1175
        %v1237 = vpop.f32.mrb[0].mxu0
        %v1238 = vadd.f32 %v1081, %v1237
        %v1239 = vpop.f32.mrb[0].mxu0
        %v1240 = vpop.f32.mrb[0].mxu0
        %v1241 = vadd.f32 %v1084, %v1240
        %v1242 = vpop.f32.mrb[0].mxu0
        %1243 = vmatprep.mubr.bf16.mxu0 0
        %1244 = vmatmul.mubr.bf16.gmra.mrb[0].mxu0 %v1178
        %v1245 = vpop.f32.mrb[0].mxu0
        %v1246 = vadd.f32 %v1089, %v1245
        %v1247 = vpop.f32.mrb[0].mxu0
        %v1248 = vpop.f32.mrb[0].mxu0
        %v1249 = vadd.f32 %v1092, %v1248
        %v1250 = vpop.f32.mrb[0].mxu0
        %1251 = vmatprep.mubr.bf16.mxu0 0
        %1252 = vmatmul.mubr.bf16.gmra.mrb[0].mxu0 %v1181
        %v1253 = vpop.f32.mrb[0].mxu0
        %v1254 = vadd.f32 %v1097, %v1253
        %v1255 = vpop.f32.mrb[0].mxu0
        %v1256 = vpop.f32.mrb[0].mxu0
        %v1257 = vadd.f32 %v1100, %v1256
        %v1258 = vpop.f32.mrb[0].mxu0
        %1259 = vmatprep.mubr.bf16.mxu0 0
        %1260 = vmatmul.mubr.bf16.gmra.mrb[0].mxu0 %v1184
        %v1261 = vpop.f32.mrb[0].mxu0
        %v1262 = vadd.f32 %v1105, %v1261
        %v1263 = vpop.f32.mrb[0].mxu0
        %v1264 = vpop.f32.mrb[0].mxu0
        %v1265 = vadd.f32 %v1108, %v1264
        %v1266 = vpop.f32.mrb[0].mxu0
        %1267 = vmatprep.mubr.bf16.mxu0 0
        %1268 = vmatmul.mubr.bf16.gmra.mrb[0].mxu0 %v1187
        %v1269 = vpop.f32.mrb[0].mxu0
        %v1270 = vadd.f32 %v1113, %v1269
        %v1271 = vpop.f32.mrb[0].mxu0
        %v1272 = vpop.f32.mrb[0].mxu0
        %v1273 = vadd.f32 %v1116, %v1272
        %v1274 = vpop.f32.mrb[0].mxu0
        %1275 = vmatprep.mubr.bf16.mxu0 0
        %1276 = vmatmul.mubr.bf16.gmra.mrb[0].mxu0 %v1190
        %v1277 = vpop.f32.mrb[0].mxu0
        %v1278 = vadd.f32 %v1121, %v1277
        %v1279 = vpop.f32.mrb[0].mxu0
        %v1280 = vpop.f32.mrb[0].mxu0
        %v1281 = vadd.f32 %v1124, %v1280
        %v1282 = vpop.f32.mrb[0].mxu0
        %1283 = vmatprep.mubr.bf16.mxu0 0
        %1284 = vmatmul.mubr.bf16.gmra.mrb[0].mxu0 %v1193
        %v1285 = vpop.f32.mrb[0].mxu0
        %v1286 = vadd.f32 %v1129, %v1285
        %v1287 = vpop.f32.mrb[0].mxu0
        %v1288 = vpop.f32.mrb[0].mxu0
        %v1289 = vadd.f32 %v1132, %v1288
        %v1290 = vpop.f32.mrb[0].mxu0
        %1291 = vdwg.mxu0
        %v1292 = vld [vmem:[%s844 + $0x10] sm:$0x8]
        %v1293 = vld [vmem:[%s844 + $0x14] sm:$0xf]
        %v1294 = vld [vmem:[%s844 + $0x18] sm:$0x7]
        %v1295 = vld [vmem:[%s844 + $0x34] sm:$0x8]
        %v1296 = vld [vmem:[%s844 + $0x38] sm:$0xf]
        %v1297 = vld [vmem:[%s844 + $0x3c] sm:$0x7]
        %v1298 = vld [vmem:[%s844 + $0x58] sm:$0x8]
        %v1299 = vld [vmem:[%s844 + $0x5c] sm:$0xf]
        %v1300 = vld [vmem:[%s844 + $0x60] sm:$0x7]
        %v1301 = vld [vmem:[%s844 + $0x7c] sm:$0x8]
        %v1302 = vld [vmem:[%s844 + $0x80] sm:$0xf]
        %v1303 = vld [vmem:[%s844 + $0x84] sm:$0x7]
        %v1304 = vld [vmem:[%s844 + $0xa0] sm:$0x8]
        %v1305 = vld [vmem:[%s844 + $0xa4] sm:$0xf]
        %v1306 = vld [vmem:[%s844 + $0xa8] sm:$0x7]
        %v1307 = vld [vmem:[%s844 + $0xc4] sm:$0x8]
        %v1308 = vld [vmem:[%s844 + $0xc8] sm:$0xf]
        %v1309 = vld [vmem:[%s844 + $0xcc] sm:$0x7]
        %v1310 = vld [vmem:[%s844 + $0xe8] sm:$0x8]
        %v1311 = vld [vmem:[%s844 + $0xec] sm:$0xf]
        %v1312 = vld [vmem:[%s844 + $0xf0] sm:$0x7]
        %v1313 = vld [vmem:[%s844 + $0x10c] sm:$0x8]
        %v1314 = vld [vmem:[%s844 + $0x110] sm:$0xf]
        %v1315 = vld [vmem:[%s844 + $0x114] sm:$0x7]
        %vm1340 = vcmask 1040384
        %vm1341 = vcmask 1044484
        %vm1342 = vmor %vm1340, %vm1341
        %v1343 = vrot.slane %v1292, 7
        %v1344 = vrot.slane %v1343, 4
        %v1345 = vrot.slane %v1293, 7
        %v1346 = vsel %vm1342, %v1344, %v1345
        %v1347 = vrot.slane %v1345, 4
        %v1348 = vrot.slane %v1294, 7
        %v1349 = vsel %vm1342, %v1347, %v1348
        %v1350 = vrot.slane %v1295, 7
        %v1351 = vrot.slane %v1350, 4
        %v1352 = vrot.slane %v1296, 7
        %v1353 = vsel %vm1342, %v1351, %v1352
        %v1354 = vrot.slane %v1352, 4
        %v1355 = vrot.slane %v1297, 7
        %v1356 = vsel %vm1342, %v1354, %v1355
        %v1357 = vrot.slane %v1298, 7
        %v1358 = vrot.slane %v1357, 4
        %v1359 = vrot.slane %v1299, 7
        %v1360 = vsel %vm1342, %v1358, %v1359
        %v1361 = vrot.slane %v1359, 4
        %v1362 = vrot.slane %v1300, 7
        %v1363 = vsel %vm1342, %v1361, %v1362
        %v1364 = vrot.slane %v1301, 7
        %v1365 = vrot.slane %v1364, 4
        %v1366 = vrot.slane %v1302, 7
        %v1367 = vsel %vm1342, %v1365, %v1366
        %v1368 = vrot.slane %v1366, 4
        %v1369 = vrot.slane %v1303, 7
        %v1370 = vsel %vm1342, %v1368, %v1369
        %v1371 = vrot.slane %v1304, 7
        %v1372 = vrot.slane %v1371, 4
        %v1373 = vrot.slane %v1305, 7
        %v1374 = vsel %vm1342, %v1372, %v1373
        %v1375 = vrot.slane %v1373, 4
        %v1376 = vrot.slane %v1306, 7
        %v1377 = vsel %vm1342, %v1375, %v1376
        %v1378 = vrot.slane %v1307, 7
        %v1379 = vrot.slane %v1378, 4
        %v1380 = vrot.slane %v1308, 7
        %v1381 = vsel %vm1342, %v1379, %v1380
        %v1382 = vrot.slane %v1380, 4
        %v1383 = vrot.slane %v1309, 7
        %v1384 = vsel %vm1342, %v1382, %v1383
        %v1385 = vrot.slane %v1310, 7
        %v1386 = vrot.slane %v1385, 4
        %v1387 = vrot.slane %v1311, 7
        %v1388 = vsel %vm1342, %v1386, %v1387
        %v1389 = vrot.slane %v1387, 4
        %v1390 = vrot.slane %v1312, 7
        %v1391 = vsel %vm1342, %v1389, %v1390
        %v1392 = vrot.slane %v1313, 7
        %v1393 = vrot.slane %v1392, 4
        %v1394 = vrot.slane %v1314, 7
        %v1395 = vsel %vm1342, %v1393, %v1394
        %v1396 = vrot.slane %v1394, 4
        %v1397 = vrot.slane %v1315, 7
        %v1398 = vsel %vm1342, %v1396, %v1397
        %s1399 = scalar_lea.vmem [#allocation6], 32
        %v1400 = vld [vmem:[%s1399] sm:$0xf]
        %v1401 = vld [vmem:[%s1399 + $0x4] sm:$0xf]
        %v1402 = vld [vmem:[%s1399 + $0x8] sm:$0xf]
        %v1403 = vld [vmem:[%s1399 + $0xc] sm:$0xf]
        %v1404 = vunpack.c.l.b16 %v1346
        %v1405 = vunpack.c.l.b16 %v1349
        %v1406 = vunpack.c.l.b16 %v1353
        %v1407 = vunpack.c.l.b16 %v1356
        %v1408 = vunpack.c.l.b16 %v1360
        %v1409 = vunpack.c.l.b16 %v1363
        %v1410 = vunpack.c.l.b16 %v1367
        %v1411 = vunpack.c.l.b16 %v1370
        %v1412 = vunpack.c.l.b16 %v1374
        %v1413 = vunpack.c.l.b16 %v1377
        %v1414 = vunpack.c.l.b16 %v1381
        %v1415 = vunpack.c.l.b16 %v1384
        %v1416 = vunpack.c.l.b16 %v1388
        %v1417 = vunpack.c.l.b16 %v1391
        %v1418 = vunpack.c.l.b16 %v1395
        %v1419 = vunpack.c.l.b16 %v1398
        %v1420 = vpack.c.b16 %v1405, %v1404
        %v1421 = vpack.c.b16 %v1407, %v1406
        %v1422 = vpack.c.b16 %v1409, %v1408
        %v1423 = vpack.c.b16 %v1411, %v1410
        %v1424 = vpack.c.b16 %v1413, %v1412
        %v1425 = vpack.c.b16 %v1415, %v1414
        %v1426 = vpack.c.b16 %v1417, %v1416
        %v1427 = vpack.c.b16 %v1419, %v1418
        %v1432 = vunpack.c.l.b16 %v1400
        %v1433 = vunpack.c.l.b16 %v1401
        %v1434 = vunpack.c.l.b16 %v1402
        %v1435 = vunpack.c.l.b16 %v1403
        %v1436 = vpack.c.b16 %v1433, %v1432
        %v1437 = vpack.c.b16 %v1435, %v1434
        %v1441 = vsel %vm1013, %v1420, 0
        %v1444 = vsel %vm1013, %v1421, 0
        %v1447 = vsel %vm1013, %v1422, 0
        %v1450 = vsel %vm1013, %v1423, 0
        %v1453 = vsel %vm1013, %v1424, 0
        %v1456 = vsel %vm1013, %v1425, 0
        %v1459 = vsel %vm1013, %v1426, 0
        %v1462 = vsel %vm1013, %v1427, 0
        %1464 = vmatprep.subr.bf16.mxu0 0
        %1465 = vmatpush1.bf16.msra.mxu0 %v1436
        %1466 = vmatprep.subr.bf16.mxu0 0
        %1467 = vmatpush1.bf16.msra.mxu0 %v1437
        %1468 = vmatprep.subr.bf16.mxu0 0
        %1469 = vmatpush1.bf16.msra.mxu0 0
        %1470 = vmatprep.subr.bf16.mxu0 0
        %1471 = vmatpush1.bf16.msra.mxu0 0
        %1472 = vmatprep.subr.bf16.mxu0 0
        %1473 = vmatpush1.bf16.msra.mxu0 0
        %1474 = vmatprep.subr.bf16.mxu0 0
        %1475 = vmatpush1.bf16.msra.mxu0 0
        %1476 = vmatprep.subr.bf16.mxu0 0
        %1477 = vmatpush1.bf16.msra.mxu0 0
        %1478 = vmatprep.subr.bf16.mxu0 0
        %1479 = vmatpush1.bf16.msra.mxu0 0
        %1480 = vmatprep.subr.bf16.mxu0 0
        %1481 = vmatpush1.bf16.msra.mxu0 0
        %1482 = vmatprep.subr.bf16.mxu0 0
        %1483 = vmatpush1.bf16.msra.mxu0 0
        %1484 = vmatprep.subr.bf16.mxu0 0
        %1485 = vmatpush1.bf16.msra.mxu0 0
        %1486 = vmatprep.subr.bf16.mxu0 0
        %1487 = vmatpush1.bf16.msra.mxu0 0
        %1488 = vmatprep.subr.bf16.mxu0 0
        %1489 = vmatpush1.bf16.msra.mxu0 0
        %1490 = vmatprep.subr.bf16.mxu0 0
        %1491 = vmatpush1.bf16.msra.mxu0 0
        %1492 = vmatprep.subr.bf16.mxu0 0
        %1493 = vmatpush1.bf16.msra.mxu0 0
        %1494 = vmatprep.subr.bf16.mxu0 0
        %1495 = vmatpush1.bf16.msra.mxu0 0
        %1496 = vmatprep.mubr.bf16.mxu0 0
        %1497 = vmatmul.mubr.bf16.gmra.mrb[0].mxu0 %v1441
        %v1498 = vpop.f32.mrb[0].mxu0
        %v1499 = vadd.f32 0.0, %v1498
        %v1500 = vpop.f32.mrb[0].mxu0
        %v1501 = vpop.f32.mrb[0].mxu0
        %v1502 = vadd.f32 0.0, %v1501
        %v1503 = vpop.f32.mrb[0].mxu0
        %1504 = vmatprep.mubr.bf16.mxu0 0
        %1505 = vmatmul.mubr.bf16.gmra.mrb[0].mxu0 %v1444
        %v1506 = vpop.f32.mrb[0].mxu0
        %v1507 = vadd.f32 0.0, %v1506
        %v1508 = vpop.f32.mrb[0].mxu0
        %v1509 = vpop.f32.mrb[0].mxu0
        %v1510 = vadd.f32 0.0, %v1509
        %v1511 = vpop.f32.mrb[0].mxu0
        %1512 = vmatprep.mubr.bf16.mxu0 0
        %1513 = vmatmul.mubr.bf16.gmra.mrb[0].mxu0 %v1447
        %v1514 = vpop.f32.mrb[0].mxu0
        %v1515 = vadd.f32 0.0, %v1514
        %v1516 = vpop.f32.mrb[0].mxu0
        %v1517 = vpop.f32.mrb[0].mxu0
        %v1518 = vadd.f32 0.0, %v1517
        %v1519 = vpop.f32.mrb[0].mxu0
        %1520 = vmatprep.mubr.bf16.mxu0 0
        %1521 = vmatmul.mubr.bf16.gmra.mrb[0].mxu0 %v1450
        %v1522 = vpop.f32.mrb[0].mxu0
        %v1523 = vadd.f32 0.0, %v1522
        %v1524 = vpop.f32.mrb[0].mxu0
        %v1525 = vpop.f32.mrb[0].mxu0
        %v1526 = vadd.f32 0.0, %v1525
        %v1527 = vpop.f32.mrb[0].mxu0
        %1528 = vmatprep.mubr.bf16.mxu0 0
        %1529 = vmatmul.mubr.bf16.gmra.mrb[0].mxu0 %v1453
        %v1530 = vpop.f32.mrb[0].mxu0
        %v1531 = vadd.f32 0.0, %v1530
        %v1532 = vpop.f32.mrb[0].mxu0
        %v1533 = vpop.f32.mrb[0].mxu0
        %v1534 = vadd.f32 0.0, %v1533
        %v1535 = vpop.f32.mrb[0].mxu0
        %1536 = vmatprep.mubr.bf16.mxu0 0
        %1537 = vmatmul.mubr.bf16.gmra.mrb[0].mxu0 %v1456
        %v1538 = vpop.f32.mrb[0].mxu0
        %v1539 = vadd.f32 0.0, %v1538
        %v1540 = vpop.f32.mrb[0].mxu0
        %v1541 = vpop.f32.mrb[0].mxu0
        %v1542 = vadd.f32 0.0, %v1541
        %v1543 = vpop.f32.mrb[0].mxu0
        %1544 = vmatprep.mubr.bf16.mxu0 0
        %1545 = vmatmul.mubr.bf16.gmra.mrb[0].mxu0 %v1459
        %v1546 = vpop.f32.mrb[0].mxu0
        %v1547 = vadd.f32 0.0, %v1546
        %v1548 = vpop.f32.mrb[0].mxu0
        %v1549 = vpop.f32.mrb[0].mxu0
        %v1550 = vadd.f32 0.0, %v1549
        %v1551 = vpop.f32.mrb[0].mxu0
        %1552 = vmatprep.mubr.bf16.mxu0 0
        %1553 = vmatmul.mubr.bf16.gmra.mrb[0].mxu0 %v1462
        %v1554 = vpop.f32.mrb[0].mxu0
        %v1555 = vadd.f32 0.0, %v1554
        %v1556 = vpop.f32.mrb[0].mxu0
        %v1557 = vpop.f32.mrb[0].mxu0
        %v1558 = vadd.f32 0.0, %v1557
        %v1559 = vpop.f32.mrb[0].mxu0
        %1560 = vdwg.mxu0
        %v1561 = vadd.f32 %v1230, %v1499
        %v1562 = vadd.f32 %v1233, %v1502
        %v1563 = vadd.f32 %v1238, %v1507
        %v1564 = vadd.f32 %v1241, %v1510
        %v1565 = vadd.f32 %v1246, %v1515
        %v1566 = vadd.f32 %v1249, %v1518
        %v1567 = vadd.f32 %v1254, %v1523
        %v1568 = vadd.f32 %v1257, %v1526
        %v1569 = vadd.f32 %v1262, %v1531
        %v1570 = vadd.f32 %v1265, %v1534
        %v1571 = vadd.f32 %v1270, %v1539
        %v1572 = vadd.f32 %v1273, %v1542
        %v1573 = vadd.f32 %v1278, %v1547
        %v1574 = vadd.f32 %v1281, %v1550
        %v1575 = vadd.f32 %v1286, %v1555
        %v1576 = vadd.f32 %v1289, %v1558
        %s1577 = sadd.s32 %s840, 18
        %s1578 = smul.u32 %s1577, 9
        %s1579 = smul.addr %s1578, 4
        %s1580 = scalar_lea.vmem [#allocation2], %s1579
        %v1581 = vld [vmem:[%s1580 + $0xc] sm:$0xe]
        %v1582 = vld [vmem:[%s1580 + $0x10] sm:$0xf]
        %v1583 = vld [vmem:[%s1580 + $0x14] sm:$0x1]
        %v1584 = vld [vmem:[%s1580 + $0x30] sm:$0xe]
        %v1585 = vld [vmem:[%s1580 + $0x34] sm:$0xf]
        %v1586 = vld [vmem:[%s1580 + $0x38] sm:$0x1]
        %v1587 = vld [vmem:[%s1580 + $0x54] sm:$0xe]
        %v1588 = vld [vmem:[%s1580 + $0x58] sm:$0xf]
        %v1589 = vld [vmem:[%s1580 + $0x5c] sm:$0x1]
        %v1590 = vld [vmem:[%s1580 + $0x78] sm:$0xe]
        %v1591 = vld [vmem:[%s1580 + $0x7c] sm:$0xf]
        %v1592 = vld [vmem:[%s1580 + $0x80] sm:$0x1]
        %v1593 = vld [vmem:[%s1580 + $0x9c] sm:$0xe]
        %v1594 = vld [vmem:[%s1580 + $0xa0] sm:$0xf]
        %v1595 = vld [vmem:[%s1580 + $0xa4] sm:$0x1]
        %v1596 = vld [vmem:[%s1580 + $0xc0] sm:$0xe]
        %v1597 = vld [vmem:[%s1580 + $0xc4] sm:$0xf]
        %v1598 = vld [vmem:[%s1580 + $0xc8] sm:$0x1]
        %v1599 = vld [vmem:[%s1580 + $0xe4] sm:$0xe]
        %v1600 = vld [vmem:[%s1580 + $0xe8] sm:$0xf]
        %v1601 = vld [vmem:[%s1580 + $0xec] sm:$0x1]
        %v1602 = vld [vmem:[%s1580 + $0x108] sm:$0xe]
        %v1603 = vld [vmem:[%s1580 + $0x10c] sm:$0xf]
        %v1604 = vld [vmem:[%s1580 + $0x110] sm:$0x1]
        %v1629 = vrot.slane %v1581, 5
        %v1630 = vrot.slane %v1629, 4
        %v1631 = vrot.slane %v1582, 5
        %v1632 = vsel %vm895, %v1630, %v1631
        %v1633 = vrot.slane %v1631, 4
        %v1634 = vrot.slane %v1583, 5
        %v1635 = vsel %vm895, %v1633, %v1634
        %v1636 = vrot.slane %v1584, 5
        %v1637 = vrot.slane %v1636, 4
        %v1638 = vrot.slane %v1585, 5
        %v1639 = vsel %vm895, %v1637, %v1638
        %v1640 = vrot.slane %v1638, 4
        %v1641 = vrot.slane %v1586, 5
        %v1642 = vsel %vm895, %v1640, %v1641
        %v1643 = vrot.slane %v1587, 5
        %v1644 = vrot.slane %v1643, 4
        %v1645 = vrot.slane %v1588, 5
        %v1646 = vsel %vm895, %v1644, %v1645
        %v1647 = vrot.slane %v1645, 4
        %v1648 = vrot.slane %v1589, 5
        %v1649 = vsel %vm895, %v1647, %v1648
        %v1650 = vrot.slane %v1590, 5
        %v1651 = vrot.slane %v1650, 4
        %v1652 = vrot.slane %v1591, 5
        %v1653 = vsel %vm895, %v1651, %v1652
        %v1654 = vrot.slane %v1652, 4
        %v1655 = vrot.slane %v1592, 5
        %v1656 = vsel %vm895, %v1654, %v1655
        %v1657 = vrot.slane %v1593, 5
        %v1658 = vrot.slane %v1657, 4
        %v1659 = vrot.slane %v1594, 5
        %v1660 = vsel %vm895, %v1658, %v1659
        %v1661 = vrot.slane %v1659, 4
        %v1662 = vrot.slane %v1595, 5
        %v1663 = vsel %vm895, %v1661, %v1662
        %v1664 = vrot.slane %v1596, 5
        %v1665 = vrot.slane %v1664, 4
        %v1666 = vrot.slane %v1597, 5
        %v1667 = vsel %vm895, %v1665, %v1666
        %v1668 = vrot.slane %v1666, 4
        %v1669 = vrot.slane %v1598, 5
        %v1670 = vsel %vm895, %v1668, %v1669
        %v1671 = vrot.slane %v1599, 5
        %v1672 = vrot.slane %v1671, 4
        %v1673 = vrot.slane %v1600, 5
        %v1674 = vsel %vm895, %v1672, %v1673
        %v1675 = vrot.slane %v1673, 4
        %v1676 = vrot.slane %v1601, 5
        %v1677 = vsel %vm895, %v1675, %v1676
        %v1678 = vrot.slane %v1602, 5
        %v1679 = vrot.slane %v1678, 4
        %v1680 = vrot.slane %v1603, 5
        %v1681 = vsel %vm895, %v1679, %v1680
        %v1682 = vrot.slane %v1680, 4
        %v1683 = vrot.slane %v1604, 5
        %v1684 = vsel %vm895, %v1682, %v1683
        %s1685 = scalar_lea.vmem [#allocation6], 48
        %v1686 = vld [vmem:[%s1685] sm:$0xf]
        %v1687 = vld [vmem:[%s1685 + $0x4] sm:$0xf]
        %v1688 = vld [vmem:[%s1685 + $0x8] sm:$0xf]
        %v1689 = vld [vmem:[%s1685 + $0xc] sm:$0xf]
        %v1690 = vunpack.c.l.b16 %v1632
        %v1691 = vunpack.c.l.b16 %v1635
        %v1692 = vunpack.c.l.b16 %v1639
        %v1693 = vunpack.c.l.b16 %v1642
        %v1694 = vunpack.c.l.b16 %v1646
        %v1695 = vunpack.c.l.b16 %v1649
        %v1696 = vunpack.c.l.b16 %v1653
        %v1697 = vunpack.c.l.b16 %v1656
        %v1698 = vunpack.c.l.b16 %v1660
        %v1699 = vunpack.c.l.b16 %v1663
        %v1700 = vunpack.c.l.b16 %v1667
        %v1701 = vunpack.c.l.b16 %v1670
        %v1702 = vunpack.c.l.b16 %v1674
        %v1703 = vunpack.c.l.b16 %v1677
        %v1704 = vunpack.c.l.b16 %v1681
        %v1705 = vunpack.c.l.b16 %v1684
        %v1706 = vpack.c.b16 %v1691, %v1690
        %v1707 = vpack.c.b16 %v1693, %v1692
        %v1708 = vpack.c.b16 %v1695, %v1694
        %v1709 = vpack.c.b16 %v1697, %v1696
        %v1710 = vpack.c.b16 %v1699, %v1698
        %v1711 = vpack.c.b16 %v1701, %v1700
        %v1712 = vpack.c.b16 %v1703, %v1702
        %v1713 = vpack.c.b16 %v1705, %v1704
        %v1718 = vunpack.c.l.b16 %v1686
        %v1719 = vunpack.c.l.b16 %v1687
        %v1720 = vunpack.c.l.b16 %v1688
        %v1721 = vunpack.c.l.b16 %v1689
        %v1722 = vpack.c.b16 %v1719, %v1718
        %v1723 = vpack.c.b16 %v1721, %v1720
        %v1727 = vsel %vm1013, %v1706, 0
        %v1730 = vsel %vm1013, %v1707, 0
        %v1733 = vsel %vm1013, %v1708, 0
        %v1736 = vsel %vm1013, %v1709, 0
        %v1739 = vsel %vm1013, %v1710, 0
        %v1742 = vsel %vm1013, %v1711, 0
        %v1745 = vsel %vm1013, %v1712, 0
        %v1748 = vsel %vm1013, %v1713, 0
        %1750 = vmatprep.subr.bf16.mxu0 0
        %1751 = vmatpush1.bf16.msra.mxu0 %v1722
        %1752 = vmatprep.subr.bf16.mxu0 0
        %1753 = vmatpush1.bf16.msra.mxu0 %v1723
        %1754 = vmatprep.subr.bf16.mxu0 0
        %1755 = vmatpush1.bf16.msra.mxu0 0
        %1756 = vmatprep.subr.bf16.mxu0 0
        %1757 = vmatpush1.bf16.msra.mxu0 0
        %1758 = vmatprep.subr.bf16.mxu0 0
        %1759 = vmatpush1.bf16.msra.mxu0 0
        %1760 = vmatprep.subr.bf16.mxu0 0
        %1761 = vmatpush1.bf16.msra.mxu0 0
        %1762 = vmatprep.subr.bf16.mxu0 0
        %1763 = vmatpush1.bf16.msra.mxu0 0
        %1764 = vmatprep.subr.bf16.mxu0 0
        %1765 = vmatpush1.bf16.msra.mxu0 0
        %1766 = vmatprep.subr.bf16.mxu0 0
        %1767 = vmatpush1.bf16.msra.mxu0 0
        %1768 = vmatprep.subr.bf16.mxu0 0
        %1769 = vmatpush1.bf16.msra.mxu0 0
        %1770 = vmatprep.subr.bf16.mxu0 0
        %1771 = vmatpush1.bf16.msra.mxu0 0
        %1772 = vmatprep.subr.bf16.mxu0 0
        %1773 = vmatpush1.bf16.msra.mxu0 0
        %1774 = vmatprep.subr.bf16.mxu0 0
        %1775 = vmatpush1.bf16.msra.mxu0 0
        %1776 = vmatprep.subr.bf16.mxu0 0
        %1777 = vmatpush1.bf16.msra.mxu0 0
        %1778 = vmatprep.subr.bf16.mxu0 0
        %1779 = vmatpush1.bf16.msra.mxu0 0
        %1780 = vmatprep.subr.bf16.mxu0 0
        %1781 = vmatpush1.bf16.msra.mxu0 0
        %1782 = vmatprep.mubr.bf16.mxu0 0
        %1783 = vmatmul.mubr.bf16.gmra.mrb[0].mxu0 %v1727
        %v1784 = vpop.f32.mrb[0].mxu0
        %v1785 = vadd.f32 0.0, %v1784
        %v1786 = vpop.f32.mrb[0].mxu0
        %v1787 = vpop.f32.mrb[0].mxu0
        %v1788 = vadd.f32 0.0, %v1787
        %v1789 = vpop.f32.mrb[0].mxu0
        %1790 = vmatprep.mubr.bf16.mxu0 0
        %1791 = vmatmul.mubr.bf16.gmra.mrb[0].mxu0 %v1730
        %v1792 = vpop.f32.mrb[0].mxu0
        %v1793 = vadd.f32 0.0, %v1792
        %v1794 = vpop.f32.mrb[0].mxu0
        %v1795 = vpop.f32.mrb[0].mxu0
        %v1796 = vadd.f32 0.0, %v1795
        %v1797 = vpop.f32.mrb[0].mxu0
        %1798 = vmatprep.mubr.bf16.mxu0 0
        %1799 = vmatmul.mubr.bf16.gmra.mrb[0].mxu0 %v1733
        %v1800 = vpop.f32.mrb[0].mxu0
        %v1801 = vadd.f32 0.0, %v1800
        %v1802 = vpop.f32.mrb[0].mxu0
        %v1803 = vpop.f32.mrb[0].mxu0
        %v1804 = vadd.f32 0.0, %v1803
        %v1805 = vpop.f32.mrb[0].mxu0
        %1806 = vmatprep.mubr.bf16.mxu0 0
        %1807 = vmatmul.mubr.bf16.gmra.mrb[0].mxu0 %v1736
        %v1808 = vpop.f32.mrb[0].mxu0
        %v1809 = vadd.f32 0.0, %v1808
        %v1810 = vpop.f32.mrb[0].mxu0
        %v1811 = vpop.f32.mrb[0].mxu0
        %v1812 = vadd.f32 0.0, %v1811
        %v1813 = vpop.f32.mrb[0].mxu0
        %1814 = vmatprep.mubr.bf16.mxu0 0
        %1815 = vmatmul.mubr.bf16.gmra.mrb[0].mxu0 %v1739
        %v1816 = vpop.f32.mrb[0].mxu0
        %v1817 = vadd.f32 0.0, %v1816
        %v1818 = vpop.f32.mrb[0].mxu0
        %v1819 = vpop.f32.mrb[0].mxu0
        %v1820 = vadd.f32 0.0, %v1819
        %v1821 = vpop.f32.mrb[0].mxu0
        %1822 = vmatprep.mubr.bf16.mxu0 0
        %1823 = vmatmul.mubr.bf16.gmra.mrb[0].mxu0 %v1742
        %v1824 = vpop.f32.mrb[0].mxu0
        %v1825 = vadd.f32 0.0, %v1824
        %v1826 = vpop.f32.mrb[0].mxu0
        %v1827 = vpop.f32.mrb[0].mxu0
        %v1828 = vadd.f32 0.0, %v1827
        %v1829 = vpop.f32.mrb[0].mxu0
        %1830 = vmatprep.mubr.bf16.mxu0 0
        %1831 = vmatmul.mubr.bf16.gmra.mrb[0].mxu0 %v1745
        %v1832 = vpop.f32.mrb[0].mxu0
        %v1833 = vadd.f32 0.0, %v1832
        %v1834 = vpop.f32.mrb[0].mxu0
        %v1835 = vpop.f32.mrb[0].mxu0
        %v1836 = vadd.f32 0.0, %v1835
        %v1837 = vpop.f32.mrb[0].mxu0
        %1838 = vmatprep.mubr.bf16.mxu0 0
        %1839 = vmatmul.mubr.bf16.gmra.mrb[0].mxu0 %v1748
        %v1840 = vpop.f32.mrb[0].mxu0
        %v1841 = vadd.f32 0.0, %v1840
        %v1842 = vpop.f32.mrb[0].mxu0
        %v1843 = vpop.f32.mrb[0].mxu0
        %v1844 = vadd.f32 0.0, %v1843
        %v1845 = vpop.f32.mrb[0].mxu0
        %1846 = vdwg.mxu0
        %v1847 = vadd.f32 %v1561, %v1785
        %v1848 = vadd.f32 %v1562, %v1788
        %v1849 = vadd.f32 %v1563, %v1793
        %v1850 = vadd.f32 %v1564, %v1796
        %v1851 = vadd.f32 %v1565, %v1801
        %v1852 = vadd.f32 %v1566, %v1804
        %v1853 = vadd.f32 %v1567, %v1809
        %v1854 = vadd.f32 %v1568, %v1812
        %v1855 = vadd.f32 %v1569, %v1817
        %v1856 = vadd.f32 %v1570, %v1820
        %v1857 = vadd.f32 %v1571, %v1825
        %v1858 = vadd.f32 %v1572, %v1828
        %v1859 = vadd.f32 %v1573, %v1833
        %v1860 = vadd.f32 %v1574, %v1836
        %v1861 = vadd.f32 %v1575, %v1841
        %v1862 = vadd.f32 %v1576, %v1844
        %v1863 = vld [vmem:[%s1580 + $0x14] sm:$0xf]
        %v1864 = vld [vmem:[%s1580 + $0x38] sm:$0xf]
        %v1865 = vld [vmem:[%s1580 + $0x5c] sm:$0xf]
        %v1866 = vld [vmem:[%s1580 + $0x80] sm:$0xf]
        %v1867 = vld [vmem:[%s1580 + $0xa4] sm:$0xf]
        %v1868 = vld [vmem:[%s1580 + $0xc8] sm:$0xf]
        %v1869 = vld [vmem:[%s1580 + $0xec] sm:$0xf]
        %v1870 = vld [vmem:[%s1580 + $0x110] sm:$0xf]
        %s1871 = scalar_lea.vmem [#allocation6], 64
        %v1872 = vld [vmem:[%s1871] sm:$0xf]
        %v1873 = vld [vmem:[%s1871 + $0x4] sm:$0xf]
        %v1874 = vld [vmem:[%s1871 + $0x8] sm:$0xf]
        %v1875 = vld [vmem:[%s1871 + $0xc] sm:$0xf]
        %v1884 = vunpack.c.l.b16 %v1582
        %v1885 = vunpack.c.l.b16 %v1863
        %v1886 = vunpack.c.l.b16 %v1585
        %v1887 = vunpack.c.l.b16 %v1864
        %v1888 = vunpack.c.l.b16 %v1588
        %v1889 = vunpack.c.l.b16 %v1865
        %v1890 = vunpack.c.l.b16 %v1591
        %v1891 = vunpack.c.l.b16 %v1866
        %v1892 = vunpack.c.l.b16 %v1594
        %v1893 = vunpack.c.l.b16 %v1867
        %v1894 = vunpack.c.l.b16 %v1597
        %v1895 = vunpack.c.l.b16 %v1868
        %v1896 = vunpack.c.l.b16 %v1600
        %v1897 = vunpack.c.l.b16 %v1869
        %v1898 = vunpack.c.l.b16 %v1603
        %v1899 = vunpack.c.l.b16 %v1870
        %v1900 = vpack.c.b16 %v1885, %v1884
        %v1901 = vpack.c.b16 %v1887, %v1886
        %v1902 = vpack.c.b16 %v1889, %v1888
        %v1903 = vpack.c.b16 %v1891, %v1890
        %v1904 = vpack.c.b16 %v1893, %v1892
        %v1905 = vpack.c.b16 %v1895, %v1894
        %v1906 = vpack.c.b16 %v1897, %v1896
        %v1907 = vpack.c.b16 %v1899, %v1898
        %v1912 = vunpack.c.l.b16 %v1872
        %v1913 = vunpack.c.l.b16 %v1873
        %v1914 = vunpack.c.l.b16 %v1874
        %v1915 = vunpack.c.l.b16 %v1875
        %v1916 = vpack.c.b16 %v1913, %v1912
        %v1917 = vpack.c.b16 %v1915, %v1914
        %v1921 = vsel %vm1013, %v1900, 0
        %v1924 = vsel %vm1013, %v1901, 0
        %v1927 = vsel %vm1013, %v1902, 0
        %v1930 = vsel %vm1013, %v1903, 0
        %v1933 = vsel %vm1013, %v1904, 0
        %v1936 = vsel %vm1013, %v1905, 0
        %v1939 = vsel %vm1013, %v1906, 0
        %v1942 = vsel %vm1013, %v1907, 0
        %1944 = vmatprep.subr.bf16.mxu0 0
        %1945 = vmatpush1.bf16.msra.mxu0 %v1916
        %1946 = vmatprep.subr.bf16.mxu0 0
        %1947 = vmatpush1.bf16.msra.mxu0 %v1917
        %1948 = vmatprep.subr.bf16.mxu0 0
        %1949 = vmatpush1.bf16.msra.mxu0 0
        %1950 = vmatprep.subr.bf16.mxu0 0
        %1951 = vmatpush1.bf16.msra.mxu0 0
        %1952 = vmatprep.subr.bf16.mxu0 0
        %1953 = vmatpush1.bf16.msra.mxu0 0
        %1954 = vmatprep.subr.bf16.mxu0 0
        %1955 = vmatpush1.bf16.msra.mxu0 0
        %1956 = vmatprep.subr.bf16.mxu0 0
        %1957 = vmatpush1.bf16.msra.mxu0 0
        %1958 = vmatprep.subr.bf16.mxu0 0
        %1959 = vmatpush1.bf16.msra.mxu0 0
        %1960 = vmatprep.subr.bf16.mxu0 0
        %1961 = vmatpush1.bf16.msra.mxu0 0
        %1962 = vmatprep.subr.bf16.mxu0 0
        %1963 = vmatpush1.bf16.msra.mxu0 0
        %1964 = vmatprep.subr.bf16.mxu0 0
        %1965 = vmatpush1.bf16.msra.mxu0 0
        %1966 = vmatprep.subr.bf16.mxu0 0
        %1967 = vmatpush1.bf16.msra.mxu0 0
        %1968 = vmatprep.subr.bf16.mxu0 0
        %1969 = vmatpush1.bf16.msra.mxu0 0
        %1970 = vmatprep.subr.bf16.mxu0 0
        %1971 = vmatpush1.bf16.msra.mxu0 0
        %1972 = vmatprep.subr.bf16.mxu0 0
        %1973 = vmatpush1.bf16.msra.mxu0 0
        %1974 = vmatprep.subr.bf16.mxu0 0
        %1975 = vmatpush1.bf16.msra.mxu0 0
        %1976 = vmatprep.mubr.bf16.mxu0 0
        %1977 = vmatmul.mubr.bf16.gmra.mrb[0].mxu0 %v1921
        %v1978 = vpop.f32.mrb[0].mxu0
        %v1979 = vadd.f32 0.0, %v1978
        %v1980 = vpop.f32.mrb[0].mxu0
        %v1981 = vpop.f32.mrb[0].mxu0
        %v1982 = vadd.f32 0.0, %v1981
        %v1983 = vpop.f32.mrb[0].mxu0
        %1984 = vmatprep.mubr.bf16.mxu0 0
        %1985 = vmatmul.mubr.bf16.gmra.mrb[0].mxu0 %v1924
        %v1986 = vpop.f32.mrb[0].mxu0
        %v1987 = vadd.f32 0.0, %v1986
        %v1988 = vpop.f32.mrb[0].mxu0
        %v1989 = vpop.f32.mrb[0].mxu0
        %v1990 = vadd.f32 0.0, %v1989
        %v1991 = vpop.f32.mrb[0].mxu0
        %1992 = vmatprep.mubr.bf16.mxu0 0
        %1993 = vmatmul.mubr.bf16.gmra.mrb[0].mxu0 %v1927
        %v1994 = vpop.f32.mrb[0].mxu0
        %v1995 = vadd.f32 0.0, %v1994
        %v1996 = vpop.f32.mrb[0].mxu0
        %v1997 = vpop.f32.mrb[0].mxu0
        %v1998 = vadd.f32 0.0, %v1997
        %v1999 = vpop.f32.mrb[0].mxu0
        %2000 = vmatprep.mubr.bf16.mxu0 0
        %2001 = vmatmul.mubr.bf16.gmra.mrb[0].mxu0 %v1930
        %v2002 = vpop.f32.mrb[0].mxu0
        %v2003 = vadd.f32 0.0, %v2002
        %v2004 = vpop.f32.mrb[0].mxu0
        %v2005 = vpop.f32.mrb[0].mxu0
        %v2006 = vadd.f32 0.0, %v2005
        %v2007 = vpop.f32.mrb[0].mxu0
        %2008 = vmatprep.mubr.bf16.mxu0 0
        %2009 = vmatmul.mubr.bf16.gmra.mrb[0].mxu0 %v1933
        %v2010 = vpop.f32.mrb[0].mxu0
        %v2011 = vadd.f32 0.0, %v2010
        %v2012 = vpop.f32.mrb[0].mxu0
        %v2013 = vpop.f32.mrb[0].mxu0
        %v2014 = vadd.f32 0.0, %v2013
        %v2015 = vpop.f32.mrb[0].mxu0
        %2016 = vmatprep.mubr.bf16.mxu0 0
        %2017 = vmatmul.mubr.bf16.gmra.mrb[0].mxu0 %v1936
        %v2018 = vpop.f32.mrb[0].mxu0
        %v2019 = vadd.f32 0.0, %v2018
        %v2020 = vpop.f32.mrb[0].mxu0
        %v2021 = vpop.f32.mrb[0].mxu0
        %v2022 = vadd.f32 0.0, %v2021
        %v2023 = vpop.f32.mrb[0].mxu0
        %2024 = vmatprep.mubr.bf16.mxu0 0
        %2025 = vmatmul.mubr.bf16.gmra.mrb[0].mxu0 %v1939
        %v2026 = vpop.f32.mrb[0].mxu0
        %v2027 = vadd.f32 0.0, %v2026
        %v2028 = vpop.f32.mrb[0].mxu0
        %v2029 = vpop.f32.mrb[0].mxu0
        %v2030 = vadd.f32 0.0, %v2029
        %v2031 = vpop.f32.mrb[0].mxu0
        %2032 = vmatprep.mubr.bf16.mxu0 0
        %2033 = vmatmul.mubr.bf16.gmra.mrb[0].mxu0 %v1942
        %v2034 = vpop.f32.mrb[0].mxu0
        %v2035 = vadd.f32 0.0, %v2034
        %v2036 = vpop.f32.mrb[0].mxu0
        %v2037 = vpop.f32.mrb[0].mxu0
        %v2038 = vadd.f32 0.0, %v2037
        %v2039 = vpop.f32.mrb[0].mxu0
        %2040 = vdwg.mxu0
        %v2041 = vadd.f32 %v1847, %v1979
        %v2042 = vadd.f32 %v1848, %v1982
        %v2043 = vadd.f32 %v1849, %v1987
        %v2044 = vadd.f32 %v1850, %v1990
        %v2045 = vadd.f32 %v1851, %v1995
        %v2046 = vadd.f32 %v1852, %v1998
        %v2047 = vadd.f32 %v1853, %v2003
        %v2048 = vadd.f32 %v1854, %v2006
        %v2049 = vadd.f32 %v1855, %v2011
        %v2050 = vadd.f32 %v1856, %v2014
        %v2051 = vadd.f32 %v1857, %v2019
        %v2052 = vadd.f32 %v1858, %v2022
        %v2053 = vadd.f32 %v1859, %v2027
        %v2054 = vadd.f32 %v1860, %v2030
        %v2055 = vadd.f32 %v1861, %v2035
        %v2056 = vadd.f32 %v1862, %v2038
        %v2057 = vld [vmem:[%s1580 + $0x10] sm:$0x8]
        %v2058 = vld [vmem:[%s1580 + $0x14] sm:$0xf]
        %v2059 = vld [vmem:[%s1580 + $0x18] sm:$0x7]
        %v2060 = vld [vmem:[%s1580 + $0x34] sm:$0x8]
        %v2061 = vld [vmem:[%s1580 + $0x38] sm:$0xf]
        %v2062 = vld [vmem:[%s1580 + $0x3c] sm:$0x7]
        %v2063 = vld [vmem:[%s1580 + $0x58] sm:$0x8]
        %v2064 = vld [vmem:[%s1580 + $0x5c] sm:$0xf]
        %v2065 = vld [vmem:[%s1580 + $0x60] sm:$0x7]
        %v2066 = vld [vmem:[%s1580 + $0x7c] sm:$0x8]
        %v2067 = vld [vmem:[%s1580 + $0x80] sm:$0xf]
        %v2068 = vld [vmem:[%s1580 + $0x84] sm:$0x7]
        %v2069 = vld [vmem:[%s1580 + $0xa0] sm:$0x8]
        %v2070 = vld [vmem:[%s1580 + $0xa4] sm:$0xf]
        %v2071 = vld [vmem:[%s1580 + $0xa8] sm:$0x7]
        %v2072 = vld [vmem:[%s1580 + $0xc4] sm:$0x8]
        %v2073 = vld [vmem:[%s1580 + $0xc8] sm:$0xf]
        %v2074 = vld [vmem:[%s1580 + $0xcc] sm:$0x7]
        %v2075 = vld [vmem:[%s1580 + $0xe8] sm:$0x8]
        %v2076 = vld [vmem:[%s1580 + $0xec] sm:$0xf]
        %v2077 = vld [vmem:[%s1580 + $0xf0] sm:$0x7]
        %v2078 = vld [vmem:[%s1580 + $0x10c] sm:$0x8]
        %v2079 = vld [vmem:[%s1580 + $0x110] sm:$0xf]
        %v2080 = vld [vmem:[%s1580 + $0x114] sm:$0x7]
        %v2105 = vrot.slane %v2057, 7
        %v2106 = vrot.slane %v2105, 4
        %v2107 = vrot.slane %v2058, 7
        %v2108 = vsel %vm1342, %v2106, %v2107
        %v2109 = vrot.slane %v2107, 4
        %v2110 = vrot.slane %v2059, 7
        %v2111 = vsel %vm1342, %v2109, %v2110
        %v2112 = vrot.slane %v2060, 7
        %v2113 = vrot.slane %v2112, 4
        %v2114 = vrot.slane %v2061, 7
        %v2115 = vsel %vm1342, %v2113, %v2114
        %v2116 = vrot.slane %v2114, 4
        %v2117 = vrot.slane %v2062, 7
        %v2118 = vsel %vm1342, %v2116, %v2117
        %v2119 = vrot.slane %v2063, 7
        %v2120 = vrot.slane %v2119, 4
        %v2121 = vrot.slane %v2064, 7
        %v2122 = vsel %vm1342, %v2120, %v2121
        %v2123 = vrot.slane %v2121, 4
        %v2124 = vrot.slane %v2065, 7
        %v2125 = vsel %vm1342, %v2123, %v2124
        %v2126 = vrot.slane %v2066, 7
        %v2127 = vrot.slane %v2126, 4
        %v2128 = vrot.slane %v2067, 7
        %v2129 = vsel %vm1342, %v2127, %v2128
        %v2130 = vrot.slane %v2128, 4
        %v2131 = vrot.slane %v2068, 7
        %v2132 = vsel %vm1342, %v2130, %v2131
        %v2133 = vrot.slane %v2069, 7
        %v2134 = vrot.slane %v2133, 4
        %v2135 = vrot.slane %v2070, 7
        %v2136 = vsel %vm1342, %v2134, %v2135
        %v2137 = vrot.slane %v2135, 4
        %v2138 = vrot.slane %v2071, 7
        %v2139 = vsel %vm1342, %v2137, %v2138
        %v2140 = vrot.slane %v2072, 7
        %v2141 = vrot.slane %v2140, 4
        %v2142 = vrot.slane %v2073, 7
        %v2143 = vsel %vm1342, %v2141, %v2142
        %v2144 = vrot.slane %v2142, 4
        %v2145 = vrot.slane %v2074, 7
        %v2146 = vsel %vm1342, %v2144, %v2145
        %v2147 = vrot.slane %v2075, 7
        %v2148 = vrot.slane %v2147, 4
        %v2149 = vrot.slane %v2076, 7
        %v2150 = vsel %vm1342, %v2148, %v2149
        %v2151 = vrot.slane %v2149, 4
        %v2152 = vrot.slane %v2077, 7
        %v2153 = vsel %vm1342, %v2151, %v2152
        %v2154 = vrot.slane %v2078, 7
        %v2155 = vrot.slane %v2154, 4
        %v2156 = vrot.slane %v2079, 7
        %v2157 = vsel %vm1342, %v2155, %v2156
        %v2158 = vrot.slane %v2156, 4
        %v2159 = vrot.slane %v2080, 7
        %v2160 = vsel %vm1342, %v2158, %v2159
        %s2161 = scalar_lea.vmem [#allocation6], 80
        %v2162 = vld [vmem:[%s2161] sm:$0xf]
        %v2163 = vld [vmem:[%s2161 + $0x4] sm:$0xf]
        %v2164 = vld [vmem:[%s2161 + $0x8] sm:$0xf]
        %v2165 = vld [vmem:[%s2161 + $0xc] sm:$0xf]
        %v2166 = vunpack.c.l.b16 %v2108
        %v2167 = vunpack.c.l.b16 %v2111
        %v2168 = vunpack.c.l.b16 %v2115
        %v2169 = vunpack.c.l.b16 %v2118
        %v2170 = vunpack.c.l.b16 %v2122
        %v2171 = vunpack.c.l.b16 %v2125
        %v2172 = vunpack.c.l.b16 %v2129
        %v2173 = vunpack.c.l.b16 %v2132
        %v2174 = vunpack.c.l.b16 %v2136
        %v2175 = vunpack.c.l.b16 %v2139
        %v2176 = vunpack.c.l.b16 %v2143
        %v2177 = vunpack.c.l.b16 %v2146
        %v2178 = vunpack.c.l.b16 %v2150
        %v2179 = vunpack.c.l.b16 %v2153
        %v2180 = vunpack.c.l.b16 %v2157
        %v2181 = vunpack.c.l.b16 %v2160
        %v2182 = vpack.c.b16 %v2167, %v2166
        %v2183 = vpack.c.b16 %v2169, %v2168
        %v2184 = vpack.c.b16 %v2171, %v2170
        %v2185 = vpack.c.b16 %v2173, %v2172
        %v2186 = vpack.c.b16 %v2175, %v2174
        %v2187 = vpack.c.b16 %v2177, %v2176
        %v2188 = vpack.c.b16 %v2179, %v2178
        %v2189 = vpack.c.b16 %v2181, %v2180
        %v2194 = vunpack.c.l.b16 %v2162
        %v2195 = vunpack.c.l.b16 %v2163
        %v2196 = vunpack.c.l.b16 %v2164
        %v2197 = vunpack.c.l.b16 %v2165
        %v2198 = vpack.c.b16 %v2195, %v2194
        %v2199 = vpack.c.b16 %v2197, %v2196
        %v2203 = vsel %vm1013, %v2182, 0
        %v2206 = vsel %vm1013, %v2183, 0
        %v2209 = vsel %vm1013, %v2184, 0
        %v2212 = vsel %vm1013, %v2185, 0
        %v2215 = vsel %vm1013, %v2186, 0
        %v2218 = vsel %vm1013, %v2187, 0
        %v2221 = vsel %vm1013, %v2188, 0
        %v2224 = vsel %vm1013, %v2189, 0
        %2226 = vmatprep.subr.bf16.mxu0 0
        %2227 = vmatpush1.bf16.msra.mxu0 %v2198
        %2228 = vmatprep.subr.bf16.mxu0 0
        %2229 = vmatpush1.bf16.msra.mxu0 %v2199
        %2230 = vmatprep.subr.bf16.mxu0 0
        %2231 = vmatpush1.bf16.msra.mxu0 0
        %2232 = vmatprep.subr.bf16.mxu0 0
        %2233 = vmatpush1.bf16.msra.mxu0 0
        %2234 = vmatprep.subr.bf16.mxu0 0
        %2235 = vmatpush1.bf16.msra.mxu0 0
        %2236 = vmatprep.subr.bf16.mxu0 0
        %2237 = vmatpush1.bf16.msra.mxu0 0
        %2238 = vmatprep.subr.bf16.mxu0 0
        %2239 = vmatpush1.bf16.msra.mxu0 0
        %2240 = vmatprep.subr.bf16.mxu0 0
        %2241 = vmatpush1.bf16.msra.mxu0 0
        %2242 = vmatprep.subr.bf16.mxu0 0
        %2243 = vmatpush1.bf16.msra.mxu0 0
        %2244 = vmatprep.subr.bf16.mxu0 0
        %2245 = vmatpush1.bf16.msra.mxu0 0
        %2246 = vmatprep.subr.bf16.mxu0 0
        %2247 = vmatpush1.bf16.msra.mxu0 0
        %2248 = vmatprep.subr.bf16.mxu0 0
        %2249 = vmatpush1.bf16.msra.mxu0 0
        %2250 = vmatprep.subr.bf16.mxu0 0
        %2251 = vmatpush1.bf16.msra.mxu0 0
        %2252 = vmatprep.subr.bf16.mxu0 0
        %2253 = vmatpush1.bf16.msra.mxu0 0
        %2254 = vmatprep.subr.bf16.mxu0 0
        %2255 = vmatpush1.bf16.msra.mxu0 0
        %2256 = vmatprep.subr.bf16.mxu0 0
        %2257 = vmatpush1.bf16.msra.mxu0 0
        %2258 = vmatprep.mubr.bf16.mxu0 0
        %2259 = vmatmul.mubr.bf16.gmra.mrb[0].mxu0 %v2203
        %v2260 = vpop.f32.mrb[0].mxu0
        %v2261 = vadd.f32 0.0, %v2260
        %v2262 = vpop.f32.mrb[0].mxu0
        %v2263 = vpop.f32.mrb[0].mxu0
        %v2264 = vadd.f32 0.0, %v2263
        %v2265 = vpop.f32.mrb[0].mxu0
        %2266 = vmatprep.mubr.bf16.mxu0 0
        %2267 = vmatmul.mubr.bf16.gmra.mrb[0].mxu0 %v2206
        %v2268 = vpop.f32.mrb[0].mxu0
        %v2269 = vadd.f32 0.0, %v2268
        %v2270 = vpop.f32.mrb[0].mxu0
        %v2271 = vpop.f32.mrb[0].mxu0
        %v2272 = vadd.f32 0.0, %v2271
        %v2273 = vpop.f32.mrb[0].mxu0
        %2274 = vmatprep.mubr.bf16.mxu0 0
        %2275 = vmatmul.mubr.bf16.gmra.mrb[0].mxu0 %v2209
        %v2276 = vpop.f32.mrb[0].mxu0
        %v2277 = vadd.f32 0.0, %v2276
        %v2278 = vpop.f32.mrb[0].mxu0
        %v2279 = vpop.f32.mrb[0].mxu0
        %v2280 = vadd.f32 0.0, %v2279
        %v2281 = vpop.f32.mrb[0].mxu0
        %2282 = vmatprep.mubr.bf16.mxu0 0
        %2283 = vmatmul.mubr.bf16.gmra.mrb[0].mxu0 %v2212
        %v2284 = vpop.f32.mrb[0].mxu0
        %v2285 = vadd.f32 0.0, %v2284
        %v2286 = vpop.f32.mrb[0].mxu0
        %v2287 = vpop.f32.mrb[0].mxu0
        %v2288 = vadd.f32 0.0, %v2287
        %v2289 = vpop.f32.mrb[0].mxu0
        %2290 = vmatprep.mubr.bf16.mxu0 0
        %2291 = vmatmul.mubr.bf16.gmra.mrb[0].mxu0 %v2215
        %v2292 = vpop.f32.mrb[0].mxu0
        %v2293 = vadd.f32 0.0, %v2292
        %v2294 = vpop.f32.mrb[0].mxu0
        %v2295 = vpop.f32.mrb[0].mxu0
        %v2296 = vadd.f32 0.0, %v2295
        %v2297 = vpop.f32.mrb[0].mxu0
        %2298 = vmatprep.mubr.bf16.mxu0 0
        %2299 = vmatmul.mubr.bf16.gmra.mrb[0].mxu0 %v2218
        %v2300 = vpop.f32.mrb[0].mxu0
        %v2301 = vadd.f32 0.0, %v2300
        %v2302 = vpop.f32.mrb[0].mxu0
        %v2303 = vpop.f32.mrb[0].mxu0
        %v2304 = vadd.f32 0.0, %v2303
        %v2305 = vpop.f32.mrb[0].mxu0
        %2306 = vmatprep.mubr.bf16.mxu0 0
        %2307 = vmatmul.mubr.bf16.gmra.mrb[0].mxu0 %v2221
        %v2308 = vpop.f32.mrb[0].mxu0
        %v2309 = vadd.f32 0.0, %v2308
        %v2310 = vpop.f32.mrb[0].mxu0
        %v2311 = vpop.f32.mrb[0].mxu0
        %v2312 = vadd.f32 0.0, %v2311
        %v2313 = vpop.f32.mrb[0].mxu0
        %2314 = vmatprep.mubr.bf16.mxu0 0
        %2315 = vmatmul.mubr.bf16.gmra.mrb[0].mxu0 %v2224
        %v2316 = vpop.f32.mrb[0].mxu0
        %v2317 = vadd.f32 0.0, %v2316
        %v2318 = vpop.f32.mrb[0].mxu0
        %v2319 = vpop.f32.mrb[0].mxu0
        %v2320 = vadd.f32 0.0, %v2319
        %v2321 = vpop.f32.mrb[0].mxu0
        %2322 = vdwg.mxu0
        %v2323 = vadd.f32 %v2041, %v2261
        %v2324 = vadd.f32 %v2042, %v2264
        %v2325 = vadd.f32 %v2043, %v2269
        %v2326 = vadd.f32 %v2044, %v2272
        %v2327 = vadd.f32 %v2045, %v2277
        %v2328 = vadd.f32 %v2046, %v2280
        %v2329 = vadd.f32 %v2047, %v2285
        %v2330 = vadd.f32 %v2048, %v2288
        %v2331 = vadd.f32 %v2049, %v2293
        %v2332 = vadd.f32 %v2050, %v2296
        %v2333 = vadd.f32 %v2051, %v2301
        %v2334 = vadd.f32 %v2052, %v2304
        %v2335 = vadd.f32 %v2053, %v2309
        %v2336 = vadd.f32 %v2054, %v2312
        %v2337 = vadd.f32 %v2055, %v2317
        %v2338 = vadd.f32 %v2056, %v2320
        %s2339 = sadd.s32 %s840, 24
        %s2340 = smul.u32 %s2339, 9
        %s2341 = smul.addr %s2340, 4
        %s2342 = scalar_lea.vmem [#allocation2], %s2341
        %v2343 = vld [vmem:[%s2342 + $0xc] sm:$0xe]
        %v2344 = vld [vmem:[%s2342 + $0x10] sm:$0xf]
        %v2345 = vld [vmem:[%s2342 + $0x14] sm:$0x1]
        %v2346 = vld [vmem:[%s2342 + $0x30] sm:$0xe]
        %v2347 = vld [vmem:[%s2342 + $0x34] sm:$0xf]
        %v2348 = vld [vmem:[%s2342 + $0x38] sm:$0x1]
        %v2349 = vld [vmem:[%s2342 + $0x54] sm:$0xe]
        %v2350 = vld [vmem:[%s2342 + $0x58] sm:$0xf]
        %v2351 = vld [vmem:[%s2342 + $0x5c] sm:$0x1]
        %v2352 = vld [vmem:[%s2342 + $0x78] sm:$0xe]
        %v2353 = vld [vmem:[%s2342 + $0x7c] sm:$0xf]
        %v2354 = vld [vmem:[%s2342 + $0x80] sm:$0x1]
        %v2355 = vld [vmem:[%s2342 + $0x9c] sm:$0xe]
        %v2356 = vld [vmem:[%s2342 + $0xa0] sm:$0xf]
        %v2357 = vld [vmem:[%s2342 + $0xa4] sm:$0x1]
        %v2358 = vld [vmem:[%s2342 + $0xc0] sm:$0xe]
        %v2359 = vld [vmem:[%s2342 + $0xc4] sm:$0xf]
        %v2360 = vld [vmem:[%s2342 + $0xc8] sm:$0x1]
        %v2361 = vld [vmem:[%s2342 + $0xe4] sm:$0xe]
        %v2362 = vld [vmem:[%s2342 + $0xe8] sm:$0xf]
        %v2363 = vld [vmem:[%s2342 + $0xec] sm:$0x1]
        %v2364 = vld [vmem:[%s2342 + $0x108] sm:$0xe]
        %v2365 = vld [vmem:[%s2342 + $0x10c] sm:$0xf]
        %v2366 = vld [vmem:[%s2342 + $0x110] sm:$0x1]
        %v2391 = vrot.slane %v2343, 5
        %v2392 = vrot.slane %v2391, 4
        %v2393 = vrot.slane %v2344, 5
        %v2394 = vsel %vm895, %v2392, %v2393
        %v2395 = vrot.slane %v2393, 4
        %v2396 = vrot.slane %v2345, 5
        %v2397 = vsel %vm895, %v2395, %v2396
        %v2398 = vrot.slane %v2346, 5
        %v2399 = vrot.slane %v2398, 4
        %v2400 = vrot.slane %v2347, 5
        %v2401 = vsel %vm895, %v2399, %v2400
        %v2402 = vrot.slane %v2400, 4
        %v2403 = vrot.slane %v2348, 5
        %v2404 = vsel %vm895, %v2402, %v2403
        %v2405 = vrot.slane %v2349, 5
        %v2406 = vrot.slane %v2405, 4
        %v2407 = vrot.slane %v2350, 5
        %v2408 = vsel %vm895, %v2406, %v2407
        %v2409 = vrot.slane %v2407, 4
        %v2410 = vrot.slane %v2351, 5
        %v2411 = vsel %vm895, %v2409, %v2410
        %v2412 = vrot.slane %v2352, 5
        %v2413 = vrot.slane %v2412, 4
        %v2414 = vrot.slane %v2353, 5
        %v2415 = vsel %vm895, %v2413, %v2414
        %v2416 = vrot.slane %v2414, 4
        %v2417 = vrot.slane %v2354, 5
        %v2418 = vsel %vm895, %v2416, %v2417
        %v2419 = vrot.slane %v2355, 5
        %v2420 = vrot.slane %v2419, 4
        %v2421 = vrot.slane %v2356, 5
        %v2422 = vsel %vm895, %v2420, %v2421
        %v2423 = vrot.slane %v2421, 4
        %v2424 = vrot.slane %v2357, 5
        %v2425 = vsel %vm895, %v2423, %v2424
        %v2426 = vrot.slane %v2358, 5
        %v2427 = vrot.slane %v2426, 4
        %v2428 = vrot.slane %v2359, 5
        %v2429 = vsel %vm895, %v2427, %v2428
        %v2430 = vrot.slane %v2428, 4
        %v2431 = vrot.slane %v2360, 5
        %v2432 = vsel %vm895, %v2430, %v2431
        %v2433 = vrot.slane %v2361, 5
        %v2434 = vrot.slane %v2433, 4
        %v2435 = vrot.slane %v2362, 5
        %v2436 = vsel %vm895, %v2434, %v2435
        %v2437 = vrot.slane %v2435, 4
        %v2438 = vrot.slane %v2363, 5
        %v2439 = vsel %vm895, %v2437, %v2438
        %v2440 = vrot.slane %v2364, 5
        %v2441 = vrot.slane %v2440, 4
        %v2442 = vrot.slane %v2365, 5
        %v2443 = vsel %vm895, %v2441, %v2442
        %v2444 = vrot.slane %v2442, 4
        %v2445 = vrot.slane %v2366, 5
        %v2446 = vsel %vm895, %v2444, %v2445
        %s2447 = scalar_lea.vmem [#allocation6], 96
        %v2448 = vld [vmem:[%s2447] sm:$0xf]
        %v2449 = vld [vmem:[%s2447 + $0x4] sm:$0xf]
        %v2450 = vld [vmem:[%s2447 + $0x8] sm:$0xf]
        %v2451 = vld [vmem:[%s2447 + $0xc] sm:$0xf]
        %v2452 = vunpack.c.l.b16 %v2394
        %v2453 = vunpack.c.l.b16 %v2397
        %v2454 = vunpack.c.l.b16 %v2401
        %v2455 = vunpack.c.l.b16 %v2404
        %v2456 = vunpack.c.l.b16 %v2408
        %v2457 = vunpack.c.l.b16 %v2411
        %v2458 = vunpack.c.l.b16 %v2415
        %v2459 = vunpack.c.l.b16 %v2418
        %v2460 = vunpack.c.l.b16 %v2422
        %v2461 = vunpack.c.l.b16 %v2425
        %v2462 = vunpack.c.l.b16 %v2429
        %v2463 = vunpack.c.l.b16 %v2432
        %v2464 = vunpack.c.l.b16 %v2436
        %v2465 = vunpack.c.l.b16 %v2439
        %v2466 = vunpack.c.l.b16 %v2443
        %v2467 = vunpack.c.l.b16 %v2446
        %v2468 = vpack.c.b16 %v2453, %v2452
        %v2469 = vpack.c.b16 %v2455, %v2454
        %v2470 = vpack.c.b16 %v2457, %v2456
        %v2471 = vpack.c.b16 %v2459, %v2458
        %v2472 = vpack.c.b16 %v2461, %v2460
        %v2473 = vpack.c.b16 %v2463, %v2462
        %v2474 = vpack.c.b16 %v2465, %v2464
        %v2475 = vpack.c.b16 %v2467, %v2466
        %v2480 = vunpack.c.l.b16 %v2448
        %v2481 = vunpack.c.l.b16 %v2449
        %v2482 = vunpack.c.l.b16 %v2450
        %v2483 = vunpack.c.l.b16 %v2451
        %v2484 = vpack.c.b16 %v2481, %v2480
        %v2485 = vpack.c.b16 %v2483, %v2482
        %v2489 = vsel %vm1013, %v2468, 0
        %v2492 = vsel %vm1013, %v2469, 0
        %v2495 = vsel %vm1013, %v2470, 0
        %v2498 = vsel %vm1013, %v2471, 0
        %v2501 = vsel %vm1013, %v2472, 0
        %v2504 = vsel %vm1013, %v2473, 0
        %v2507 = vsel %vm1013, %v2474, 0
        %v2510 = vsel %vm1013, %v2475, 0
        %2512 = vmatprep.subr.bf16.mxu0 0
        %2513 = vmatpush1.bf16.msra.mxu0 %v2484
        %2514 = vmatprep.subr.bf16.mxu0 0
        %2515 = vmatpush1.bf16.msra.mxu0 %v2485
        %2516 = vmatprep.subr.bf16.mxu0 0
        %2517 = vmatpush1.bf16.msra.mxu0 0
        %2518 = vmatprep.subr.bf16.mxu0 0
        %2519 = vmatpush1.bf16.msra.mxu0 0
        %2520 = vmatprep.subr.bf16.mxu0 0
        %2521 = vmatpush1.bf16.msra.mxu0 0
        %2522 = vmatprep.subr.bf16.mxu0 0
        %2523 = vmatpush1.bf16.msra.mxu0 0
        %2524 = vmatprep.subr.bf16.mxu0 0
        %2525 = vmatpush1.bf16.msra.mxu0 0
        %2526 = vmatprep.subr.bf16.mxu0 0
        %2527 = vmatpush1.bf16.msra.mxu0 0
        %2528 = vmatprep.subr.bf16.mxu0 0
        %2529 = vmatpush1.bf16.msra.mxu0 0
        %2530 = vmatprep.subr.bf16.mxu0 0
        %2531 = vmatpush1.bf16.msra.mxu0 0
        %2532 = vmatprep.subr.bf16.mxu0 0
        %2533 = vmatpush1.bf16.msra.mxu0 0
        %2534 = vmatprep.subr.bf16.mxu0 0
        %2535 = vmatpush1.bf16.msra.mxu0 0
        %2536 = vmatprep.subr.bf16.mxu0 0
        %2537 = vmatpush1.bf16.msra.mxu0 0
        %2538 = vmatprep.subr.bf16.mxu0 0
        %2539 = vmatpush1.bf16.msra.mxu0 0
        %2540 = vmatprep.subr.bf16.mxu0 0
        %2541 = vmatpush1.bf16.msra.mxu0 0
        %2542 = vmatprep.subr.bf16.mxu0 0
        %2543 = vmatpush1.bf16.msra.mxu0 0
        %2544 = vmatprep.mubr.bf16.mxu0 0
        %2545 = vmatmul.mubr.bf16.gmra.mrb[0].mxu0 %v2489
        %v2546 = vpop.f32.mrb[0].mxu0
        %v2547 = vadd.f32 0.0, %v2546
        %v2548 = vpop.f32.mrb[0].mxu0
        %v2549 = vpop.f32.mrb[0].mxu0
        %v2550 = vadd.f32 0.0, %v2549
        %v2551 = vpop.f32.mrb[0].mxu0
        %2552 = vmatprep.mubr.bf16.mxu0 0
        %2553 = vmatmul.mubr.bf16.gmra.mrb[0].mxu0 %v2492
        %v2554 = vpop.f32.mrb[0].mxu0
        %v2555 = vadd.f32 0.0, %v2554
        %v2556 = vpop.f32.mrb[0].mxu0
        %v2557 = vpop.f32.mrb[0].mxu0
        %v2558 = vadd.f32 0.0, %v2557
        %v2559 = vpop.f32.mrb[0].mxu0
        %2560 = vmatprep.mubr.bf16.mxu0 0
        %2561 = vmatmul.mubr.bf16.gmra.mrb[0].mxu0 %v2495
        %v2562 = vpop.f32.mrb[0].mxu0
        %v2563 = vadd.f32 0.0, %v2562
        %v2564 = vpop.f32.mrb[0].mxu0
        %v2565 = vpop.f32.mrb[0].mxu0
        %v2566 = vadd.f32 0.0, %v2565
        %v2567 = vpop.f32.mrb[0].mxu0
        %2568 = vmatprep.mubr.bf16.mxu0 0
        %2569 = vmatmul.mubr.bf16.gmra.mrb[0].mxu0 %v2498
        %v2570 = vpop.f32.mrb[0].mxu0
        %v2571 = vadd.f32 0.0, %v2570
        %v2572 = vpop.f32.mrb[0].mxu0
        %v2573 = vpop.f32.mrb[0].mxu0
        %v2574 = vadd.f32 0.0, %v2573
        %v2575 = vpop.f32.mrb[0].mxu0
        %2576 = vmatprep.mubr.bf16.mxu0 0
        %2577 = vmatmul.mubr.bf16.gmra.mrb[0].mxu0 %v2501
        %v2578 = vpop.f32.mrb[0].mxu0
        %v2579 = vadd.f32 0.0, %v2578
        %v2580 = vpop.f32.mrb[0].mxu0
        %v2581 = vpop.f32.mrb[0].mxu0
        %v2582 = vadd.f32 0.0, %v2581
        %v2583 = vpop.f32.mrb[0].mxu0
        %2584 = vmatprep.mubr.bf16.mxu0 0
        %2585 = vmatmul.mubr.bf16.gmra.mrb[0].mxu0 %v2504
        %v2586 = vpop.f32.mrb[0].mxu0
        %v2587 = vadd.f32 0.0, %v2586
        %v2588 = vpop.f32.mrb[0].mxu0
        %v2589 = vpop.f32.mrb[0].mxu0
        %v2590 = vadd.f32 0.0, %v2589
        %v2591 = vpop.f32.mrb[0].mxu0
        %2592 = vmatprep.mubr.bf16.mxu0 0
        %2593 = vmatmul.mubr.bf16.gmra.mrb[0].mxu0 %v2507
        %v2594 = vpop.f32.mrb[0].mxu0
        %v2595 = vadd.f32 0.0, %v2594
        %v2596 = vpop.f32.mrb[0].mxu0
        %v2597 = vpop.f32.mrb[0].mxu0
        %v2598 = vadd.f32 0.0, %v2597
        %v2599 = vpop.f32.mrb[0].mxu0
        %2600 = vmatprep.mubr.bf16.mxu0 0
        %2601 = vmatmul.mubr.bf16.gmra.mrb[0].mxu0 %v2510
        %v2602 = vpop.f32.mrb[0].mxu0
        %v2603 = vadd.f32 0.0, %v2602
        %v2604 = vpop.f32.mrb[0].mxu0
        %v2605 = vpop.f32.mrb[0].mxu0
        %v2606 = vadd.f32 0.0, %v2605
        %v2607 = vpop.f32.mrb[0].mxu0
        %2608 = vdwg.mxu0
        %v2609 = vadd.f32 %v2323, %v2547
        %v2610 = vadd.f32 %v2324, %v2550
        %v2611 = vadd.f32 %v2325, %v2555
        %v2612 = vadd.f32 %v2326, %v2558
        %v2613 = vadd.f32 %v2327, %v2563
        %v2614 = vadd.f32 %v2328, %v2566
        %v2615 = vadd.f32 %v2329, %v2571
        %v2616 = vadd.f32 %v2330, %v2574
        %v2617 = vadd.f32 %v2331, %v2579
        %v2618 = vadd.f32 %v2332, %v2582
        %v2619 = vadd.f32 %v2333, %v2587
        %v2620 = vadd.f32 %v2334, %v2590
        %v2621 = vadd.f32 %v2335, %v2595
        %v2622 = vadd.f32 %v2336, %v2598
        %v2623 = vadd.f32 %v2337, %v2603
        %v2624 = vadd.f32 %v2338, %v2606
        %v2625 = vld [vmem:[%s2342 + $0x14] sm:$0xf]
        %v2626 = vld [vmem:[%s2342 + $0x38] sm:$0xf]
        %v2627 = vld [vmem:[%s2342 + $0x5c] sm:$0xf]
        %v2628 = vld [vmem:[%s2342 + $0x80] sm:$0xf]
        %v2629 = vld [vmem:[%s2342 + $0xa4] sm:$0xf]
        %v2630 = vld [vmem:[%s2342 + $0xc8] sm:$0xf]
        %v2631 = vld [vmem:[%s2342 + $0xec] sm:$0xf]
        %v2632 = vld [vmem:[%s2342 + $0x110] sm:$0xf]
        %s2633 = scalar_lea.vmem [#allocation6], 112
        %v2634 = vld [vmem:[%s2633] sm:$0xf]
        %v2635 = vld [vmem:[%s2633 + $0x4] sm:$0xf]
        %v2636 = vld [vmem:[%s2633 + $0x8] sm:$0xf]
        %v2637 = vld [vmem:[%s2633 + $0xc] sm:$0xf]
        %v2646 = vunpack.c.l.b16 %v2344
        %v2647 = vunpack.c.l.b16 %v2625
        %v2648 = vunpack.c.l.b16 %v2347
        %v2649 = vunpack.c.l.b16 %v2626
        %v2650 = vunpack.c.l.b16 %v2350
        %v2651 = vunpack.c.l.b16 %v2627
        %v2652 = vunpack.c.l.b16 %v2353
        %v2653 = vunpack.c.l.b16 %v2628
        %v2654 = vunpack.c.l.b16 %v2356
        %v2655 = vunpack.c.l.b16 %v2629
        %v2656 = vunpack.c.l.b16 %v2359
        %v2657 = vunpack.c.l.b16 %v2630
        %v2658 = vunpack.c.l.b16 %v2362
        %v2659 = vunpack.c.l.b16 %v2631
        %v2660 = vunpack.c.l.b16 %v2365
        %v2661 = vunpack.c.l.b16 %v2632
        %v2662 = vpack.c.b16 %v2647, %v2646
        %v2663 = vpack.c.b16 %v2649, %v2648
        %v2664 = vpack.c.b16 %v2651, %v2650
        %v2665 = vpack.c.b16 %v2653, %v2652
        %v2666 = vpack.c.b16 %v2655, %v2654
        %v2667 = vpack.c.b16 %v2657, %v2656
        %v2668 = vpack.c.b16 %v2659, %v2658
        %v2669 = vpack.c.b16 %v2661, %v2660
        %v2674 = vunpack.c.l.b16 %v2634
        %v2675 = vunpack.c.l.b16 %v2635
        %v2676 = vunpack.c.l.b16 %v2636
        %v2677 = vunpack.c.l.b16 %v2637
        %v2678 = vpack.c.b16 %v2675, %v2674
        %v2679 = vpack.c.b16 %v2677, %v2676
        %v2683 = vsel %vm1013, %v2662, 0
        %v2686 = vsel %vm1013, %v2663, 0
        %v2689 = vsel %vm1013, %v2664, 0
        %v2692 = vsel %vm1013, %v2665, 0
        %v2695 = vsel %vm1013, %v2666, 0
        %v2698 = vsel %vm1013, %v2667, 0
        %v2701 = vsel %vm1013, %v2668, 0
        %v2704 = vsel %vm1013, %v2669, 0
        %2706 = vmatprep.subr.bf16.mxu0 0
        %2707 = vmatpush1.bf16.msra.mxu0 %v2678
        %2708 = vmatprep.subr.bf16.mxu0 0
        %2709 = vmatpush1.bf16.msra.mxu0 %v2679
        %2710 = vmatprep.subr.bf16.mxu0 0
        %2711 = vmatpush1.bf16.msra.mxu0 0
        %2712 = vmatprep.subr.bf16.mxu0 0
        %2713 = vmatpush1.bf16.msra.mxu0 0
        %2714 = vmatprep.subr.bf16.mxu0 0
        %2715 = vmatpush1.bf16.msra.mxu0 0
        %2716 = vmatprep.subr.bf16.mxu0 0
        %2717 = vmatpush1.bf16.msra.mxu0 0
        %2718 = vmatprep.subr.bf16.mxu0 0
        %2719 = vmatpush1.bf16.msra.mxu0 0
        %2720 = vmatprep.subr.bf16.mxu0 0
        %2721 = vmatpush1.bf16.msra.mxu0 0
        %2722 = vmatprep.subr.bf16.mxu0 0
        %2723 = vmatpush1.bf16.msra.mxu0 0
        %2724 = vmatprep.subr.bf16.mxu0 0
        %2725 = vmatpush1.bf16.msra.mxu0 0
        %2726 = vmatprep.subr.bf16.mxu0 0
        %2727 = vmatpush1.bf16.msra.mxu0 0
        %2728 = vmatprep.subr.bf16.mxu0 0
        %2729 = vmatpush1.bf16.msra.mxu0 0
        %2730 = vmatprep.subr.bf16.mxu0 0
        %2731 = vmatpush1.bf16.msra.mxu0 0
        %2732 = vmatprep.subr.bf16.mxu0 0
        %2733 = vmatpush1.bf16.msra.mxu0 0
        %2734 = vmatprep.subr.bf16.mxu0 0
        %2735 = vmatpush1.bf16.msra.mxu0 0
        %2736 = vmatprep.subr.bf16.mxu0 0
        %2737 = vmatpush1.bf16.msra.mxu0 0
        %2738 = vmatprep.mubr.bf16.mxu0 0
        %2739 = vmatmul.mubr.bf16.gmra.mrb[0].mxu0 %v2683
        %v2740 = vpop.f32.mrb[0].mxu0
        %v2741 = vadd.f32 0.0, %v2740
        %v2742 = vpop.f32.mrb[0].mxu0
        %v2743 = vpop.f32.mrb[0].mxu0
        %v2744 = vadd.f32 0.0, %v2743
        %v2745 = vpop.f32.mrb[0].mxu0
        %2746 = vmatprep.mubr.bf16.mxu0 0
        %2747 = vmatmul.mubr.bf16.gmra.mrb[0].mxu0 %v2686
        %v2748 = vpop.f32.mrb[0].mxu0
        %v2749 = vadd.f32 0.0, %v2748
        %v2750 = vpop.f32.mrb[0].mxu0
        %v2751 = vpop.f32.mrb[0].mxu0
        %v2752 = vadd.f32 0.0, %v2751
        %v2753 = vpop.f32.mrb[0].mxu0
        %2754 = vmatprep.mubr.bf16.mxu0 0
        %2755 = vmatmul.mubr.bf16.gmra.mrb[0].mxu0 %v2689
        %v2756 = vpop.f32.mrb[0].mxu0
        %v2757 = vadd.f32 0.0, %v2756
        %v2758 = vpop.f32.mrb[0].mxu0
        %v2759 = vpop.f32.mrb[0].mxu0
        %v2760 = vadd.f32 0.0, %v2759
        %v2761 = vpop.f32.mrb[0].mxu0
        %2762 = vmatprep.mubr.bf16.mxu0 0
        %2763 = vmatmul.mubr.bf16.gmra.mrb[0].mxu0 %v2692
        %v2764 = vpop.f32.mrb[0].mxu0
        %v2765 = vadd.f32 0.0, %v2764
        %v2766 = vpop.f32.mrb[0].mxu0
        %v2767 = vpop.f32.mrb[0].mxu0
        %v2768 = vadd.f32 0.0, %v2767
        %v2769 = vpop.f32.mrb[0].mxu0
        %2770 = vmatprep.mubr.bf16.mxu0 0
        %2771 = vmatmul.mubr.bf16.gmra.mrb[0].mxu0 %v2695
        %v2772 = vpop.f32.mrb[0].mxu0
        %v2773 = vadd.f32 0.0, %v2772
        %v2774 = vpop.f32.mrb[0].mxu0
        %v2775 = vpop.f32.mrb[0].mxu0
        %v2776 = vadd.f32 0.0, %v2775
        %v2777 = vpop.f32.mrb[0].mxu0
        %2778 = vmatprep.mubr.bf16.mxu0 0
        %2779 = vmatmul.mubr.bf16.gmra.mrb[0].mxu0 %v2698
        %v2780 = vpop.f32.mrb[0].mxu0
        %v2781 = vadd.f32 0.0, %v2780
        %v2782 = vpop.f32.mrb[0].mxu0
        %v2783 = vpop.f32.mrb[0].mxu0
        %v2784 = vadd.f32 0.0, %v2783
        %v2785 = vpop.f32.mrb[0].mxu0
        %2786 = vmatprep.mubr.bf16.mxu0 0
        %2787 = vmatmul.mubr.bf16.gmra.mrb[0].mxu0 %v2701
        %v2788 = vpop.f32.mrb[0].mxu0
        %v2789 = vadd.f32 0.0, %v2788
        %v2790 = vpop.f32.mrb[0].mxu0
        %v2791 = vpop.f32.mrb[0].mxu0
        %v2792 = vadd.f32 0.0, %v2791
        %v2793 = vpop.f32.mrb[0].mxu0
        %2794 = vmatprep.mubr.bf16.mxu0 0
        %2795 = vmatmul.mubr.bf16.gmra.mrb[0].mxu0 %v2704
        %v2796 = vpop.f32.mrb[0].mxu0
        %v2797 = vadd.f32 0.0, %v2796
        %v2798 = vpop.f32.mrb[0].mxu0
        %v2799 = vpop.f32.mrb[0].mxu0
        %v2800 = vadd.f32 0.0, %v2799
        %v2801 = vpop.f32.mrb[0].mxu0
        %2802 = vdwg.mxu0
        %v2803 = vadd.f32 %v2609, %v2741
        %v2804 = vadd.f32 %v2610, %v2744
        %v2805 = vadd.f32 %v2611, %v2749
        %v2806 = vadd.f32 %v2612, %v2752
        %v2807 = vadd.f32 %v2613, %v2757
        %v2808 = vadd.f32 %v2614, %v2760
        %v2809 = vadd.f32 %v2615, %v2765
        %v2810 = vadd.f32 %v2616, %v2768
        %v2811 = vadd.f32 %v2617, %v2773
        %v2812 = vadd.f32 %v2618, %v2776
        %v2813 = vadd.f32 %v2619, %v2781
        %v2814 = vadd.f32 %v2620, %v2784
        %v2815 = vadd.f32 %v2621, %v2789
        %v2816 = vadd.f32 %v2622, %v2792
        %v2817 = vadd.f32 %v2623, %v2797
        %v2818 = vadd.f32 %v2624, %v2800
        %v2819 = vld [vmem:[%s2342 + $0x10] sm:$0x8]
        %v2820 = vld [vmem:[%s2342 + $0x14] sm:$0xf]
        %v2821 = vld [vmem:[%s2342 + $0x18] sm:$0x7]
        %v2822 = vld [vmem:[%s2342 + $0x34] sm:$0x8]
        %v2823 = vld [vmem:[%s2342 + $0x38] sm:$0xf]
        %v2824 = vld [vmem:[%s2342 + $0x3c] sm:$0x7]
        %v2825 = vld [vmem:[%s2342 + $0x58] sm:$0x8]
        %v2826 = vld [vmem:[%s2342 + $0x5c] sm:$0xf]
        %v2827 = vld [vmem:[%s2342 + $0x60] sm:$0x7]
        %v2828 = vld [vmem:[%s2342 + $0x7c] sm:$0x8]
        %v2829 = vld [vmem:[%s2342 + $0x80] sm:$0xf]
        %v2830 = vld [vmem:[%s2342 + $0x84] sm:$0x7]
        %v2831 = vld [vmem:[%s2342 + $0xa0] sm:$0x8]
        %v2832 = vld [vmem:[%s2342 + $0xa4] sm:$0xf]
        %v2833 = vld [vmem:[%s2342 + $0xa8] sm:$0x7]
        %v2834 = vld [vmem:[%s2342 + $0xc4] sm:$0x8]
        %v2835 = vld [vmem:[%s2342 + $0xc8] sm:$0xf]
        %v2836 = vld [vmem:[%s2342 + $0xcc] sm:$0x7]
        %v2837 = vld [vmem:[%s2342 + $0xe8] sm:$0x8]
        %v2838 = vld [vmem:[%s2342 + $0xec] sm:$0xf]
        %v2839 = vld [vmem:[%s2342 + $0xf0] sm:$0x7]
        %v2840 = vld [vmem:[%s2342 + $0x10c] sm:$0x8]
        %v2841 = vld [vmem:[%s2342 + $0x110] sm:$0xf]
        %v2842 = vld [vmem:[%s2342 + $0x114] sm:$0x7]
        %v2867 = vrot.slane %v2819, 7
        %v2868 = vrot.slane %v2867, 4
        %v2869 = vrot.slane %v2820, 7
        %v2870 = vsel %vm1342, %v2868, %v2869
        %v2871 = vrot.slane %v2869, 4
        %v2872 = vrot.slane %v2821, 7
        %v2873 = vsel %vm1342, %v2871, %v2872
        %v2874 = vrot.slane %v2822, 7
        %v2875 = vrot.slane %v2874, 4
        %v2876 = vrot.slane %v2823, 7
        %v2877 = vsel %vm1342, %v2875, %v2876
        %v2878 = vrot.slane %v2876, 4
        %v2879 = vrot.slane %v2824, 7
        %v2880 = vsel %vm1342, %v2878, %v2879
        %v2881 = vrot.slane %v2825, 7
        %v2882 = vrot.slane %v2881, 4
        %v2883 = vrot.slane %v2826, 7
        %v2884 = vsel %vm1342, %v2882, %v2883
        %v2885 = vrot.slane %v2883, 4
        %v2886 = vrot.slane %v2827, 7
        %v2887 = vsel %vm1342, %v2885, %v2886
        %v2888 = vrot.slane %v2828, 7
        %v2889 = vrot.slane %v2888, 4
        %v2890 = vrot.slane %v2829, 7
        %v2891 = vsel %vm1342, %v2889, %v2890
        %v2892 = vrot.slane %v2890, 4
        %v2893 = vrot.slane %v2830, 7
        %v2894 = vsel %vm1342, %v2892, %v2893
        %v2895 = vrot.slane %v2831, 7
        %v2896 = vrot.slane %v2895, 4
        %v2897 = vrot.slane %v2832, 7
        %v2898 = vsel %vm1342, %v2896, %v2897
        %v2899 = vrot.slane %v2897, 4
        %v2900 = vrot.slane %v2833, 7
        %v2901 = vsel %vm1342, %v2899, %v2900
        %v2902 = vrot.slane %v2834, 7
        %v2903 = vrot.slane %v2902, 4
        %v2904 = vrot.slane %v2835, 7
        %v2905 = vsel %vm1342, %v2903, %v2904
        %v2906 = vrot.slane %v2904, 4
        %v2907 = vrot.slane %v2836, 7
        %v2908 = vsel %vm1342, %v2906, %v2907
        %v2909 = vrot.slane %v2837, 7
        %v2910 = vrot.slane %v2909, 4
        %v2911 = vrot.slane %v2838, 7
        %v2912 = vsel %vm1342, %v2910, %v2911
        %v2913 = vrot.slane %v2911, 4
        %v2914 = vrot.slane %v2839, 7
        %v2915 = vsel %vm1342, %v2913, %v2914
        %v2916 = vrot.slane %v2840, 7
        %v2917 = vrot.slane %v2916, 4
        %v2918 = vrot.slane %v2841, 7
        %v2919 = vsel %vm1342, %v2917, %v2918
        %v2920 = vrot.slane %v2918, 4
        %v2921 = vrot.slane %v2842, 7
        %v2922 = vsel %vm1342, %v2920, %v2921
        %s2923 = scalar_lea.vmem [#allocation6], 128
        %v2924 = vld [vmem:[%s2923] sm:$0xf]
        %v2925 = vld [vmem:[%s2923 + $0x4] sm:$0xf]
        %v2926 = vld [vmem:[%s2923 + $0x8] sm:$0xf]
        %v2927 = vld [vmem:[%s2923 + $0xc] sm:$0xf]
        %v2928 = vunpack.c.l.b16 %v2870
        %v2929 = vunpack.c.l.b16 %v2873
        %v2930 = vunpack.c.l.b16 %v2877
        %v2931 = vunpack.c.l.b16 %v2880
        %v2932 = vunpack.c.l.b16 %v2884
        %v2933 = vunpack.c.l.b16 %v2887
        %v2934 = vunpack.c.l.b16 %v2891
        %v2935 = vunpack.c.l.b16 %v2894
        %v2936 = vunpack.c.l.b16 %v2898
        %v2937 = vunpack.c.l.b16 %v2901
        %v2938 = vunpack.c.l.b16 %v2905
        %v2939 = vunpack.c.l.b16 %v2908
        %v2940 = vunpack.c.l.b16 %v2912
        %v2941 = vunpack.c.l.b16 %v2915
        %v2942 = vunpack.c.l.b16 %v2919
        %v2943 = vunpack.c.l.b16 %v2922
        %v2944 = vpack.c.b16 %v2929, %v2928
        %v2945 = vpack.c.b16 %v2931, %v2930
        %v2946 = vpack.c.b16 %v2933, %v2932
        %v2947 = vpack.c.b16 %v2935, %v2934
        %v2948 = vpack.c.b16 %v2937, %v2936
        %v2949 = vpack.c.b16 %v2939, %v2938
        %v2950 = vpack.c.b16 %v2941, %v2940
        %v2951 = vpack.c.b16 %v2943, %v2942
        %v2956 = vunpack.c.l.b16 %v2924
        %v2957 = vunpack.c.l.b16 %v2925
        %v2958 = vunpack.c.l.b16 %v2926
        %v2959 = vunpack.c.l.b16 %v2927
        %v2960 = vpack.c.b16 %v2957, %v2956
        %v2961 = vpack.c.b16 %v2959, %v2958
        %v2965 = vsel %vm1013, %v2944, 0
        %v2968 = vsel %vm1013, %v2945, 0
        %v2971 = vsel %vm1013, %v2946, 0
        %v2974 = vsel %vm1013, %v2947, 0
        %v2977 = vsel %vm1013, %v2948, 0
        %v2980 = vsel %vm1013, %v2949, 0
        %v2983 = vsel %vm1013, %v2950, 0
        %v2986 = vsel %vm1013, %v2951, 0
        %2988 = vmatprep.subr.bf16.mxu0 0
        %2989 = vmatpush1.bf16.msra.mxu0 %v2960
        %2990 = vmatprep.subr.bf16.mxu0 0
        %2991 = vmatpush1.bf16.msra.mxu0 %v2961
        %2992 = vmatprep.subr.bf16.mxu0 0
        %2993 = vmatpush1.bf16.msra.mxu0 0
        %2994 = vmatprep.subr.bf16.mxu0 0
        %2995 = vmatpush1.bf16.msra.mxu0 0
        %2996 = vmatprep.subr.bf16.mxu0 0
        %2997 = vmatpush1.bf16.msra.mxu0 0
        %2998 = vmatprep.subr.bf16.mxu0 0
        %2999 = vmatpush1.bf16.msra.mxu0 0
        %3000 = vmatprep.subr.bf16.mxu0 0
        %3001 = vmatpush1.bf16.msra.mxu0 0
        %3002 = vmatprep.subr.bf16.mxu0 0
        %3003 = vmatpush1.bf16.msra.mxu0 0
        %3004 = vmatprep.subr.bf16.mxu0 0
        %3005 = vmatpush1.bf16.msra.mxu0 0
        %3006 = vmatprep.subr.bf16.mxu0 0
        %3007 = vmatpush1.bf16.msra.mxu0 0
        %3008 = vmatprep.subr.bf16.mxu0 0
        %3009 = vmatpush1.bf16.msra.mxu0 0
        %3010 = vmatprep.subr.bf16.mxu0 0
        %3011 = vmatpush1.bf16.msra.mxu0 0
        %3012 = vmatprep.subr.bf16.mxu0 0
        %3013 = vmatpush1.bf16.msra.mxu0 0
        %3014 = vmatprep.subr.bf16.mxu0 0
        %3015 = vmatpush1.bf16.msra.mxu0 0
        %3016 = vmatprep.subr.bf16.mxu0 0
        %3017 = vmatpush1.bf16.msra.mxu0 0
        %3018 = vmatprep.subr.bf16.mxu0 0
        %3019 = vmatpush1.bf16.msra.mxu0 0
        %3020 = vmatprep.mubr.bf16.mxu0 0
        %3021 = vmatmul.mubr.bf16.gmra.mrb[0].mxu0 %v2965
        %v3022 = vpop.f32.mrb[0].mxu0
        %v3023 = vadd.f32 0.0, %v3022
        %v3024 = vpop.f32.mrb[0].mxu0
        %v3025 = vpop.f32.mrb[0].mxu0
        %v3026 = vadd.f32 0.0, %v3025
        %v3027 = vpop.f32.mrb[0].mxu0
        %3028 = vmatprep.mubr.bf16.mxu0 0
        %3029 = vmatmul.mubr.bf16.gmra.mrb[0].mxu0 %v2968
        %v3030 = vpop.f32.mrb[0].mxu0
        %v3031 = vadd.f32 0.0, %v3030
        %v3032 = vpop.f32.mrb[0].mxu0
        %v3033 = vpop.f32.mrb[0].mxu0
        %v3034 = vadd.f32 0.0, %v3033
        %v3035 = vpop.f32.mrb[0].mxu0
        %3036 = vmatprep.mubr.bf16.mxu0 0
        %3037 = vmatmul.mubr.bf16.gmra.mrb[0].mxu0 %v2971
        %v3038 = vpop.f32.mrb[0].mxu0
        %v3039 = vadd.f32 0.0, %v3038
        %v3040 = vpop.f32.mrb[0].mxu0
        %v3041 = vpop.f32.mrb[0].mxu0
        %v3042 = vadd.f32 0.0, %v3041
        %v3043 = vpop.f32.mrb[0].mxu0
        %3044 = vmatprep.mubr.bf16.mxu0 0
        %3045 = vmatmul.mubr.bf16.gmra.mrb[0].mxu0 %v2974
        %v3046 = vpop.f32.mrb[0].mxu0
        %v3047 = vadd.f32 0.0, %v3046
        %v3048 = vpop.f32.mrb[0].mxu0
        %v3049 = vpop.f32.mrb[0].mxu0
        %v3050 = vadd.f32 0.0, %v3049
        %v3051 = vpop.f32.mrb[0].mxu0
        %3052 = vmatprep.mubr.bf16.mxu0 0
        %3053 = vmatmul.mubr.bf16.gmra.mrb[0].mxu0 %v2977
        %v3054 = vpop.f32.mrb[0].mxu0
        %v3055 = vadd.f32 0.0, %v3054
        %v3056 = vpop.f32.mrb[0].mxu0
        %v3057 = vpop.f32.mrb[0].mxu0
        %v3058 = vadd.f32 0.0, %v3057
        %v3059 = vpop.f32.mrb[0].mxu0
        %3060 = vmatprep.mubr.bf16.mxu0 0
        %3061 = vmatmul.mubr.bf16.gmra.mrb[0].mxu0 %v2980
        %v3062 = vpop.f32.mrb[0].mxu0
        %v3063 = vadd.f32 0.0, %v3062
        %v3064 = vpop.f32.mrb[0].mxu0
        %v3065 = vpop.f32.mrb[0].mxu0
        %v3066 = vadd.f32 0.0, %v3065
        %v3067 = vpop.f32.mrb[0].mxu0
        %3068 = vmatprep.mubr.bf16.mxu0 0
        %3069 = vmatmul.mubr.bf16.gmra.mrb[0].mxu0 %v2983
        %v3070 = vpop.f32.mrb[0].mxu0
        %v3071 = vadd.f32 0.0, %v3070
        %v3072 = vpop.f32.mrb[0].mxu0
        %v3073 = vpop.f32.mrb[0].mxu0
        %v3074 = vadd.f32 0.0, %v3073
        %v3075 = vpop.f32.mrb[0].mxu0
        %3076 = vmatprep.mubr.bf16.mxu0 0
        %3077 = vmatmul.mubr.bf16.gmra.mrb[0].mxu0 %v2986
        %v3078 = vpop.f32.mrb[0].mxu0
        %v3079 = vadd.f32 0.0, %v3078
        %v3080 = vpop.f32.mrb[0].mxu0
        %v3081 = vpop.f32.mrb[0].mxu0
        %v3082 = vadd.f32 0.0, %v3081
        %v3083 = vpop.f32.mrb[0].mxu0
        %3084 = vdwg.mxu0
        %v3085 = vadd.f32 %v2803, %v3023
        %v3086 = vadd.f32 %v2804, %v3026
        %v3087 = vadd.f32 %v2805, %v3031
        %v3088 = vadd.f32 %v2806, %v3034
        %v3089 = vadd.f32 %v2807, %v3039
        %v3090 = vadd.f32 %v2808, %v3042
        %v3091 = vadd.f32 %v2809, %v3047
        %v3092 = vadd.f32 %v2810, %v3050
        %v3093 = vadd.f32 %v2811, %v3055
        %v3094 = vadd.f32 %v2812, %v3058
        %v3095 = vadd.f32 %v2813, %v3063
        %v3096 = vadd.f32 %v2814, %v3066
        %v3097 = vadd.f32 %v2815, %v3071
        %v3098 = vadd.f32 %v2816, %v3074
        %v3099 = vadd.f32 %v2817, %v3079
        %v3100 = vadd.f32 %v2818, %v3082
        %s3101 = sadd.s32 %s840, 6
        %s3102 = smul.u32 %s3101, 9
        %s3103 = smul.addr %s3102, 4
        %s3104 = scalar_lea.vmem [#allocation2], %s3103
        %v3105 = vld [vmem:[%s3104 + $0x8] sm:$0xc]
        %v3106 = vld [vmem:[%s3104 + $0xc] sm:$0xf]
        %v3107 = vld [vmem:[%s3104 + $0x10] sm:$0x3]
        %v3108 = vld [vmem:[%s3104 + $0x2c] sm:$0xc]
        %v3109 = vld [vmem:[%s3104 + $0x30] sm:$0xf]
        %v3110 = vld [vmem:[%s3104 + $0x34] sm:$0x3]
        %v3111 = vld [vmem:[%s3104 + $0x50] sm:$0xc]
        %v3112 = vld [vmem:[%s3104 + $0x54] sm:$0xf]
        %v3113 = vld [vmem:[%s3104 + $0x58] sm:$0x3]
        %v3114 = vld [vmem:[%s3104 + $0x74] sm:$0xc]
        %v3115 = vld [vmem:[%s3104 + $0x78] sm:$0xf]
        %v3116 = vld [vmem:[%s3104 + $0x7c] sm:$0x3]
        %v3117 = vld [vmem:[%s3104 + $0x98] sm:$0xc]
        %v3118 = vld [vmem:[%s3104 + $0x9c] sm:$0xf]
        %v3119 = vld [vmem:[%s3104 + $0xa0] sm:$0x3]
        %v3120 = vld [vmem:[%s3104 + $0xbc] sm:$0xc]
        %v3121 = vld [vmem:[%s3104 + $0xc0] sm:$0xf]
        %v3122 = vld [vmem:[%s3104 + $0xc4] sm:$0x3]
        %v3123 = vld [vmem:[%s3104 + $0xe0] sm:$0xc]
        %v3124 = vld [vmem:[%s3104 + $0xe4] sm:$0xf]
        %v3125 = vld [vmem:[%s3104 + $0xe8] sm:$0x3]
        %v3126 = vld [vmem:[%s3104 + $0x104] sm:$0xc]
        %v3127 = vld [vmem:[%s3104 + $0x108] sm:$0xf]
        %v3128 = vld [vmem:[%s3104 + $0x10c] sm:$0x3]
        %vm3153 = vcmask 1041408
        %vm3154 = vcmask 1045508
        %vm3155 = vmor %vm3153, %vm3154
        %v3156 = vrot.slane %v3105, 6
        %v3157 = vrot.slane %v3156, 4
        %v3158 = vrot.slane %v3106, 6
        %v3159 = vsel %vm3155, %v3157, %v3158
        %v3160 = vrot.slane %v3158, 4
        %v3161 = vrot.slane %v3107, 6
        %v3162 = vsel %vm3155, %v3160, %v3161
        %v3163 = vrot.slane %v3108, 6
        %v3164 = vrot.slane %v3163, 4
        %v3165 = vrot.slane %v3109, 6
        %v3166 = vsel %vm3155, %v3164, %v3165
        %v3167 = vrot.slane %v3165, 4
        %v3168 = vrot.slane %v3110, 6
        %v3169 = vsel %vm3155, %v3167, %v3168
        %v3170 = vrot.slane %v3111, 6
        %v3171 = vrot.slane %v3170, 4
        %v3172 = vrot.slane %v3112, 6
        %v3173 = vsel %vm3155, %v3171, %v3172
        %v3174 = vrot.slane %v3172, 4
        %v3175 = vrot.slane %v3113, 6
        %v3176 = vsel %vm3155, %v3174, %v3175
        %v3177 = vrot.slane %v3114, 6
        %v3178 = vrot.slane %v3177, 4
        %v3179 = vrot.slane %v3115, 6
        %v3180 = vsel %vm3155, %v3178, %v3179
        %v3181 = vrot.slane %v3179, 4
        %v3182 = vrot.slane %v3116, 6
        %v3183 = vsel %vm3155, %v3181, %v3182
        %v3184 = vrot.slane %v3117, 6
        %v3185 = vrot.slane %v3184, 4
        %v3186 = vrot.slane %v3118, 6
        %v3187 = vsel %vm3155, %v3185, %v3186
        %v3188 = vrot.slane %v3186, 4
        %v3189 = vrot.slane %v3119, 6
        %v3190 = vsel %vm3155, %v3188, %v3189
        %v3191 = vrot.slane %v3120, 6
        %v3192 = vrot.slane %v3191, 4
        %v3193 = vrot.slane %v3121, 6
        %v3194 = vsel %vm3155, %v3192, %v3193
        %v3195 = vrot.slane %v3193, 4
        %v3196 = vrot.slane %v3122, 6
        %v3197 = vsel %vm3155, %v3195, %v3196
        %v3198 = vrot.slane %v3123, 6
        %v3199 = vrot.slane %v3198, 4
        %v3200 = vrot.slane %v3124, 6
        %v3201 = vsel %vm3155, %v3199, %v3200
        %v3202 = vrot.slane %v3200, 4
        %v3203 = vrot.slane %v3125, 6
        %v3204 = vsel %vm3155, %v3202, %v3203
        %v3205 = vrot.slane %v3126, 6
        %v3206 = vrot.slane %v3205, 4
        %v3207 = vrot.slane %v3127, 6
        %v3208 = vsel %vm3155, %v3206, %v3207
        %v3209 = vrot.slane %v3207, 4
        %v3210 = vrot.slane %v3128, 6
        %v3211 = vsel %vm3155, %v3209, %v3210
        %s3212 = scalar_lea.vmem [#allocation6], 144
        %v3213 = vld [vmem:[%s3212] sm:$0xf]
        %v3214 = vld [vmem:[%s3212 + $0x4] sm:$0xf]
        %v3215 = vld [vmem:[%s3212 + $0x8] sm:$0xf]
        %v3216 = vld [vmem:[%s3212 + $0xc] sm:$0xf]
        %v3217 = vld [vmem:[%s3104 + $0x10] sm:$0xf]
        %v3218 = vld [vmem:[%s3104 + $0x14] sm:$0xf]
        %v3219 = vld [vmem:[%s3104 + $0x34] sm:$0xf]
        %v3220 = vld [vmem:[%s3104 + $0x38] sm:$0xf]
        %v3221 = vld [vmem:[%s3104 + $0x58] sm:$0xf]
        %v3222 = vld [vmem:[%s3104 + $0x5c] sm:$0xf]
        %v3223 = vld [vmem:[%s3104 + $0x7c] sm:$0xf]
        %v3224 = vld [vmem:[%s3104 + $0x80] sm:$0xf]
        %v3225 = vld [vmem:[%s3104 + $0xa0] sm:$0xf]
        %v3226 = vld [vmem:[%s3104 + $0xa4] sm:$0xf]
        %v3227 = vld [vmem:[%s3104 + $0xc4] sm:$0xf]
        %v3228 = vld [vmem:[%s3104 + $0xc8] sm:$0xf]
        %v3229 = vld [vmem:[%s3104 + $0xe8] sm:$0xf]
        %v3230 = vld [vmem:[%s3104 + $0xec] sm:$0xf]
        %v3231 = vld [vmem:[%s3104 + $0x10c] sm:$0xf]
        %v3232 = vld [vmem:[%s3104 + $0x110] sm:$0xf]
        %s3233 = scalar_lea.vmem [#allocation6], 160
        %v3234 = vld [vmem:[%s3233] sm:$0xf]
        %v3235 = vld [vmem:[%s3233 + $0x4] sm:$0xf]
        %v3236 = vld [vmem:[%s3233 + $0x8] sm:$0xf]
        %v3237 = vld [vmem:[%s3233 + $0xc] sm:$0xf]
        %v3254 = vunpack.c.l.b16 %v3217
        %v3255 = vunpack.c.l.b16 %v3218
        %v3256 = vunpack.c.l.b16 %v3219
        %v3257 = vunpack.c.l.b16 %v3220
        %v3258 = vunpack.c.l.b16 %v3221
        %v3259 = vunpack.c.l.b16 %v3222
        %v3260 = vunpack.c.l.b16 %v3223
        %v3261 = vunpack.c.l.b16 %v3224
        %v3262 = vunpack.c.l.b16 %v3225
        %v3263 = vunpack.c.l.b16 %v3226
        %v3264 = vunpack.c.l.b16 %v3227
        %v3265 = vunpack.c.l.b16 %v3228
        %v3266 = vunpack.c.l.b16 %v3229
        %v3267 = vunpack.c.l.b16 %v3230
        %v3268 = vunpack.c.l.b16 %v3231
        %v3269 = vunpack.c.l.b16 %v3232
        %v3270 = vpack.c.b16 %v3255, %v3254
        %v3271 = vpack.c.b16 %v3257, %v3256
        %v3272 = vpack.c.b16 %v3259, %v3258
        %v3273 = vpack.c.b16 %v3261, %v3260
        %v3274 = vpack.c.b16 %v3263, %v3262
        %v3275 = vpack.c.b16 %v3265, %v3264
        %v3276 = vpack.c.b16 %v3267, %v3266
        %v3277 = vpack.c.b16 %v3269, %v3268
        %v3282 = vunpack.c.l.b16 %v3234
        %v3283 = vunpack.c.l.b16 %v3235
        %v3284 = vunpack.c.l.b16 %v3236
        %v3285 = vunpack.c.l.b16 %v3237
        %v3286 = vpack.c.b16 %v3283, %v3282
        %v3287 = vpack.c.b16 %v3285, %v3284
        %v3291 = vsel %vm1013, %v3270, 0
        %v3294 = vsel %vm1013, %v3271, 0
        %v3297 = vsel %vm1013, %v3272, 0
        %v3300 = vsel %vm1013, %v3273, 0
        %v3303 = vsel %vm1013, %v3274, 0
        %v3306 = vsel %vm1013, %v3275, 0
        %v3309 = vsel %vm1013, %v3276, 0
        %v3312 = vsel %vm1013, %v3277, 0
        %3314 = vmatprep.subr.bf16.mxu0 0
        %3315 = vmatpush1.bf16.msra.mxu0 %v3286
        %3316 = vmatprep.subr.bf16.mxu0 0
        %3317 = vmatpush1.bf16.msra.mxu0 %v3287
        %3318 = vmatprep.subr.bf16.mxu0 0
        %3319 = vmatpush1.bf16.msra.mxu0 0
        %3320 = vmatprep.subr.bf16.mxu0 0
        %3321 = vmatpush1.bf16.msra.mxu0 0
        %3322 = vmatprep.subr.bf16.mxu0 0
        %3323 = vmatpush1.bf16.msra.mxu0 0
        %3324 = vmatprep.subr.bf16.mxu0 0
        %3325 = vmatpush1.bf16.msra.mxu0 0
        %3326 = vmatprep.subr.bf16.mxu0 0
        %3327 = vmatpush1.bf16.msra.mxu0 0
        %3328 = vmatprep.subr.bf16.mxu0 0
        %3329 = vmatpush1.bf16.msra.mxu0 0
        %3330 = vmatprep.subr.bf16.mxu0 0
        %3331 = vmatpush1.bf16.msra.mxu0 0
        %3332 = vmatprep.subr.bf16.mxu0 0
        %3333 = vmatpush1.bf16.msra.mxu0 0
        %3334 = vmatprep.subr.bf16.mxu0 0
        %3335 = vmatpush1.bf16.msra.mxu0 0
        %3336 = vmatprep.subr.bf16.mxu0 0
        %3337 = vmatpush1.bf16.msra.mxu0 0
        %3338 = vmatprep.subr.bf16.mxu0 0
        %3339 = vmatpush1.bf16.msra.mxu0 0
        %3340 = vmatprep.subr.bf16.mxu0 0
        %3341 = vmatpush1.bf16.msra.mxu0 0
        %3342 = vmatprep.subr.bf16.mxu0 0
        %3343 = vmatpush1.bf16.msra.mxu0 0
        %3344 = vmatprep.subr.bf16.mxu0 0
        %3345 = vmatpush1.bf16.msra.mxu0 0
        %3346 = vmatprep.mubr.bf16.mxu0 0
        %3347 = vmatmul.mubr.bf16.gmra.mrb[0].mxu0 %v3291
        %v3348 = vpop.f32.mrb[0].mxu0
        %v3349 = vadd.f32 0.0, %v3348
        %v3350 = vpop.f32.mrb[0].mxu0
        %v3351 = vpop.f32.mrb[0].mxu0
        %v3352 = vadd.f32 0.0, %v3351
        %v3353 = vpop.f32.mrb[0].mxu0
        %3354 = vmatprep.mubr.bf16.mxu0 0
        %3355 = vmatmul.mubr.bf16.gmra.mrb[0].mxu0 %v3294
        %v3356 = vpop.f32.mrb[0].mxu0
        %v3357 = vadd.f32 0.0, %v3356
        %v3358 = vpop.f32.mrb[0].mxu0
        %v3359 = vpop.f32.mrb[0].mxu0
        %v3360 = vadd.f32 0.0, %v3359
        %v3361 = vpop.f32.mrb[0].mxu0
        %3362 = vmatprep.mubr.bf16.mxu0 0
        %3363 = vmatmul.mubr.bf16.gmra.mrb[0].mxu0 %v3297
        %v3364 = vpop.f32.mrb[0].mxu0
        %v3365 = vadd.f32 0.0, %v3364
        %v3366 = vpop.f32.mrb[0].mxu0
        %v3367 = vpop.f32.mrb[0].mxu0
        %v3368 = vadd.f32 0.0, %v3367
        %v3369 = vpop.f32.mrb[0].mxu0
        %3370 = vmatprep.mubr.bf16.mxu0 0
        %3371 = vmatmul.mubr.bf16.gmra.mrb[0].mxu0 %v3300
        %v3372 = vpop.f32.mrb[0].mxu0
        %v3373 = vadd.f32 0.0, %v3372
        %v3374 = vpop.f32.mrb[0].mxu0
        %v3375 = vpop.f32.mrb[0].mxu0
        %v3376 = vadd.f32 0.0, %v3375
        %v3377 = vpop.f32.mrb[0].mxu0
        %3378 = vmatprep.mubr.bf16.mxu0 0
        %3379 = vmatmul.mubr.bf16.gmra.mrb[0].mxu0 %v3303
        %v3380 = vpop.f32.mrb[0].mxu0
        %v3381 = vadd.f32 0.0, %v3380
        %v3382 = vpop.f32.mrb[0].mxu0
        %v3383 = vpop.f32.mrb[0].mxu0
        %v3384 = vadd.f32 0.0, %v3383
        %v3385 = vpop.f32.mrb[0].mxu0
        %3386 = vmatprep.mubr.bf16.mxu0 0
        %3387 = vmatmul.mubr.bf16.gmra.mrb[0].mxu0 %v3306
        %v3388 = vpop.f32.mrb[0].mxu0
        %v3389 = vadd.f32 0.0, %v3388
        %v3390 = vpop.f32.mrb[0].mxu0
        %v3391 = vpop.f32.mrb[0].mxu0
        %v3392 = vadd.f32 0.0, %v3391
        %v3393 = vpop.f32.mrb[0].mxu0
        %3394 = vmatprep.mubr.bf16.mxu0 0
        %3395 = vmatmul.mubr.bf16.gmra.mrb[0].mxu0 %v3309
        %v3396 = vpop.f32.mrb[0].mxu0
        %v3397 = vadd.f32 0.0, %v3396
        %v3398 = vpop.f32.mrb[0].mxu0
        %v3399 = vpop.f32.mrb[0].mxu0
        %v3400 = vadd.f32 0.0, %v3399
        %v3401 = vpop.f32.mrb[0].mxu0
        %3402 = vmatprep.mubr.bf16.mxu0 0
        %3403 = vmatmul.mubr.bf16.gmra.mrb[0].mxu0 %v3312
        %v3404 = vpop.f32.mrb[0].mxu0
        %v3405 = vadd.f32 0.0, %v3404
        %v3406 = vpop.f32.mrb[0].mxu0
        %v3407 = vpop.f32.mrb[0].mxu0
        %v3408 = vadd.f32 0.0, %v3407
        %v3409 = vpop.f32.mrb[0].mxu0
        %3410 = vdwg.mxu0
        %v3411 = vunpack.c.l.b16 %v3159
        %v3412 = vunpack.c.l.b16 %v3162
        %v3413 = vunpack.c.l.b16 %v3166
        %v3414 = vunpack.c.l.b16 %v3169
        %v3415 = vunpack.c.l.b16 %v3173
        %v3416 = vunpack.c.l.b16 %v3176
        %v3417 = vunpack.c.l.b16 %v3180
        %v3418 = vunpack.c.l.b16 %v3183
        %v3419 = vunpack.c.l.b16 %v3187
        %v3420 = vunpack.c.l.b16 %v3190
        %v3421 = vunpack.c.l.b16 %v3194
        %v3422 = vunpack.c.l.b16 %v3197
        %v3423 = vunpack.c.l.b16 %v3201
        %v3424 = vunpack.c.l.b16 %v3204
        %v3425 = vunpack.c.l.b16 %v3208
        %v3426 = vunpack.c.l.b16 %v3211
        %v3427 = vpack.c.b16 %v3412, %v3411
        %v3428 = vpack.c.b16 %v3414, %v3413
        %v3429 = vpack.c.b16 %v3416, %v3415
        %v3430 = vpack.c.b16 %v3418, %v3417
        %v3431 = vpack.c.b16 %v3420, %v3419
        %v3432 = vpack.c.b16 %v3422, %v3421
        %v3433 = vpack.c.b16 %v3424, %v3423
        %v3434 = vpack.c.b16 %v3426, %v3425
        %v3439 = vunpack.c.l.b16 %v3213
        %v3440 = vunpack.c.l.b16 %v3214
        %v3441 = vunpack.c.l.b16 %v3215
        %v3442 = vunpack.c.l.b16 %v3216
        %v3443 = vpack.c.b16 %v3440, %v3439
        %v3444 = vpack.c.b16 %v3442, %v3441
        %v3448 = vsel %vm1013, %v3427, 0
        %v3451 = vsel %vm1013, %v3428, 0
        %v3454 = vsel %vm1013, %v3429, 0
        %v3457 = vsel %vm1013, %v3430, 0
        %v3460 = vsel %vm1013, %v3431, 0
        %v3463 = vsel %vm1013, %v3432, 0
        %v3466 = vsel %vm1013, %v3433, 0
        %v3469 = vsel %vm1013, %v3434, 0
        %3471 = vmatprep.subr.bf16.mxu0 0
        %3472 = vmatpush1.bf16.msra.mxu0 %v3443
        %3473 = vmatprep.subr.bf16.mxu0 0
        %3474 = vmatpush1.bf16.msra.mxu0 %v3444
        %3475 = vmatprep.subr.bf16.mxu0 0
        %3476 = vmatpush1.bf16.msra.mxu0 0
        %3477 = vmatprep.subr.bf16.mxu0 0
        %3478 = vmatpush1.bf16.msra.mxu0 0
        %3479 = vmatprep.subr.bf16.mxu0 0
        %3480 = vmatpush1.bf16.msra.mxu0 0
        %3481 = vmatprep.subr.bf16.mxu0 0
        %3482 = vmatpush1.bf16.msra.mxu0 0
        %3483 = vmatprep.subr.bf16.mxu0 0
        %3484 = vmatpush1.bf16.msra.mxu0 0
        %3485 = vmatprep.subr.bf16.mxu0 0
        %3486 = vmatpush1.bf16.msra.mxu0 0
        %3487 = vmatprep.subr.bf16.mxu0 0
        %3488 = vmatpush1.bf16.msra.mxu0 0
        %3489 = vmatprep.subr.bf16.mxu0 0
        %3490 = vmatpush1.bf16.msra.mxu0 0
        %3491 = vmatprep.subr.bf16.mxu0 0
        %3492 = vmatpush1.bf16.msra.mxu0 0
        %3493 = vmatprep.subr.bf16.mxu0 0
        %3494 = vmatpush1.bf16.msra.mxu0 0
        %3495 = vmatprep.subr.bf16.mxu0 0
        %3496 = vmatpush1.bf16.msra.mxu0 0
        %3497 = vmatprep.subr.bf16.mxu0 0
        %3498 = vmatpush1.bf16.msra.mxu0 0
        %3499 = vmatprep.subr.bf16.mxu0 0
        %3500 = vmatpush1.bf16.msra.mxu0 0
        %3501 = vmatprep.subr.bf16.mxu0 0
        %3502 = vmatpush1.bf16.msra.mxu0 0
        %3503 = vmatprep.mubr.bf16.mxu0 0
        %3504 = vmatmul.mubr.bf16.gmra.mrb[0].mxu0 %v3448
        %v3505 = vpop.f32.mrb[0].mxu0
        %v3506 = vadd.f32 %v3349, %v3505
        %v3507 = vpop.f32.mrb[0].mxu0
        %v3508 = vpop.f32.mrb[0].mxu0
        %v3509 = vadd.f32 %v3352, %v3508
        %v3510 = vpop.f32.mrb[0].mxu0
        %3511 = vmatprep.mubr.bf16.mxu0 0
        %3512 = vmatmul.mubr.bf16.gmra.mrb[0].mxu0 %v3451
        %v3513 = vpop.f32.mrb[0].mxu0
        %v3514 = vadd.f32 %v3357, %v3513
        %v3515 = vpop.f32.mrb[0].mxu0
        %v3516 = vpop.f32.mrb[0].mxu0
        %v3517 = vadd.f32 %v3360, %v3516
        %v3518 = vpop.f32.mrb[0].mxu0
        %3519 = vmatprep.mubr.bf16.mxu0 0
        %3520 = vmatmul.mubr.bf16.gmra.mrb[0].mxu0 %v3454
        %v3521 = vpop.f32.mrb[0].mxu0
        %v3522 = vadd.f32 %v3365, %v3521
        %v3523 = vpop.f32.mrb[0].mxu0
        %v3524 = vpop.f32.mrb[0].mxu0
        %v3525 = vadd.f32 %v3368, %v3524
        %v3526 = vpop.f32.mrb[0].mxu0
        %3527 = vmatprep.mubr.bf16.mxu0 0
        %3528 = vmatmul.mubr.bf16.gmra.mrb[0].mxu0 %v3457
        %v3529 = vpop.f32.mrb[0].mxu0
        %v3530 = vadd.f32 %v3373, %v3529
        %v3531 = vpop.f32.mrb[0].mxu0
        %v3532 = vpop.f32.mrb[0].mxu0
        %v3533 = vadd.f32 %v3376, %v3532
        %v3534 = vpop.f32.mrb[0].mxu0
        %3535 = vmatprep.mubr.bf16.mxu0 0
        %3536 = vmatmul.mubr.bf16.gmra.mrb[0].mxu0 %v3460
        %v3537 = vpop.f32.mrb[0].mxu0
        %v3538 = vadd.f32 %v3381, %v3537
        %v3539 = vpop.f32.mrb[0].mxu0
        %v3540 = vpop.f32.mrb[0].mxu0
        %v3541 = vadd.f32 %v3384, %v3540
        %v3542 = vpop.f32.mrb[0].mxu0
        %3543 = vmatprep.mubr.bf16.mxu0 0
        %3544 = vmatmul.mubr.bf16.gmra.mrb[0].mxu0 %v3463
        %v3545 = vpop.f32.mrb[0].mxu0
        %v3546 = vadd.f32 %v3389, %v3545
        %v3547 = vpop.f32.mrb[0].mxu0
        %v3548 = vpop.f32.mrb[0].mxu0
        %v3549 = vadd.f32 %v3392, %v3548
        %v3550 = vpop.f32.mrb[0].mxu0
        %3551 = vmatprep.mubr.bf16.mxu0 0
        %3552 = vmatmul.mubr.bf16.gmra.mrb[0].mxu0 %v3466
        %v3553 = vpop.f32.mrb[0].mxu0
        %v3554 = vadd.f32 %v3397, %v3553
        %v3555 = vpop.f32.mrb[0].mxu0
        %v3556 = vpop.f32.mrb[0].mxu0
        %v3557 = vadd.f32 %v3400, %v3556
        %v3558 = vpop.f32.mrb[0].mxu0
        %3559 = vmatprep.mubr.bf16.mxu0 0
        %3560 = vmatmul.mubr.bf16.gmra.mrb[0].mxu0 %v3469
        %v3561 = vpop.f32.mrb[0].mxu0
        %v3562 = vadd.f32 %v3405, %v3561
        %v3563 = vpop.f32.mrb[0].mxu0
        %v3564 = vpop.f32.mrb[0].mxu0
        %v3565 = vadd.f32 %v3408, %v3564
        %v3566 = vpop.f32.mrb[0].mxu0
        %3567 = vdwg.mxu0
        %v3568 = vld [vmem:[%s3104 + $0x14] sm:$0xc]
        %v3569 = vld [vmem:[%s3104 + $0x18] sm:$0xf]
        %v3570 = vld [vmem:[%s3104 + $0x1c] sm:$0x3]
        %v3571 = vld [vmem:[%s3104 + $0x38] sm:$0xc]
        %v3572 = vld [vmem:[%s3104 + $0x3c] sm:$0xf]
        %v3573 = vld [vmem:[%s3104 + $0x40] sm:$0x3]
        %v3574 = vld [vmem:[%s3104 + $0x5c] sm:$0xc]
        %v3575 = vld [vmem:[%s3104 + $0x60] sm:$0xf]
        %v3576 = vld [vmem:[%s3104 + $0x64] sm:$0x3]
        %v3577 = vld [vmem:[%s3104 + $0x80] sm:$0xc]
        %v3578 = vld [vmem:[%s3104 + $0x84] sm:$0xf]
        %v3579 = vld [vmem:[%s3104 + $0x88] sm:$0x3]
        %v3580 = vld [vmem:[%s3104 + $0xa4] sm:$0xc]
        %v3581 = vld [vmem:[%s3104 + $0xa8] sm:$0xf]
        %v3582 = vld [vmem:[%s3104 + $0xac] sm:$0x3]
        %v3583 = vld [vmem:[%s3104 + $0xc8] sm:$0xc]
        %v3584 = vld [vmem:[%s3104 + $0xcc] sm:$0xf]
        %v3585 = vld [vmem:[%s3104 + $0xd0] sm:$0x3]
        %v3586 = vld [vmem:[%s3104 + $0xec] sm:$0xc]
        %v3587 = vld [vmem:[%s3104 + $0xf0] sm:$0xf]
        %v3588 = vld [vmem:[%s3104 + $0xf4] sm:$0x3]
        %v3589 = vld [vmem:[%s3104 + $0x110] sm:$0xc]
        %v3590 = vld [vmem:[%s3104 + $0x114] sm:$0xf]
        %v3591 = vld [vmem:[%s3104 + $0x118] sm:$0x3]
        %v3616 = vrot.slane %v3568, 6
        %v3617 = vrot.slane %v3616, 4
        %v3618 = vrot.slane %v3569, 6
        %v3619 = vsel %vm3155, %v3617, %v3618
        %v3620 = vrot.slane %v3618, 4
        %v3621 = vrot.slane %v3570, 6
        %v3622 = vsel %vm3155, %v3620, %v3621
        %v3623 = vrot.slane %v3571, 6
        %v3624 = vrot.slane %v3623, 4
        %v3625 = vrot.slane %v3572, 6
        %v3626 = vsel %vm3155, %v3624, %v3625
        %v3627 = vrot.slane %v3625, 4
        %v3628 = vrot.slane %v3573, 6
        %v3629 = vsel %vm3155, %v3627, %v3628
        %v3630 = vrot.slane %v3574, 6
        %v3631 = vrot.slane %v3630, 4
        %v3632 = vrot.slane %v3575, 6
        %v3633 = vsel %vm3155, %v3631, %v3632
        %v3634 = vrot.slane %v3632, 4
        %v3635 = vrot.slane %v3576, 6
        %v3636 = vsel %vm3155, %v3634, %v3635
        %v3637 = vrot.slane %v3577, 6
        %v3638 = vrot.slane %v3637, 4
        %v3639 = vrot.slane %v3578, 6
        %v3640 = vsel %vm3155, %v3638, %v3639
        %v3641 = vrot.slane %v3639, 4
        %v3642 = vrot.slane %v3579, 6
        %v3643 = vsel %vm3155, %v3641, %v3642
        %v3644 = vrot.slane %v3580, 6
        %v3645 = vrot.slane %v3644, 4
        %v3646 = vrot.slane %v3581, 6
        %v3647 = vsel %vm3155, %v3645, %v3646
        %v3648 = vrot.slane %v3646, 4
        %v3649 = vrot.slane %v3582, 6
        %v3650 = vsel %vm3155, %v3648, %v3649
        %v3651 = vrot.slane %v3583, 6
        %v3652 = vrot.slane %v3651, 4
        %v3653 = vrot.slane %v3584, 6
        %v3654 = vsel %vm3155, %v3652, %v3653
        %v3655 = vrot.slane %v3653, 4
        %v3656 = vrot.slane %v3585, 6
        %v3657 = vsel %vm3155, %v3655, %v3656
        %v3658 = vrot.slane %v3586, 6
        %v3659 = vrot.slane %v3658, 4
        %v3660 = vrot.slane %v3587, 6
        %v3661 = vsel %vm3155, %v3659, %v3660
        %v3662 = vrot.slane %v3660, 4
        %v3663 = vrot.slane %v3588, 6
        %v3664 = vsel %vm3155, %v3662, %v3663
        %v3665 = vrot.slane %v3589, 6
        %v3666 = vrot.slane %v3665, 4
        %v3667 = vrot.slane %v3590, 6
        %v3668 = vsel %vm3155, %v3666, %v3667
        %v3669 = vrot.slane %v3667, 4
        %v3670 = vrot.slane %v3591, 6
        %v3671 = vsel %vm3155, %v3669, %v3670
        %s3672 = scalar_lea.vmem [#allocation6], 176
        %v3673 = vld [vmem:[%s3672] sm:$0xf]
        %v3674 = vld [vmem:[%s3672 + $0x4] sm:$0xf]
        %v3675 = vld [vmem:[%s3672 + $0x8] sm:$0xf]
        %v3676 = vld [vmem:[%s3672 + $0xc] sm:$0xf]
        %v3677 = vunpack.c.l.b16 %v3619
        %v3678 = vunpack.c.l.b16 %v3622
        %v3679 = vunpack.c.l.b16 %v3626
        %v3680 = vunpack.c.l.b16 %v3629
        %v3681 = vunpack.c.l.b16 %v3633
        %v3682 = vunpack.c.l.b16 %v3636
        %v3683 = vunpack.c.l.b16 %v3640
        %v3684 = vunpack.c.l.b16 %v3643
        %v3685 = vunpack.c.l.b16 %v3647
        %v3686 = vunpack.c.l.b16 %v3650
        %v3687 = vunpack.c.l.b16 %v3654
        %v3688 = vunpack.c.l.b16 %v3657
        %v3689 = vunpack.c.l.b16 %v3661
        %v3690 = vunpack.c.l.b16 %v3664
        %v3691 = vunpack.c.l.b16 %v3668
        %v3692 = vunpack.c.l.b16 %v3671
        %v3693 = vpack.c.b16 %v3678, %v3677
        %v3694 = vpack.c.b16 %v3680, %v3679
        %v3695 = vpack.c.b16 %v3682, %v3681
        %v3696 = vpack.c.b16 %v3684, %v3683
        %v3697 = vpack.c.b16 %v3686, %v3685
        %v3698 = vpack.c.b16 %v3688, %v3687
        %v3699 = vpack.c.b16 %v3690, %v3689
        %v3700 = vpack.c.b16 %v3692, %v3691
        %v3705 = vunpack.c.l.b16 %v3673
        %v3706 = vunpack.c.l.b16 %v3674
        %v3707 = vunpack.c.l.b16 %v3675
        %v3708 = vunpack.c.l.b16 %v3676
        %v3709 = vpack.c.b16 %v3706, %v3705
        %v3710 = vpack.c.b16 %v3708, %v3707
        %v3714 = vsel %vm1013, %v3693, 0
        %v3717 = vsel %vm1013, %v3694, 0
        %v3720 = vsel %vm1013, %v3695, 0
        %v3723 = vsel %vm1013, %v3696, 0
        %v3726 = vsel %vm1013, %v3697, 0
        %v3729 = vsel %vm1013, %v3698, 0
        %v3732 = vsel %vm1013, %v3699, 0
        %v3735 = vsel %vm1013, %v3700, 0
        %3737 = vmatprep.subr.bf16.mxu0 0
        %3738 = vmatpush1.bf16.msra.mxu0 %v3709
        %3739 = vmatprep.subr.bf16.mxu0 0
        %3740 = vmatpush1.bf16.msra.mxu0 %v3710
        %3741 = vmatprep.subr.bf16.mxu0 0
        %3742 = vmatpush1.bf16.msra.mxu0 0
        %3743 = vmatprep.subr.bf16.mxu0 0
        %3744 = vmatpush1.bf16.msra.mxu0 0
        %3745 = vmatprep.subr.bf16.mxu0 0
        %3746 = vmatpush1.bf16.msra.mxu0 0
        %3747 = vmatprep.subr.bf16.mxu0 0
        %3748 = vmatpush1.bf16.msra.mxu0 0
        %3749 = vmatprep.subr.bf16.mxu0 0
        %3750 = vmatpush1.bf16.msra.mxu0 0
        %3751 = vmatprep.subr.bf16.mxu0 0
        %3752 = vmatpush1.bf16.msra.mxu0 0
        %3753 = vmatprep.subr.bf16.mxu0 0
        %3754 = vmatpush1.bf16.msra.mxu0 0
        %3755 = vmatprep.subr.bf16.mxu0 0
        %3756 = vmatpush1.bf16.msra.mxu0 0
        %3757 = vmatprep.subr.bf16.mxu0 0
        %3758 = vmatpush1.bf16.msra.mxu0 0
        %3759 = vmatprep.subr.bf16.mxu0 0
        %3760 = vmatpush1.bf16.msra.mxu0 0
        %3761 = vmatprep.subr.bf16.mxu0 0
        %3762 = vmatpush1.bf16.msra.mxu0 0
        %3763 = vmatprep.subr.bf16.mxu0 0
        %3764 = vmatpush1.bf16.msra.mxu0 0
        %3765 = vmatprep.subr.bf16.mxu0 0
        %3766 = vmatpush1.bf16.msra.mxu0 0
        %3767 = vmatprep.subr.bf16.mxu0 0
        %3768 = vmatpush1.bf16.msra.mxu0 0
        %3769 = vmatprep.mubr.bf16.mxu0 0
        %3770 = vmatmul.mubr.bf16.gmra.mrb[0].mxu0 %v3714
        %v3771 = vpop.f32.mrb[0].mxu0
        %v3772 = vadd.f32 0.0, %v3771
        %v3773 = vpop.f32.mrb[0].mxu0
        %v3774 = vpop.f32.mrb[0].mxu0
        %v3775 = vadd.f32 0.0, %v3774
        %v3776 = vpop.f32.mrb[0].mxu0
        %3777 = vmatprep.mubr.bf16.mxu0 0
        %3778 = vmatmul.mubr.bf16.gmra.mrb[0].mxu0 %v3717
        %v3779 = vpop.f32.mrb[0].mxu0
        %v3780 = vadd.f32 0.0, %v3779
        %v3781 = vpop.f32.mrb[0].mxu0
        %v3782 = vpop.f32.mrb[0].mxu0
        %v3783 = vadd.f32 0.0, %v3782
        %v3784 = vpop.f32.mrb[0].mxu0
        %3785 = vmatprep.mubr.bf16.mxu0 0
        %3786 = vmatmul.mubr.bf16.gmra.mrb[0].mxu0 %v3720
        %v3787 = vpop.f32.mrb[0].mxu0
        %v3788 = vadd.f32 0.0, %v3787
        %v3789 = vpop.f32.mrb[0].mxu0
        %v3790 = vpop.f32.mrb[0].mxu0
        %v3791 = vadd.f32 0.0, %v3790
        %v3792 = vpop.f32.mrb[0].mxu0
        %3793 = vmatprep.mubr.bf16.mxu0 0
        %3794 = vmatmul.mubr.bf16.gmra.mrb[0].mxu0 %v3723
        %v3795 = vpop.f32.mrb[0].mxu0
        %v3796 = vadd.f32 0.0, %v3795
        %v3797 = vpop.f32.mrb[0].mxu0
        %v3798 = vpop.f32.mrb[0].mxu0
        %v3799 = vadd.f32 0.0, %v3798
        %v3800 = vpop.f32.mrb[0].mxu0
        %3801 = vmatprep.mubr.bf16.mxu0 0
        %3802 = vmatmul.mubr.bf16.gmra.mrb[0].mxu0 %v3726
        %v3803 = vpop.f32.mrb[0].mxu0
        %v3804 = vadd.f32 0.0, %v3803
        %v3805 = vpop.f32.mrb[0].mxu0
        %v3806 = vpop.f32.mrb[0].mxu0
        %v3807 = vadd.f32 0.0, %v3806
        %v3808 = vpop.f32.mrb[0].mxu0
        %3809 = vmatprep.mubr.bf16.mxu0 0
        %3810 = vmatmul.mubr.bf16.gmra.mrb[0].mxu0 %v3729
        %v3811 = vpop.f32.mrb[0].mxu0
        %v3812 = vadd.f32 0.0, %v3811
        %v3813 = vpop.f32.mrb[0].mxu0
        %v3814 = vpop.f32.mrb[0].mxu0
        %v3815 = vadd.f32 0.0, %v3814
        %v3816 = vpop.f32.mrb[0].mxu0
        %3817 = vmatprep.mubr.bf16.mxu0 0
        %3818 = vmatmul.mubr.bf16.gmra.mrb[0].mxu0 %v3732
        %v3819 = vpop.f32.mrb[0].mxu0
        %v3820 = vadd.f32 0.0, %v3819
        %v3821 = vpop.f32.mrb[0].mxu0
        %v3822 = vpop.f32.mrb[0].mxu0
        %v3823 = vadd.f32 0.0, %v3822
        %v3824 = vpop.f32.mrb[0].mxu0
        %3825 = vmatprep.mubr.bf16.mxu0 0
        %3826 = vmatmul.mubr.bf16.gmra.mrb[0].mxu0 %v3735
        %v3827 = vpop.f32.mrb[0].mxu0
        %v3828 = vadd.f32 0.0, %v3827
        %v3829 = vpop.f32.mrb[0].mxu0
        %v3830 = vpop.f32.mrb[0].mxu0
        %v3831 = vadd.f32 0.0, %v3830
        %v3832 = vpop.f32.mrb[0].mxu0
        %3833 = vdwg.mxu0
        %v3834 = vadd.f32 %v3506, %v3772
        %v3835 = vadd.f32 %v3509, %v3775
        %v3836 = vadd.f32 %v3514, %v3780
        %v3837 = vadd.f32 %v3517, %v3783
        %v3838 = vadd.f32 %v3522, %v3788
        %v3839 = vadd.f32 %v3525, %v3791
        %v3840 = vadd.f32 %v3530, %v3796
        %v3841 = vadd.f32 %v3533, %v3799
        %v3842 = vadd.f32 %v3538, %v3804
        %v3843 = vadd.f32 %v3541, %v3807
        %v3844 = vadd.f32 %v3546, %v3812
        %v3845 = vadd.f32 %v3549, %v3815
        %v3846 = vadd.f32 %v3554, %v3820
        %v3847 = vadd.f32 %v3557, %v3823
        %v3848 = vadd.f32 %v3562, %v3828
        %v3849 = vadd.f32 %v3565, %v3831
        %v3850 = vld [vmem:[%s1580 + $0x8] sm:$0xc]
        %v3851 = vld [vmem:[%s1580 + $0xc] sm:$0xf]
        %v3852 = vld [vmem:[%s1580 + $0x10] sm:$0x3]
        %v3853 = vld [vmem:[%s1580 + $0x2c] sm:$0xc]
        %v3854 = vld [vmem:[%s1580 + $0x30] sm:$0xf]
        %v3855 = vld [vmem:[%s1580 + $0x34] sm:$0x3]
        %v3856 = vld [vmem:[%s1580 + $0x50] sm:$0xc]
        %v3857 = vld [vmem:[%s1580 + $0x54] sm:$0xf]
        %v3858 = vld [vmem:[%s1580 + $0x58] sm:$0x3]
        %v3859 = vld [vmem:[%s1580 + $0x74] sm:$0xc]
        %v3860 = vld [vmem:[%s1580 + $0x78] sm:$0xf]
        %v3861 = vld [vmem:[%s1580 + $0x7c] sm:$0x3]
        %v3862 = vld [vmem:[%s1580 + $0x98] sm:$0xc]
        %v3863 = vld [vmem:[%s1580 + $0x9c] sm:$0xf]
        %v3864 = vld [vmem:[%s1580 + $0xa0] sm:$0x3]
        %v3865 = vld [vmem:[%s1580 + $0xbc] sm:$0xc]
        %v3866 = vld [vmem:[%s1580 + $0xc0] sm:$0xf]
        %v3867 = vld [vmem:[%s1580 + $0xc4] sm:$0x3]
        %v3868 = vld [vmem:[%s1580 + $0xe0] sm:$0xc]
        %v3869 = vld [vmem:[%s1580 + $0xe4] sm:$0xf]
        %v3870 = vld [vmem:[%s1580 + $0xe8] sm:$0x3]
        %v3871 = vld [vmem:[%s1580 + $0x104] sm:$0xc]
        %v3872 = vld [vmem:[%s1580 + $0x108] sm:$0xf]
        %v3873 = vld [vmem:[%s1580 + $0x10c] sm:$0x3]
        %v3898 = vrot.slane %v3850, 6
        %v3899 = vrot.slane %v3898, 4
        %v3900 = vrot.slane %v3851, 6
        %v3901 = vsel %vm3155, %v3899, %v3900
        %v3902 = vrot.slane %v3900, 4
        %v3903 = vrot.slane %v3852, 6
        %v3904 = vsel %vm3155, %v3902, %v3903
        %v3905 = vrot.slane %v3853, 6
        %v3906 = vrot.slane %v3905, 4
        %v3907 = vrot.slane %v3854, 6
        %v3908 = vsel %vm3155, %v3906, %v3907
        %v3909 = vrot.slane %v3907, 4
        %v3910 = vrot.slane %v3855, 6
        %v3911 = vsel %vm3155, %v3909, %v3910
        %v3912 = vrot.slane %v3856, 6
        %v3913 = vrot.slane %v3912, 4
        %v3914 = vrot.slane %v3857, 6
        %v3915 = vsel %vm3155, %v3913, %v3914
        %v3916 = vrot.slane %v3914, 4
        %v3917 = vrot.slane %v3858, 6
        %v3918 = vsel %vm3155, %v3916, %v3917
        %v3919 = vrot.slane %v3859, 6
        %v3920 = vrot.slane %v3919, 4
        %v3921 = vrot.slane %v3860, 6
        %v3922 = vsel %vm3155, %v3920, %v3921
        %v3923 = vrot.slane %v3921, 4
        %v3924 = vrot.slane %v3861, 6
        %v3925 = vsel %vm3155, %v3923, %v3924
        %v3926 = vrot.slane %v3862, 6
        %v3927 = vrot.slane %v3926, 4
        %v3928 = vrot.slane %v3863, 6
        %v3929 = vsel %vm3155, %v3927, %v3928
        %v3930 = vrot.slane %v3928, 4
        %v3931 = vrot.slane %v3864, 6
        %v3932 = vsel %vm3155, %v3930, %v3931
        %v3933 = vrot.slane %v3865, 6
        %v3934 = vrot.slane %v3933, 4
        %v3935 = vrot.slane %v3866, 6
        %v3936 = vsel %vm3155, %v3934, %v3935
        %v3937 = vrot.slane %v3935, 4
        %v3938 = vrot.slane %v3867, 6
        %v3939 = vsel %vm3155, %v3937, %v3938
        %v3940 = vrot.slane %v3868, 6
        %v3941 = vrot.slane %v3940, 4
        %v3942 = vrot.slane %v3869, 6
        %v3943 = vsel %vm3155, %v3941, %v3942
        %v3944 = vrot.slane %v3942, 4
        %v3945 = vrot.slane %v3870, 6
        %v3946 = vsel %vm3155, %v3944, %v3945
        %v3947 = vrot.slane %v3871, 6
        %v3948 = vrot.slane %v3947, 4
        %v3949 = vrot.slane %v3872, 6
        %v3950 = vsel %vm3155, %v3948, %v3949
        %v3951 = vrot.slane %v3949, 4
        %v3952 = vrot.slane %v3873, 6
        %v3953 = vsel %vm3155, %v3951, %v3952
        %s3954 = scalar_lea.vmem [#allocation6], 192
        %v3955 = vld [vmem:[%s3954] sm:$0xf]
        %v3956 = vld [vmem:[%s3954 + $0x4] sm:$0xf]
        %v3957 = vld [vmem:[%s3954 + $0x8] sm:$0xf]
        %v3958 = vld [vmem:[%s3954 + $0xc] sm:$0xf]
        %v3959 = vunpack.c.l.b16 %v3901
        %v3960 = vunpack.c.l.b16 %v3904
        %v3961 = vunpack.c.l.b16 %v3908
        %v3962 = vunpack.c.l.b16 %v3911
        %v3963 = vunpack.c.l.b16 %v3915
        %v3964 = vunpack.c.l.b16 %v3918
        %v3965 = vunpack.c.l.b16 %v3922
        %v3966 = vunpack.c.l.b16 %v3925
        %v3967 = vunpack.c.l.b16 %v3929
        %v3968 = vunpack.c.l.b16 %v3932
        %v3969 = vunpack.c.l.b16 %v3936
        %v3970 = vunpack.c.l.b16 %v3939
        %v3971 = vunpack.c.l.b16 %v3943
        %v3972 = vunpack.c.l.b16 %v3946
        %v3973 = vunpack.c.l.b16 %v3950
        %v3974 = vunpack.c.l.b16 %v3953
        %v3975 = vpack.c.b16 %v3960, %v3959
        %v3976 = vpack.c.b16 %v3962, %v3961
        %v3977 = vpack.c.b16 %v3964, %v3963
        %v3978 = vpack.c.b16 %v3966, %v3965
        %v3979 = vpack.c.b16 %v3968, %v3967
        %v3980 = vpack.c.b16 %v3970, %v3969
        %v3981 = vpack.c.b16 %v3972, %v3971
        %v3982 = vpack.c.b16 %v3974, %v3973
        %v3987 = vunpack.c.l.b16 %v3955
        %v3988 = vunpack.c.l.b16 %v3956
        %v3989 = vunpack.c.l.b16 %v3957
        %v3990 = vunpack.c.l.b16 %v3958
        %v3991 = vpack.c.b16 %v3988, %v3987
        %v3992 = vpack.c.b16 %v3990, %v3989
        %v3996 = vsel %vm1013, %v3975, 0
        %v3999 = vsel %vm1013, %v3976, 0
        %v4002 = vsel %vm1013, %v3977, 0
        %v4005 = vsel %vm1013, %v3978, 0
        %v4008 = vsel %vm1013, %v3979, 0
        %v4011 = vsel %vm1013, %v3980, 0
        %v4014 = vsel %vm1013, %v3981, 0
        %v4017 = vsel %vm1013, %v3982, 0
        %4019 = vmatprep.subr.bf16.mxu0 0
        %4020 = vmatpush1.bf16.msra.mxu0 %v3991
        %4021 = vmatprep.subr.bf16.mxu0 0
        %4022 = vmatpush1.bf16.msra.mxu0 %v3992
        %4023 = vmatprep.subr.bf16.mxu0 0
        %4024 = vmatpush1.bf16.msra.mxu0 0
        %4025 = vmatprep.subr.bf16.mxu0 0
        %4026 = vmatpush1.bf16.msra.mxu0 0
        %4027 = vmatprep.subr.bf16.mxu0 0
        %4028 = vmatpush1.bf16.msra.mxu0 0
        %4029 = vmatprep.subr.bf16.mxu0 0
        %4030 = vmatpush1.bf16.msra.mxu0 0
        %4031 = vmatprep.subr.bf16.mxu0 0
        %4032 = vmatpush1.bf16.msra.mxu0 0
        %4033 = vmatprep.subr.bf16.mxu0 0
        %4034 = vmatpush1.bf16.msra.mxu0 0
        %4035 = vmatprep.subr.bf16.mxu0 0
        %4036 = vmatpush1.bf16.msra.mxu0 0
        %4037 = vmatprep.subr.bf16.mxu0 0
        %4038 = vmatpush1.bf16.msra.mxu0 0
        %4039 = vmatprep.subr.bf16.mxu0 0
        %4040 = vmatpush1.bf16.msra.mxu0 0
        %4041 = vmatprep.subr.bf16.mxu0 0
        %4042 = vmatpush1.bf16.msra.mxu0 0
        %4043 = vmatprep.subr.bf16.mxu0 0
        %4044 = vmatpush1.bf16.msra.mxu0 0
        %4045 = vmatprep.subr.bf16.mxu0 0
        %4046 = vmatpush1.bf16.msra.mxu0 0
        %4047 = vmatprep.subr.bf16.mxu0 0
        %4048 = vmatpush1.bf16.msra.mxu0 0
        %4049 = vmatprep.subr.bf16.mxu0 0
        %4050 = vmatpush1.bf16.msra.mxu0 0
        %4051 = vmatprep.mubr.bf16.mxu0 0
        %4052 = vmatmul.mubr.bf16.gmra.mrb[0].mxu0 %v3996
        %v4053 = vpop.f32.mrb[0].mxu0
        %v4054 = vadd.f32 0.0, %v4053
        %v4055 = vpop.f32.mrb[0].mxu0
        %v4056 = vpop.f32.mrb[0].mxu0
        %v4057 = vadd.f32 0.0, %v4056
        %v4058 = vpop.f32.mrb[0].mxu0
        %4059 = vmatprep.mubr.bf16.mxu0 0
        %4060 = vmatmul.mubr.bf16.gmra.mrb[0].mxu0 %v3999
        %v4061 = vpop.f32.mrb[0].mxu0
        %v4062 = vadd.f32 0.0, %v4061
        %v4063 = vpop.f32.mrb[0].mxu0
        %v4064 = vpop.f32.mrb[0].mxu0
        %v4065 = vadd.f32 0.0, %v4064
        %v4066 = vpop.f32.mrb[0].mxu0
        %4067 = vmatprep.mubr.bf16.mxu0 0
        %4068 = vmatmul.mubr.bf16.gmra.mrb[0].mxu0 %v4002
        %v4069 = vpop.f32.mrb[0].mxu0
        %v4070 = vadd.f32 0.0, %v4069
        %v4071 = vpop.f32.mrb[0].mxu0
        %v4072 = vpop.f32.mrb[0].mxu0
        %v4073 = vadd.f32 0.0, %v4072
        %v4074 = vpop.f32.mrb[0].mxu0
        %4075 = vmatprep.mubr.bf16.mxu0 0
        %4076 = vmatmul.mubr.bf16.gmra.mrb[0].mxu0 %v4005
        %v4077 = vpop.f32.mrb[0].mxu0
        %v4078 = vadd.f32 0.0, %v4077
        %v4079 = vpop.f32.mrb[0].mxu0
        %v4080 = vpop.f32.mrb[0].mxu0
        %v4081 = vadd.f32 0.0, %v4080
        %v4082 = vpop.f32.mrb[0].mxu0
        %4083 = vmatprep.mubr.bf16.mxu0 0
        %4084 = vmatmul.mubr.bf16.gmra.mrb[0].mxu0 %v4008
        %v4085 = vpop.f32.mrb[0].mxu0
        %v4086 = vadd.f32 0.0, %v4085
        %v4087 = vpop.f32.mrb[0].mxu0
        %v4088 = vpop.f32.mrb[0].mxu0
        %v4089 = vadd.f32 0.0, %v4088
        %v4090 = vpop.f32.mrb[0].mxu0
        %4091 = vmatprep.mubr.bf16.mxu0 0
        %4092 = vmatmul.mubr.bf16.gmra.mrb[0].mxu0 %v4011
        %v4093 = vpop.f32.mrb[0].mxu0
        %v4094 = vadd.f32 0.0, %v4093
        %v4095 = vpop.f32.mrb[0].mxu0
        %v4096 = vpop.f32.mrb[0].mxu0
        %v4097 = vadd.f32 0.0, %v4096
        %v4098 = vpop.f32.mrb[0].mxu0
        %4099 = vmatprep.mubr.bf16.mxu0 0
        %4100 = vmatmul.mubr.bf16.gmra.mrb[0].mxu0 %v4014
        %v4101 = vpop.f32.mrb[0].mxu0
        %v4102 = vadd.f32 0.0, %v4101
        %v4103 = vpop.f32.mrb[0].mxu0
        %v4104 = vpop.f32.mrb[0].mxu0
        %v4105 = vadd.f32 0.0, %v4104
        %v4106 = vpop.f32.mrb[0].mxu0
        %4107 = vmatprep.mubr.bf16.mxu0 0
        %4108 = vmatmul.mubr.bf16.gmra.mrb[0].mxu0 %v4017
        %v4109 = vpop.f32.mrb[0].mxu0
        %v4110 = vadd.f32 0.0, %v4109
        %v4111 = vpop.f32.mrb[0].mxu0
        %v4112 = vpop.f32.mrb[0].mxu0
        %v4113 = vadd.f32 0.0, %v4112
        %v4114 = vpop.f32.mrb[0].mxu0
        %4115 = vdwg.mxu0
        %v4116 = vadd.f32 %v3834, %v4054
        %v4117 = vadd.f32 %v3835, %v4057
        %v4118 = vadd.f32 %v3836, %v4062
        %v4119 = vadd.f32 %v3837, %v4065
        %v4120 = vadd.f32 %v3838, %v4070
        %v4121 = vadd.f32 %v3839, %v4073
        %v4122 = vadd.f32 %v3840, %v4078
        %v4123 = vadd.f32 %v3841, %v4081
        %v4124 = vadd.f32 %v3842, %v4086
        %v4125 = vadd.f32 %v3843, %v4089
        %v4126 = vadd.f32 %v3844, %v4094
        %v4127 = vadd.f32 %v3845, %v4097
        %v4128 = vadd.f32 %v3846, %v4102
        %v4129 = vadd.f32 %v3847, %v4105
        %v4130 = vadd.f32 %v3848, %v4110
        %v4131 = vadd.f32 %v3849, %v4113
        %s4132 = scalar_lea.vmem [#allocation6], 208
        %v4133 = vld [vmem:[%s4132] sm:$0xf]
        %v4134 = vld [vmem:[%s4132 + $0x4] sm:$0xf]
        %v4135 = vld [vmem:[%s4132 + $0x8] sm:$0xf]
        %v4136 = vld [vmem:[%s4132 + $0xc] sm:$0xf]
        %v4141 = vunpack.c.l.b16 %v4133
        %v4142 = vunpack.c.l.b16 %v4134
        %v4143 = vunpack.c.l.b16 %v4135
        %v4144 = vunpack.c.l.b16 %v4136
        %v4145 = vpack.c.b16 %v4142, %v4141
        %v4146 = vpack.c.b16 %v4144, %v4143
        %4149 = vmatprep.subr.bf16.mxu0 0
        %4150 = vmatpush1.bf16.msra.mxu0 %v4145
        %4151 = vmatprep.subr.bf16.mxu0 0
        %4152 = vmatpush1.bf16.msra.mxu0 %v4146
        %4153 = vmatprep.subr.bf16.mxu0 0
        %4154 = vmatpush1.bf16.msra.mxu0 0
        %4155 = vmatprep.subr.bf16.mxu0 0
        %4156 = vmatpush1.bf16.msra.mxu0 0
        %4157 = vmatprep.subr.bf16.mxu0 0
        %4158 = vmatpush1.bf16.msra.mxu0 0
        %4159 = vmatprep.subr.bf16.mxu0 0
        %4160 = vmatpush1.bf16.msra.mxu0 0
        %4161 = vmatprep.subr.bf16.mxu0 0
        %4162 = vmatpush1.bf16.msra.mxu0 0
        %4163 = vmatprep.subr.bf16.mxu0 0
        %4164 = vmatpush1.bf16.msra.mxu0 0
        %4165 = vmatprep.subr.bf16.mxu0 0
        %4166 = vmatpush1.bf16.msra.mxu0 0
        %4167 = vmatprep.subr.bf16.mxu0 0
        %4168 = vmatpush1.bf16.msra.mxu0 0
        %4169 = vmatprep.subr.bf16.mxu0 0
        %4170 = vmatpush1.bf16.msra.mxu0 0
        %4171 = vmatprep.subr.bf16.mxu0 0
        %4172 = vmatpush1.bf16.msra.mxu0 0
        %4173 = vmatprep.subr.bf16.mxu0 0
        %4174 = vmatpush1.bf16.msra.mxu0 0
        %4175 = vmatprep.subr.bf16.mxu0 0
        %4176 = vmatpush1.bf16.msra.mxu0 0
        %4177 = vmatprep.subr.bf16.mxu0 0
        %4178 = vmatpush1.bf16.msra.mxu0 0
        %4179 = vmatprep.subr.bf16.mxu0 0
        %4180 = vmatpush1.bf16.msra.mxu0 0
        %4181 = vmatprep.mubr.bf16.mxu0 0
        %4182 = vmatmul.mubr.bf16.gmra.mrb[0].mxu0 %v1921
        %v4183 = vpop.f32.mrb[0].mxu0
        %v4184 = vadd.f32 0.0, %v4183
        %v4185 = vpop.f32.mrb[0].mxu0
        %v4186 = vpop.f32.mrb[0].mxu0
        %v4187 = vadd.f32 0.0, %v4186
        %v4188 = vpop.f32.mrb[0].mxu0
        %4189 = vmatprep.mubr.bf16.mxu0 0
        %4190 = vmatmul.mubr.bf16.gmra.mrb[0].mxu0 %v1924
        %v4191 = vpop.f32.mrb[0].mxu0
        %v4192 = vadd.f32 0.0, %v4191
        %v4193 = vpop.f32.mrb[0].mxu0
        %v4194 = vpop.f32.mrb[0].mxu0
        %v4195 = vadd.f32 0.0, %v4194
        %v4196 = vpop.f32.mrb[0].mxu0
        %4197 = vmatprep.mubr.bf16.mxu0 0
        %4198 = vmatmul.mubr.bf16.gmra.mrb[0].mxu0 %v1927
        %v4199 = vpop.f32.mrb[0].mxu0
        %v4200 = vadd.f32 0.0, %v4199
        %v4201 = vpop.f32.mrb[0].mxu0
        %v4202 = vpop.f32.mrb[0].mxu0
        %v4203 = vadd.f32 0.0, %v4202
        %v4204 = vpop.f32.mrb[0].mxu0
        %4205 = vmatprep.mubr.bf16.mxu0 0
        %4206 = vmatmul.mubr.bf16.gmra.mrb[0].mxu0 %v1930
        %v4207 = vpop.f32.mrb[0].mxu0
        %v4208 = vadd.f32 0.0, %v4207
        %v4209 = vpop.f32.mrb[0].mxu0
        %v4210 = vpop.f32.mrb[0].mxu0
        %v4211 = vadd.f32 0.0, %v4210
        %v4212 = vpop.f32.mrb[0].mxu0
        %4213 = vmatprep.mubr.bf16.mxu0 0
        %4214 = vmatmul.mubr.bf16.gmra.mrb[0].mxu0 %v1933
        %v4215 = vpop.f32.mrb[0].mxu0
        %v4216 = vadd.f32 0.0, %v4215
        %v4217 = vpop.f32.mrb[0].mxu0
        %v4218 = vpop.f32.mrb[0].mxu0
        %v4219 = vadd.f32 0.0, %v4218
        %v4220 = vpop.f32.mrb[0].mxu0
        %4221 = vmatprep.mubr.bf16.mxu0 0
        %4222 = vmatmul.mubr.bf16.gmra.mrb[0].mxu0 %v1936
        %v4223 = vpop.f32.mrb[0].mxu0
        %v4224 = vadd.f32 0.0, %v4223
        %v4225 = vpop.f32.mrb[0].mxu0
        %v4226 = vpop.f32.mrb[0].mxu0
        %v4227 = vadd.f32 0.0, %v4226
        %v4228 = vpop.f32.mrb[0].mxu0
        %4229 = vmatprep.mubr.bf16.mxu0 0
        %4230 = vmatmul.mubr.bf16.gmra.mrb[0].mxu0 %v1939
        %v4231 = vpop.f32.mrb[0].mxu0
        %v4232 = vadd.f32 0.0, %v4231
        %v4233 = vpop.f32.mrb[0].mxu0
        %v4234 = vpop.f32.mrb[0].mxu0
        %v4235 = vadd.f32 0.0, %v4234
        %v4236 = vpop.f32.mrb[0].mxu0
        %4237 = vmatprep.mubr.bf16.mxu0 0
        %4238 = vmatmul.mubr.bf16.gmra.mrb[0].mxu0 %v1942
        %v4239 = vpop.f32.mrb[0].mxu0
        %v4240 = vadd.f32 0.0, %v4239
        %v4241 = vpop.f32.mrb[0].mxu0
        %v4242 = vpop.f32.mrb[0].mxu0
        %v4243 = vadd.f32 0.0, %v4242
        %v4244 = vpop.f32.mrb[0].mxu0
        %4245 = vdwg.mxu0
        %v4246 = vadd.f32 %v4116, %v4184
        %v4247 = vadd.f32 %v4117, %v4187
        %v4248 = vadd.f32 %v4118, %v4192
        %v4249 = vadd.f32 %v4119, %v4195
        %v4250 = vadd.f32 %v4120, %v4200
        %v4251 = vadd.f32 %v4121, %v4203
        %v4252 = vadd.f32 %v4122, %v4208
        %v4253 = vadd.f32 %v4123, %v4211
        %v4254 = vadd.f32 %v4124, %v4216
        %v4255 = vadd.f32 %v4125, %v4219
        %v4256 = vadd.f32 %v4126, %v4224
        %v4257 = vadd.f32 %v4127, %v4227
        %v4258 = vadd.f32 %v4128, %v4232
        %v4259 = vadd.f32 %v4129, %v4235
        %v4260 = vadd.f32 %v4130, %v4240
        %v4261 = vadd.f32 %v4131, %v4243
        %v4262 = vld [vmem:[%s1580 + $0x14] sm:$0xc]
        %v4263 = vld [vmem:[%s1580 + $0x18] sm:$0xf]
        %v4264 = vld [vmem:[%s1580 + $0x1c] sm:$0x3]
        %v4265 = vld [vmem:[%s1580 + $0x38] sm:$0xc]
        %v4266 = vld [vmem:[%s1580 + $0x3c] sm:$0xf]
        %v4267 = vld [vmem:[%s1580 + $0x40] sm:$0x3]
        %v4268 = vld [vmem:[%s1580 + $0x5c] sm:$0xc]
        %v4269 = vld [vmem:[%s1580 + $0x60] sm:$0xf]
        %v4270 = vld [vmem:[%s1580 + $0x64] sm:$0x3]
        %v4271 = vld [vmem:[%s1580 + $0x80] sm:$0xc]
        %v4272 = vld [vmem:[%s1580 + $0x84] sm:$0xf]
        %v4273 = vld [vmem:[%s1580 + $0x88] sm:$0x3]
        %v4274 = vld [vmem:[%s1580 + $0xa4] sm:$0xc]
        %v4275 = vld [vmem:[%s1580 + $0xa8] sm:$0xf]
        %v4276 = vld [vmem:[%s1580 + $0xac] sm:$0x3]
        %v4277 = vld [vmem:[%s1580 + $0xc8] sm:$0xc]
        %v4278 = vld [vmem:[%s1580 + $0xcc] sm:$0xf]
        %v4279 = vld [vmem:[%s1580 + $0xd0] sm:$0x3]
        %v4280 = vld [vmem:[%s1580 + $0xec] sm:$0xc]
        %v4281 = vld [vmem:[%s1580 + $0xf0] sm:$0xf]
        %v4282 = vld [vmem:[%s1580 + $0xf4] sm:$0x3]
        %v4283 = vld [vmem:[%s1580 + $0x110] sm:$0xc]
        %v4284 = vld [vmem:[%s1580 + $0x114] sm:$0xf]
        %v4285 = vld [vmem:[%s1580 + $0x118] sm:$0x3]
        %v4310 = vrot.slane %v4262, 6
        %v4311 = vrot.slane %v4310, 4
        %v4312 = vrot.slane %v4263, 6
        %v4313 = vsel %vm3155, %v4311, %v4312
        %v4314 = vrot.slane %v4312, 4
        %v4315 = vrot.slane %v4264, 6
        %v4316 = vsel %vm3155, %v4314, %v4315
        %v4317 = vrot.slane %v4265, 6
        %v4318 = vrot.slane %v4317, 4
        %v4319 = vrot.slane %v4266, 6
        %v4320 = vsel %vm3155, %v4318, %v4319
        %v4321 = vrot.slane %v4319, 4
        %v4322 = vrot.slane %v4267, 6
        %v4323 = vsel %vm3155, %v4321, %v4322
        %v4324 = vrot.slane %v4268, 6
        %v4325 = vrot.slane %v4324, 4
        %v4326 = vrot.slane %v4269, 6
        %v4327 = vsel %vm3155, %v4325, %v4326
        %v4328 = vrot.slane %v4326, 4
        %v4329 = vrot.slane %v4270, 6
        %v4330 = vsel %vm3155, %v4328, %v4329
        %v4331 = vrot.slane %v4271, 6
        %v4332 = vrot.slane %v4331, 4
        %v4333 = vrot.slane %v4272, 6
        %v4334 = vsel %vm3155, %v4332, %v4333
        %v4335 = vrot.slane %v4333, 4
        %v4336 = vrot.slane %v4273, 6
        %v4337 = vsel %vm3155, %v4335, %v4336
        %v4338 = vrot.slane %v4274, 6
        %v4339 = vrot.slane %v4338, 4
        %v4340 = vrot.slane %v4275, 6
        %v4341 = vsel %vm3155, %v4339, %v4340
        %v4342 = vrot.slane %v4340, 4
        %v4343 = vrot.slane %v4276, 6
        %v4344 = vsel %vm3155, %v4342, %v4343
        %v4345 = vrot.slane %v4277, 6
        %v4346 = vrot.slane %v4345, 4
        %v4347 = vrot.slane %v4278, 6
        %v4348 = vsel %vm3155, %v4346, %v4347
        %v4349 = vrot.slane %v4347, 4
        %v4350 = vrot.slane %v4279, 6
        %v4351 = vsel %vm3155, %v4349, %v4350
        %v4352 = vrot.slane %v4280, 6
        %v4353 = vrot.slane %v4352, 4
        %v4354 = vrot.slane %v4281, 6
        %v4355 = vsel %vm3155, %v4353, %v4354
        %v4356 = vrot.slane %v4354, 4
        %v4357 = vrot.slane %v4282, 6
        %v4358 = vsel %vm3155, %v4356, %v4357
        %v4359 = vrot.slane %v4283, 6
        %v4360 = vrot.slane %v4359, 4
        %v4361 = vrot.slane %v4284, 6
        %v4362 = vsel %vm3155, %v4360, %v4361
        %v4363 = vrot.slane %v4361, 4
        %v4364 = vrot.slane %v4285, 6
        %v4365 = vsel %vm3155, %v4363, %v4364
        %s4366 = scalar_lea.vmem [#allocation6], 224
        %v4367 = vld [vmem:[%s4366] sm:$0xf]
        %v4368 = vld [vmem:[%s4366 + $0x4] sm:$0xf]
        %v4369 = vld [vmem:[%s4366 + $0x8] sm:$0xf]
        %v4370 = vld [vmem:[%s4366 + $0xc] sm:$0xf]
        %v4371 = vunpack.c.l.b16 %v4313
        %v4372 = vunpack.c.l.b16 %v4316
        %v4373 = vunpack.c.l.b16 %v4320
        %v4374 = vunpack.c.l.b16 %v4323
        %v4375 = vunpack.c.l.b16 %v4327
        %v4376 = vunpack.c.l.b16 %v4330
        %v4377 = vunpack.c.l.b16 %v4334
        %v4378 = vunpack.c.l.b16 %v4337
        %v4379 = vunpack.c.l.b16 %v4341
        %v4380 = vunpack.c.l.b16 %v4344
        %v4381 = vunpack.c.l.b16 %v4348
        %v4382 = vunpack.c.l.b16 %v4351
        %v4383 = vunpack.c.l.b16 %v4355
        %v4384 = vunpack.c.l.b16 %v4358
        %v4385 = vunpack.c.l.b16 %v4362
        %v4386 = vunpack.c.l.b16 %v4365
        %v4387 = vpack.c.b16 %v4372, %v4371
        %v4388 = vpack.c.b16 %v4374, %v4373
        %v4389 = vpack.c.b16 %v4376, %v4375
        %v4390 = vpack.c.b16 %v4378, %v4377
        %v4391 = vpack.c.b16 %v4380, %v4379
        %v4392 = vpack.c.b16 %v4382, %v4381
        %v4393 = vpack.c.b16 %v4384, %v4383
        %v4394 = vpack.c.b16 %v4386, %v4385
        %v4399 = vunpack.c.l.b16 %v4367
        %v4400 = vunpack.c.l.b16 %v4368
        %v4401 = vunpack.c.l.b16 %v4369
        %v4402 = vunpack.c.l.b16 %v4370
        %v4403 = vpack.c.b16 %v4400, %v4399
        %v4404 = vpack.c.b16 %v4402, %v4401
        %v4408 = vsel %vm1013, %v4387, 0
        %v4411 = vsel %vm1013, %v4388, 0
        %v4414 = vsel %vm1013, %v4389, 0
        %v4417 = vsel %vm1013, %v4390, 0
        %v4420 = vsel %vm1013, %v4391, 0
        %v4423 = vsel %vm1013, %v4392, 0
        %v4426 = vsel %vm1013, %v4393, 0
        %v4429 = vsel %vm1013, %v4394, 0
        %4431 = vmatprep.subr.bf16.mxu0 0
        %4432 = vmatpush1.bf16.msra.mxu0 %v4403
        %4433 = vmatprep.subr.bf16.mxu0 0
        %4434 = vmatpush1.bf16.msra.mxu0 %v4404
        %4435 = vmatprep.subr.bf16.mxu0 0
        %4436 = vmatpush1.bf16.msra.mxu0 0
        %4437 = vmatprep.subr.bf16.mxu0 0
        %4438 = vmatpush1.bf16.msra.mxu0 0
        %4439 = vmatprep.subr.bf16.mxu0 0
        %4440 = vmatpush1.bf16.msra.mxu0 0
        %4441 = vmatprep.subr.bf16.mxu0 0
        %4442 = vmatpush1.bf16.msra.mxu0 0
        %4443 = vmatprep.subr.bf16.mxu0 0
        %4444 = vmatpush1.bf16.msra.mxu0 0
        %4445 = vmatprep.subr.bf16.mxu0 0
        %4446 = vmatpush1.bf16.msra.mxu0 0
        %4447 = vmatprep.subr.bf16.mxu0 0
        %4448 = vmatpush1.bf16.msra.mxu0 0
        %4449 = vmatprep.subr.bf16.mxu0 0
        %4450 = vmatpush1.bf16.msra.mxu0 0
        %4451 = vmatprep.subr.bf16.mxu0 0
        %4452 = vmatpush1.bf16.msra.mxu0 0
        %4453 = vmatprep.subr.bf16.mxu0 0
        %4454 = vmatpush1.bf16.msra.mxu0 0
        %4455 = vmatprep.subr.bf16.mxu0 0
        %4456 = vmatpush1.bf16.msra.mxu0 0
        %4457 = vmatprep.subr.bf16.mxu0 0
        %4458 = vmatpush1.bf16.msra.mxu0 0
        %4459 = vmatprep.subr.bf16.mxu0 0
        %4460 = vmatpush1.bf16.msra.mxu0 0
        %4461 = vmatprep.subr.bf16.mxu0 0
        %4462 = vmatpush1.bf16.msra.mxu0 0
        %4463 = vmatprep.mubr.bf16.mxu0 0
        %4464 = vmatmul.mubr.bf16.gmra.mrb[0].mxu0 %v4408
        %v4465 = vpop.f32.mrb[0].mxu0
        %v4466 = vadd.f32 0.0, %v4465
        %v4467 = vpop.f32.mrb[0].mxu0
        %v4468 = vpop.f32.mrb[0].mxu0
        %v4469 = vadd.f32 0.0, %v4468
        %v4470 = vpop.f32.mrb[0].mxu0
        %4471 = vmatprep.mubr.bf16.mxu0 0
        %4472 = vmatmul.mubr.bf16.gmra.mrb[0].mxu0 %v4411
        %v4473 = vpop.f32.mrb[0].mxu0
        %v4474 = vadd.f32 0.0, %v4473
        %v4475 = vpop.f32.mrb[0].mxu0
        %v4476 = vpop.f32.mrb[0].mxu0
        %v4477 = vadd.f32 0.0, %v4476
        %v4478 = vpop.f32.mrb[0].mxu0
        %4479 = vmatprep.mubr.bf16.mxu0 0
        %4480 = vmatmul.mubr.bf16.gmra.mrb[0].mxu0 %v4414
        %v4481 = vpop.f32.mrb[0].mxu0
        %v4482 = vadd.f32 0.0, %v4481
        %v4483 = vpop.f32.mrb[0].mxu0
        %v4484 = vpop.f32.mrb[0].mxu0
        %v4485 = vadd.f32 0.0, %v4484
        %v4486 = vpop.f32.mrb[0].mxu0
        %4487 = vmatprep.mubr.bf16.mxu0 0
        %4488 = vmatmul.mubr.bf16.gmra.mrb[0].mxu0 %v4417
        %v4489 = vpop.f32.mrb[0].mxu0
        %v4490 = vadd.f32 0.0, %v4489
        %v4491 = vpop.f32.mrb[0].mxu0
        %v4492 = vpop.f32.mrb[0].mxu0
        %v4493 = vadd.f32 0.0, %v4492
        %v4494 = vpop.f32.mrb[0].mxu0
        %4495 = vmatprep.mubr.bf16.mxu0 0
        %4496 = vmatmul.mubr.bf16.gmra.mrb[0].mxu0 %v4420
        %v4497 = vpop.f32.mrb[0].mxu0
        %v4498 = vadd.f32 0.0, %v4497
        %v4499 = vpop.f32.mrb[0].mxu0
        %v4500 = vpop.f32.mrb[0].mxu0
        %v4501 = vadd.f32 0.0, %v4500
        %v4502 = vpop.f32.mrb[0].mxu0
        %4503 = vmatprep.mubr.bf16.mxu0 0
        %4504 = vmatmul.mubr.bf16.gmra.mrb[0].mxu0 %v4423
        %v4505 = vpop.f32.mrb[0].mxu0
        %v4506 = vadd.f32 0.0, %v4505
        %v4507 = vpop.f32.mrb[0].mxu0
        %v4508 = vpop.f32.mrb[0].mxu0
        %v4509 = vadd.f32 0.0, %v4508
        %v4510 = vpop.f32.mrb[0].mxu0
        %4511 = vmatprep.mubr.bf16.mxu0 0
        %4512 = vmatmul.mubr.bf16.gmra.mrb[0].mxu0 %v4426
        %v4513 = vpop.f32.mrb[0].mxu0
        %v4514 = vadd.f32 0.0, %v4513
        %v4515 = vpop.f32.mrb[0].mxu0
        %v4516 = vpop.f32.mrb[0].mxu0
        %v4517 = vadd.f32 0.0, %v4516
        %v4518 = vpop.f32.mrb[0].mxu0
        %4519 = vmatprep.mubr.bf16.mxu0 0
        %4520 = vmatmul.mubr.bf16.gmra.mrb[0].mxu0 %v4429
        %v4521 = vpop.f32.mrb[0].mxu0
        %v4522 = vadd.f32 0.0, %v4521
        %v4523 = vpop.f32.mrb[0].mxu0
        %v4524 = vpop.f32.mrb[0].mxu0
        %v4525 = vadd.f32 0.0, %v4524
        %v4526 = vpop.f32.mrb[0].mxu0
        %4527 = vdwg.mxu0
        %v4528 = vadd.f32 %v4246, %v4466
        %v4529 = vadd.f32 %v4247, %v4469
        %v4530 = vadd.f32 %v4248, %v4474
        %v4531 = vadd.f32 %v4249, %v4477
        %v4532 = vadd.f32 %v4250, %v4482
        %v4533 = vadd.f32 %v4251, %v4485
        %v4534 = vadd.f32 %v4252, %v4490
        %v4535 = vadd.f32 %v4253, %v4493
        %v4536 = vadd.f32 %v4254, %v4498
        %v4537 = vadd.f32 %v4255, %v4501
        %v4538 = vadd.f32 %v4256, %v4506
        %v4539 = vadd.f32 %v4257, %v4509
        %v4540 = vadd.f32 %v4258, %v4514
        %v4541 = vadd.f32 %v4259, %v4517
        %v4542 = vadd.f32 %v4260, %v4522
        %v4543 = vadd.f32 %v4261, %v4525
        %s4544 = sadd.s32 %s840, 30
        %s4545 = smul.u32 %s4544, 9
        %s4546 = smul.addr %s4545, 4
        %s4547 = scalar_lea.vmem [#allocation2], %s4546
        %v4548 = vld [vmem:[%s4547 + $0x8] sm:$0xc]
        %v4549 = vld [vmem:[%s4547 + $0xc] sm:$0xf]
        %v4550 = vld [vmem:[%s4547 + $0x10] sm:$0x3]
        %v4551 = vld [vmem:[%s4547 + $0x2c] sm:$0xc]
        %v4552 = vld [vmem:[%s4547 + $0x30] sm:$0xf]
        %v4553 = vld [vmem:[%s4547 + $0x34] sm:$0x3]
        %v4554 = vld [vmem:[%s4547 + $0x50] sm:$0xc]
        %v4555 = vld [vmem:[%s4547 + $0x54] sm:$0xf]
        %v4556 = vld [vmem:[%s4547 + $0x58] sm:$0x3]
        %v4557 = vld [vmem:[%s4547 + $0x74] sm:$0xc]
        %v4558 = vld [vmem:[%s4547 + $0x78] sm:$0xf]
        %v4559 = vld [vmem:[%s4547 + $0x7c] sm:$0x3]
        %v4560 = vld [vmem:[%s4547 + $0x98] sm:$0xc]
        %v4561 = vld [vmem:[%s4547 + $0x9c] sm:$0xf]
        %v4562 = vld [vmem:[%s4547 + $0xa0] sm:$0x3]
        %v4563 = vld [vmem:[%s4547 + $0xbc] sm:$0xc]
        %v4564 = vld [vmem:[%s4547 + $0xc0] sm:$0xf]
        %v4565 = vld [vmem:[%s4547 + $0xc4] sm:$0x3]
        %v4566 = vld [vmem:[%s4547 + $0xe0] sm:$0xc]
        %v4567 = vld [vmem:[%s4547 + $0xe4] sm:$0xf]
        %v4568 = vld [vmem:[%s4547 + $0xe8] sm:$0x3]
        %v4569 = vld [vmem:[%s4547 + $0x104] sm:$0xc]
        %v4570 = vld [vmem:[%s4547 + $0x108] sm:$0xf]
        %v4571 = vld [vmem:[%s4547 + $0x10c] sm:$0x3]
        %v4596 = vrot.slane %v4548, 6
        %v4597 = vrot.slane %v4596, 4
        %v4598 = vrot.slane %v4549, 6
        %v4599 = vsel %vm3155, %v4597, %v4598
        %v4600 = vrot.slane %v4598, 4
        %v4601 = vrot.slane %v4550, 6
        %v4602 = vsel %vm3155, %v4600, %v4601
        %v4603 = vrot.slane %v4551, 6
        %v4604 = vrot.slane %v4603, 4
        %v4605 = vrot.slane %v4552, 6
        %v4606 = vsel %vm3155, %v4604, %v4605
        %v4607 = vrot.slane %v4605, 4
        %v4608 = vrot.slane %v4553, 6
        %v4609 = vsel %vm3155, %v4607, %v4608
        %v4610 = vrot.slane %v4554, 6
        %v4611 = vrot.slane %v4610, 4
        %v4612 = vrot.slane %v4555, 6
        %v4613 = vsel %vm3155, %v4611, %v4612
        %v4614 = vrot.slane %v4612, 4
        %v4615 = vrot.slane %v4556, 6
        %v4616 = vsel %vm3155, %v4614, %v4615
        %v4617 = vrot.slane %v4557, 6
        %v4618 = vrot.slane %v4617, 4
        %v4619 = vrot.slane %v4558, 6
        %v4620 = vsel %vm3155, %v4618, %v4619
        %v4621 = vrot.slane %v4619, 4
        %v4622 = vrot.slane %v4559, 6
        %v4623 = vsel %vm3155, %v4621, %v4622
        %v4624 = vrot.slane %v4560, 6
        %v4625 = vrot.slane %v4624, 4
        %v4626 = vrot.slane %v4561, 6
        %v4627 = vsel %vm3155, %v4625, %v4626
        %v4628 = vrot.slane %v4626, 4
        %v4629 = vrot.slane %v4562, 6
        %v4630 = vsel %vm3155, %v4628, %v4629
        %v4631 = vrot.slane %v4563, 6
        %v4632 = vrot.slane %v4631, 4
        %v4633 = vrot.slane %v4564, 6
        %v4634 = vsel %vm3155, %v4632, %v4633
        %v4635 = vrot.slane %v4633, 4
        %v4636 = vrot.slane %v4565, 6
        %v4637 = vsel %vm3155, %v4635, %v4636
        %v4638 = vrot.slane %v4566, 6
        %v4639 = vrot.slane %v4638, 4
        %v4640 = vrot.slane %v4567, 6
        %v4641 = vsel %vm3155, %v4639, %v4640
        %v4642 = vrot.slane %v4640, 4
        %v4643 = vrot.slane %v4568, 6
        %v4644 = vsel %vm3155, %v4642, %v4643
        %v4645 = vrot.slane %v4569, 6
        %v4646 = vrot.slane %v4645, 4
        %v4647 = vrot.slane %v4570, 6
        %v4648 = vsel %vm3155, %v4646, %v4647
        %v4649 = vrot.slane %v4647, 4
        %v4650 = vrot.slane %v4571, 6
        %v4651 = vsel %vm3155, %v4649, %v4650
        %s4652 = scalar_lea.vmem [#allocation6], 240
        %v4653 = vld [vmem:[%s4652] sm:$0xf]
        %v4654 = vld [vmem:[%s4652 + $0x4] sm:$0xf]
        %v4655 = vld [vmem:[%s4652 + $0x8] sm:$0xf]
        %v4656 = vld [vmem:[%s4652 + $0xc] sm:$0xf]
        %v4657 = vunpack.c.l.b16 %v4599
        %v4658 = vunpack.c.l.b16 %v4602
        %v4659 = vunpack.c.l.b16 %v4606
        %v4660 = vunpack.c.l.b16 %v4609
        %v4661 = vunpack.c.l.b16 %v4613
        %v4662 = vunpack.c.l.b16 %v4616
        %v4663 = vunpack.c.l.b16 %v4620
        %v4664 = vunpack.c.l.b16 %v4623
        %v4665 = vunpack.c.l.b16 %v4627
        %v4666 = vunpack.c.l.b16 %v4630
        %v4667 = vunpack.c.l.b16 %v4634
        %v4668 = vunpack.c.l.b16 %v4637
        %v4669 = vunpack.c.l.b16 %v4641
        %v4670 = vunpack.c.l.b16 %v4644
        %v4671 = vunpack.c.l.b16 %v4648
        %v4672 = vunpack.c.l.b16 %v4651
        %v4673 = vpack.c.b16 %v4658, %v4657
        %v4674 = vpack.c.b16 %v4660, %v4659
        %v4675 = vpack.c.b16 %v4662, %v4661
        %v4676 = vpack.c.b16 %v4664, %v4663
        %v4677 = vpack.c.b16 %v4666, %v4665
        %v4678 = vpack.c.b16 %v4668, %v4667
        %v4679 = vpack.c.b16 %v4670, %v4669
        %v4680 = vpack.c.b16 %v4672, %v4671
        %v4685 = vunpack.c.l.b16 %v4653
        %v4686 = vunpack.c.l.b16 %v4654
        %v4687 = vunpack.c.l.b16 %v4655
        %v4688 = vunpack.c.l.b16 %v4656
        %v4689 = vpack.c.b16 %v4686, %v4685
        %v4690 = vpack.c.b16 %v4688, %v4687
        %v4694 = vsel %vm1013, %v4673, 0
        %v4697 = vsel %vm1013, %v4674, 0
        %v4700 = vsel %vm1013, %v4675, 0
        %v4703 = vsel %vm1013, %v4676, 0
        %v4706 = vsel %vm1013, %v4677, 0
        %v4709 = vsel %vm1013, %v4678, 0
        %v4712 = vsel %vm1013, %v4679, 0
        %v4715 = vsel %vm1013, %v4680, 0
        %4717 = vmatprep.subr.bf16.mxu0 0
        %4718 = vmatpush1.bf16.msra.mxu0 %v4689
        %4719 = vmatprep.subr.bf16.mxu0 0
        %4720 = vmatpush1.bf16.msra.mxu0 %v4690
        %4721 = vmatprep.subr.bf16.mxu0 0
        %4722 = vmatpush1.bf16.msra.mxu0 0
        %4723 = vmatprep.subr.bf16.mxu0 0
        %4724 = vmatpush1.bf16.msra.mxu0 0
        %4725 = vmatprep.subr.bf16.mxu0 0
        %4726 = vmatpush1.bf16.msra.mxu0 0
        %4727 = vmatprep.subr.bf16.mxu0 0
        %4728 = vmatpush1.bf16.msra.mxu0 0
        %4729 = vmatprep.subr.bf16.mxu0 0
        %4730 = vmatpush1.bf16.msra.mxu0 0
        %4731 = vmatprep.subr.bf16.mxu0 0
        %4732 = vmatpush1.bf16.msra.mxu0 0
        %4733 = vmatprep.subr.bf16.mxu0 0
        %4734 = vmatpush1.bf16.msra.mxu0 0
        %4735 = vmatprep.subr.bf16.mxu0 0
        %4736 = vmatpush1.bf16.msra.mxu0 0
        %4737 = vmatprep.subr.bf16.mxu0 0
        %4738 = vmatpush1.bf16.msra.mxu0 0
        %4739 = vmatprep.subr.bf16.mxu0 0
        %4740 = vmatpush1.bf16.msra.mxu0 0
        %4741 = vmatprep.subr.bf16.mxu0 0
        %4742 = vmatpush1.bf16.msra.mxu0 0
        %4743 = vmatprep.subr.bf16.mxu0 0
        %4744 = vmatpush1.bf16.msra.mxu0 0
        %4745 = vmatprep.subr.bf16.mxu0 0
        %4746 = vmatpush1.bf16.msra.mxu0 0
        %4747 = vmatprep.subr.bf16.mxu0 0
        %4748 = vmatpush1.bf16.msra.mxu0 0
        %4749 = vmatprep.mubr.bf16.mxu0 0
        %4750 = vmatmul.mubr.bf16.gmra.mrb[0].mxu0 %v4694
        %v4751 = vpop.f32.mrb[0].mxu0
        %v4752 = vadd.f32 0.0, %v4751
        %v4753 = vpop.f32.mrb[0].mxu0
        %v4754 = vpop.f32.mrb[0].mxu0
        %v4755 = vadd.f32 0.0, %v4754
        %v4756 = vpop.f32.mrb[0].mxu0
        %4757 = vmatprep.mubr.bf16.mxu0 0
        %4758 = vmatmul.mubr.bf16.gmra.mrb[0].mxu0 %v4697
        %v4759 = vpop.f32.mrb[0].mxu0
        %v4760 = vadd.f32 0.0, %v4759
        %v4761 = vpop.f32.mrb[0].mxu0
        %v4762 = vpop.f32.mrb[0].mxu0
        %v4763 = vadd.f32 0.0, %v4762
        %v4764 = vpop.f32.mrb[0].mxu0
        %4765 = vmatprep.mubr.bf16.mxu0 0
        %4766 = vmatmul.mubr.bf16.gmra.mrb[0].mxu0 %v4700
        %v4767 = vpop.f32.mrb[0].mxu0
        %v4768 = vadd.f32 0.0, %v4767
        %v4769 = vpop.f32.mrb[0].mxu0
        %v4770 = vpop.f32.mrb[0].mxu0
        %v4771 = vadd.f32 0.0, %v4770
        %v4772 = vpop.f32.mrb[0].mxu0
        %4773 = vmatprep.mubr.bf16.mxu0 0
        %4774 = vmatmul.mubr.bf16.gmra.mrb[0].mxu0 %v4703
        %v4775 = vpop.f32.mrb[0].mxu0
        %v4776 = vadd.f32 0.0, %v4775
        %v4777 = vpop.f32.mrb[0].mxu0
        %v4778 = vpop.f32.mrb[0].mxu0
        %v4779 = vadd.f32 0.0, %v4778
        %v4780 = vpop.f32.mrb[0].mxu0
        %4781 = vmatprep.mubr.bf16.mxu0 0
        %4782 = vmatmul.mubr.bf16.gmra.mrb[0].mxu0 %v4706
        %v4783 = vpop.f32.mrb[0].mxu0
        %v4784 = vadd.f32 0.0, %v4783
        %v4785 = vpop.f32.mrb[0].mxu0
        %v4786 = vpop.f32.mrb[0].mxu0
        %v4787 = vadd.f32 0.0, %v4786
        %v4788 = vpop.f32.mrb[0].mxu0
        %4789 = vmatprep.mubr.bf16.mxu0 0
        %4790 = vmatmul.mubr.bf16.gmra.mrb[0].mxu0 %v4709
        %v4791 = vpop.f32.mrb[0].mxu0
        %v4792 = vadd.f32 0.0, %v4791
        %v4793 = vpop.f32.mrb[0].mxu0
        %v4794 = vpop.f32.mrb[0].mxu0
        %v4795 = vadd.f32 0.0, %v4794
        %v4796 = vpop.f32.mrb[0].mxu0
        %4797 = vmatprep.mubr.bf16.mxu0 0
        %4798 = vmatmul.mubr.bf16.gmra.mrb[0].mxu0 %v4712
        %v4799 = vpop.f32.mrb[0].mxu0
        %v4800 = vadd.f32 0.0, %v4799
        %v4801 = vpop.f32.mrb[0].mxu0
        %v4802 = vpop.f32.mrb[0].mxu0
        %v4803 = vadd.f32 0.0, %v4802
        %v4804 = vpop.f32.mrb[0].mxu0
        %4805 = vmatprep.mubr.bf16.mxu0 0
        %4806 = vmatmul.mubr.bf16.gmra.mrb[0].mxu0 %v4715
        %v4807 = vpop.f32.mrb[0].mxu0
        %v4808 = vadd.f32 0.0, %v4807
        %v4809 = vpop.f32.mrb[0].mxu0
        %v4810 = vpop.f32.mrb[0].mxu0
        %v4811 = vadd.f32 0.0, %v4810
        %v4812 = vpop.f32.mrb[0].mxu0
        %4813 = vdwg.mxu0
        %v4814 = vadd.f32 %v4528, %v4752
        %v4815 = vadd.f32 %v4529, %v4755
        %v4816 = vadd.f32 %v4530, %v4760
        %v4817 = vadd.f32 %v4531, %v4763
        %v4818 = vadd.f32 %v4532, %v4768
        %v4819 = vadd.f32 %v4533, %v4771
        %v4820 = vadd.f32 %v4534, %v4776
        %v4821 = vadd.f32 %v4535, %v4779
        %v4822 = vadd.f32 %v4536, %v4784
        %v4823 = vadd.f32 %v4537, %v4787
        %v4824 = vadd.f32 %v4538, %v4792
        %v4825 = vadd.f32 %v4539, %v4795
        %v4826 = vadd.f32 %v4540, %v4800
        %v4827 = vadd.f32 %v4541, %v4803
        %v4828 = vadd.f32 %v4542, %v4808
        %v4829 = vadd.f32 %v4543, %v4811
        %v4830 = vld [vmem:[%s4547 + $0x10] sm:$0xf]
        %v4831 = vld [vmem:[%s4547 + $0x14] sm:$0xf]
        %v4832 = vld [vmem:[%s4547 + $0x34] sm:$0xf]
        %v4833 = vld [vmem:[%s4547 + $0x38] sm:$0xf]
        %v4834 = vld [vmem:[%s4547 + $0x58] sm:$0xf]
        %v4835 = vld [vmem:[%s4547 + $0x5c] sm:$0xf]
        %v4836 = vld [vmem:[%s4547 + $0x7c] sm:$0xf]
        %v4837 = vld [vmem:[%s4547 + $0x80] sm:$0xf]
        %v4838 = vld [vmem:[%s4547 + $0xa0] sm:$0xf]
        %v4839 = vld [vmem:[%s4547 + $0xa4] sm:$0xf]
        %v4840 = vld [vmem:[%s4547 + $0xc4] sm:$0xf]
        %v4841 = vld [vmem:[%s4547 + $0xc8] sm:$0xf]
        %v4842 = vld [vmem:[%s4547 + $0xe8] sm:$0xf]
        %v4843 = vld [vmem:[%s4547 + $0xec] sm:$0xf]
        %v4844 = vld [vmem:[%s4547 + $0x10c] sm:$0xf]
        %v4845 = vld [vmem:[%s4547 + $0x110] sm:$0xf]
        %s4846 = scalar_lea.vmem [#allocation6], 256
        %v4847 = vld [vmem:[%s4846] sm:$0xf]
        %v4848 = vld [vmem:[%s4846 + $0x4] sm:$0xf]
        %v4849 = vld [vmem:[%s4846 + $0x8] sm:$0xf]
        %v4850 = vld [vmem:[%s4846 + $0xc] sm:$0xf]
        %v4867 = vunpack.c.l.b16 %v4830
        %v4868 = vunpack.c.l.b16 %v4831
        %v4869 = vunpack.c.l.b16 %v4832
        %v4870 = vunpack.c.l.b16 %v4833
        %v4871 = vunpack.c.l.b16 %v4834
        %v4872 = vunpack.c.l.b16 %v4835
        %v4873 = vunpack.c.l.b16 %v4836
        %v4874 = vunpack.c.l.b16 %v4837
        %v4875 = vunpack.c.l.b16 %v4838
        %v4876 = vunpack.c.l.b16 %v4839
        %v4877 = vunpack.c.l.b16 %v4840
        %v4878 = vunpack.c.l.b16 %v4841
        %v4879 = vunpack.c.l.b16 %v4842
        %v4880 = vunpack.c.l.b16 %v4843
        %v4881 = vunpack.c.l.b16 %v4844
        %v4882 = vunpack.c.l.b16 %v4845
        %v4883 = vpack.c.b16 %v4868, %v4867
        %v4884 = vpack.c.b16 %v4870, %v4869
        %v4885 = vpack.c.b16 %v4872, %v4871
        %v4886 = vpack.c.b16 %v4874, %v4873
        %v4887 = vpack.c.b16 %v4876, %v4875
        %v4888 = vpack.c.b16 %v4878, %v4877
        %v4889 = vpack.c.b16 %v4880, %v4879
        %v4890 = vpack.c.b16 %v4882, %v4881
        %v4895 = vunpack.c.l.b16 %v4847
        %v4896 = vunpack.c.l.b16 %v4848
        %v4897 = vunpack.c.l.b16 %v4849
        %v4898 = vunpack.c.l.b16 %v4850
        %v4899 = vpack.c.b16 %v4896, %v4895
        %v4900 = vpack.c.b16 %v4898, %v4897
        %v4904 = vsel %vm1013, %v4883, 0
        %v4907 = vsel %vm1013, %v4884, 0
        %v4910 = vsel %vm1013, %v4885, 0
        %v4913 = vsel %vm1013, %v4886, 0
        %v4916 = vsel %vm1013, %v4887, 0
        %v4919 = vsel %vm1013, %v4888, 0
        %v4922 = vsel %vm1013, %v4889, 0
        %v4925 = vsel %vm1013, %v4890, 0
        %4927 = vmatprep.subr.bf16.mxu0 0
        %4928 = vmatpush1.bf16.msra.mxu0 %v4899
        %4929 = vmatprep.subr.bf16.mxu0 0
        %4930 = vmatpush1.bf16.msra.mxu0 %v4900
        %4931 = vmatprep.subr.bf16.mxu0 0
        %4932 = vmatpush1.bf16.msra.mxu0 0
        %4933 = vmatprep.subr.bf16.mxu0 0
        %4934 = vmatpush1.bf16.msra.mxu0 0
        %4935 = vmatprep.subr.bf16.mxu0 0
        %4936 = vmatpush1.bf16.msra.mxu0 0
        %4937 = vmatprep.subr.bf16.mxu0 0
        %4938 = vmatpush1.bf16.msra.mxu0 0
        %4939 = vmatprep.subr.bf16.mxu0 0
        %4940 = vmatpush1.bf16.msra.mxu0 0
        %4941 = vmatprep.subr.bf16.mxu0 0
        %4942 = vmatpush1.bf16.msra.mxu0 0
        %4943 = vmatprep.subr.bf16.mxu0 0
        %4944 = vmatpush1.bf16.msra.mxu0 0
        %4945 = vmatprep.subr.bf16.mxu0 0
        %4946 = vmatpush1.bf16.msra.mxu0 0
        %4947 = vmatprep.subr.bf16.mxu0 0
        %4948 = vmatpush1.bf16.msra.mxu0 0
        %4949 = vmatprep.subr.bf16.mxu0 0
        %4950 = vmatpush1.bf16.msra.mxu0 0
        %4951 = vmatprep.subr.bf16.mxu0 0
        %4952 = vmatpush1.bf16.msra.mxu0 0
        %4953 = vmatprep.subr.bf16.mxu0 0
        %4954 = vmatpush1.bf16.msra.mxu0 0
        %4955 = vmatprep.subr.bf16.mxu0 0
        %4956 = vmatpush1.bf16.msra.mxu0 0
        %4957 = vmatprep.subr.bf16.mxu0 0
        %4958 = vmatpush1.bf16.msra.mxu0 0
        %4959 = vmatprep.mubr.bf16.mxu0 0
        %4960 = vmatmul.mubr.bf16.gmra.mrb[0].mxu0 %v4904
        %v4961 = vpop.f32.mrb[0].mxu0
        %v4962 = vadd.f32 0.0, %v4961
        %v4963 = vpop.f32.mrb[0].mxu0
        %v4964 = vpop.f32.mrb[0].mxu0
        %v4965 = vadd.f32 0.0, %v4964
        %v4966 = vpop.f32.mrb[0].mxu0
        %4967 = vmatprep.mubr.bf16.mxu0 0
        %4968 = vmatmul.mubr.bf16.gmra.mrb[0].mxu0 %v4907
        %v4969 = vpop.f32.mrb[0].mxu0
        %v4970 = vadd.f32 0.0, %v4969
        %v4971 = vpop.f32.mrb[0].mxu0
        %v4972 = vpop.f32.mrb[0].mxu0
        %v4973 = vadd.f32 0.0, %v4972
        %v4974 = vpop.f32.mrb[0].mxu0
        %4975 = vmatprep.mubr.bf16.mxu0 0
        %4976 = vmatmul.mubr.bf16.gmra.mrb[0].mxu0 %v4910
        %v4977 = vpop.f32.mrb[0].mxu0
        %v4978 = vadd.f32 0.0, %v4977
        %v4979 = vpop.f32.mrb[0].mxu0
        %v4980 = vpop.f32.mrb[0].mxu0
        %v4981 = vadd.f32 0.0, %v4980
        %v4982 = vpop.f32.mrb[0].mxu0
        %4983 = vmatprep.mubr.bf16.mxu0 0
        %4984 = vmatmul.mubr.bf16.gmra.mrb[0].mxu0 %v4913
        %v4985 = vpop.f32.mrb[0].mxu0
        %v4986 = vadd.f32 0.0, %v4985
        %v4987 = vpop.f32.mrb[0].mxu0
        %v4988 = vpop.f32.mrb[0].mxu0
        %v4989 = vadd.f32 0.0, %v4988
        %v4990 = vpop.f32.mrb[0].mxu0
        %4991 = vmatprep.mubr.bf16.mxu0 0
        %4992 = vmatmul.mubr.bf16.gmra.mrb[0].mxu0 %v4916
        %v4993 = vpop.f32.mrb[0].mxu0
        %v4994 = vadd.f32 0.0, %v4993
        %v4995 = vpop.f32.mrb[0].mxu0
        %v4996 = vpop.f32.mrb[0].mxu0
        %v4997 = vadd.f32 0.0, %v4996
        %v4998 = vpop.f32.mrb[0].mxu0
        %4999 = vmatprep.mubr.bf16.mxu0 0
        %5000 = vmatmul.mubr.bf16.gmra.mrb[0].mxu0 %v4919
        %v5001 = vpop.f32.mrb[0].mxu0
        %v5002 = vadd.f32 0.0, %v5001
        %v5003 = vpop.f32.mrb[0].mxu0
        %v5004 = vpop.f32.mrb[0].mxu0
        %v5005 = vadd.f32 0.0, %v5004
        %v5006 = vpop.f32.mrb[0].mxu0
        %5007 = vmatprep.mubr.bf16.mxu0 0
        %5008 = vmatmul.mubr.bf16.gmra.mrb[0].mxu0 %v4922
        %v5009 = vpop.f32.mrb[0].mxu0
        %v5010 = vadd.f32 0.0, %v5009
        %v5011 = vpop.f32.mrb[0].mxu0
        %v5012 = vpop.f32.mrb[0].mxu0
        %v5013 = vadd.f32 0.0, %v5012
        %v5014 = vpop.f32.mrb[0].mxu0
        %5015 = vmatprep.mubr.bf16.mxu0 0
        %5016 = vmatmul.mubr.bf16.gmra.mrb[0].mxu0 %v4925
        %v5017 = vpop.f32.mrb[0].mxu0
        %v5018 = vadd.f32 0.0, %v5017
        %v5019 = vpop.f32.mrb[0].mxu0
        %v5020 = vpop.f32.mrb[0].mxu0
        %v5021 = vadd.f32 0.0, %v5020
        %v5022 = vpop.f32.mrb[0].mxu0
        %5023 = vdwg.mxu0
        %v5024 = vadd.f32 %v4814, %v4962
        %v5025 = vadd.f32 %v4815, %v4965
        %v5026 = vadd.f32 %v4816, %v4970
        %v5027 = vadd.f32 %v4817, %v4973
        %v5028 = vadd.f32 %v4818, %v4978
        %v5029 = vadd.f32 %v4819, %v4981
        %v5030 = vadd.f32 %v4820, %v4986
        %v5031 = vadd.f32 %v4821, %v4989
        %v5032 = vadd.f32 %v4822, %v4994
        %v5033 = vadd.f32 %v4823, %v4997
        %v5034 = vadd.f32 %v4824, %v5002
        %v5035 = vadd.f32 %v4825, %v5005
        %v5036 = vadd.f32 %v4826, %v5010
        %v5037 = vadd.f32 %v4827, %v5013
        %v5038 = vadd.f32 %v4828, %v5018
        %v5039 = vadd.f32 %v4829, %v5021
        %v5040 = vld [vmem:[%s4547 + $0x14] sm:$0xc]
        %v5041 = vld [vmem:[%s4547 + $0x18] sm:$0xf]
        %v5042 = vld [vmem:[%s4547 + $0x1c] sm:$0x3]
        %v5043 = vld [vmem:[%s4547 + $0x38] sm:$0xc]
        %v5044 = vld [vmem:[%s4547 + $0x3c] sm:$0xf]
        %v5045 = vld [vmem:[%s4547 + $0x40] sm:$0x3]
        %v5046 = vld [vmem:[%s4547 + $0x5c] sm:$0xc]
        %v5047 = vld [vmem:[%s4547 + $0x60] sm:$0xf]
        %v5048 = vld [vmem:[%s4547 + $0x64] sm:$0x3]
        %v5049 = vld [vmem:[%s4547 + $0x80] sm:$0xc]
        %v5050 = vld [vmem:[%s4547 + $0x84] sm:$0xf]
        %v5051 = vld [vmem:[%s4547 + $0x88] sm:$0x3]
        %v5052 = vld [vmem:[%s4547 + $0xa4] sm:$0xc]
        %v5053 = vld [vmem:[%s4547 + $0xa8] sm:$0xf]
        %v5054 = vld [vmem:[%s4547 + $0xac] sm:$0x3]
        %v5055 = vld [vmem:[%s4547 + $0xc8] sm:$0xc]
        %v5056 = vld [vmem:[%s4547 + $0xcc] sm:$0xf]
        %v5057 = vld [vmem:[%s4547 + $0xd0] sm:$0x3]
        %v5058 = vld [vmem:[%s4547 + $0xec] sm:$0xc]
        %v5059 = vld [vmem:[%s4547 + $0xf0] sm:$0xf]
        %v5060 = vld [vmem:[%s4547 + $0xf4] sm:$0x3]
        %v5061 = vld [vmem:[%s4547 + $0x110] sm:$0xc]
        %v5062 = vld [vmem:[%s4547 + $0x114] sm:$0xf]
        %v5063 = vld [vmem:[%s4547 + $0x118] sm:$0x3]
        %v5088 = vrot.slane %v5040, 6
        %v5089 = vrot.slane %v5088, 4
        %v5090 = vrot.slane %v5041, 6
        %v5091 = vsel %vm3155, %v5089, %v5090
        %v5092 = vrot.slane %v5090, 4
        %v5093 = vrot.slane %v5042, 6
        %v5094 = vsel %vm3155, %v5092, %v5093
        %v5095 = vrot.slane %v5043, 6
        %v5096 = vrot.slane %v5095, 4
        %v5097 = vrot.slane %v5044, 6
        %v5098 = vsel %vm3155, %v5096, %v5097
        %v5099 = vrot.slane %v5097, 4
        %v5100 = vrot.slane %v5045, 6
        %v5101 = vsel %vm3155, %v5099, %v5100
        %v5102 = vrot.slane %v5046, 6
        %v5103 = vrot.slane %v5102, 4
        %v5104 = vrot.slane %v5047, 6
        %v5105 = vsel %vm3155, %v5103, %v5104
        %v5106 = vrot.slane %v5104, 4
        %v5107 = vrot.slane %v5048, 6
        %v5108 = vsel %vm3155, %v5106, %v5107
        %v5109 = vrot.slane %v5049, 6
        %v5110 = vrot.slane %v5109, 4
        %v5111 = vrot.slane %v5050, 6
        %v5112 = vsel %vm3155, %v5110, %v5111
        %v5113 = vrot.slane %v5111, 4
        %v5114 = vrot.slane %v5051, 6
        %v5115 = vsel %vm3155, %v5113, %v5114
        %v5116 = vrot.slane %v5052, 6
        %v5117 = vrot.slane %v5116, 4
        %v5118 = vrot.slane %v5053, 6
        %v5119 = vsel %vm3155, %v5117, %v5118
        %v5120 = vrot.slane %v5118, 4
        %v5121 = vrot.slane %v5054, 6
        %v5122 = vsel %vm3155, %v5120, %v5121
        %v5123 = vrot.slane %v5055, 6
        %v5124 = vrot.slane %v5123, 4
        %v5125 = vrot.slane %v5056, 6
        %v5126 = vsel %vm3155, %v5124, %v5125
        %v5127 = vrot.slane %v5125, 4
        %v5128 = vrot.slane %v5057, 6
        %v5129 = vsel %vm3155, %v5127, %v5128
        %v5130 = vrot.slane %v5058, 6
        %v5131 = vrot.slane %v5130, 4
        %v5132 = vrot.slane %v5059, 6
        %v5133 = vsel %vm3155, %v5131, %v5132
        %v5134 = vrot.slane %v5132, 4
        %v5135 = vrot.slane %v5060, 6
        %v5136 = vsel %vm3155, %v5134, %v5135
        %v5137 = vrot.slane %v5061, 6
        %v5138 = vrot.slane %v5137, 4
        %v5139 = vrot.slane %v5062, 6
        %v5140 = vsel %vm3155, %v5138, %v5139
        %v5141 = vrot.slane %v5139, 4
        %v5142 = vrot.slane %v5063, 6
        %v5143 = vsel %vm3155, %v5141, %v5142
        %s5144 = scalar_lea.vmem [#allocation6], 272
        %v5145 = vld [vmem:[%s5144] sm:$0xf]
        %v5146 = vld [vmem:[%s5144 + $0x4] sm:$0xf]
        %v5147 = vld [vmem:[%s5144 + $0x8] sm:$0xf]
        %v5148 = vld [vmem:[%s5144 + $0xc] sm:$0xf]
        %v5149 = vunpack.c.l.b16 %v5091
        %v5150 = vunpack.c.l.b16 %v5094
        %v5151 = vunpack.c.l.b16 %v5098
        %v5152 = vunpack.c.l.b16 %v5101
        %v5153 = vunpack.c.l.b16 %v5105
        %v5154 = vunpack.c.l.b16 %v5108
        %v5155 = vunpack.c.l.b16 %v5112
        %v5156 = vunpack.c.l.b16 %v5115
        %v5157 = vunpack.c.l.b16 %v5119
        %v5158 = vunpack.c.l.b16 %v5122
        %v5159 = vunpack.c.l.b16 %v5126
        %v5160 = vunpack.c.l.b16 %v5129
        %v5161 = vunpack.c.l.b16 %v5133
        %v5162 = vunpack.c.l.b16 %v5136
        %v5163 = vunpack.c.l.b16 %v5140
        %v5164 = vunpack.c.l.b16 %v5143
        %v5165 = vpack.c.b16 %v5150, %v5149
        %v5166 = vpack.c.b16 %v5152, %v5151
        %v5167 = vpack.c.b16 %v5154, %v5153
        %v5168 = vpack.c.b16 %v5156, %v5155
        %v5169 = vpack.c.b16 %v5158, %v5157
        %v5170 = vpack.c.b16 %v5160, %v5159
        %v5171 = vpack.c.b16 %v5162, %v5161
        %v5172 = vpack.c.b16 %v5164, %v5163
        %v5177 = vunpack.c.l.b16 %v5145
        %v5178 = vunpack.c.l.b16 %v5146
        %v5179 = vunpack.c.l.b16 %v5147
        %v5180 = vunpack.c.l.b16 %v5148
        %v5181 = vpack.c.b16 %v5178, %v5177
        %v5182 = vpack.c.b16 %v5180, %v5179
        %v5186 = vsel %vm1013, %v5165, 0
        %v5189 = vsel %vm1013, %v5166, 0
        %v5192 = vsel %vm1013, %v5167, 0
        %v5195 = vsel %vm1013, %v5168, 0
        %v5198 = vsel %vm1013, %v5169, 0
        %v5201 = vsel %vm1013, %v5170, 0
        %v5204 = vsel %vm1013, %v5171, 0
        %v5207 = vsel %vm1013, %v5172, 0
        %5209 = vmatprep.subr.bf16.mxu0 0
        %5210 = vmatpush1.bf16.msra.mxu0 %v5181
        %5211 = vmatprep.subr.bf16.mxu0 0
        %5212 = vmatpush1.bf16.msra.mxu0 %v5182
        %5213 = vmatprep.subr.bf16.mxu0 0
        %5214 = vmatpush1.bf16.msra.mxu0 0
        %5215 = vmatprep.subr.bf16.mxu0 0
        %5216 = vmatpush1.bf16.msra.mxu0 0
        %5217 = vmatprep.subr.bf16.mxu0 0
        %5218 = vmatpush1.bf16.msra.mxu0 0
        %5219 = vmatprep.subr.bf16.mxu0 0
        %5220 = vmatpush1.bf16.msra.mxu0 0
        %5221 = vmatprep.subr.bf16.mxu0 0
        %5222 = vmatpush1.bf16.msra.mxu0 0
        %5223 = vmatprep.subr.bf16.mxu0 0
        %5224 = vmatpush1.bf16.msra.mxu0 0
        %5225 = vmatprep.subr.bf16.mxu0 0
        %5226 = vmatpush1.bf16.msra.mxu0 0
        %5227 = vmatprep.subr.bf16.mxu0 0
        %5228 = vmatpush1.bf16.msra.mxu0 0
        %5229 = vmatprep.subr.bf16.mxu0 0
        %5230 = vmatpush1.bf16.msra.mxu0 0
        %5231 = vmatprep.subr.bf16.mxu0 0
        %5232 = vmatpush1.bf16.msra.mxu0 0
        %5233 = vmatprep.subr.bf16.mxu0 0
        %5234 = vmatpush1.bf16.msra.mxu0 0
        %5235 = vmatprep.subr.bf16.mxu0 0
        %5236 = vmatpush1.bf16.msra.mxu0 0
        %5237 = vmatprep.subr.bf16.mxu0 0
        %5238 = vmatpush1.bf16.msra.mxu0 0
        %5239 = vmatprep.subr.bf16.mxu0 0
        %5240 = vmatpush1.bf16.msra.mxu0 0
        %5241 = vmatprep.mubr.bf16.mxu0 0
        %5242 = vmatmul.mubr.bf16.gmra.mrb[0].mxu0 %v5186
        %v5243 = vpop.f32.mrb[0].mxu0
        %v5244 = vadd.f32 0.0, %v5243
        %v5245 = vpop.f32.mrb[0].mxu0
        %v5246 = vpop.f32.mrb[0].mxu0
        %v5247 = vadd.f32 0.0, %v5246
        %v5248 = vpop.f32.mrb[0].mxu0
        %5249 = vmatprep.mubr.bf16.mxu0 0
        %5250 = vmatmul.mubr.bf16.gmra.mrb[0].mxu0 %v5189
        %v5251 = vpop.f32.mrb[0].mxu0
        %v5252 = vadd.f32 0.0, %v5251
        %v5253 = vpop.f32.mrb[0].mxu0
        %v5254 = vpop.f32.mrb[0].mxu0
        %v5255 = vadd.f32 0.0, %v5254
        %v5256 = vpop.f32.mrb[0].mxu0
        %5257 = vmatprep.mubr.bf16.mxu0 0
        %5258 = vmatmul.mubr.bf16.gmra.mrb[0].mxu0 %v5192
        %v5259 = vpop.f32.mrb[0].mxu0
        %v5260 = vadd.f32 0.0, %v5259
        %v5261 = vpop.f32.mrb[0].mxu0
        %v5262 = vpop.f32.mrb[0].mxu0
        %v5263 = vadd.f32 0.0, %v5262
        %v5264 = vpop.f32.mrb[0].mxu0
        %5265 = vmatprep.mubr.bf16.mxu0 0
        %5266 = vmatmul.mubr.bf16.gmra.mrb[0].mxu0 %v5195
        %v5267 = vpop.f32.mrb[0].mxu0
        %v5268 = vadd.f32 0.0, %v5267
        %v5269 = vpop.f32.mrb[0].mxu0
        %v5270 = vpop.f32.mrb[0].mxu0
        %v5271 = vadd.f32 0.0, %v5270
        %v5272 = vpop.f32.mrb[0].mxu0
        %5273 = vmatprep.mubr.bf16.mxu0 0
        %5274 = vmatmul.mubr.bf16.gmra.mrb[0].mxu0 %v5198
        %v5275 = vpop.f32.mrb[0].mxu0
        %v5276 = vadd.f32 0.0, %v5275
        %v5277 = vpop.f32.mrb[0].mxu0
        %v5278 = vpop.f32.mrb[0].mxu0
        %v5279 = vadd.f32 0.0, %v5278
        %v5280 = vpop.f32.mrb[0].mxu0
        %5281 = vmatprep.mubr.bf16.mxu0 0
        %5282 = vmatmul.mubr.bf16.gmra.mrb[0].mxu0 %v5201
        %v5283 = vpop.f32.mrb[0].mxu0
        %v5284 = vadd.f32 0.0, %v5283
        %v5285 = vpop.f32.mrb[0].mxu0
        %v5286 = vpop.f32.mrb[0].mxu0
        %v5287 = vadd.f32 0.0, %v5286
        %v5288 = vpop.f32.mrb[0].mxu0
        %5289 = vmatprep.mubr.bf16.mxu0 0
        %5290 = vmatmul.mubr.bf16.gmra.mrb[0].mxu0 %v5204
        %v5291 = vpop.f32.mrb[0].mxu0
        %v5292 = vadd.f32 0.0, %v5291
        %v5293 = vpop.f32.mrb[0].mxu0
        %v5294 = vpop.f32.mrb[0].mxu0
        %v5295 = vadd.f32 0.0, %v5294
        %v5296 = vpop.f32.mrb[0].mxu0
        %5297 = vmatprep.mubr.bf16.mxu0 0
        %5298 = vmatmul.mubr.bf16.gmra.mrb[0].mxu0 %v5207
        %v5299 = vpop.f32.mrb[0].mxu0
        %v5300 = vadd.f32 0.0, %v5299
        %v5301 = vpop.f32.mrb[0].mxu0
        %v5302 = vpop.f32.mrb[0].mxu0
        %v5303 = vadd.f32 0.0, %v5302
        %v5304 = vpop.f32.mrb[0].mxu0
        %5305 = vdwg.mxu0
        %v5306 = vadd.f32 %v5024, %v5244
        %v5307 = vadd.f32 %v5025, %v5247
        %v5308 = vadd.f32 %v5026, %v5252
        %v5309 = vadd.f32 %v5027, %v5255
        %v5310 = vadd.f32 %v5028, %v5260
        %v5311 = vadd.f32 %v5029, %v5263
        %v5312 = vadd.f32 %v5030, %v5268
        %v5313 = vadd.f32 %v5031, %v5271
        %v5314 = vadd.f32 %v5032, %v5276
        %v5315 = vadd.f32 %v5033, %v5279
        %v5316 = vadd.f32 %v5034, %v5284
        %v5317 = vadd.f32 %v5035, %v5287
        %v5318 = vadd.f32 %v5036, %v5292
        %v5319 = vadd.f32 %v5037, %v5295
        %v5320 = vadd.f32 %v5038, %v5300
        %v5321 = vadd.f32 %v5039, %v5303
        %s5322 = smul.u32 %s840, 9
        %s5323 = smul.addr %s5322, 4
        %s5324 = scalar_lea.vmem [#allocation2], %s5323
        %v5325 = vld [vmem:[%s5324 + $0x4] sm:$0x8]
        %v5326 = vld [vmem:[%s5324 + $0x8] sm:$0xf]
        %v5327 = vld [vmem:[%s5324 + $0xc] sm:$0x7]
        %v5328 = vld [vmem:[%s5324 + $0x28] sm:$0x8]
        %v5329 = vld [vmem:[%s5324 + $0x2c] sm:$0xf]
        %v5330 = vld [vmem:[%s5324 + $0x30] sm:$0x7]
        %v5331 = vld [vmem:[%s5324 + $0x4c] sm:$0x8]
        %v5332 = vld [vmem:[%s5324 + $0x50] sm:$0xf]
        %v5333 = vld [vmem:[%s5324 + $0x54] sm:$0x7]
        %v5334 = vld [vmem:[%s5324 + $0x70] sm:$0x8]
        %v5335 = vld [vmem:[%s5324 + $0x74] sm:$0xf]
        %v5336 = vld [vmem:[%s5324 + $0x78] sm:$0x7]
        %v5337 = vld [vmem:[%s5324 + $0x94] sm:$0x8]
        %v5338 = vld [vmem:[%s5324 + $0x98] sm:$0xf]
        %v5339 = vld [vmem:[%s5324 + $0x9c] sm:$0x7]
        %v5340 = vld [vmem:[%s5324 + $0xb8] sm:$0x8]
        %v5341 = vld [vmem:[%s5324 + $0xbc] sm:$0xf]
        %v5342 = vld [vmem:[%s5324 + $0xc0] sm:$0x7]
        %v5343 = vld [vmem:[%s5324 + $0xdc] sm:$0x8]
        %v5344 = vld [vmem:[%s5324 + $0xe0] sm:$0xf]
        %v5345 = vld [vmem:[%s5324 + $0xe4] sm:$0x7]
        %v5346 = vld [vmem:[%s5324 + $0x100] sm:$0x8]
        %v5347 = vld [vmem:[%s5324 + $0x104] sm:$0xf]
        %v5348 = vld [vmem:[%s5324 + $0x108] sm:$0x7]
        %v5373 = vrot.slane %v5325, 7
        %v5374 = vrot.slane %v5373, 4
        %v5375 = vrot.slane %v5326, 7
        %v5376 = vsel %vm1342, %v5374, %v5375
        %v5377 = vrot.slane %v5375, 4
        %v5378 = vrot.slane %v5327, 7
        %v5379 = vsel %vm1342, %v5377, %v5378
        %v5380 = vrot.slane %v5328, 7
        %v5381 = vrot.slane %v5380, 4
        %v5382 = vrot.slane %v5329, 7
        %v5383 = vsel %vm1342, %v5381, %v5382
        %v5384 = vrot.slane %v5382, 4
        %v5385 = vrot.slane %v5330, 7
        %v5386 = vsel %vm1342, %v5384, %v5385
        %v5387 = vrot.slane %v5331, 7
        %v5388 = vrot.slane %v5387, 4
        %v5389 = vrot.slane %v5332, 7
        %v5390 = vsel %vm1342, %v5388, %v5389
        %v5391 = vrot.slane %v5389, 4
        %v5392 = vrot.slane %v5333, 7
        %v5393 = vsel %vm1342, %v5391, %v5392
        %v5394 = vrot.slane %v5334, 7
        %v5395 = vrot.slane %v5394, 4
        %v5396 = vrot.slane %v5335, 7
        %v5397 = vsel %vm1342, %v5395, %v5396
        %v5398 = vrot.slane %v5396, 4
        %v5399 = vrot.slane %v5336, 7
        %v5400 = vsel %vm1342, %v5398, %v5399
        %v5401 = vrot.slane %v5337, 7
        %v5402 = vrot.slane %v5401, 4
        %v5403 = vrot.slane %v5338, 7
        %v5404 = vsel %vm1342, %v5402, %v5403
        %v5405 = vrot.slane %v5403, 4
        %v5406 = vrot.slane %v5339, 7
        %v5407 = vsel %vm1342, %v5405, %v5406
        %v5408 = vrot.slane %v5340, 7
        %v5409 = vrot.slane %v5408, 4
        %v5410 = vrot.slane %v5341, 7
        %v5411 = vsel %vm1342, %v5409, %v5410
        %v5412 = vrot.slane %v5410, 4
        %v5413 = vrot.slane %v5342, 7
        %v5414 = vsel %vm1342, %v5412, %v5413
        %v5415 = vrot.slane %v5343, 7
        %v5416 = vrot.slane %v5415, 4
        %v5417 = vrot.slane %v5344, 7
        %v5418 = vsel %vm1342, %v5416, %v5417
        %v5419 = vrot.slane %v5417, 4
        %v5420 = vrot.slane %v5345, 7
        %v5421 = vsel %vm1342, %v5419, %v5420
        %v5422 = vrot.slane %v5346, 7
        %v5423 = vrot.slane %v5422, 4
        %v5424 = vrot.slane %v5347, 7
        %v5425 = vsel %vm1342, %v5423, %v5424
        %v5426 = vrot.slane %v5424, 4
        %v5427 = vrot.slane %v5348, 7
        %v5428 = vsel %vm1342, %v5426, %v5427
        %s5429 = scalar_lea.vmem [#allocation6], 288
        %v5430 = vld [vmem:[%s5429] sm:$0xf]
        %v5431 = vld [vmem:[%s5429 + $0x4] sm:$0xf]
        %v5432 = vld [vmem:[%s5429 + $0x8] sm:$0xf]
        %v5433 = vld [vmem:[%s5429 + $0xc] sm:$0xf]
        %v5434 = vld [vmem:[%s5324 + $0x10] sm:$0xf]
        %v5435 = vld [vmem:[%s5324 + $0x14] sm:$0xf]
        %v5436 = vld [vmem:[%s5324 + $0x34] sm:$0xf]
        %v5437 = vld [vmem:[%s5324 + $0x38] sm:$0xf]
        %v5438 = vld [vmem:[%s5324 + $0x58] sm:$0xf]
        %v5439 = vld [vmem:[%s5324 + $0x5c] sm:$0xf]
        %v5440 = vld [vmem:[%s5324 + $0x7c] sm:$0xf]
        %v5441 = vld [vmem:[%s5324 + $0x80] sm:$0xf]
        %v5442 = vld [vmem:[%s5324 + $0xa0] sm:$0xf]
        %v5443 = vld [vmem:[%s5324 + $0xa4] sm:$0xf]
        %v5444 = vld [vmem:[%s5324 + $0xc4] sm:$0xf]
        %v5445 = vld [vmem:[%s5324 + $0xc8] sm:$0xf]
        %v5446 = vld [vmem:[%s5324 + $0xe8] sm:$0xf]
        %v5447 = vld [vmem:[%s5324 + $0xec] sm:$0xf]
        %v5448 = vld [vmem:[%s5324 + $0x10c] sm:$0xf]
        %v5449 = vld [vmem:[%s5324 + $0x110] sm:$0xf]
        %s5450 = scalar_lea.vmem [#allocation6], 304
        %v5451 = vld [vmem:[%s5450] sm:$0xf]
        %v5452 = vld [vmem:[%s5450 + $0x4] sm:$0xf]
        %v5453 = vld [vmem:[%s5450 + $0x8] sm:$0xf]
        %v5454 = vld [vmem:[%s5450 + $0xc] sm:$0xf]
        %v5471 = vunpack.c.l.b16 %v5434
        %v5472 = vunpack.c.l.b16 %v5435
        %v5473 = vunpack.c.l.b16 %v5436
        %v5474 = vunpack.c.l.b16 %v5437
        %v5475 = vunpack.c.l.b16 %v5438
        %v5476 = vunpack.c.l.b16 %v5439
        %v5477 = vunpack.c.l.b16 %v5440
        %v5478 = vunpack.c.l.b16 %v5441
        %v5479 = vunpack.c.l.b16 %v5442
        %v5480 = vunpack.c.l.b16 %v5443
        %v5481 = vunpack.c.l.b16 %v5444
        %v5482 = vunpack.c.l.b16 %v5445
        %v5483 = vunpack.c.l.b16 %v5446
        %v5484 = vunpack.c.l.b16 %v5447
        %v5485 = vunpack.c.l.b16 %v5448
        %v5486 = vunpack.c.l.b16 %v5449
        %v5487 = vpack.c.b16 %v5472, %v5471
        %v5488 = vpack.c.b16 %v5474, %v5473
        %v5489 = vpack.c.b16 %v5476, %v5475
        %v5490 = vpack.c.b16 %v5478, %v5477
        %v5491 = vpack.c.b16 %v5480, %v5479
        %v5492 = vpack.c.b16 %v5482, %v5481
        %v5493 = vpack.c.b16 %v5484, %v5483
        %v5494 = vpack.c.b16 %v5486, %v5485
        %v5499 = vunpack.c.l.b16 %v5451
        %v5500 = vunpack.c.l.b16 %v5452
        %v5501 = vunpack.c.l.b16 %v5453
        %v5502 = vunpack.c.l.b16 %v5454
        %v5503 = vpack.c.b16 %v5500, %v5499
        %v5504 = vpack.c.b16 %v5502, %v5501
        %v5508 = vsel %vm1013, %v5487, 0
        %v5511 = vsel %vm1013, %v5488, 0
        %v5514 = vsel %vm1013, %v5489, 0
        %v5517 = vsel %vm1013, %v5490, 0
        %v5520 = vsel %vm1013, %v5491, 0
        %v5523 = vsel %vm1013, %v5492, 0
        %v5526 = vsel %vm1013, %v5493, 0
        %v5529 = vsel %vm1013, %v5494, 0
        %5531 = vmatprep.subr.bf16.mxu0 0
        %5532 = vmatpush1.bf16.msra.mxu0 %v5503
        %5533 = vmatprep.subr.bf16.mxu0 0
        %5534 = vmatpush1.bf16.msra.mxu0 %v5504
        %5535 = vmatprep.subr.bf16.mxu0 0
        %5536 = vmatpush1.bf16.msra.mxu0 0
        %5537 = vmatprep.subr.bf16.mxu0 0
        %5538 = vmatpush1.bf16.msra.mxu0 0
        %5539 = vmatprep.subr.bf16.mxu0 0
        %5540 = vmatpush1.bf16.msra.mxu0 0
        %5541 = vmatprep.subr.bf16.mxu0 0
        %5542 = vmatpush1.bf16.msra.mxu0 0
        %5543 = vmatprep.subr.bf16.mxu0 0
        %5544 = vmatpush1.bf16.msra.mxu0 0
        %5545 = vmatprep.subr.bf16.mxu0 0
        %5546 = vmatpush1.bf16.msra.mxu0 0
        %5547 = vmatprep.subr.bf16.mxu0 0
        %5548 = vmatpush1.bf16.msra.mxu0 0
        %5549 = vmatprep.subr.bf16.mxu0 0
        %5550 = vmatpush1.bf16.msra.mxu0 0
        %5551 = vmatprep.subr.bf16.mxu0 0
        %5552 = vmatpush1.bf16.msra.mxu0 0
        %5553 = vmatprep.subr.bf16.mxu0 0
        %5554 = vmatpush1.bf16.msra.mxu0 0
        %5555 = vmatprep.subr.bf16.mxu0 0
        %5556 = vmatpush1.bf16.msra.mxu0 0
        %5557 = vmatprep.subr.bf16.mxu0 0
        %5558 = vmatpush1.bf16.msra.mxu0 0
        %5559 = vmatprep.subr.bf16.mxu0 0
        %5560 = vmatpush1.bf16.msra.mxu0 0
        %5561 = vmatprep.subr.bf16.mxu0 0
        %5562 = vmatpush1.bf16.msra.mxu0 0
        %5563 = vmatprep.mubr.bf16.mxu0 0
        %5564 = vmatmul.mubr.bf16.gmra.mrb[0].mxu0 %v5508
        %v5565 = vpop.f32.mrb[0].mxu0
        %v5566 = vadd.f32 0.0, %v5565
        %v5567 = vpop.f32.mrb[0].mxu0
        %v5568 = vpop.f32.mrb[0].mxu0
        %v5569 = vadd.f32 0.0, %v5568
        %v5570 = vpop.f32.mrb[0].mxu0
        %5571 = vmatprep.mubr.bf16.mxu0 0
        %5572 = vmatmul.mubr.bf16.gmra.mrb[0].mxu0 %v5511
        %v5573 = vpop.f32.mrb[0].mxu0
        %v5574 = vadd.f32 0.0, %v5573
        %v5575 = vpop.f32.mrb[0].mxu0
        %v5576 = vpop.f32.mrb[0].mxu0
        %v5577 = vadd.f32 0.0, %v5576
        %v5578 = vpop.f32.mrb[0].mxu0
        %5579 = vmatprep.mubr.bf16.mxu0 0
        %5580 = vmatmul.mubr.bf16.gmra.mrb[0].mxu0 %v5514
        %v5581 = vpop.f32.mrb[0].mxu0
        %v5582 = vadd.f32 0.0, %v5581
        %v5583 = vpop.f32.mrb[0].mxu0
        %v5584 = vpop.f32.mrb[0].mxu0
        %v5585 = vadd.f32 0.0, %v5584
        %v5586 = vpop.f32.mrb[0].mxu0
        %5587 = vmatprep.mubr.bf16.mxu0 0
        %5588 = vmatmul.mubr.bf16.gmra.mrb[0].mxu0 %v5517
        %v5589 = vpop.f32.mrb[0].mxu0
        %v5590 = vadd.f32 0.0, %v5589
        %v5591 = vpop.f32.mrb[0].mxu0
        %v5592 = vpop.f32.mrb[0].mxu0
        %v5593 = vadd.f32 0.0, %v5592
        %v5594 = vpop.f32.mrb[0].mxu0
        %5595 = vmatprep.mubr.bf16.mxu0 0
        %5596 = vmatmul.mubr.bf16.gmra.mrb[0].mxu0 %v5520
        %v5597 = vpop.f32.mrb[0].mxu0
        %v5598 = vadd.f32 0.0, %v5597
        %v5599 = vpop.f32.mrb[0].mxu0
        %v5600 = vpop.f32.mrb[0].mxu0
        %v5601 = vadd.f32 0.0, %v5600
        %v5602 = vpop.f32.mrb[0].mxu0
        %5603 = vmatprep.mubr.bf16.mxu0 0
        %5604 = vmatmul.mubr.bf16.gmra.mrb[0].mxu0 %v5523
        %v5605 = vpop.f32.mrb[0].mxu0
        %v5606 = vadd.f32 0.0, %v5605
        %v5607 = vpop.f32.mrb[0].mxu0
        %v5608 = vpop.f32.mrb[0].mxu0
        %v5609 = vadd.f32 0.0, %v5608
        %v5610 = vpop.f32.mrb[0].mxu0
        %5611 = vmatprep.mubr.bf16.mxu0 0
        %5612 = vmatmul.mubr.bf16.gmra.mrb[0].mxu0 %v5526
        %v5613 = vpop.f32.mrb[0].mxu0
        %v5614 = vadd.f32 0.0, %v5613
        %v5615 = vpop.f32.mrb[0].mxu0
        %v5616 = vpop.f32.mrb[0].mxu0
        %v5617 = vadd.f32 0.0, %v5616
        %v5618 = vpop.f32.mrb[0].mxu0
        %5619 = vmatprep.mubr.bf16.mxu0 0
        %5620 = vmatmul.mubr.bf16.gmra.mrb[0].mxu0 %v5529
        %v5621 = vpop.f32.mrb[0].mxu0
        %v5622 = vadd.f32 0.0, %v5621
        %v5623 = vpop.f32.mrb[0].mxu0
        %v5624 = vpop.f32.mrb[0].mxu0
        %v5625 = vadd.f32 0.0, %v5624
        %v5626 = vpop.f32.mrb[0].mxu0
        %5627 = vdwg.mxu0
        %v5628 = vunpack.c.l.b16 %v5376
        %v5629 = vunpack.c.l.b16 %v5379
        %v5630 = vunpack.c.l.b16 %v5383
        %v5631 = vunpack.c.l.b16 %v5386
        %v5632 = vunpack.c.l.b16 %v5390
        %v5633 = vunpack.c.l.b16 %v5393
        %v5634 = vunpack.c.l.b16 %v5397
        %v5635 = vunpack.c.l.b16 %v5400
        %v5636 = vunpack.c.l.b16 %v5404
        %v5637 = vunpack.c.l.b16 %v5407
        %v5638 = vunpack.c.l.b16 %v5411
        %v5639 = vunpack.c.l.b16 %v5414
        %v5640 = vunpack.c.l.b16 %v5418
        %v5641 = vunpack.c.l.b16 %v5421
        %v5642 = vunpack.c.l.b16 %v5425
        %v5643 = vunpack.c.l.b16 %v5428
        %v5644 = vpack.c.b16 %v5629, %v5628
        %v5645 = vpack.c.b16 %v5631, %v5630
        %v5646 = vpack.c.b16 %v5633, %v5632
        %v5647 = vpack.c.b16 %v5635, %v5634
        %v5648 = vpack.c.b16 %v5637, %v5636
        %v5649 = vpack.c.b16 %v5639, %v5638
        %v5650 = vpack.c.b16 %v5641, %v5640
        %v5651 = vpack.c.b16 %v5643, %v5642
        %v5656 = vunpack.c.l.b16 %v5430
        %v5657 = vunpack.c.l.b16 %v5431
        %v5658 = vunpack.c.l.b16 %v5432
        %v5659 = vunpack.c.l.b16 %v5433
        %v5660 = vpack.c.b16 %v5657, %v5656
        %v5661 = vpack.c.b16 %v5659, %v5658
        %v5665 = vsel %vm1013, %v5644, 0
        %v5668 = vsel %vm1013, %v5645, 0
        %v5671 = vsel %vm1013, %v5646, 0
        %v5674 = vsel %vm1013, %v5647, 0
        %v5677 = vsel %vm1013, %v5648, 0
        %v5680 = vsel %vm1013, %v5649, 0
        %v5683 = vsel %vm1013, %v5650, 0
        %v5686 = vsel %vm1013, %v5651, 0
        %5688 = vmatprep.subr.bf16.mxu0 0
        %5689 = vmatpush1.bf16.msra.mxu0 %v5660
        %5690 = vmatprep.subr.bf16.mxu0 0
        %5691 = vmatpush1.bf16.msra.mxu0 %v5661
        %5692 = vmatprep.subr.bf16.mxu0 0
        %5693 = vmatpush1.bf16.msra.mxu0 0
        %5694 = vmatprep.subr.bf16.mxu0 0
        %5695 = vmatpush1.bf16.msra.mxu0 0
        %5696 = vmatprep.subr.bf16.mxu0 0
        %5697 = vmatpush1.bf16.msra.mxu0 0
        %5698 = vmatprep.subr.bf16.mxu0 0
        %5699 = vmatpush1.bf16.msra.mxu0 0
        %5700 = vmatprep.subr.bf16.mxu0 0
        %5701 = vmatpush1.bf16.msra.mxu0 0
        %5702 = vmatprep.subr.bf16.mxu0 0
        %5703 = vmatpush1.bf16.msra.mxu0 0
        %5704 = vmatprep.subr.bf16.mxu0 0
        %5705 = vmatpush1.bf16.msra.mxu0 0
        %5706 = vmatprep.subr.bf16.mxu0 0
        %5707 = vmatpush1.bf16.msra.mxu0 0
        %5708 = vmatprep.subr.bf16.mxu0 0
        %5709 = vmatpush1.bf16.msra.mxu0 0
        %5710 = vmatprep.subr.bf16.mxu0 0
        %5711 = vmatpush1.bf16.msra.mxu0 0
        %5712 = vmatprep.subr.bf16.mxu0 0
        %5713 = vmatpush1.bf16.msra.mxu0 0
        %5714 = vmatprep.subr.bf16.mxu0 0
        %5715 = vmatpush1.bf16.msra.mxu0 0
        %5716 = vmatprep.subr.bf16.mxu0 0
        %5717 = vmatpush1.bf16.msra.mxu0 0
        %5718 = vmatprep.subr.bf16.mxu0 0
        %5719 = vmatpush1.bf16.msra.mxu0 0
        %5720 = vmatprep.mubr.bf16.mxu0 0
        %5721 = vmatmul.mubr.bf16.gmra.mrb[0].mxu0 %v5665
        %v5722 = vpop.f32.mrb[0].mxu0
        %v5723 = vadd.f32 %v5566, %v5722
        %v5724 = vpop.f32.mrb[0].mxu0
        %v5725 = vpop.f32.mrb[0].mxu0
        %v5726 = vadd.f32 %v5569, %v5725
        %v5727 = vpop.f32.mrb[0].mxu0
        %5728 = vmatprep.mubr.bf16.mxu0 0
        %5729 = vmatmul.mubr.bf16.gmra.mrb[0].mxu0 %v5668
        %v5730 = vpop.f32.mrb[0].mxu0
        %v5731 = vadd.f32 %v5574, %v5730
        %v5732 = vpop.f32.mrb[0].mxu0
        %v5733 = vpop.f32.mrb[0].mxu0
        %v5734 = vadd.f32 %v5577, %v5733
        %v5735 = vpop.f32.mrb[0].mxu0
        %5736 = vmatprep.mubr.bf16.mxu0 0
        %5737 = vmatmul.mubr.bf16.gmra.mrb[0].mxu0 %v5671
        %v5738 = vpop.f32.mrb[0].mxu0
        %v5739 = vadd.f32 %v5582, %v5738
        %v5740 = vpop.f32.mrb[0].mxu0
        %v5741 = vpop.f32.mrb[0].mxu0
        %v5742 = vadd.f32 %v5585, %v5741
        %v5743 = vpop.f32.mrb[0].mxu0
        %5744 = vmatprep.mubr.bf16.mxu0 0
        %5745 = vmatmul.mubr.bf16.gmra.mrb[0].mxu0 %v5674
        %v5746 = vpop.f32.mrb[0].mxu0
        %v5747 = vadd.f32 %v5590, %v5746
        %v5748 = vpop.f32.mrb[0].mxu0
        %v5749 = vpop.f32.mrb[0].mxu0
        %v5750 = vadd.f32 %v5593, %v5749
        %v5751 = vpop.f32.mrb[0].mxu0
        %5752 = vmatprep.mubr.bf16.mxu0 0
        %5753 = vmatmul.mubr.bf16.gmra.mrb[0].mxu0 %v5677
        %v5754 = vpop.f32.mrb[0].mxu0
        %v5755 = vadd.f32 %v5598, %v5754
        %v5756 = vpop.f32.mrb[0].mxu0
        %v5757 = vpop.f32.mrb[0].mxu0
        %v5758 = vadd.f32 %v5601, %v5757
        %v5759 = vpop.f32.mrb[0].mxu0
        %5760 = vmatprep.mubr.bf16.mxu0 0
        %5761 = vmatmul.mubr.bf16.gmra.mrb[0].mxu0 %v5680
        %v5762 = vpop.f32.mrb[0].mxu0
        %v5763 = vadd.f32 %v5606, %v5762
        %v5764 = vpop.f32.mrb[0].mxu0
        %v5765 = vpop.f32.mrb[0].mxu0
        %v5766 = vadd.f32 %v5609, %v5765
        %v5767 = vpop.f32.mrb[0].mxu0
        %5768 = vmatprep.mubr.bf16.mxu0 0
        %5769 = vmatmul.mubr.bf16.gmra.mrb[0].mxu0 %v5683
        %v5770 = vpop.f32.mrb[0].mxu0
        %v5771 = vadd.f32 %v5614, %v5770
        %v5772 = vpop.f32.mrb[0].mxu0
        %v5773 = vpop.f32.mrb[0].mxu0
        %v5774 = vadd.f32 %v5617, %v5773
        %v5775 = vpop.f32.mrb[0].mxu0
        %5776 = vmatprep.mubr.bf16.mxu0 0
        %5777 = vmatmul.mubr.bf16.gmra.mrb[0].mxu0 %v5686
        %v5778 = vpop.f32.mrb[0].mxu0
        %v5779 = vadd.f32 %v5622, %v5778
        %v5780 = vpop.f32.mrb[0].mxu0
        %v5781 = vpop.f32.mrb[0].mxu0
        %v5782 = vadd.f32 %v5625, %v5781
        %v5783 = vpop.f32.mrb[0].mxu0
        %5784 = vdwg.mxu0
        %v5785 = vld [vmem:[%s5324 + $0x18] sm:$0xe]
        %v5786 = vld [vmem:[%s5324 + $0x1c] sm:$0xf]
        %v5787 = vld [vmem:[%s5324 + $0x20] sm:$0x1]
        %v5788 = vld [vmem:[%s5324 + $0x3c] sm:$0xe]
        %v5789 = vld [vmem:[%s5324 + $0x40] sm:$0xf]
        %v5790 = vld [vmem:[%s5324 + $0x44] sm:$0x1]
        %v5791 = vld [vmem:[%s5324 + $0x60] sm:$0xe]
        %v5792 = vld [vmem:[%s5324 + $0x64] sm:$0xf]
        %v5793 = vld [vmem:[%s5324 + $0x68] sm:$0x1]
        %v5794 = vld [vmem:[%s5324 + $0x84] sm:$0xe]
        %v5795 = vld [vmem:[%s5324 + $0x88] sm:$0xf]
        %v5796 = vld [vmem:[%s5324 + $0x8c] sm:$0x1]
        %v5797 = vld [vmem:[%s5324 + $0xa8] sm:$0xe]
        %v5798 = vld [vmem:[%s5324 + $0xac] sm:$0xf]
        %v5799 = vld [vmem:[%s5324 + $0xb0] sm:$0x1]
        %v5800 = vld [vmem:[%s5324 + $0xcc] sm:$0xe]
        %v5801 = vld [vmem:[%s5324 + $0xd0] sm:$0xf]
        %v5802 = vld [vmem:[%s5324 + $0xd4] sm:$0x1]
        %v5803 = vld [vmem:[%s5324 + $0xf0] sm:$0xe]
        %v5804 = vld [vmem:[%s5324 + $0xf4] sm:$0xf]
        %v5805 = vld [vmem:[%s5324 + $0xf8] sm:$0x1]
        %v5806 = vld [vmem:[%s5324 + $0x114] sm:$0xe]
        %v5807 = vld [vmem:[%s5324 + $0x118] sm:$0xf]
        %v5808 = vld [vmem:[%s5324 + $0x11c] sm:$0x1]
        %v5833 = vrot.slane %v5785, 5
        %v5834 = vrot.slane %v5833, 4
        %v5835 = vrot.slane %v5786, 5
        %v5836 = vsel %vm895, %v5834, %v5835
        %v5837 = vrot.slane %v5835, 4
        %v5838 = vrot.slane %v5787, 5
        %v5839 = vsel %vm895, %v5837, %v5838
        %v5840 = vrot.slane %v5788, 5
        %v5841 = vrot.slane %v5840, 4
        %v5842 = vrot.slane %v5789, 5
        %v5843 = vsel %vm895, %v5841, %v5842
        %v5844 = vrot.slane %v5842, 4
        %v5845 = vrot.slane %v5790, 5
        %v5846 = vsel %vm895, %v5844, %v5845
        %v5847 = vrot.slane %v5791, 5
        %v5848 = vrot.slane %v5847, 4
        %v5849 = vrot.slane %v5792, 5
        %v5850 = vsel %vm895, %v5848, %v5849
        %v5851 = vrot.slane %v5849, 4
        %v5852 = vrot.slane %v5793, 5
        %v5853 = vsel %vm895, %v5851, %v5852
        %v5854 = vrot.slane %v5794, 5
        %v5855 = vrot.slane %v5854, 4
        %v5856 = vrot.slane %v5795, 5
        %v5857 = vsel %vm895, %v5855, %v5856
        %v5858 = vrot.slane %v5856, 4
        %v5859 = vrot.slane %v5796, 5
        %v5860 = vsel %vm895, %v5858, %v5859
        %v5861 = vrot.slane %v5797, 5
        %v5862 = vrot.slane %v5861, 4
        %v5863 = vrot.slane %v5798, 5
        %v5864 = vsel %vm895, %v5862, %v5863
        %v5865 = vrot.slane %v5863, 4
        %v5866 = vrot.slane %v5799, 5
        %v5867 = vsel %vm895, %v5865, %v5866
        %v5868 = vrot.slane %v5800, 5
        %v5869 = vrot.slane %v5868, 4
        %v5870 = vrot.slane %v5801, 5
        %v5871 = vsel %vm895, %v5869, %v5870
        %v5872 = vrot.slane %v5870, 4
        %v5873 = vrot.slane %v5802, 5
        %v5874 = vsel %vm895, %v5872, %v5873
        %v5875 = vrot.slane %v5803, 5
        %v5876 = vrot.slane %v5875, 4
        %v5877 = vrot.slane %v5804, 5
        %v5878 = vsel %vm895, %v5876, %v5877
        %v5879 = vrot.slane %v5877, 4
        %v5880 = vrot.slane %v5805, 5
        %v5881 = vsel %vm895, %v5879, %v5880
        %v5882 = vrot.slane %v5806, 5
        %v5883 = vrot.slane %v5882, 4
        %v5884 = vrot.slane %v5807, 5
        %v5885 = vsel %vm895, %v5883, %v5884
        %v5886 = vrot.slane %v5884, 4
        %v5887 = vrot.slane %v5808, 5
        %v5888 = vsel %vm895, %v5886, %v5887
        %s5889 = scalar_lea.vmem [#allocation6], 320
        %v5890 = vld [vmem:[%s5889] sm:$0xf]
        %v5891 = vld [vmem:[%s5889 + $0x4] sm:$0xf]
        %v5892 = vld [vmem:[%s5889 + $0x8] sm:$0xf]
        %v5893 = vld [vmem:[%s5889 + $0xc] sm:$0xf]
        %v5894 = vunpack.c.l.b16 %v5836
        %v5895 = vunpack.c.l.b16 %v5839
        %v5896 = vunpack.c.l.b16 %v5843
        %v5897 = vunpack.c.l.b16 %v5846
        %v5898 = vunpack.c.l.b16 %v5850
        %v5899 = vunpack.c.l.b16 %v5853
        %v5900 = vunpack.c.l.b16 %v5857
        %v5901 = vunpack.c.l.b16 %v5860
        %v5902 = vunpack.c.l.b16 %v5864
        %v5903 = vunpack.c.l.b16 %v5867
        %v5904 = vunpack.c.l.b16 %v5871
        %v5905 = vunpack.c.l.b16 %v5874
        %v5906 = vunpack.c.l.b16 %v5878
        %v5907 = vunpack.c.l.b16 %v5881
        %v5908 = vunpack.c.l.b16 %v5885
        %v5909 = vunpack.c.l.b16 %v5888
        %v5910 = vpack.c.b16 %v5895, %v5894
        %v5911 = vpack.c.b16 %v5897, %v5896
        %v5912 = vpack.c.b16 %v5899, %v5898
        %v5913 = vpack.c.b16 %v5901, %v5900
        %v5914 = vpack.c.b16 %v5903, %v5902
        %v5915 = vpack.c.b16 %v5905, %v5904
        %v5916 = vpack.c.b16 %v5907, %v5906
        %v5917 = vpack.c.b16 %v5909, %v5908
        %v5922 = vunpack.c.l.b16 %v5890
        %v5923 = vunpack.c.l.b16 %v5891
        %v5924 = vunpack.c.l.b16 %v5892
        %v5925 = vunpack.c.l.b16 %v5893
        %v5926 = vpack.c.b16 %v5923, %v5922
        %v5927 = vpack.c.b16 %v5925, %v5924
        %v5931 = vsel %vm1013, %v5910, 0
        %v5934 = vsel %vm1013, %v5911, 0
        %v5937 = vsel %vm1013, %v5912, 0
        %v5940 = vsel %vm1013, %v5913, 0
        %v5943 = vsel %vm1013, %v5914, 0
        %v5946 = vsel %vm1013, %v5915, 0
        %v5949 = vsel %vm1013, %v5916, 0
        %v5952 = vsel %vm1013, %v5917, 0
        %5954 = vmatprep.subr.bf16.mxu0 0
        %5955 = vmatpush1.bf16.msra.mxu0 %v5926
        %5956 = vmatprep.subr.bf16.mxu0 0
        %5957 = vmatpush1.bf16.msra.mxu0 %v5927
        %5958 = vmatprep.subr.bf16.mxu0 0
        %5959 = vmatpush1.bf16.msra.mxu0 0
        %5960 = vmatprep.subr.bf16.mxu0 0
        %5961 = vmatpush1.bf16.msra.mxu0 0
        %5962 = vmatprep.subr.bf16.mxu0 0
        %5963 = vmatpush1.bf16.msra.mxu0 0
        %5964 = vmatprep.subr.bf16.mxu0 0
        %5965 = vmatpush1.bf16.msra.mxu0 0
        %5966 = vmatprep.subr.bf16.mxu0 0
        %5967 = vmatpush1.bf16.msra.mxu0 0
        %5968 = vmatprep.subr.bf16.mxu0 0
        %5969 = vmatpush1.bf16.msra.mxu0 0
        %5970 = vmatprep.subr.bf16.mxu0 0
        %5971 = vmatpush1.bf16.msra.mxu0 0
        %5972 = vmatprep.subr.bf16.mxu0 0
        %5973 = vmatpush1.bf16.msra.mxu0 0
        %5974 = vmatprep.subr.bf16.mxu0 0
        %5975 = vmatpush1.bf16.msra.mxu0 0
        %5976 = vmatprep.subr.bf16.mxu0 0
        %5977 = vmatpush1.bf16.msra.mxu0 0
        %5978 = vmatprep.subr.bf16.mxu0 0
        %5979 = vmatpush1.bf16.msra.mxu0 0
        %5980 = vmatprep.subr.bf16.mxu0 0
        %5981 = vmatpush1.bf16.msra.mxu0 0
        %5982 = vmatprep.subr.bf16.mxu0 0
        %5983 = vmatpush1.bf16.msra.mxu0 0
        %5984 = vmatprep.subr.bf16.mxu0 0
        %5985 = vmatpush1.bf16.msra.mxu0 0
        %5986 = vmatprep.mubr.bf16.mxu0 0
        %5987 = vmatmul.mubr.bf16.gmra.mrb[0].mxu0 %v5931
        %v5988 = vpop.f32.mrb[0].mxu0
        %v5989 = vadd.f32 0.0, %v5988
        %v5990 = vpop.f32.mrb[0].mxu0
        %v5991 = vpop.f32.mrb[0].mxu0
        %v5992 = vadd.f32 0.0, %v5991
        %v5993 = vpop.f32.mrb[0].mxu0
        %5994 = vmatprep.mubr.bf16.mxu0 0
        %5995 = vmatmul.mubr.bf16.gmra.mrb[0].mxu0 %v5934
        %v5996 = vpop.f32.mrb[0].mxu0
        %v5997 = vadd.f32 0.0, %v5996
        %v5998 = vpop.f32.mrb[0].mxu0
        %v5999 = vpop.f32.mrb[0].mxu0
        %v6000 = vadd.f32 0.0, %v5999
        %v6001 = vpop.f32.mrb[0].mxu0
        %6002 = vmatprep.mubr.bf16.mxu0 0
        %6003 = vmatmul.mubr.bf16.gmra.mrb[0].mxu0 %v5937
        %v6004 = vpop.f32.mrb[0].mxu0
        %v6005 = vadd.f32 0.0, %v6004
        %v6006 = vpop.f32.mrb[0].mxu0
        %v6007 = vpop.f32.mrb[0].mxu0
        %v6008 = vadd.f32 0.0, %v6007
        %v6009 = vpop.f32.mrb[0].mxu0
        %6010 = vmatprep.mubr.bf16.mxu0 0
        %6011 = vmatmul.mubr.bf16.gmra.mrb[0].mxu0 %v5940
        %v6012 = vpop.f32.mrb[0].mxu0
        %v6013 = vadd.f32 0.0, %v6012
        %v6014 = vpop.f32.mrb[0].mxu0
        %v6015 = vpop.f32.mrb[0].mxu0
        %v6016 = vadd.f32 0.0, %v6015
        %v6017 = vpop.f32.mrb[0].mxu0
        %6018 = vmatprep.mubr.bf16.mxu0 0
        %6019 = vmatmul.mubr.bf16.gmra.mrb[0].mxu0 %v5943
        %v6020 = vpop.f32.mrb[0].mxu0
        %v6021 = vadd.f32 0.0, %v6020
        %v6022 = vpop.f32.mrb[0].mxu0
        %v6023 = vpop.f32.mrb[0].mxu0
        %v6024 = vadd.f32 0.0, %v6023
        %v6025 = vpop.f32.mrb[0].mxu0
        %6026 = vmatprep.mubr.bf16.mxu0 0
        %6027 = vmatmul.mubr.bf16.gmra.mrb[0].mxu0 %v5946
        %v6028 = vpop.f32.mrb[0].mxu0
        %v6029 = vadd.f32 0.0, %v6028
        %v6030 = vpop.f32.mrb[0].mxu0
        %v6031 = vpop.f32.mrb[0].mxu0
        %v6032 = vadd.f32 0.0, %v6031
        %v6033 = vpop.f32.mrb[0].mxu0
        %6034 = vmatprep.mubr.bf16.mxu0 0
        %6035 = vmatmul.mubr.bf16.gmra.mrb[0].mxu0 %v5949
        %v6036 = vpop.f32.mrb[0].mxu0
        %v6037 = vadd.f32 0.0, %v6036
        %v6038 = vpop.f32.mrb[0].mxu0
        %v6039 = vpop.f32.mrb[0].mxu0
        %v6040 = vadd.f32 0.0, %v6039
        %v6041 = vpop.f32.mrb[0].mxu0
        %6042 = vmatprep.mubr.bf16.mxu0 0
        %6043 = vmatmul.mubr.bf16.gmra.mrb[0].mxu0 %v5952
        %v6044 = vpop.f32.mrb[0].mxu0
        %v6045 = vadd.f32 0.0, %v6044
        %v6046 = vpop.f32.mrb[0].mxu0
        %v6047 = vpop.f32.mrb[0].mxu0
        %v6048 = vadd.f32 0.0, %v6047
        %v6049 = vpop.f32.mrb[0].mxu0
        %6050 = vdwg.mxu0
        %v6051 = vadd.f32 %v5723, %v5989
        %v6052 = vadd.f32 %v5726, %v5992
        %v6053 = vadd.f32 %v5731, %v5997
        %v6054 = vadd.f32 %v5734, %v6000
        %v6055 = vadd.f32 %v5739, %v6005
        %v6056 = vadd.f32 %v5742, %v6008
        %v6057 = vadd.f32 %v5747, %v6013
        %v6058 = vadd.f32 %v5750, %v6016
        %v6059 = vadd.f32 %v5755, %v6021
        %v6060 = vadd.f32 %v5758, %v6024
        %v6061 = vadd.f32 %v5763, %v6029
        %v6062 = vadd.f32 %v5766, %v6032
        %v6063 = vadd.f32 %v5771, %v6037
        %v6064 = vadd.f32 %v5774, %v6040
        %v6065 = vadd.f32 %v5779, %v6045
        %v6066 = vadd.f32 %v5782, %v6048
        %v6067 = vld [vmem:[%s1580 + $0x4] sm:$0x8]
        %v6068 = vld [vmem:[%s1580 + $0x8] sm:$0xf]
        %v6069 = vld [vmem:[%s1580 + $0xc] sm:$0x7]
        %v6070 = vld [vmem:[%s1580 + $0x28] sm:$0x8]
        %v6071 = vld [vmem:[%s1580 + $0x2c] sm:$0xf]
        %v6072 = vld [vmem:[%s1580 + $0x30] sm:$0x7]
        %v6073 = vld [vmem:[%s1580 + $0x4c] sm:$0x8]
        %v6074 = vld [vmem:[%s1580 + $0x50] sm:$0xf]
        %v6075 = vld [vmem:[%s1580 + $0x54] sm:$0x7]
        %v6076 = vld [vmem:[%s1580 + $0x70] sm:$0x8]
        %v6077 = vld [vmem:[%s1580 + $0x74] sm:$0xf]
        %v6078 = vld [vmem:[%s1580 + $0x78] sm:$0x7]
        %v6079 = vld [vmem:[%s1580 + $0x94] sm:$0x8]
        %v6080 = vld [vmem:[%s1580 + $0x98] sm:$0xf]
        %v6081 = vld [vmem:[%s1580 + $0x9c] sm:$0x7]
        %v6082 = vld [vmem:[%s1580 + $0xb8] sm:$0x8]
        %v6083 = vld [vmem:[%s1580 + $0xbc] sm:$0xf]
        %v6084 = vld [vmem:[%s1580 + $0xc0] sm:$0x7]
        %v6085 = vld [vmem:[%s1580 + $0xdc] sm:$0x8]
        %v6086 = vld [vmem:[%s1580 + $0xe0] sm:$0xf]
        %v6087 = vld [vmem:[%s1580 + $0xe4] sm:$0x7]
        %v6088 = vld [vmem:[%s1580 + $0x100] sm:$0x8]
        %v6089 = vld [vmem:[%s1580 + $0x104] sm:$0xf]
        %v6090 = vld [vmem:[%s1580 + $0x108] sm:$0x7]
        %v6115 = vrot.slane %v6067, 7
        %v6116 = vrot.slane %v6115, 4
        %v6117 = vrot.slane %v6068, 7
        %v6118 = vsel %vm1342, %v6116, %v6117
        %v6119 = vrot.slane %v6117, 4
        %v6120 = vrot.slane %v6069, 7
        %v6121 = vsel %vm1342, %v6119, %v6120
        %v6122 = vrot.slane %v6070, 7
        %v6123 = vrot.slane %v6122, 4
        %v6124 = vrot.slane %v6071, 7
        %v6125 = vsel %vm1342, %v6123, %v6124
        %v6126 = vrot.slane %v6124, 4
        %v6127 = vrot.slane %v6072, 7
        %v6128 = vsel %vm1342, %v6126, %v6127
        %v6129 = vrot.slane %v6073, 7
        %v6130 = vrot.slane %v6129, 4
        %v6131 = vrot.slane %v6074, 7
        %v6132 = vsel %vm1342, %v6130, %v6131
        %v6133 = vrot.slane %v6131, 4
        %v6134 = vrot.slane %v6075, 7
        %v6135 = vsel %vm1342, %v6133, %v6134
        %v6136 = vrot.slane %v6076, 7
        %v6137 = vrot.slane %v6136, 4
        %v6138 = vrot.slane %v6077, 7
        %v6139 = vsel %vm1342, %v6137, %v6138
        %v6140 = vrot.slane %v6138, 4
        %v6141 = vrot.slane %v6078, 7
        %v6142 = vsel %vm1342, %v6140, %v6141
        %v6143 = vrot.slane %v6079, 7
        %v6144 = vrot.slane %v6143, 4
        %v6145 = vrot.slane %v6080, 7
        %v6146 = vsel %vm1342, %v6144, %v6145
        %v6147 = vrot.slane %v6145, 4
        %v6148 = vrot.slane %v6081, 7
        %v6149 = vsel %vm1342, %v6147, %v6148
        %v6150 = vrot.slane %v6082, 7
        %v6151 = vrot.slane %v6150, 4
        %v6152 = vrot.slane %v6083, 7
        %v6153 = vsel %vm1342, %v6151, %v6152
        %v6154 = vrot.slane %v6152, 4
        %v6155 = vrot.slane %v6084, 7
        %v6156 = vsel %vm1342, %v6154, %v6155
        %v6157 = vrot.slane %v6085, 7
        %v6158 = vrot.slane %v6157, 4
        %v6159 = vrot.slane %v6086, 7
        %v6160 = vsel %vm1342, %v6158, %v6159
        %v6161 = vrot.slane %v6159, 4
        %v6162 = vrot.slane %v6087, 7
        %v6163 = vsel %vm1342, %v6161, %v6162
        %v6164 = vrot.slane %v6088, 7
        %v6165 = vrot.slane %v6164, 4
        %v6166 = vrot.slane %v6089, 7
        %v6167 = vsel %vm1342, %v6165, %v6166
        %v6168 = vrot.slane %v6166, 4
        %v6169 = vrot.slane %v6090, 7
        %v6170 = vsel %vm1342, %v6168, %v6169
        %s6171 = scalar_lea.vmem [#allocation6], 336
        %v6172 = vld [vmem:[%s6171] sm:$0xf]
        %v6173 = vld [vmem:[%s6171 + $0x4] sm:$0xf]
        %v6174 = vld [vmem:[%s6171 + $0x8] sm:$0xf]
        %v6175 = vld [vmem:[%s6171 + $0xc] sm:$0xf]
        %v6176 = vunpack.c.l.b16 %v6118
        %v6177 = vunpack.c.l.b16 %v6121
        %v6178 = vunpack.c.l.b16 %v6125
        %v6179 = vunpack.c.l.b16 %v6128
        %v6180 = vunpack.c.l.b16 %v6132
        %v6181 = vunpack.c.l.b16 %v6135
        %v6182 = vunpack.c.l.b16 %v6139
        %v6183 = vunpack.c.l.b16 %v6142
        %v6184 = vunpack.c.l.b16 %v6146
        %v6185 = vunpack.c.l.b16 %v6149
        %v6186 = vunpack.c.l.b16 %v6153
        %v6187 = vunpack.c.l.b16 %v6156
        %v6188 = vunpack.c.l.b16 %v6160
        %v6189 = vunpack.c.l.b16 %v6163
        %v6190 = vunpack.c.l.b16 %v6167
        %v6191 = vunpack.c.l.b16 %v6170
        %v6192 = vpack.c.b16 %v6177, %v6176
        %v6193 = vpack.c.b16 %v6179, %v6178
        %v6194 = vpack.c.b16 %v6181, %v6180
        %v6195 = vpack.c.b16 %v6183, %v6182
        %v6196 = vpack.c.b16 %v6185, %v6184
        %v6197 = vpack.c.b16 %v6187, %v6186
        %v6198 = vpack.c.b16 %v6189, %v6188
        %v6199 = vpack.c.b16 %v6191, %v6190
        %v6204 = vunpack.c.l.b16 %v6172
        %v6205 = vunpack.c.l.b16 %v6173
        %v6206 = vunpack.c.l.b16 %v6174
        %v6207 = vunpack.c.l.b16 %v6175
        %v6208 = vpack.c.b16 %v6205, %v6204
        %v6209 = vpack.c.b16 %v6207, %v6206
        %v6213 = vsel %vm1013, %v6192, 0
        %v6216 = vsel %vm1013, %v6193, 0
        %v6219 = vsel %vm1013, %v6194, 0
        %v6222 = vsel %vm1013, %v6195, 0
        %v6225 = vsel %vm1013, %v6196, 0
        %v6228 = vsel %vm1013, %v6197, 0
        %v6231 = vsel %vm1013, %v6198, 0
        %v6234 = vsel %vm1013, %v6199, 0
        %6236 = vmatprep.subr.bf16.mxu0 0
        %6237 = vmatpush1.bf16.msra.mxu0 %v6208
        %6238 = vmatprep.subr.bf16.mxu0 0
        %6239 = vmatpush1.bf16.msra.mxu0 %v6209
        %6240 = vmatprep.subr.bf16.mxu0 0
        %6241 = vmatpush1.bf16.msra.mxu0 0
        %6242 = vmatprep.subr.bf16.mxu0 0
        %6243 = vmatpush1.bf16.msra.mxu0 0
        %6244 = vmatprep.subr.bf16.mxu0 0
        %6245 = vmatpush1.bf16.msra.mxu0 0
        %6246 = vmatprep.subr.bf16.mxu0 0
        %6247 = vmatpush1.bf16.msra.mxu0 0
        %6248 = vmatprep.subr.bf16.mxu0 0
        %6249 = vmatpush1.bf16.msra.mxu0 0
        %6250 = vmatprep.subr.bf16.mxu0 0
        %6251 = vmatpush1.bf16.msra.mxu0 0
        %6252 = vmatprep.subr.bf16.mxu0 0
        %6253 = vmatpush1.bf16.msra.mxu0 0
        %6254 = vmatprep.subr.bf16.mxu0 0
        %6255 = vmatpush1.bf16.msra.mxu0 0
        %6256 = vmatprep.subr.bf16.mxu0 0
        %6257 = vmatpush1.bf16.msra.mxu0 0
        %6258 = vmatprep.subr.bf16.mxu0 0
        %6259 = vmatpush1.bf16.msra.mxu0 0
        %6260 = vmatprep.subr.bf16.mxu0 0
        %6261 = vmatpush1.bf16.msra.mxu0 0
        %6262 = vmatprep.subr.bf16.mxu0 0
        %6263 = vmatpush1.bf16.msra.mxu0 0
        %6264 = vmatprep.subr.bf16.mxu0 0
        %6265 = vmatpush1.bf16.msra.mxu0 0
        %6266 = vmatprep.subr.bf16.mxu0 0
        %6267 = vmatpush1.bf16.msra.mxu0 0
        %6268 = vmatprep.mubr.bf16.mxu0 0
        %6269 = vmatmul.mubr.bf16.gmra.mrb[0].mxu0 %v6213
        %v6270 = vpop.f32.mrb[0].mxu0
        %v6271 = vadd.f32 0.0, %v6270
        %v6272 = vpop.f32.mrb[0].mxu0
        %v6273 = vpop.f32.mrb[0].mxu0
        %v6274 = vadd.f32 0.0, %v6273
        %v6275 = vpop.f32.mrb[0].mxu0
        %6276 = vmatprep.mubr.bf16.mxu0 0
        %6277 = vmatmul.mubr.bf16.gmra.mrb[0].mxu0 %v6216
        %v6278 = vpop.f32.mrb[0].mxu0
        %v6279 = vadd.f32 0.0, %v6278
        %v6280 = vpop.f32.mrb[0].mxu0
        %v6281 = vpop.f32.mrb[0].mxu0
        %v6282 = vadd.f32 0.0, %v6281
        %v6283 = vpop.f32.mrb[0].mxu0
        %6284 = vmatprep.mubr.bf16.mxu0 0
        %6285 = vmatmul.mubr.bf16.gmra.mrb[0].mxu0 %v6219
        %v6286 = vpop.f32.mrb[0].mxu0
        %v6287 = vadd.f32 0.0, %v6286
        %v6288 = vpop.f32.mrb[0].mxu0
        %v6289 = vpop.f32.mrb[0].mxu0
        %v6290 = vadd.f32 0.0, %v6289
        %v6291 = vpop.f32.mrb[0].mxu0
        %6292 = vmatprep.mubr.bf16.mxu0 0
        %6293 = vmatmul.mubr.bf16.gmra.mrb[0].mxu0 %v6222
        %v6294 = vpop.f32.mrb[0].mxu0
        %v6295 = vadd.f32 0.0, %v6294
        %v6296 = vpop.f32.mrb[0].mxu0
        %v6297 = vpop.f32.mrb[0].mxu0
        %v6298 = vadd.f32 0.0, %v6297
        %v6299 = vpop.f32.mrb[0].mxu0
        %6300 = vmatprep.mubr.bf16.mxu0 0
        %6301 = vmatmul.mubr.bf16.gmra.mrb[0].mxu0 %v6225
        %v6302 = vpop.f32.mrb[0].mxu0
        %v6303 = vadd.f32 0.0, %v6302
        %v6304 = vpop.f32.mrb[0].mxu0
        %v6305 = vpop.f32.mrb[0].mxu0
        %v6306 = vadd.f32 0.0, %v6305
        %v6307 = vpop.f32.mrb[0].mxu0
        %6308 = vmatprep.mubr.bf16.mxu0 0
        %6309 = vmatmul.mubr.bf16.gmra.mrb[0].mxu0 %v6228
        %v6310 = vpop.f32.mrb[0].mxu0
        %v6311 = vadd.f32 0.0, %v6310
        %v6312 = vpop.f32.mrb[0].mxu0
        %v6313 = vpop.f32.mrb[0].mxu0
        %v6314 = vadd.f32 0.0, %v6313
        %v6315 = vpop.f32.mrb[0].mxu0
        %6316 = vmatprep.mubr.bf16.mxu0 0
        %6317 = vmatmul.mubr.bf16.gmra.mrb[0].mxu0 %v6231
        %v6318 = vpop.f32.mrb[0].mxu0
        %v6319 = vadd.f32 0.0, %v6318
        %v6320 = vpop.f32.mrb[0].mxu0
        %v6321 = vpop.f32.mrb[0].mxu0
        %v6322 = vadd.f32 0.0, %v6321
        %v6323 = vpop.f32.mrb[0].mxu0
        %6324 = vmatprep.mubr.bf16.mxu0 0
        %6325 = vmatmul.mubr.bf16.gmra.mrb[0].mxu0 %v6234
        %v6326 = vpop.f32.mrb[0].mxu0
        %v6327 = vadd.f32 0.0, %v6326
        %v6328 = vpop.f32.mrb[0].mxu0
        %v6329 = vpop.f32.mrb[0].mxu0
        %v6330 = vadd.f32 0.0, %v6329
        %v6331 = vpop.f32.mrb[0].mxu0
        %6332 = vdwg.mxu0
        %v6333 = vadd.f32 %v6051, %v6271
        %v6334 = vadd.f32 %v6052, %v6274
        %v6335 = vadd.f32 %v6053, %v6279
        %v6336 = vadd.f32 %v6054, %v6282
        %v6337 = vadd.f32 %v6055, %v6287
        %v6338 = vadd.f32 %v6056, %v6290
        %v6339 = vadd.f32 %v6057, %v6295
        %v6340 = vadd.f32 %v6058, %v6298
        %v6341 = vadd.f32 %v6059, %v6303
        %v6342 = vadd.f32 %v6060, %v6306
        %v6343 = vadd.f32 %v6061, %v6311
        %v6344 = vadd.f32 %v6062, %v6314
        %v6345 = vadd.f32 %v6063, %v6319
        %v6346 = vadd.f32 %v6064, %v6322
        %v6347 = vadd.f32 %v6065, %v6327
        %v6348 = vadd.f32 %v6066, %v6330
        %s6349 = scalar_lea.vmem [#allocation6], 352
        %v6350 = vld [vmem:[%s6349] sm:$0xf]
        %v6351 = vld [vmem:[%s6349 + $0x4] sm:$0xf]
        %v6352 = vld [vmem:[%s6349 + $0x8] sm:$0xf]
        %v6353 = vld [vmem:[%s6349 + $0xc] sm:$0xf]
        %v6358 = vunpack.c.l.b16 %v6350
        %v6359 = vunpack.c.l.b16 %v6351
        %v6360 = vunpack.c.l.b16 %v6352
        %v6361 = vunpack.c.l.b16 %v6353
        %v6362 = vpack.c.b16 %v6359, %v6358
        %v6363 = vpack.c.b16 %v6361, %v6360
        %6366 = vmatprep.subr.bf16.mxu0 0
        %6367 = vmatpush1.bf16.msra.mxu0 %v6362
        %6368 = vmatprep.subr.bf16.mxu0 0
        %6369 = vmatpush1.bf16.msra.mxu0 %v6363
        %6370 = vmatprep.subr.bf16.mxu0 0
        %6371 = vmatpush1.bf16.msra.mxu0 0
        %6372 = vmatprep.subr.bf16.mxu0 0
        %6373 = vmatpush1.bf16.msra.mxu0 0
        %6374 = vmatprep.subr.bf16.mxu0 0
        %6375 = vmatpush1.bf16.msra.mxu0 0
        %6376 = vmatprep.subr.bf16.mxu0 0
        %6377 = vmatpush1.bf16.msra.mxu0 0
        %6378 = vmatprep.subr.bf16.mxu0 0
        %6379 = vmatpush1.bf16.msra.mxu0 0
        %6380 = vmatprep.subr.bf16.mxu0 0
        %6381 = vmatpush1.bf16.msra.mxu0 0
        %6382 = vmatprep.subr.bf16.mxu0 0
        %6383 = vmatpush1.bf16.msra.mxu0 0
        %6384 = vmatprep.subr.bf16.mxu0 0
        %6385 = vmatpush1.bf16.msra.mxu0 0
        %6386 = vmatprep.subr.bf16.mxu0 0
        %6387 = vmatpush1.bf16.msra.mxu0 0
        %6388 = vmatprep.subr.bf16.mxu0 0
        %6389 = vmatpush1.bf16.msra.mxu0 0
        %6390 = vmatprep.subr.bf16.mxu0 0
        %6391 = vmatpush1.bf16.msra.mxu0 0
        %6392 = vmatprep.subr.bf16.mxu0 0
        %6393 = vmatpush1.bf16.msra.mxu0 0
        %6394 = vmatprep.subr.bf16.mxu0 0
        %6395 = vmatpush1.bf16.msra.mxu0 0
        %6396 = vmatprep.subr.bf16.mxu0 0
        %6397 = vmatpush1.bf16.msra.mxu0 0
        %6398 = vmatprep.mubr.bf16.mxu0 0
        %6399 = vmatmul.mubr.bf16.gmra.mrb[0].mxu0 %v1921
        %v6400 = vpop.f32.mrb[0].mxu0
        %v6401 = vadd.f32 0.0, %v6400
        %v6402 = vpop.f32.mrb[0].mxu0
        %v6403 = vpop.f32.mrb[0].mxu0
        %v6404 = vadd.f32 0.0, %v6403
        %v6405 = vpop.f32.mrb[0].mxu0
        %6406 = vmatprep.mubr.bf16.mxu0 0
        %6407 = vmatmul.mubr.bf16.gmra.mrb[0].mxu0 %v1924
        %v6408 = vpop.f32.mrb[0].mxu0
        %v6409 = vadd.f32 0.0, %v6408
        %v6410 = vpop.f32.mrb[0].mxu0
        %v6411 = vpop.f32.mrb[0].mxu0
        %v6412 = vadd.f32 0.0, %v6411
        %v6413 = vpop.f32.mrb[0].mxu0
        %6414 = vmatprep.mubr.bf16.mxu0 0
        %6415 = vmatmul.mubr.bf16.gmra.mrb[0].mxu0 %v1927
        %v6416 = vpop.f32.mrb[0].mxu0
        %v6417 = vadd.f32 0.0, %v6416
        %v6418 = vpop.f32.mrb[0].mxu0
        %v6419 = vpop.f32.mrb[0].mxu0
        %v6420 = vadd.f32 0.0, %v6419
        %v6421 = vpop.f32.mrb[0].mxu0
        %6422 = vmatprep.mubr.bf16.mxu0 0
        %6423 = vmatmul.mubr.bf16.gmra.mrb[0].mxu0 %v1930
        %v6424 = vpop.f32.mrb[0].mxu0
        %v6425 = vadd.f32 0.0, %v6424
        %v6426 = vpop.f32.mrb[0].mxu0
        %v6427 = vpop.f32.mrb[0].mxu0
        %v6428 = vadd.f32 0.0, %v6427
        %v6429 = vpop.f32.mrb[0].mxu0
        %6430 = vmatprep.mubr.bf16.mxu0 0
        %6431 = vmatmul.mubr.bf16.gmra.mrb[0].mxu0 %v1933
        %v6432 = vpop.f32.mrb[0].mxu0
        %v6433 = vadd.f32 0.0, %v6432
        %v6434 = vpop.f32.mrb[0].mxu0
        %v6435 = vpop.f32.mrb[0].mxu0
        %v6436 = vadd.f32 0.0, %v6435
        %v6437 = vpop.f32.mrb[0].mxu0
        %6438 = vmatprep.mubr.bf16.mxu0 0
        %6439 = vmatmul.mubr.bf16.gmra.mrb[0].mxu0 %v1936
        %v6440 = vpop.f32.mrb[0].mxu0
        %v6441 = vadd.f32 0.0, %v6440
        %v6442 = vpop.f32.mrb[0].mxu0
        %v6443 = vpop.f32.mrb[0].mxu0
        %v6444 = vadd.f32 0.0, %v6443
        %v6445 = vpop.f32.mrb[0].mxu0
        %6446 = vmatprep.mubr.bf16.mxu0 0
        %6447 = vmatmul.mubr.bf16.gmra.mrb[0].mxu0 %v1939
        %v6448 = vpop.f32.mrb[0].mxu0
        %v6449 = vadd.f32 0.0, %v6448
        %v6450 = vpop.f32.mrb[0].mxu0
        %v6451 = vpop.f32.mrb[0].mxu0
        %v6452 = vadd.f32 0.0, %v6451
        %v6453 = vpop.f32.mrb[0].mxu0
        %6454 = vmatprep.mubr.bf16.mxu0 0
        %6455 = vmatmul.mubr.bf16.gmra.mrb[0].mxu0 %v1942
        %v6456 = vpop.f32.mrb[0].mxu0
        %v6457 = vadd.f32 0.0, %v6456
        %v6458 = vpop.f32.mrb[0].mxu0
        %v6459 = vpop.f32.mrb[0].mxu0
        %v6460 = vadd.f32 0.0, %v6459
        %v6461 = vpop.f32.mrb[0].mxu0
        %6462 = vdwg.mxu0
        %v6463 = vadd.f32 %v6333, %v6401
        %v6464 = vadd.f32 %v6334, %v6404
        %v6465 = vadd.f32 %v6335, %v6409
        %v6466 = vadd.f32 %v6336, %v6412
        %v6467 = vadd.f32 %v6337, %v6417
        %v6468 = vadd.f32 %v6338, %v6420
        %v6469 = vadd.f32 %v6339, %v6425
        %v6470 = vadd.f32 %v6340, %v6428
        %v6471 = vadd.f32 %v6341, %v6433
        %v6472 = vadd.f32 %v6342, %v6436
        %v6473 = vadd.f32 %v6343, %v6441
        %v6474 = vadd.f32 %v6344, %v6444
        %v6475 = vadd.f32 %v6345, %v6449
        %v6476 = vadd.f32 %v6346, %v6452
        %v6477 = vadd.f32 %v6347, %v6457
        %v6478 = vadd.f32 %v6348, %v6460
        %v6479 = vld [vmem:[%s1580 + $0x18] sm:$0xe]
        %v6480 = vld [vmem:[%s1580 + $0x1c] sm:$0xf]
        %v6481 = vld [vmem:[%s1580 + $0x20] sm:$0x1]
        %v6482 = vld [vmem:[%s1580 + $0x3c] sm:$0xe]
        %v6483 = vld [vmem:[%s1580 + $0x40] sm:$0xf]
        %v6484 = vld [vmem:[%s1580 + $0x44] sm:$0x1]
        %v6485 = vld [vmem:[%s1580 + $0x60] sm:$0xe]
        %v6486 = vld [vmem:[%s1580 + $0x64] sm:$0xf]
        %v6487 = vld [vmem:[%s1580 + $0x68] sm:$0x1]
        %v6488 = vld [vmem:[%s1580 + $0x84] sm:$0xe]
        %v6489 = vld [vmem:[%s1580 + $0x88] sm:$0xf]
        %v6490 = vld [vmem:[%s1580 + $0x8c] sm:$0x1]
        %v6491 = vld [vmem:[%s1580 + $0xa8] sm:$0xe]
        %v6492 = vld [vmem:[%s1580 + $0xac] sm:$0xf]
        %v6493 = vld [vmem:[%s1580 + $0xb0] sm:$0x1]
        %v6494 = vld [vmem:[%s1580 + $0xcc] sm:$0xe]
        %v6495 = vld [vmem:[%s1580 + $0xd0] sm:$0xf]
        %v6496 = vld [vmem:[%s1580 + $0xd4] sm:$0x1]
        %v6497 = vld [vmem:[%s1580 + $0xf0] sm:$0xe]
        %v6498 = vld [vmem:[%s1580 + $0xf4] sm:$0xf]
        %v6499 = vld [vmem:[%s1580 + $0xf8] sm:$0x1]
        %v6500 = vld [vmem:[%s1580 + $0x114] sm:$0xe]
        %v6501 = vld [vmem:[%s1580 + $0x118] sm:$0xf]
        %v6502 = vld [vmem:[%s1580 + $0x11c] sm:$0x1]
        %v6527 = vrot.slane %v6479, 5
        %v6528 = vrot.slane %v6527, 4
        %v6529 = vrot.slane %v6480, 5
        %v6530 = vsel %vm895, %v6528, %v6529
        %v6531 = vrot.slane %v6529, 4
        %v6532 = vrot.slane %v6481, 5
        %v6533 = vsel %vm895, %v6531, %v6532
        %v6534 = vrot.slane %v6482, 5
        %v6535 = vrot.slane %v6534, 4
        %v6536 = vrot.slane %v6483, 5
        %v6537 = vsel %vm895, %v6535, %v6536
        %v6538 = vrot.slane %v6536, 4
        %v6539 = vrot.slane %v6484, 5
        %v6540 = vsel %vm895, %v6538, %v6539
        %v6541 = vrot.slane %v6485, 5
        %v6542 = vrot.slane %v6541, 4
        %v6543 = vrot.slane %v6486, 5
        %v6544 = vsel %vm895, %v6542, %v6543
        %v6545 = vrot.slane %v6543, 4
        %v6546 = vrot.slane %v6487, 5
        %v6547 = vsel %vm895, %v6545, %v6546
        %v6548 = vrot.slane %v6488, 5
        %v6549 = vrot.slane %v6548, 4
        %v6550 = vrot.slane %v6489, 5
        %v6551 = vsel %vm895, %v6549, %v6550
        %v6552 = vrot.slane %v6550, 4
        %v6553 = vrot.slane %v6490, 5
        %v6554 = vsel %vm895, %v6552, %v6553
        %v6555 = vrot.slane %v6491, 5
        %v6556 = vrot.slane %v6555, 4
        %v6557 = vrot.slane %v6492, 5
        %v6558 = vsel %vm895, %v6556, %v6557
        %v6559 = vrot.slane %v6557, 4
        %v6560 = vrot.slane %v6493, 5
        %v6561 = vsel %vm895, %v6559, %v6560
        %v6562 = vrot.slane %v6494, 5
        %v6563 = vrot.slane %v6562, 4
        %v6564 = vrot.slane %v6495, 5
        %v6565 = vsel %vm895, %v6563, %v6564
        %v6566 = vrot.slane %v6564, 4
        %v6567 = vrot.slane %v6496, 5
        %v6568 = vsel %vm895, %v6566, %v6567
        %v6569 = vrot.slane %v6497, 5
        %v6570 = vrot.slane %v6569, 4
        %v6571 = vrot.slane %v6498, 5
        %v6572 = vsel %vm895, %v6570, %v6571
        %v6573 = vrot.slane %v6571, 4
        %v6574 = vrot.slane %v6499, 5
        %v6575 = vsel %vm895, %v6573, %v6574
        %v6576 = vrot.slane %v6500, 5
        %v6577 = vrot.slane %v6576, 4
        %v6578 = vrot.slane %v6501, 5
        %v6579 = vsel %vm895, %v6577, %v6578
        %v6580 = vrot.slane %v6578, 4
        %v6581 = vrot.slane %v6502, 5
        %v6582 = vsel %vm895, %v6580, %v6581
        %s6583 = scalar_lea.vmem [#allocation6], 368
        %v6584 = vld [vmem:[%s6583] sm:$0xf]
        %v6585 = vld [vmem:[%s6583 + $0x4] sm:$0xf]
        %v6586 = vld [vmem:[%s6583 + $0x8] sm:$0xf]
        %v6587 = vld [vmem:[%s6583 + $0xc] sm:$0xf]
        %v6588 = vunpack.c.l.b16 %v6530
        %v6589 = vunpack.c.l.b16 %v6533
        %v6590 = vunpack.c.l.b16 %v6537
        %v6591 = vunpack.c.l.b16 %v6540
        %v6592 = vunpack.c.l.b16 %v6544
        %v6593 = vunpack.c.l.b16 %v6547
        %v6594 = vunpack.c.l.b16 %v6551
        %v6595 = vunpack.c.l.b16 %v6554
        %v6596 = vunpack.c.l.b16 %v6558
        %v6597 = vunpack.c.l.b16 %v6561
        %v6598 = vunpack.c.l.b16 %v6565
        %v6599 = vunpack.c.l.b16 %v6568
        %v6600 = vunpack.c.l.b16 %v6572
        %v6601 = vunpack.c.l.b16 %v6575
        %v6602 = vunpack.c.l.b16 %v6579
        %v6603 = vunpack.c.l.b16 %v6582
        %v6604 = vpack.c.b16 %v6589, %v6588
        %v6605 = vpack.c.b16 %v6591, %v6590
        %v6606 = vpack.c.b16 %v6593, %v6592
        %v6607 = vpack.c.b16 %v6595, %v6594
        %v6608 = vpack.c.b16 %v6597, %v6596
        %v6609 = vpack.c.b16 %v6599, %v6598
        %v6610 = vpack.c.b16 %v6601, %v6600
        %v6611 = vpack.c.b16 %v6603, %v6602
        %v6616 = vunpack.c.l.b16 %v6584
        %v6617 = vunpack.c.l.b16 %v6585
        %v6618 = vunpack.c.l.b16 %v6586
        %v6619 = vunpack.c.l.b16 %v6587
        %v6620 = vpack.c.b16 %v6617, %v6616
        %v6621 = vpack.c.b16 %v6619, %v6618
        %v6625 = vsel %vm1013, %v6604, 0
        %v6628 = vsel %vm1013, %v6605, 0
        %v6631 = vsel %vm1013, %v6606, 0
        %v6634 = vsel %vm1013, %v6607, 0
        %v6637 = vsel %vm1013, %v6608, 0
        %v6640 = vsel %vm1013, %v6609, 0
        %v6643 = vsel %vm1013, %v6610, 0
        %v6646 = vsel %vm1013, %v6611, 0
        %6648 = vmatprep.subr.bf16.mxu0 0
        %6649 = vmatpush1.bf16.msra.mxu0 %v6620
        %6650 = vmatprep.subr.bf16.mxu0 0
        %6651 = vmatpush1.bf16.msra.mxu0 %v6621
        %6652 = vmatprep.subr.bf16.mxu0 0
        %6653 = vmatpush1.bf16.msra.mxu0 0
        %6654 = vmatprep.subr.bf16.mxu0 0
        %6655 = vmatpush1.bf16.msra.mxu0 0
        %6656 = vmatprep.subr.bf16.mxu0 0
        %6657 = vmatpush1.bf16.msra.mxu0 0
        %6658 = vmatprep.subr.bf16.mxu0 0
        %6659 = vmatpush1.bf16.msra.mxu0 0
        %6660 = vmatprep.subr.bf16.mxu0 0
        %6661 = vmatpush1.bf16.msra.mxu0 0
        %6662 = vmatprep.subr.bf16.mxu0 0
        %6663 = vmatpush1.bf16.msra.mxu0 0
        %6664 = vmatprep.subr.bf16.mxu0 0
        %6665 = vmatpush1.bf16.msra.mxu0 0
        %6666 = vmatprep.subr.bf16.mxu0 0
        %6667 = vmatpush1.bf16.msra.mxu0 0
        %6668 = vmatprep.subr.bf16.mxu0 0
        %6669 = vmatpush1.bf16.msra.mxu0 0
        %6670 = vmatprep.subr.bf16.mxu0 0
        %6671 = vmatpush1.bf16.msra.mxu0 0
        %6672 = vmatprep.subr.bf16.mxu0 0
        %6673 = vmatpush1.bf16.msra.mxu0 0
        %6674 = vmatprep.subr.bf16.mxu0 0
        %6675 = vmatpush1.bf16.msra.mxu0 0
        %6676 = vmatprep.subr.bf16.mxu0 0
        %6677 = vmatpush1.bf16.msra.mxu0 0
        %6678 = vmatprep.subr.bf16.mxu0 0
        %6679 = vmatpush1.bf16.msra.mxu0 0
        %6680 = vmatprep.mubr.bf16.mxu0 0
        %6681 = vmatmul.mubr.bf16.gmra.mrb[0].mxu0 %v6625
        %v6682 = vpop.f32.mrb[0].mxu0
        %v6683 = vadd.f32 0.0, %v6682
        %v6684 = vpop.f32.mrb[0].mxu0
        %v6685 = vpop.f32.mrb[0].mxu0
        %v6686 = vadd.f32 0.0, %v6685
        %v6687 = vpop.f32.mrb[0].mxu0
        %6688 = vmatprep.mubr.bf16.mxu0 0
        %6689 = vmatmul.mubr.bf16.gmra.mrb[0].mxu0 %v6628
        %v6690 = vpop.f32.mrb[0].mxu0
        %v6691 = vadd.f32 0.0, %v6690
        %v6692 = vpop.f32.mrb[0].mxu0
        %v6693 = vpop.f32.mrb[0].mxu0
        %v6694 = vadd.f32 0.0, %v6693
        %v6695 = vpop.f32.mrb[0].mxu0
        %6696 = vmatprep.mubr.bf16.mxu0 0
        %6697 = vmatmul.mubr.bf16.gmra.mrb[0].mxu0 %v6631
        %v6698 = vpop.f32.mrb[0].mxu0
        %v6699 = vadd.f32 0.0, %v6698
        %v6700 = vpop.f32.mrb[0].mxu0
        %v6701 = vpop.f32.mrb[0].mxu0
        %v6702 = vadd.f32 0.0, %v6701
        %v6703 = vpop.f32.mrb[0].mxu0
        %6704 = vmatprep.mubr.bf16.mxu0 0
        %6705 = vmatmul.mubr.bf16.gmra.mrb[0].mxu0 %v6634
        %v6706 = vpop.f32.mrb[0].mxu0
        %v6707 = vadd.f32 0.0, %v6706
        %v6708 = vpop.f32.mrb[0].mxu0
        %v6709 = vpop.f32.mrb[0].mxu0
        %v6710 = vadd.f32 0.0, %v6709
        %v6711 = vpop.f32.mrb[0].mxu0
        %6712 = vmatprep.mubr.bf16.mxu0 0
        %6713 = vmatmul.mubr.bf16.gmra.mrb[0].mxu0 %v6637
        %v6714 = vpop.f32.mrb[0].mxu0
        %v6715 = vadd.f32 0.0, %v6714
        %v6716 = vpop.f32.mrb[0].mxu0
        %v6717 = vpop.f32.mrb[0].mxu0
        %v6718 = vadd.f32 0.0, %v6717
        %v6719 = vpop.f32.mrb[0].mxu0
        %6720 = vmatprep.mubr.bf16.mxu0 0
        %6721 = vmatmul.mubr.bf16.gmra.mrb[0].mxu0 %v6640
        %v6722 = vpop.f32.mrb[0].mxu0
        %v6723 = vadd.f32 0.0, %v6722
        %v6724 = vpop.f32.mrb[0].mxu0
        %v6725 = vpop.f32.mrb[0].mxu0
        %v6726 = vadd.f32 0.0, %v6725
        %v6727 = vpop.f32.mrb[0].mxu0
        %6728 = vmatprep.mubr.bf16.mxu0 0
        %6729 = vmatmul.mubr.bf16.gmra.mrb[0].mxu0 %v6643
        %v6730 = vpop.f32.mrb[0].mxu0
        %v6731 = vadd.f32 0.0, %v6730
        %v6732 = vpop.f32.mrb[0].mxu0
        %v6733 = vpop.f32.mrb[0].mxu0
        %v6734 = vadd.f32 0.0, %v6733
        %v6735 = vpop.f32.mrb[0].mxu0
        %6736 = vmatprep.mubr.bf16.mxu0 0
        %6737 = vmatmul.mubr.bf16.gmra.mrb[0].mxu0 %v6646
        %v6738 = vpop.f32.mrb[0].mxu0
        %v6739 = vadd.f32 0.0, %v6738
        %v6740 = vpop.f32.mrb[0].mxu0
        %v6741 = vpop.f32.mrb[0].mxu0
        %v6742 = vadd.f32 0.0, %v6741
        %v6743 = vpop.f32.mrb[0].mxu0
        %6744 = vdwg.mxu0
        %v6745 = vadd.f32 %v6463, %v6683
        %v6746 = vadd.f32 %v6464, %v6686
        %v6747 = vadd.f32 %v6465, %v6691
        %v6748 = vadd.f32 %v6466, %v6694
        %v6749 = vadd.f32 %v6467, %v6699
        %v6750 = vadd.f32 %v6468, %v6702
        %v6751 = vadd.f32 %v6469, %v6707
        %v6752 = vadd.f32 %v6470, %v6710
        %v6753 = vadd.f32 %v6471, %v6715
        %v6754 = vadd.f32 %v6472, %v6718
        %v6755 = vadd.f32 %v6473, %v6723
        %v6756 = vadd.f32 %v6474, %v6726
        %v6757 = vadd.f32 %v6475, %v6731
        %v6758 = vadd.f32 %v6476, %v6734
        %v6759 = vadd.f32 %v6477, %v6739
        %v6760 = vadd.f32 %v6478, %v6742
        %s6761 = sadd.s32 %s840, 36
        %s6762 = smul.u32 %s6761, 9
        %s6763 = smul.addr %s6762, 4
        %s6764 = scalar_lea.vmem [#allocation2], %s6763
        %v6765 = vld [vmem:[%s6764 + $0x4] sm:$0x8]
        %v6766 = vld [vmem:[%s6764 + $0x8] sm:$0xf]
        %v6767 = vld [vmem:[%s6764 + $0xc] sm:$0x7]
        %v6768 = vld [vmem:[%s6764 + $0x28] sm:$0x8]
        %v6769 = vld [vmem:[%s6764 + $0x2c] sm:$0xf]
        %v6770 = vld [vmem:[%s6764 + $0x30] sm:$0x7]
        %v6771 = vld [vmem:[%s6764 + $0x4c] sm:$0x8]
        %v6772 = vld [vmem:[%s6764 + $0x50] sm:$0xf]
        %v6773 = vld [vmem:[%s6764 + $0x54] sm:$0x7]
        %v6774 = vld [vmem:[%s6764 + $0x70] sm:$0x8]
        %v6775 = vld [vmem:[%s6764 + $0x74] sm:$0xf]
        %v6776 = vld [vmem:[%s6764 + $0x78] sm:$0x7]
        %v6777 = vld [vmem:[%s6764 + $0x94] sm:$0x8]
        %v6778 = vld [vmem:[%s6764 + $0x98] sm:$0xf]
        %v6779 = vld [vmem:[%s6764 + $0x9c] sm:$0x7]
        %v6780 = vld [vmem:[%s6764 + $0xb8] sm:$0x8]
        %v6781 = vld [vmem:[%s6764 + $0xbc] sm:$0xf]
        %v6782 = vld [vmem:[%s6764 + $0xc0] sm:$0x7]
        %v6783 = vld [vmem:[%s6764 + $0xdc] sm:$0x8]
        %v6784 = vld [vmem:[%s6764 + $0xe0] sm:$0xf]
        %v6785 = vld [vmem:[%s6764 + $0xe4] sm:$0x7]
        %v6786 = vld [vmem:[%s6764 + $0x100] sm:$0x8]
        %v6787 = vld [vmem:[%s6764 + $0x104] sm:$0xf]
        %v6788 = vld [vmem:[%s6764 + $0x108] sm:$0x7]
        %v6813 = vrot.slane %v6765, 7
        %v6814 = vrot.slane %v6813, 4
        %v6815 = vrot.slane %v6766, 7
        %v6816 = vsel %vm1342, %v6814, %v6815
        %v6817 = vrot.slane %v6815, 4
        %v6818 = vrot.slane %v6767, 7
        %v6819 = vsel %vm1342, %v6817, %v6818
        %v6820 = vrot.slane %v6768, 7
        %v6821 = vrot.slane %v6820, 4
        %v6822 = vrot.slane %v6769, 7
        %v6823 = vsel %vm1342, %v6821, %v6822
        %v6824 = vrot.slane %v6822, 4
        %v6825 = vrot.slane %v6770, 7
        %v6826 = vsel %vm1342, %v6824, %v6825
        %v6827 = vrot.slane %v6771, 7
        %v6828 = vrot.slane %v6827, 4
        %v6829 = vrot.slane %v6772, 7
        %v6830 = vsel %vm1342, %v6828, %v6829
        %v6831 = vrot.slane %v6829, 4
        %v6832 = vrot.slane %v6773, 7
        %v6833 = vsel %vm1342, %v6831, %v6832
        %v6834 = vrot.slane %v6774, 7
        %v6835 = vrot.slane %v6834, 4
        %v6836 = vrot.slane %v6775, 7
        %v6837 = vsel %vm1342, %v6835, %v6836
        %v6838 = vrot.slane %v6836, 4
        %v6839 = vrot.slane %v6776, 7
        %v6840 = vsel %vm1342, %v6838, %v6839
        %v6841 = vrot.slane %v6777, 7
        %v6842 = vrot.slane %v6841, 4
        %v6843 = vrot.slane %v6778, 7
        %v6844 = vsel %vm1342, %v6842, %v6843
        %v6845 = vrot.slane %v6843, 4
        %v6846 = vrot.slane %v6779, 7
        %v6847 = vsel %vm1342, %v6845, %v6846
        %v6848 = vrot.slane %v6780, 7
        %v6849 = vrot.slane %v6848, 4
        %v6850 = vrot.slane %v6781, 7
        %v6851 = vsel %vm1342, %v6849, %v6850
        %v6852 = vrot.slane %v6850, 4
        %v6853 = vrot.slane %v6782, 7
        %v6854 = vsel %vm1342, %v6852, %v6853
        %v6855 = vrot.slane %v6783, 7
        %v6856 = vrot.slane %v6855, 4
        %v6857 = vrot.slane %v6784, 7
        %v6858 = vsel %vm1342, %v6856, %v6857
        %v6859 = vrot.slane %v6857, 4
        %v6860 = vrot.slane %v6785, 7
        %v6861 = vsel %vm1342, %v6859, %v6860
        %v6862 = vrot.slane %v6786, 7
        %v6863 = vrot.slane %v6862, 4
        %v6864 = vrot.slane %v6787, 7
        %v6865 = vsel %vm1342, %v6863, %v6864
        %v6866 = vrot.slane %v6864, 4
        %v6867 = vrot.slane %v6788, 7
        %v6868 = vsel %vm1342, %v6866, %v6867
        %s6869 = scalar_lea.vmem [#allocation6], 384
        %v6870 = vld [vmem:[%s6869] sm:$0xf]
        %v6871 = vld [vmem:[%s6869 + $0x4] sm:$0xf]
        %v6872 = vld [vmem:[%s6869 + $0x8] sm:$0xf]
        %v6873 = vld [vmem:[%s6869 + $0xc] sm:$0xf]
        %v6874 = vunpack.c.l.b16 %v6816
        %v6875 = vunpack.c.l.b16 %v6819
        %v6876 = vunpack.c.l.b16 %v6823
        %v6877 = vunpack.c.l.b16 %v6826
        %v6878 = vunpack.c.l.b16 %v6830
        %v6879 = vunpack.c.l.b16 %v6833
        %v6880 = vunpack.c.l.b16 %v6837
        %v6881 = vunpack.c.l.b16 %v6840
        %v6882 = vunpack.c.l.b16 %v6844
        %v6883 = vunpack.c.l.b16 %v6847
        %v6884 = vunpack.c.l.b16 %v6851
        %v6885 = vunpack.c.l.b16 %v6854
        %v6886 = vunpack.c.l.b16 %v6858
        %v6887 = vunpack.c.l.b16 %v6861
        %v6888 = vunpack.c.l.b16 %v6865
        %v6889 = vunpack.c.l.b16 %v6868
        %v6890 = vpack.c.b16 %v6875, %v6874
        %v6891 = vpack.c.b16 %v6877, %v6876
        %v6892 = vpack.c.b16 %v6879, %v6878
        %v6893 = vpack.c.b16 %v6881, %v6880
        %v6894 = vpack.c.b16 %v6883, %v6882
        %v6895 = vpack.c.b16 %v6885, %v6884
        %v6896 = vpack.c.b16 %v6887, %v6886
        %v6897 = vpack.c.b16 %v6889, %v6888
        %v6902 = vunpack.c.l.b16 %v6870
        %v6903 = vunpack.c.l.b16 %v6871
        %v6904 = vunpack.c.l.b16 %v6872
        %v6905 = vunpack.c.l.b16 %v6873
        %v6906 = vpack.c.b16 %v6903, %v6902
        %v6907 = vpack.c.b16 %v6905, %v6904
        %v6911 = vsel %vm1013, %v6890, 0
        %v6914 = vsel %vm1013, %v6891, 0
        %v6917 = vsel %vm1013, %v6892, 0
        %v6920 = vsel %vm1013, %v6893, 0
        %v6923 = vsel %vm1013, %v6894, 0
        %v6926 = vsel %vm1013, %v6895, 0
        %v6929 = vsel %vm1013, %v6896, 0
        %v6932 = vsel %vm1013, %v6897, 0
        %6934 = vmatprep.subr.bf16.mxu0 0
        %6935 = vmatpush1.bf16.msra.mxu0 %v6906
        %6936 = vmatprep.subr.bf16.mxu0 0
        %6937 = vmatpush1.bf16.msra.mxu0 %v6907
        %6938 = vmatprep.subr.bf16.mxu0 0
        %6939 = vmatpush1.bf16.msra.mxu0 0
        %6940 = vmatprep.subr.bf16.mxu0 0
        %6941 = vmatpush1.bf16.msra.mxu0 0
        %6942 = vmatprep.subr.bf16.mxu0 0
        %6943 = vmatpush1.bf16.msra.mxu0 0
        %6944 = vmatprep.subr.bf16.mxu0 0
        %6945 = vmatpush1.bf16.msra.mxu0 0
        %6946 = vmatprep.subr.bf16.mxu0 0
        %6947 = vmatpush1.bf16.msra.mxu0 0
        %6948 = vmatprep.subr.bf16.mxu0 0
        %6949 = vmatpush1.bf16.msra.mxu0 0
        %6950 = vmatprep.subr.bf16.mxu0 0
        %6951 = vmatpush1.bf16.msra.mxu0 0
        %6952 = vmatprep.subr.bf16.mxu0 0
        %6953 = vmatpush1.bf16.msra.mxu0 0
        %6954 = vmatprep.subr.bf16.mxu0 0
        %6955 = vmatpush1.bf16.msra.mxu0 0
        %6956 = vmatprep.subr.bf16.mxu0 0
        %6957 = vmatpush1.bf16.msra.mxu0 0
        %6958 = vmatprep.subr.bf16.mxu0 0
        %6959 = vmatpush1.bf16.msra.mxu0 0
        %6960 = vmatprep.subr.bf16.mxu0 0
        %6961 = vmatpush1.bf16.msra.mxu0 0
        %6962 = vmatprep.subr.bf16.mxu0 0
        %6963 = vmatpush1.bf16.msra.mxu0 0
        %6964 = vmatprep.subr.bf16.mxu0 0
        %6965 = vmatpush1.bf16.msra.mxu0 0
        %6966 = vmatprep.mubr.bf16.mxu0 0
        %6967 = vmatmul.mubr.bf16.gmra.mrb[0].mxu0 %v6911
        %v6968 = vpop.f32.mrb[0].mxu0
        %v6969 = vadd.f32 0.0, %v6968
        %v6970 = vpop.f32.mrb[0].mxu0
        %v6971 = vpop.f32.mrb[0].mxu0
        %v6972 = vadd.f32 0.0, %v6971
        %v6973 = vpop.f32.mrb[0].mxu0
        %6974 = vmatprep.mubr.bf16.mxu0 0
        %6975 = vmatmul.mubr.bf16.gmra.mrb[0].mxu0 %v6914
        %v6976 = vpop.f32.mrb[0].mxu0
        %v6977 = vadd.f32 0.0, %v6976
        %v6978 = vpop.f32.mrb[0].mxu0
        %v6979 = vpop.f32.mrb[0].mxu0
        %v6980 = vadd.f32 0.0, %v6979
        %v6981 = vpop.f32.mrb[0].mxu0
        %6982 = vmatprep.mubr.bf16.mxu0 0
        %6983 = vmatmul.mubr.bf16.gmra.mrb[0].mxu0 %v6917
        %v6984 = vpop.f32.mrb[0].mxu0
        %v6985 = vadd.f32 0.0, %v6984
        %v6986 = vpop.f32.mrb[0].mxu0
        %v6987 = vpop.f32.mrb[0].mxu0
        %v6988 = vadd.f32 0.0, %v6987
        %v6989 = vpop.f32.mrb[0].mxu0
        %6990 = vmatprep.mubr.bf16.mxu0 0
        %6991 = vmatmul.mubr.bf16.gmra.mrb[0].mxu0 %v6920
        %v6992 = vpop.f32.mrb[0].mxu0
        %v6993 = vadd.f32 0.0, %v6992
        %v6994 = vpop.f32.mrb[0].mxu0
        %v6995 = vpop.f32.mrb[0].mxu0
        %v6996 = vadd.f32 0.0, %v6995
        %v6997 = vpop.f32.mrb[0].mxu0
        %6998 = vmatprep.mubr.bf16.mxu0 0
        %6999 = vmatmul.mubr.bf16.gmra.mrb[0].mxu0 %v6923
        %v7000 = vpop.f32.mrb[0].mxu0
        %v7001 = vadd.f32 0.0, %v7000
        %v7002 = vpop.f32.mrb[0].mxu0
        %v7003 = vpop.f32.mrb[0].mxu0
        %v7004 = vadd.f32 0.0, %v7003
        %v7005 = vpop.f32.mrb[0].mxu0
        %7006 = vmatprep.mubr.bf16.mxu0 0
        %7007 = vmatmul.mubr.bf16.gmra.mrb[0].mxu0 %v6926
        %v7008 = vpop.f32.mrb[0].mxu0
        %v7009 = vadd.f32 0.0, %v7008
        %v7010 = vpop.f32.mrb[0].mxu0
        %v7011 = vpop.f32.mrb[0].mxu0
        %v7012 = vadd.f32 0.0, %v7011
        %v7013 = vpop.f32.mrb[0].mxu0
        %7014 = vmatprep.mubr.bf16.mxu0 0
        %7015 = vmatmul.mubr.bf16.gmra.mrb[0].mxu0 %v6929
        %v7016 = vpop.f32.mrb[0].mxu0
        %v7017 = vadd.f32 0.0, %v7016
        %v7018 = vpop.f32.mrb[0].mxu0
        %v7019 = vpop.f32.mrb[0].mxu0
        %v7020 = vadd.f32 0.0, %v7019
        %v7021 = vpop.f32.mrb[0].mxu0
        %7022 = vmatprep.mubr.bf16.mxu0 0
        %7023 = vmatmul.mubr.bf16.gmra.mrb[0].mxu0 %v6932
        %v7024 = vpop.f32.mrb[0].mxu0
        %v7025 = vadd.f32 0.0, %v7024
        %v7026 = vpop.f32.mrb[0].mxu0
        %v7027 = vpop.f32.mrb[0].mxu0
        %v7028 = vadd.f32 0.0, %v7027
        %v7029 = vpop.f32.mrb[0].mxu0
        %7030 = vdwg.mxu0
        %v7031 = vadd.f32 %v6745, %v6969
        %v7032 = vadd.f32 %v6746, %v6972
        %v7033 = vadd.f32 %v6747, %v6977
        %v7034 = vadd.f32 %v6748, %v6980
        %v7035 = vadd.f32 %v6749, %v6985
        %v7036 = vadd.f32 %v6750, %v6988
        %v7037 = vadd.f32 %v6751, %v6993
        %v7038 = vadd.f32 %v6752, %v6996
        %v7039 = vadd.f32 %v6753, %v7001
        %v7040 = vadd.f32 %v6754, %v7004
        %v7041 = vadd.f32 %v6755, %v7009
        %v7042 = vadd.f32 %v6756, %v7012
        %v7043 = vadd.f32 %v6757, %v7017
        %v7044 = vadd.f32 %v6758, %v7020
        %v7045 = vadd.f32 %v6759, %v7025
        %v7046 = vadd.f32 %v6760, %v7028
        %v7047 = vld [vmem:[%s6764 + $0x10] sm:$0xf]
        %v7048 = vld [vmem:[%s6764 + $0x14] sm:$0xf]
        %v7049 = vld [vmem:[%s6764 + $0x34] sm:$0xf]
        %v7050 = vld [vmem:[%s6764 + $0x38] sm:$0xf]
        %v7051 = vld [vmem:[%s6764 + $0x58] sm:$0xf]
        %v7052 = vld [vmem:[%s6764 + $0x5c] sm:$0xf]
        %v7053 = vld [vmem:[%s6764 + $0x7c] sm:$0xf]
        %v7054 = vld [vmem:[%s6764 + $0x80] sm:$0xf]
        %v7055 = vld [vmem:[%s6764 + $0xa0] sm:$0xf]
        %v7056 = vld [vmem:[%s6764 + $0xa4] sm:$0xf]
        %v7057 = vld [vmem:[%s6764 + $0xc4] sm:$0xf]
        %v7058 = vld [vmem:[%s6764 + $0xc8] sm:$0xf]
        %v7059 = vld [vmem:[%s6764 + $0xe8] sm:$0xf]
        %v7060 = vld [vmem:[%s6764 + $0xec] sm:$0xf]
        %v7061 = vld [vmem:[%s6764 + $0x10c] sm:$0xf]
        %v7062 = vld [vmem:[%s6764 + $0x110] sm:$0xf]
        %s7063 = scalar_lea.vmem [#allocation6], 400
        %v7064 = vld [vmem:[%s7063] sm:$0xf]
        %v7065 = vld [vmem:[%s7063 + $0x4] sm:$0xf]
        %v7066 = vld [vmem:[%s7063 + $0x8] sm:$0xf]
        %v7067 = vld [vmem:[%s7063 + $0xc] sm:$0xf]
        %v7084 = vunpack.c.l.b16 %v7047
        %v7085 = vunpack.c.l.b16 %v7048
        %v7086 = vunpack.c.l.b16 %v7049
        %v7087 = vunpack.c.l.b16 %v7050
        %v7088 = vunpack.c.l.b16 %v7051
        %v7089 = vunpack.c.l.b16 %v7052
        %v7090 = vunpack.c.l.b16 %v7053
        %v7091 = vunpack.c.l.b16 %v7054
        %v7092 = vunpack.c.l.b16 %v7055
        %v7093 = vunpack.c.l.b16 %v7056
        %v7094 = vunpack.c.l.b16 %v7057
        %v7095 = vunpack.c.l.b16 %v7058
        %v7096 = vunpack.c.l.b16 %v7059
        %v7097 = vunpack.c.l.b16 %v7060
        %v7098 = vunpack.c.l.b16 %v7061
        %v7099 = vunpack.c.l.b16 %v7062
        %v7100 = vpack.c.b16 %v7085, %v7084
        %v7101 = vpack.c.b16 %v7087, %v7086
        %v7102 = vpack.c.b16 %v7089, %v7088
        %v7103 = vpack.c.b16 %v7091, %v7090
        %v7104 = vpack.c.b16 %v7093, %v7092
        %v7105 = vpack.c.b16 %v7095, %v7094
        %v7106 = vpack.c.b16 %v7097, %v7096
        %v7107 = vpack.c.b16 %v7099, %v7098
        %v7112 = vunpack.c.l.b16 %v7064
        %v7113 = vunpack.c.l.b16 %v7065
        %v7114 = vunpack.c.l.b16 %v7066
        %v7115 = vunpack.c.l.b16 %v7067
        %v7116 = vpack.c.b16 %v7113, %v7112
        %v7117 = vpack.c.b16 %v7115, %v7114
        %v7121 = vsel %vm1013, %v7100, 0
        %v7124 = vsel %vm1013, %v7101, 0
        %v7127 = vsel %vm1013, %v7102, 0
        %v7130 = vsel %vm1013, %v7103, 0
        %v7133 = vsel %vm1013, %v7104, 0
        %v7136 = vsel %vm1013, %v7105, 0
        %v7139 = vsel %vm1013, %v7106, 0
        %v7142 = vsel %vm1013, %v7107, 0
        %7144 = vmatprep.subr.bf16.mxu0 0
        %7145 = vmatpush1.bf16.msra.mxu0 %v7116
        %7146 = vmatprep.subr.bf16.mxu0 0
        %7147 = vmatpush1.bf16.msra.mxu0 %v7117
        %7148 = vmatprep.subr.bf16.mxu0 0
        %7149 = vmatpush1.bf16.msra.mxu0 0
        %7150 = vmatprep.subr.bf16.mxu0 0
        %7151 = vmatpush1.bf16.msra.mxu0 0
        %7152 = vmatprep.subr.bf16.mxu0 0
        %7153 = vmatpush1.bf16.msra.mxu0 0
        %7154 = vmatprep.subr.bf16.mxu0 0
        %7155 = vmatpush1.bf16.msra.mxu0 0
        %7156 = vmatprep.subr.bf16.mxu0 0
        %7157 = vmatpush1.bf16.msra.mxu0 0
        %7158 = vmatprep.subr.bf16.mxu0 0
        %7159 = vmatpush1.bf16.msra.mxu0 0
        %7160 = vmatprep.subr.bf16.mxu0 0
        %7161 = vmatpush1.bf16.msra.mxu0 0
        %7162 = vmatprep.subr.bf16.mxu0 0
        %7163 = vmatpush1.bf16.msra.mxu0 0
        %7164 = vmatprep.subr.bf16.mxu0 0
        %7165 = vmatpush1.bf16.msra.mxu0 0
        %7166 = vmatprep.subr.bf16.mxu0 0
        %7167 = vmatpush1.bf16.msra.mxu0 0
        %7168 = vmatprep.subr.bf16.mxu0 0
        %7169 = vmatpush1.bf16.msra.mxu0 0
        %7170 = vmatprep.subr.bf16.mxu0 0
        %7171 = vmatpush1.bf16.msra.mxu0 0
        %7172 = vmatprep.subr.bf16.mxu0 0
        %7173 = vmatpush1.bf16.msra.mxu0 0
        %7174 = vmatprep.subr.bf16.mxu0 0
        %7175 = vmatpush1.bf16.msra.mxu0 0
        %7176 = vmatprep.mubr.bf16.mxu0 0
        %7177 = vmatmul.mubr.bf16.gmra.mrb[0].mxu0 %v7121
        %v7178 = vpop.f32.mrb[0].mxu0
        %v7179 = vadd.f32 0.0, %v7178
        %v7180 = vpop.f32.mrb[0].mxu0
        %v7181 = vpop.f32.mrb[0].mxu0
        %v7182 = vadd.f32 0.0, %v7181
        %v7183 = vpop.f32.mrb[0].mxu0
        %7184 = vmatprep.mubr.bf16.mxu0 0
        %7185 = vmatmul.mubr.bf16.gmra.mrb[0].mxu0 %v7124
        %v7186 = vpop.f32.mrb[0].mxu0
        %v7187 = vadd.f32 0.0, %v7186
        %v7188 = vpop.f32.mrb[0].mxu0
        %v7189 = vpop.f32.mrb[0].mxu0
        %v7190 = vadd.f32 0.0, %v7189
        %v7191 = vpop.f32.mrb[0].mxu0
        %7192 = vmatprep.mubr.bf16.mxu0 0
        %7193 = vmatmul.mubr.bf16.gmra.mrb[0].mxu0 %v7127
        %v7194 = vpop.f32.mrb[0].mxu0
        %v7195 = vadd.f32 0.0, %v7194
        %v7196 = vpop.f32.mrb[0].mxu0
        %v7197 = vpop.f32.mrb[0].mxu0
        %v7198 = vadd.f32 0.0, %v7197
        %v7199 = vpop.f32.mrb[0].mxu0
        %7200 = vmatprep.mubr.bf16.mxu0 0
        %7201 = vmatmul.mubr.bf16.gmra.mrb[0].mxu0 %v7130
        %v7202 = vpop.f32.mrb[0].mxu0
        %v7203 = vadd.f32 0.0, %v7202
        %v7204 = vpop.f32.mrb[0].mxu0
        %v7205 = vpop.f32.mrb[0].mxu0
        %v7206 = vadd.f32 0.0, %v7205
        %v7207 = vpop.f32.mrb[0].mxu0
        %7208 = vmatprep.mubr.bf16.mxu0 0
        %7209 = vmatmul.mubr.bf16.gmra.mrb[0].mxu0 %v7133
        %v7210 = vpop.f32.mrb[0].mxu0
        %v7211 = vadd.f32 0.0, %v7210
        %v7212 = vpop.f32.mrb[0].mxu0
        %v7213 = vpop.f32.mrb[0].mxu0
        %v7214 = vadd.f32 0.0, %v7213
        %v7215 = vpop.f32.mrb[0].mxu0
        %7216 = vmatprep.mubr.bf16.mxu0 0
        %7217 = vmatmul.mubr.bf16.gmra.mrb[0].mxu0 %v7136
        %v7218 = vpop.f32.mrb[0].mxu0
        %v7219 = vadd.f32 0.0, %v7218
        %v7220 = vpop.f32.mrb[0].mxu0
        %v7221 = vpop.f32.mrb[0].mxu0
        %v7222 = vadd.f32 0.0, %v7221
        %v7223 = vpop.f32.mrb[0].mxu0
        %7224 = vmatprep.mubr.bf16.mxu0 0
        %7225 = vmatmul.mubr.bf16.gmra.mrb[0].mxu0 %v7139
        %v7226 = vpop.f32.mrb[0].mxu0
        %v7227 = vadd.f32 0.0, %v7226
        %v7228 = vpop.f32.mrb[0].mxu0
        %v7229 = vpop.f32.mrb[0].mxu0
        %v7230 = vadd.f32 0.0, %v7229
        %v7231 = vpop.f32.mrb[0].mxu0
        %7232 = vmatprep.mubr.bf16.mxu0 0
        %7233 = vmatmul.mubr.bf16.gmra.mrb[0].mxu0 %v7142
        %v7234 = vpop.f32.mrb[0].mxu0
        %v7235 = vadd.f32 0.0, %v7234
        %v7236 = vpop.f32.mrb[0].mxu0
        %v7237 = vpop.f32.mrb[0].mxu0
        %v7238 = vadd.f32 0.0, %v7237
        %v7239 = vpop.f32.mrb[0].mxu0
        %7240 = vdwg.mxu0
        %v7241 = vadd.f32 %v7031, %v7179
        %v7242 = vadd.f32 %v7032, %v7182
        %v7243 = vadd.f32 %v7033, %v7187
        %v7244 = vadd.f32 %v7034, %v7190
        %v7245 = vadd.f32 %v7035, %v7195
        %v7246 = vadd.f32 %v7036, %v7198
        %v7247 = vadd.f32 %v7037, %v7203
        %v7248 = vadd.f32 %v7038, %v7206
        %v7249 = vadd.f32 %v7039, %v7211
        %v7250 = vadd.f32 %v7040, %v7214
        %v7251 = vadd.f32 %v7041, %v7219
        %v7252 = vadd.f32 %v7042, %v7222
        %v7253 = vadd.f32 %v7043, %v7227
        %v7254 = vadd.f32 %v7044, %v7230
        %v7255 = vadd.f32 %v7045, %v7235
        %v7256 = vadd.f32 %v7046, %v7238
        %v7257 = vld [vmem:[%s6764 + $0x18] sm:$0xe]
        %v7258 = vld [vmem:[%s6764 + $0x1c] sm:$0xf]
        %v7259 = vld [vmem:[%s6764 + $0x20] sm:$0x1]
        %v7260 = vld [vmem:[%s6764 + $0x3c] sm:$0xe]
        %v7261 = vld [vmem:[%s6764 + $0x40] sm:$0xf]
        %v7262 = vld [vmem:[%s6764 + $0x44] sm:$0x1]
        %v7263 = vld [vmem:[%s6764 + $0x60] sm:$0xe]
        %v7264 = vld [vmem:[%s6764 + $0x64] sm:$0xf]
        %v7265 = vld [vmem:[%s6764 + $0x68] sm:$0x1]
        %v7266 = vld [vmem:[%s6764 + $0x84] sm:$0xe]
        %v7267 = vld [vmem:[%s6764 + $0x88] sm:$0xf]
        %v7268 = vld [vmem:[%s6764 + $0x8c] sm:$0x1]
        %v7269 = vld [vmem:[%s6764 + $0xa8] sm:$0xe]
        %v7270 = vld [vmem:[%s6764 + $0xac] sm:$0xf]
        %v7271 = vld [vmem:[%s6764 + $0xb0] sm:$0x1]
        %v7272 = vld [vmem:[%s6764 + $0xcc] sm:$0xe]
        %v7273 = vld [vmem:[%s6764 + $0xd0] sm:$0xf]
        %v7274 = vld [vmem:[%s6764 + $0xd4] sm:$0x1]
        %v7275 = vld [vmem:[%s6764 + $0xf0] sm:$0xe]
        %v7276 = vld [vmem:[%s6764 + $0xf4] sm:$0xf]
        %v7277 = vld [vmem:[%s6764 + $0xf8] sm:$0x1]
        %v7278 = vld [vmem:[%s6764 + $0x114] sm:$0xe]
        %v7279 = vld [vmem:[%s6764 + $0x118] sm:$0xf]
        %v7280 = vld [vmem:[%s6764 + $0x11c] sm:$0x1]
        %v7305 = vrot.slane %v7257, 5
        %v7306 = vrot.slane %v7305, 4
        %v7307 = vrot.slane %v7258, 5
        %v7308 = vsel %vm895, %v7306, %v7307
        %v7309 = vrot.slane %v7307, 4
        %v7310 = vrot.slane %v7259, 5
        %v7311 = vsel %vm895, %v7309, %v7310
        %v7312 = vrot.slane %v7260, 5
        %v7313 = vrot.slane %v7312, 4
        %v7314 = vrot.slane %v7261, 5
        %v7315 = vsel %vm895, %v7313, %v7314
        %v7316 = vrot.slane %v7314, 4
        %v7317 = vrot.slane %v7262, 5
        %v7318 = vsel %vm895, %v7316, %v7317
        %v7319 = vrot.slane %v7263, 5
        %v7320 = vrot.slane %v7319, 4
        %v7321 = vrot.slane %v7264, 5
        %v7322 = vsel %vm895, %v7320, %v7321
        %v7323 = vrot.slane %v7321, 4
        %v7324 = vrot.slane %v7265, 5
        %v7325 = vsel %vm895, %v7323, %v7324
        %v7326 = vrot.slane %v7266, 5
        %v7327 = vrot.slane %v7326, 4
        %v7328 = vrot.slane %v7267, 5
        %v7329 = vsel %vm895, %v7327, %v7328
        %v7330 = vrot.slane %v7328, 4
        %v7331 = vrot.slane %v7268, 5
        %v7332 = vsel %vm895, %v7330, %v7331
        %v7333 = vrot.slane %v7269, 5
        %v7334 = vrot.slane %v7333, 4
        %v7335 = vrot.slane %v7270, 5
        %v7336 = vsel %vm895, %v7334, %v7335
        %v7337 = vrot.slane %v7335, 4
        %v7338 = vrot.slane %v7271, 5
        %v7339 = vsel %vm895, %v7337, %v7338
        %v7340 = vrot.slane %v7272, 5
        %v7341 = vrot.slane %v7340, 4
        %v7342 = vrot.slane %v7273, 5
        %v7343 = vsel %vm895, %v7341, %v7342
        %v7344 = vrot.slane %v7342, 4
        %v7345 = vrot.slane %v7274, 5
        %v7346 = vsel %vm895, %v7344, %v7345
        %v7347 = vrot.slane %v7275, 5
        %v7348 = vrot.slane %v7347, 4
        %v7349 = vrot.slane %v7276, 5
        %v7350 = vsel %vm895, %v7348, %v7349
        %v7351 = vrot.slane %v7349, 4
        %v7352 = vrot.slane %v7277, 5
        %v7353 = vsel %vm895, %v7351, %v7352
        %v7354 = vrot.slane %v7278, 5
        %v7355 = vrot.slane %v7354, 4
        %v7356 = vrot.slane %v7279, 5
        %v7357 = vsel %vm895, %v7355, %v7356
        %v7358 = vrot.slane %v7356, 4
        %v7359 = vrot.slane %v7280, 5
        %v7360 = vsel %vm895, %v7358, %v7359
        %s7361 = scalar_lea.vmem [#allocation6], 416
        %v7362 = vld [vmem:[%s7361] sm:$0xf]
        %v7363 = vld [vmem:[%s7361 + $0x4] sm:$0xf]
        %v7364 = vld [vmem:[%s7361 + $0x8] sm:$0xf]
        %v7365 = vld [vmem:[%s7361 + $0xc] sm:$0xf]
        %v7366 = vunpack.c.l.b16 %v7308
        %v7367 = vunpack.c.l.b16 %v7311
        %v7368 = vunpack.c.l.b16 %v7315
        %v7369 = vunpack.c.l.b16 %v7318
        %v7370 = vunpack.c.l.b16 %v7322
        %v7371 = vunpack.c.l.b16 %v7325
        %v7372 = vunpack.c.l.b16 %v7329
        %v7373 = vunpack.c.l.b16 %v7332
        %v7374 = vunpack.c.l.b16 %v7336
        %v7375 = vunpack.c.l.b16 %v7339
        %v7376 = vunpack.c.l.b16 %v7343
        %v7377 = vunpack.c.l.b16 %v7346
        %v7378 = vunpack.c.l.b16 %v7350
        %v7379 = vunpack.c.l.b16 %v7353
        %v7380 = vunpack.c.l.b16 %v7357
        %v7381 = vunpack.c.l.b16 %v7360
        %v7382 = vpack.c.b16 %v7367, %v7366
        %v7383 = vpack.c.b16 %v7369, %v7368
        %v7384 = vpack.c.b16 %v7371, %v7370
        %v7385 = vpack.c.b16 %v7373, %v7372
        %v7386 = vpack.c.b16 %v7375, %v7374
        %v7387 = vpack.c.b16 %v7377, %v7376
        %v7388 = vpack.c.b16 %v7379, %v7378
        %v7389 = vpack.c.b16 %v7381, %v7380
        %v7394 = vunpack.c.l.b16 %v7362
        %v7395 = vunpack.c.l.b16 %v7363
        %v7396 = vunpack.c.l.b16 %v7364
        %v7397 = vunpack.c.l.b16 %v7365
        %v7398 = vpack.c.b16 %v7395, %v7394
        %v7399 = vpack.c.b16 %v7397, %v7396
        %v7403 = vsel %vm1013, %v7382, 0
        %v7406 = vsel %vm1013, %v7383, 0
        %v7409 = vsel %vm1013, %v7384, 0
        %v7412 = vsel %vm1013, %v7385, 0
        %v7415 = vsel %vm1013, %v7386, 0
        %v7418 = vsel %vm1013, %v7387, 0
        %v7421 = vsel %vm1013, %v7388, 0
        %v7424 = vsel %vm1013, %v7389, 0
        %7426 = vmatprep.subr.bf16.mxu0 0
        %7427 = vmatpush1.bf16.msra.mxu0 %v7398
        %7428 = vmatprep.subr.bf16.mxu0 0
        %7429 = vmatpush1.bf16.msra.mxu0 %v7399
        %7430 = vmatprep.subr.bf16.mxu0 0
        %7431 = vmatpush1.bf16.msra.mxu0 0
        %7432 = vmatprep.subr.bf16.mxu0 0
        %7433 = vmatpush1.bf16.msra.mxu0 0
        %7434 = vmatprep.subr.bf16.mxu0 0
        %7435 = vmatpush1.bf16.msra.mxu0 0
        %7436 = vmatprep.subr.bf16.mxu0 0
        %7437 = vmatpush1.bf16.msra.mxu0 0
        %7438 = vmatprep.subr.bf16.mxu0 0
        %7439 = vmatpush1.bf16.msra.mxu0 0
        %7440 = vmatprep.subr.bf16.mxu0 0
        %7441 = vmatpush1.bf16.msra.mxu0 0
        %7442 = vmatprep.subr.bf16.mxu0 0
        %7443 = vmatpush1.bf16.msra.mxu0 0
        %7444 = vmatprep.subr.bf16.mxu0 0
        %7445 = vmatpush1.bf16.msra.mxu0 0
        %7446 = vmatprep.subr.bf16.mxu0 0
        %7447 = vmatpush1.bf16.msra.mxu0 0
        %7448 = vmatprep.subr.bf16.mxu0 0
        %7449 = vmatpush1.bf16.msra.mxu0 0
        %7450 = vmatprep.subr.bf16.mxu0 0
        %7451 = vmatpush1.bf16.msra.mxu0 0
        %7452 = vmatprep.subr.bf16.mxu0 0
        %7453 = vmatpush1.bf16.msra.mxu0 0
        %7454 = vmatprep.subr.bf16.mxu0 0
        %7455 = vmatpush1.bf16.msra.mxu0 0
        %7456 = vmatprep.subr.bf16.mxu0 0
        %7457 = vmatpush1.bf16.msra.mxu0 0
        %7458 = vmatprep.mubr.bf16.mxu0 0
        %7459 = vmatmul.mubr.bf16.gmra.mrb[0].mxu0 %v7403
        %v7460 = vpop.f32.mrb[0].mxu0
        %v7461 = vadd.f32 0.0, %v7460
        %v7462 = vpop.f32.mrb[0].mxu0
        %v7463 = vpop.f32.mrb[0].mxu0
        %v7464 = vadd.f32 0.0, %v7463
        %v7465 = vpop.f32.mrb[0].mxu0
        %7466 = vmatprep.mubr.bf16.mxu0 0
        %7467 = vmatmul.mubr.bf16.gmra.mrb[0].mxu0 %v7406
        %v7468 = vpop.f32.mrb[0].mxu0
        %v7469 = vadd.f32 0.0, %v7468
        %v7470 = vpop.f32.mrb[0].mxu0
        %v7471 = vpop.f32.mrb[0].mxu0
        %v7472 = vadd.f32 0.0, %v7471
        %v7473 = vpop.f32.mrb[0].mxu0
        %7474 = vmatprep.mubr.bf16.mxu0 0
        %7475 = vmatmul.mubr.bf16.gmra.mrb[0].mxu0 %v7409
        %v7476 = vpop.f32.mrb[0].mxu0
        %v7477 = vadd.f32 0.0, %v7476
        %v7478 = vpop.f32.mrb[0].mxu0
        %v7479 = vpop.f32.mrb[0].mxu0
        %v7480 = vadd.f32 0.0, %v7479
        %v7481 = vpop.f32.mrb[0].mxu0
        %7482 = vmatprep.mubr.bf16.mxu0 0
        %7483 = vmatmul.mubr.bf16.gmra.mrb[0].mxu0 %v7412
        %v7484 = vpop.f32.mrb[0].mxu0
        %v7485 = vadd.f32 0.0, %v7484
        %v7486 = vpop.f32.mrb[0].mxu0
        %v7487 = vpop.f32.mrb[0].mxu0
        %v7488 = vadd.f32 0.0, %v7487
        %v7489 = vpop.f32.mrb[0].mxu0
        %7490 = vmatprep.mubr.bf16.mxu0 0
        %7491 = vmatmul.mubr.bf16.gmra.mrb[0].mxu0 %v7415
        %v7492 = vpop.f32.mrb[0].mxu0
        %v7493 = vadd.f32 0.0, %v7492
        %v7494 = vpop.f32.mrb[0].mxu0
        %v7495 = vpop.f32.mrb[0].mxu0
        %v7496 = vadd.f32 0.0, %v7495
        %v7497 = vpop.f32.mrb[0].mxu0
        %7498 = vmatprep.mubr.bf16.mxu0 0
        %7499 = vmatmul.mubr.bf16.gmra.mrb[0].mxu0 %v7418
        %v7500 = vpop.f32.mrb[0].mxu0
        %v7501 = vadd.f32 0.0, %v7500
        %v7502 = vpop.f32.mrb[0].mxu0
        %v7503 = vpop.f32.mrb[0].mxu0
        %v7504 = vadd.f32 0.0, %v7503
        %v7505 = vpop.f32.mrb[0].mxu0
        %7506 = vmatprep.mubr.bf16.mxu0 0
        %7507 = vmatmul.mubr.bf16.gmra.mrb[0].mxu0 %v7421
        %v7508 = vpop.f32.mrb[0].mxu0
        %v7509 = vadd.f32 0.0, %v7508
        %v7510 = vpop.f32.mrb[0].mxu0
        %v7511 = vpop.f32.mrb[0].mxu0
        %v7512 = vadd.f32 0.0, %v7511
        %v7513 = vpop.f32.mrb[0].mxu0
        %7514 = vmatprep.mubr.bf16.mxu0 0
        %7515 = vmatmul.mubr.bf16.gmra.mrb[0].mxu0 %v7424
        %v7516 = vpop.f32.mrb[0].mxu0
        %v7517 = vadd.f32 0.0, %v7516
        %v7518 = vpop.f32.mrb[0].mxu0
        %v7519 = vpop.f32.mrb[0].mxu0
        %v7520 = vadd.f32 0.0, %v7519
        %v7521 = vpop.f32.mrb[0].mxu0
        %7522 = vdwg.mxu0
        %v7523 = vadd.f32 %v7241, %v7461
        %v7524 = vadd.f32 %v7242, %v7464
        %v7525 = vadd.f32 %v7243, %v7469
        %v7526 = vadd.f32 %v7244, %v7472
        %v7527 = vadd.f32 %v7245, %v7477
        %v7528 = vadd.f32 %v7246, %v7480
        %v7529 = vadd.f32 %v7247, %v7485
        %v7530 = vadd.f32 %v7248, %v7488
        %v7531 = vadd.f32 %v7249, %v7493
        %v7532 = vadd.f32 %v7250, %v7496
        %v7533 = vadd.f32 %v7251, %v7501
        %v7534 = vadd.f32 %v7252, %v7504
        %v7535 = vadd.f32 %v7253, %v7509
        %v7536 = vadd.f32 %v7254, %v7512
        %v7537 = vadd.f32 %v7255, %v7517
        %v7538 = vadd.f32 %v7256, %v7520
        %7555 = vrot.lane.b32.xlu0 %v5306, 32
        %v7556 = vpop.permute.xlu0 %7555
        %7557 = vrot.lane.b32.xlu0 %v5307, 32
        %v7558 = vpop.permute.xlu0 %7557
        %7559 = vrot.lane.b32.xlu0 %v5308, 32
        %v7560 = vpop.permute.xlu0 %7559
        %7561 = vrot.lane.b32.xlu0 %v5309, 32
        %v7562 = vpop.permute.xlu0 %7561
        %7563 = vrot.lane.b32.xlu0 %v5310, 32
        %v7564 = vpop.permute.xlu0 %7563
        %7565 = vrot.lane.b32.xlu0 %v5311, 32
        %v7566 = vpop.permute.xlu0 %7565
        %7567 = vrot.lane.b32.xlu0 %v5312, 32
        %v7568 = vpop.permute.xlu0 %7567
        %7569 = vrot.lane.b32.xlu0 %v5313, 32
        %v7570 = vpop.permute.xlu0 %7569
        %7571 = vrot.lane.b32.xlu0 %v5314, 32
        %v7572 = vpop.permute.xlu0 %7571
        %7573 = vrot.lane.b32.xlu0 %v5315, 32
        %v7574 = vpop.permute.xlu0 %7573
        %7575 = vrot.lane.b32.xlu0 %v5316, 32
        %v7576 = vpop.permute.xlu0 %7575
        %7577 = vrot.lane.b32.xlu0 %v5317, 32
        %v7578 = vpop.permute.xlu0 %7577
        %7579 = vrot.lane.b32.xlu0 %v5318, 32
        %v7580 = vpop.permute.xlu0 %7579
        %7581 = vrot.lane.b32.xlu0 %v5319, 32
        %v7582 = vpop.permute.xlu0 %7581
        %7583 = vrot.lane.b32.xlu0 %v5320, 32
        %v7584 = vpop.permute.xlu0 %7583
        %7585 = vrot.lane.b32.xlu0 %v5321, 32
        %v7586 = vpop.permute.xlu0 %7585
        %7619 = vrot.lane.b32.xlu0 %v7523, 64
        %v7620 = vpop.permute.xlu0 %7619
        %7621 = vrot.lane.b32.xlu0 %v7524, 64
        %v7622 = vpop.permute.xlu0 %7621
        %7623 = vrot.lane.b32.xlu0 %v7525, 64
        %v7624 = vpop.permute.xlu0 %7623
        %7625 = vrot.lane.b32.xlu0 %v7526, 64
        %v7626 = vpop.permute.xlu0 %7625
        %7627 = vrot.lane.b32.xlu0 %v7527, 64
        %v7628 = vpop.permute.xlu0 %7627
        %7629 = vrot.lane.b32.xlu0 %v7528, 64
        %v7630 = vpop.permute.xlu0 %7629
        %7631 = vrot.lane.b32.xlu0 %v7529, 64
        %v7632 = vpop.permute.xlu0 %7631
        %7633 = vrot.lane.b32.xlu0 %v7530, 64
        %v7634 = vpop.permute.xlu0 %7633
        %7635 = vrot.lane.b32.xlu0 %v7531, 64
        %v7636 = vpop.permute.xlu0 %7635
        %7637 = vrot.lane.b32.xlu0 %v7532, 64
        %v7638 = vpop.permute.xlu0 %7637
        %7639 = vrot.lane.b32.xlu0 %v7533, 64
        %v7640 = vpop.permute.xlu0 %7639
        %7641 = vrot.lane.b32.xlu0 %v7534, 64
        %v7642 = vpop.permute.xlu0 %7641
        %7643 = vrot.lane.b32.xlu0 %v7535, 64
        %v7644 = vpop.permute.xlu0 %7643
        %7645 = vrot.lane.b32.xlu0 %v7536, 64
        %v7646 = vpop.permute.xlu0 %7645
        %7647 = vrot.lane.b32.xlu0 %v7537, 64
        %v7648 = vpop.permute.xlu0 %7647
        %7649 = vrot.lane.b32.xlu0 %v7538, 64
        %v7650 = vpop.permute.xlu0 %7649
        %v7667 = vsel %vm1013, %v3085, %v7556
        %v7668 = vsel %vm1013, %v3086, %v7558
        %v7669 = vsel %vm1013, %v3087, %v7560
        %v7670 = vsel %vm1013, %v3088, %v7562
        %v7671 = vsel %vm1013, %v3089, %v7564
        %v7672 = vsel %vm1013, %v3090, %v7566
        %v7673 = vsel %vm1013, %v3091, %v7568
        %v7674 = vsel %vm1013, %v3092, %v7570
        %v7675 = vsel %vm1013, %v3093, %v7572
        %v7676 = vsel %vm1013, %v3094, %v7574
        %v7677 = vsel %vm1013, %v3095, %v7576
        %v7678 = vsel %vm1013, %v3096, %v7578
        %v7679 = vsel %vm1013, %v3097, %v7580
        %v7680 = vsel %vm1013, %v3098, %v7582
        %v7681 = vsel %vm1013, %v3099, %v7584
        %v7682 = vsel %vm1013, %v3100, %v7586
        %vm7683 = vcmask 523264
        %v7684 = vsel %vm7683, %v7667, %v7620
        %v7685 = vsel %vm7683, %v7668, %v7622
        %v7686 = vsel %vm7683, %v7669, %v7624
        %v7687 = vsel %vm7683, %v7670, %v7626
        %v7688 = vsel %vm7683, %v7671, %v7628
        %v7689 = vsel %vm7683, %v7672, %v7630
        %v7690 = vsel %vm7683, %v7673, %v7632
        %v7691 = vsel %vm7683, %v7674, %v7634
        %v7692 = vsel %vm7683, %v7675, %v7636
        %v7693 = vsel %vm7683, %v7676, %v7638
        %v7694 = vsel %vm7683, %v7677, %v7640
        %v7695 = vsel %vm7683, %v7678, %v7642
        %v7696 = vsel %vm7683, %v7679, %v7644
        %v7697 = vsel %vm7683, %v7680, %v7646
        %v7698 = vsel %vm7683, %v7681, %v7648
        %v7699 = vsel %vm7683, %v7682, %v7650
        %v7700 = vld [vmem:[%s2] sm:$0x1]
        %v7702 = vlaneseq
        %v7703 = vshrl.u32 %v7702, 7
        %v7704 = vsub.s32 0, %v7703
        %v7705 = vrot.slane %v7700, %v7704
        %v7707 = vmul.f32 %v7684, %v7705
        %v7708 = vmul.f32 %v7685, %v7705
        %v7709 = vmul.f32 %v7686, %v7705
        %v7710 = vmul.f32 %v7687, %v7705
        %v7711 = vmul.f32 %v7688, %v7705
        %v7712 = vmul.f32 %v7689, %v7705
        %v7713 = vmul.f32 %v7690, %v7705
        %v7714 = vmul.f32 %v7691, %v7705
        %v7715 = vmul.f32 %v7692, %v7705
        %v7716 = vmul.f32 %v7693, %v7705
        %v7717 = vmul.f32 %v7694, %v7705
        %v7718 = vmul.f32 %v7695, %v7705
        %v7719 = vmul.f32 %v7696, %v7705
        %v7720 = vmul.f32 %v7697, %v7705
        %v7721 = vmul.f32 %v7698, %v7705
        %v7722 = vmul.f32 %v7699, %v7705
        %v7723 = vld [vmem:[%s3] sm:$0x1]
        %v7725 = vlaneseq
        %v7726 = vshrl.u32 %v7725, 7
        %v7727 = vsub.s32 0, %v7726
        %v7728 = vrot.slane %v7723, %v7727
        %v7730 = vadd.f32 %v7707, %v7728
        %v7731 = vadd.f32 %v7708, %v7728
        %v7732 = vadd.f32 %v7709, %v7728
        %v7733 = vadd.f32 %v7710, %v7728
        %v7734 = vadd.f32 %v7711, %v7728
        %v7735 = vadd.f32 %v7712, %v7728
        %v7736 = vadd.f32 %v7713, %v7728
        %v7737 = vadd.f32 %v7714, %v7728
        %v7738 = vadd.f32 %v7715, %v7728
        %v7739 = vadd.f32 %v7716, %v7728
        %v7740 = vadd.f32 %v7717, %v7728
        %v7741 = vadd.f32 %v7718, %v7728
        %v7742 = vadd.f32 %v7719, %v7728
        %v7743 = vadd.f32 %v7720, %v7728
        %v7744 = vadd.f32 %v7721, %v7728
        %v7745 = vadd.f32 %v7722, %v7728
        %v7746 = vmax.f32 %v7730, 0.0
        %v7747 = vmax.f32 %v7731, 0.0
        %v7748 = vmax.f32 %v7732, 0.0
        %v7749 = vmax.f32 %v7733, 0.0
        %v7750 = vmax.f32 %v7734, 0.0
        %v7751 = vmax.f32 %v7735, 0.0
        %v7752 = vmax.f32 %v7736, 0.0
        %v7753 = vmax.f32 %v7737, 0.0
        %v7754 = vmax.f32 %v7738, 0.0
        %v7755 = vmax.f32 %v7739, 0.0
        %v7756 = vmax.f32 %v7740, 0.0
        %v7757 = vmax.f32 %v7741, 0.0
        %v7758 = vmax.f32 %v7742, 0.0
        %v7759 = vmax.f32 %v7743, 0.0
        %v7760 = vmax.f32 %v7744, 0.0
        %v7761 = vmax.f32 %v7745, 0.0
        %v7762 = vld [vmem:[%s4] sm:$0x1]
        %v7764 = vlaneseq
        %v7765 = vshrl.u32 %v7764, 7
        %v7766 = vsub.s32 0, %v7765
        %v7767 = vrot.slane %v7762, %v7766
        %v7769 = vmul.f32 %v7746, %v7767
        %v7770 = vmul.f32 %v7747, %v7767
        %v7771 = vmul.f32 %v7748, %v7767
        %v7772 = vmul.f32 %v7749, %v7767
        %v7773 = vmul.f32 %v7750, %v7767
        %v7774 = vmul.f32 %v7751, %v7767
        %v7775 = vmul.f32 %v7752, %v7767
        %v7776 = vmul.f32 %v7753, %v7767
        %v7777 = vmul.f32 %v7754, %v7767
        %v7778 = vmul.f32 %v7755, %v7767
        %v7779 = vmul.f32 %v7756, %v7767
        %v7780 = vmul.f32 %v7757, %v7767
        %v7781 = vmul.f32 %v7758, %v7767
        %v7782 = vmul.f32 %v7759, %v7767
        %v7783 = vmul.f32 %v7760, %v7767
        %v7784 = vmul.f32 %v7761, %v7767
        %v7785 = vld [vmem:[%s5] sm:$0x1]
        %v7787 = vlaneseq
        %v7788 = vshrl.u32 %v7787, 7
        %v7789 = vsub.s32 0, %v7788
        %v7790 = vrot.slane %v7785, %v7789
        %v7792 = vadd.f32 %v7769, %v7790
        %v7793 = vadd.f32 %v7770, %v7790
        %v7794 = vadd.f32 %v7771, %v7790
        %v7795 = vadd.f32 %v7772, %v7790
        %v7796 = vadd.f32 %v7773, %v7790
        %v7797 = vadd.f32 %v7774, %v7790
        %v7798 = vadd.f32 %v7775, %v7790
        %v7799 = vadd.f32 %v7776, %v7790
        %v7800 = vadd.f32 %v7777, %v7790
        %v7801 = vadd.f32 %v7778, %v7790
        %v7802 = vadd.f32 %v7779, %v7790
        %v7803 = vadd.f32 %v7780, %v7790
        %v7804 = vadd.f32 %v7781, %v7790
        %v7805 = vadd.f32 %v7782, %v7790
        %v7806 = vadd.f32 %v7783, %v7790
        %v7807 = vadd.f32 %v7784, %v7790
        %v7808 = vmax.f32 %v7792, 0.0
        %v7809 = vmax.f32 %v7793, 0.0
        %v7810 = vmax.f32 %v7794, 0.0
        %v7811 = vmax.f32 %v7795, 0.0
        %v7812 = vmax.f32 %v7796, 0.0
        %v7813 = vmax.f32 %v7797, 0.0
        %v7814 = vmax.f32 %v7798, 0.0
        %v7815 = vmax.f32 %v7799, 0.0
        %v7816 = vmax.f32 %v7800, 0.0
        %v7817 = vmax.f32 %v7801, 0.0
        %v7818 = vmax.f32 %v7802, 0.0
        %v7819 = vmax.f32 %v7803, 0.0
        %v7820 = vmax.f32 %v7804, 0.0
        %v7821 = vmax.f32 %v7805, 0.0
        %v7822 = vmax.f32 %v7806, 0.0
        %v7823 = vmax.f32 %v7807, 0.0
        %v7824 = vpack.c.bf16 %v7809, %v7808
        %v7825 = vpack.c.bf16 %v7811, %v7810
        %v7826 = vpack.c.bf16 %v7813, %v7812
        %v7827 = vpack.c.bf16 %v7815, %v7814
        %v7828 = vpack.c.bf16 %v7817, %v7816
        %v7829 = vpack.c.bf16 %v7819, %v7818
        %v7830 = vpack.c.bf16 %v7821, %v7820
        %v7831 = vpack.c.bf16 %v7823, %v7822
        %v7840 = vunpack.c.l.b16 %v7824
        %v7841 = vunpack.c.h.b16 %v7824
        %v7842 = vunpack.c.l.b16 %v7825
        %v7843 = vunpack.c.h.b16 %v7825
        %v7844 = vunpack.c.l.b16 %v7826
        %v7845 = vunpack.c.h.b16 %v7826
        %v7846 = vunpack.c.l.b16 %v7827
        %v7847 = vunpack.c.h.b16 %v7827
        %v7848 = vunpack.c.l.b16 %v7828
        %v7849 = vunpack.c.h.b16 %v7828
        %v7850 = vunpack.c.l.b16 %v7829
        %v7851 = vunpack.c.h.b16 %v7829
        %v7852 = vunpack.c.l.b16 %v7830
        %v7853 = vunpack.c.h.b16 %v7830
        %v7854 = vunpack.c.l.b16 %v7831
        %v7855 = vunpack.c.h.b16 %v7831
        %v7856 = vpack.c.b16 %v7840, %v7840
        %v7857 = vpack.c.b16 %v7841, %v7841
        %v7858 = vpack.c.b16 %v7842, %v7842
        %v7859 = vpack.c.b16 %v7843, %v7843
        %v7860 = vpack.c.b16 %v7844, %v7844
        %v7861 = vpack.c.b16 %v7845, %v7845
        %v7862 = vpack.c.b16 %v7846, %v7846
        %v7863 = vpack.c.b16 %v7847, %v7847
        %v7864 = vpack.c.b16 %v7848, %v7848
        %v7865 = vpack.c.b16 %v7849, %v7849
        %v7866 = vpack.c.b16 %v7850, %v7850
        %v7867 = vpack.c.b16 %v7851, %v7851
        %v7868 = vpack.c.b16 %v7852, %v7852
        %v7869 = vpack.c.b16 %v7853, %v7853
        %v7870 = vpack.c.b16 %v7854, %v7854
        %v7871 = vpack.c.b16 %v7855, %v7855
        %vm7888 = vcmask 781312
        %7889 = vst.msk [vmem:[%s298] sm:$0xf] %vm7888, %v7856
        %7890 = vst.msk [vmem:[%s298 + $0x4] sm:$0xf] %vm7888, %v7857
        %7891 = vst.msk [vmem:[%s298 + $0x8] sm:$0xf] %vm7888, %v7858
        %7892 = vst.msk [vmem:[%s298 + $0xc] sm:$0xf] %vm7888, %v7859
        %7893 = vst.msk [vmem:[%s298 + $0x10] sm:$0xf] %vm7888, %v7860
        %7894 = vst.msk [vmem:[%s298 + $0x14] sm:$0xf] %vm7888, %v7861
        %7895 = vst.msk [vmem:[%s298 + $0x18] sm:$0xf] %vm7888, %v7862
        %7896 = vst.msk [vmem:[%s298 + $0x1c] sm:$0xf] %vm7888, %v7863
        %7897 = vst.msk [vmem:[%s298 + $0x20] sm:$0xf] %vm7888, %v7864
        %7898 = vst.msk [vmem:[%s298 + $0x24] sm:$0xf] %vm7888, %v7865
        %7899 = vst.msk [vmem:[%s298 + $0x28] sm:$0xf] %vm7888, %v7866
        %7900 = vst.msk [vmem:[%s298 + $0x2c] sm:$0xf] %vm7888, %v7867
        %7901 = vst.msk [vmem:[%s298 + $0x30] sm:$0xf] %vm7888, %v7868
        %7902 = vst.msk [vmem:[%s298 + $0x34] sm:$0xf] %vm7888, %v7869
        %7903 = vst.msk [vmem:[%s298 + $0x38] sm:$0xf] %vm7888, %v7870
        %7904 = vst.msk [vmem:[%s298 + $0x3c] sm:$0xf] %vm7888, %v7871
        %s7905 = sand.u32 %s177, 1
        %s7906 = scalar_lea.sflag [#allocation5], %s7905
        %s7907 = sand.u32 %s177, 1
        %s7908 = smul.addr %s7907, 64
        %s7909 = scalar_lea.vmem [#allocation8], %s7908
        // Predicated region
        $region57: #{tpu_custom_call.1} parent=43 // pred_check
          %p7910 = pneg %p187
        $region58: #{tpu_custom_call.1} parent=43 // pred_check_branch
          %7912 = sbr.rel (%p7910) target = $region60
        $region59: #{tpu_custom_call.1} parent=43 // pred_region
          %s7913 = smul.u32 8, %s29
          %s7915 = ssub.s32 1024, 1024
          %7916 = vsyncadd %s7906, %s7915
          %s7917 = smul.addr %s7913, 2
          %s7918 = smul.addr %s28, 32
          %s7919 = sadd.s32 %s7917, %s7918
          %s7920 = smul.addr %s7919, 64
          %s7921 = scalar_lea.hbm %s6, %s7920
          %s7922 = sshll.u32 %s7909, 4
          %s7923 = int_to_ptr.vmem [resolvable:$true] %s7922
          %7928 = dma.vmem_to_hbm [thread:$0]  %s7923, 1024, %s7921, %s7906, 64, 64, 4
        $region60: #{tpu_custom_call.1} parent=43 // pred_fallthru
          _
      $region44: #{tpu_custom_call.1} parent=5 // pred_fallthru
        _
      %p7929 = scmp.le.s32.totalorder 2, %s19
      // Predicated region
      $region61: #{tpu_custom_call.1} parent=5 // pred_check
        %p7930 = pneg %p7929
      $region62: #{tpu_custom_call.1} parent=5 // pred_check_branch
        %7932 = sbr.rel (%p7930) target = $region64
      $region63: #{tpu_custom_call.1} parent=5 // pred_region
        %s7933 = ssub.s32 %s19, 2
        // Predicated region
        $region65: #{tpu_custom_call.1} parent=63 // pred_check
          %p7934 = pneg %p193
        $region66: #{tpu_custom_call.1} parent=63 // pred_check_branch
          %7936 = sbr.rel (%p7934) target = $region68
        $region67: #{tpu_custom_call.1} parent=63 // pred_region
          %s7937 = sand.u32 %s178, 1
          %s7938 = scalar_lea.sflag [#allocation5], %s7937
          %s7939 = sand.u32 %s178, 1
          %s7940 = smul.addr %s7939, 64
          %s7941 = scalar_lea.vmem [#allocation8], %s7940
          %7942 = dma.done %s7938, 1024
        $region68: #{tpu_custom_call.1} parent=63 // pred_fallthru
          _
      $region64: #{tpu_custom_call.1} parent=5 // pred_fallthru
        _
    $region6: #{tpu_custom_call.1} parent=1 // loop_footer
      %s23 = sadd.s32 1, %s19
    $region7: #{tpu_custom_call.1} parent=1 // loop_footer_branch
      %18 = sbr.rel target = $region3
    $region8: #{tpu_custom_call.1} parent=1 // loop_exit
      _
    %7943 = vsyncpa [#allocation4], 1
    %s7944 = scalar_lea.sflag [#allocation4], 1
    %7945 = vsyncpa %s7944, 1
    %7946 = vsyncpa [#allocation7], 1
    %7947 = vsyncpa [#allocation5], 1
    %s7948 = scalar_lea.sflag [#allocation5], 1
    %7949 = vsyncpa %s7948, 1

</llo_original>
